<compile_context>
chip_gen: v7x
topology: tpu7x:2x2x1
jax: 0.10.0
libtpu: 0.0.40
codegen_flags: <defaults>
</compile_context>

<pallas_src>
import numpy as np
import jax
import jax.numpy as jnp
from jax import lax
from jax.experimental import pallas as pl
from jax.experimental.pallas import tpu as pltpu

# Problem sizes implied by the module.
N, CIN, H, W = 2, 4, 16, 16      # batch, in-channels, spatial
COUT = 8                         # conv out-channels
KH = KW = 3                      # conv kernel
PAD = 1                          # "same" padding
HIDDEN = 32                      # linear out features
FLAT = COUT * H * W              # 2048

# Derived kernel-layout sizes.
NH = N * H                       # 32  rows of conv activation: (n, h)
WC = W * COUT                    # 128 cols of conv activation: (w, co)   (lane-dense)
KCOL = CIN * KH * W              # 192 im2col contraction axis: (ci, dy, u)
JH = HIDDEN * H                  # 512 cols after first FC contraction: (j, h')
LOG2_H = 4                       # H == 16 (power of two; used for >> and & masks)


# -----------------------------------------------------------------------------
# Single fused kernel: conv3x3 + ReLU + flatten + linear + ReLU.
# -----------------------------------------------------------------------------
def net_fused_kernel(x_ref, wconv_ref, bconv_ref, wfc_ref, bfc_ref, o_ref,
                     xpad_ref):
    f32 = jnp.float32
    hp = lax.Precision.HIGHEST

    # ---- zero "same" padding of the H axis, done in VMEM (no wrapper pad op).
    xpad_ref[...] = jnp.zeros_like(xpad_ref)
    xpad_ref[:, :, PAD:PAD + H, :] = x_ref[...]
    xp = xpad_ref[...]                                   # (N, CIN, H+2, W)

    # ---- im2col: P[(n,h), (ci,dy,u)] = xpad[n, ci, h+dy, u].
    # Only static slices + leading-dim merges (no lane-crossing reshapes); the
    # dx shift and W-axis zero padding are folded into the conv weight.
    pieces = []
    for ci in range(CIN):
        for dy in range(KH):
            pieces.append(xp[:, ci, dy:dy + H, :].reshape(NH, W))   # (32, 16)
    p = jnp.concatenate(pieces, axis=1)                  # (32, 192)

    # ---- conv + bias + ReLU as ONE matmul; activation stays lane-dense.
    act = jnp.dot(p, wconv_ref[...], precision=hp, preferred_element_type=f32)
    act = jnp.maximum(act + bconv_ref[...], 0.0)         # (32, 128) rows=(n,h) cols=(w,co)

    # ---- Linear, step 1: contract the (w, co) lane axis.  q[(n,h), (j,h')].
    q = jnp.dot(act, wfc_ref[...], precision=hp, preferred_element_type=f32)   # (32, 512)

    # ---- Linear, step 2: keep only h == h' terms, then block-sum rows -> n
    # and columns -> j with tiny 0/1 selector matmuls (MXU; no reshapes).
    r_id = lax.broadcasted_iota(jnp.int32, (NH, JH), 0)          # row index (n*H + h)
    l_id = lax.broadcasted_iota(jnp.int32, (NH, JH), 1)          # col index (j*H + h')
    qm = jnp.where((r_id & (H - 1)) == (l_id & (H - 1)), q, 0.0)  # h == h'

    row_sel = ((lax.broadcasted_iota(jnp.int32, (N, NH), 1) >> LOG2_H)
               == lax.broadcasted_iota(jnp.int32, (N, NH), 0)).astype(f32)       # (2, 32)
    col_sel = ((lax.broadcasted_iota(jnp.int32, (JH, HIDDEN), 0) >> LOG2_H)
               == lax.broadcasted_iota(jnp.int32, (JH, HIDDEN), 1)).astype(f32)  # (512, 32)

    y = jnp.dot(jnp.dot(row_sel, qm, precision=hp, preferred_element_type=f32),
                col_sel, precision=hp, preferred_element_type=f32)               # (2, 32)
    o_ref[...] = jnp.maximum(y + bfc_ref[...], 0.0)


def net_forward(x, kernel_params):
    """Net.forward: x is NCHW (2, 4, 16, 16), exactly as PyTorch provides it."""
    wconv, bconv, wfc, bfc = kernel_params
    vmem = pl.BlockSpec(memory_space=pltpu.MemorySpace.VMEM)
    return pl.pallas_call(
        net_fused_kernel,
        out_shape=jax.ShapeDtypeStruct((N, HIDDEN), jnp.float32),
        in_specs=[vmem, vmem, vmem, vmem, vmem],
        out_specs=vmem,
        scratch_shapes=[pltpu.VMEM((N, CIN, H + 2 * PAD, W), jnp.float32)],
    )(x, wconv, bconv, wfc, bfc)


# -----------------------------------------------------------------------------
# One-time weight preparation (off the hot path): fold all layout work into the
# weights so the kernel needs no transposes and no lane-crossing reshapes.
# -----------------------------------------------------------------------------
def prepare_kernel_params(conv_w, conv_b, fc_w, fc_b):
    """conv_w: (COUT, CIN, KH, KW) PyTorch Conv2d layout.
       fc_w:   (HIDDEN, COUT*H*W) PyTorch Linear layout, columns in (c,h,w) order."""
    cw = np.asarray(conv_w, np.float32)
    cb = np.asarray(conv_b, np.float32)
    fw = np.asarray(fc_w, np.float32)
    fb = np.asarray(fc_b, np.float32)

    # Block-Toeplitz conv weight: wconv[(ci*KH+dy)*W + u, w*COUT + co]
    #   = cw[co, ci, dy, u - w + PAD]   (zero outside the kernel -> W padding).
    wconv = np.zeros((KCOL, WC), np.float32)
    for ci in range(CIN):
        for dy in range(KH):
            for u in range(W):
                row = (ci * KH + dy) * W + u
                for w in range(W):
                    dx = u - w + PAD
                    if 0 <= dx < KW:
                        wconv[row, w * COUT:(w + 1) * COUT] = cw[:, ci, dy, dx]
    bconv = np.tile(cb, W).reshape(1, WC)            # [0, w*COUT + co] = cb[co]

    # FC weight permuted so the first contraction runs over the conv
    # activation's lane axis (w, co):
    #   wfc[w*COUT + co, j*H + h] = fw[j, co*H*W + h*W + w]
    fw4 = fw.reshape(HIDDEN, COUT, H, W)             # (j, co, h, w)
    wfc = np.transpose(fw4, (3, 1, 0, 2)).reshape(WC, JH)   # (128, 512), lane-dense
    bfc = fb.reshape(1, HIDDEN)

    return (jnp.asarray(wconv), jnp.asarray(bconv),
            jnp.asarray(wfc), jnp.asarray(bfc))


# -----------------------------------------------------------------------------
# Deterministic synthetic parameters (PyTorch layouts) and a pure-JAX reference.
# -----------------------------------------------------------------------------
def init_torch_params():
    k1, k2, k3, k4 = jax.random.split(jax.random.PRNGKey(0), 4)
    conv_w = jax.random.normal(k1, (COUT, CIN, KH, KW), jnp.float32) * 0.1
    conv_b = jax.random.normal(k2, (COUT,), jnp.float32) * 0.1
    fc_w = jax.random.normal(k3, (HIDDEN, FLAT), jnp.float32) * 0.02
    fc_b = jax.random.normal(k4, (HIDDEN,), jnp.float32) * 0.02
    return conv_w, conv_b, fc_w, fc_b


def reference_forward(x, conv_w, conv_b, fc_w, fc_b):
    y = lax.conv_general_dilated(
        x, conv_w, window_strides=(1, 1), padding=((PAD, PAD), (PAD, PAD)),
        dimension_numbers=("NCHW", "OIHW", "NCHW"),
        precision=lax.Precision.HIGHEST)
    y = jnp.maximum(y + conv_b.reshape(1, COUT, 1, 1), 0.0)
    y = y.reshape(N, FLAT)                           # PyTorch Flatten: (c, h, w) order
    y = jnp.dot(y, fc_w.T, precision=lax.Precision.HIGHEST) + fc_b
    return jnp.maximum(y, 0.0)


if __name__ == "__main__":
    conv_w, conv_b, fc_w, fc_b = init_torch_params()
    kparams = prepare_kernel_params(conv_w, conv_b, fc_w, fc_b)

    x = jax.random.normal(jax.random.PRNGKey(0), (N, CIN, H, W), jnp.float32)

    out = jax.jit(net_forward)(x, kparams)
    out = jax.block_until_ready(out)
    assert out.shape == (N, HIDDEN), out.shape
    assert out.dtype == jnp.float32

    ref = jax.block_until_ready(
        reference_forward(x, conv_w, conv_b, fc_w, fc_b))
    np.testing.assert_allclose(np.asarray(out), np.asarray(ref),
                               rtol=2e-2, atol=2e-2)

    print("KERNEL_OK")
</pallas_src>

<mosaic_0001>
module attributes {stable_mosaic.version = 11 : i64} {
  func.func @net_fused_kernel(%arg0: memref<2x4x16x16xf32, #tpu.memory_space<vmem>>, %arg1: memref<192x128xf32, #tpu.memory_space<vmem>>, %arg2: memref<1x128xf32, #tpu.memory_space<vmem>>, %arg3: memref<128x512xf32, #tpu.memory_space<vmem>>, %arg4: memref<1x32xf32, #tpu.memory_space<vmem>>, %arg5: memref<2x32xf32, #tpu.memory_space<vmem>>, %arg6: memref<2x4x18x16xf32, #tpu.memory_space<vmem>>) attributes {dimension_semantics = [], scalar_prefetch = 0 : i64, scratch_operands = 1 : i64, tpu.core_type = #tpu.core_type<tc>} {
    %cst = arith.constant 0.000000e+00 : f32
    %0 = vector.broadcast %cst : f32 to vector<2x4x18x16xf32>
    %c0 = arith.constant 0 : index
    %c0_0 = arith.constant 0 : index
    %c0_1 = arith.constant 0 : index
    %c0_2 = arith.constant 0 : index
    %1 = vector.load %arg6[%c0, %c0_0, %c0_1, %c0_2] : memref<2x4x18x16xf32, #tpu.memory_space<vmem>>, vector<2x4x18x16xf32>
    tpu.vector_store %arg6[%c0, %c0_0, %c0_1, %c0_2], %0 {strides = array<i32>} : memref<2x4x18x16xf32, #tpu.memory_space<vmem>>, vector<2x4x18x16xf32>,
    %c0_3 = arith.constant 0 : index
    %c0_4 = arith.constant 0 : index
    %c0_5 = arith.constant 0 : index
    %c0_6 = arith.constant 0 : index
    %2 = vector.load %arg0[%c0_3, %c0_4, %c0_5, %c0_6] : memref<2x4x16x16xf32, #tpu.memory_space<vmem>>, vector<2x4x16x16xf32>
    %c0_7 = arith.constant 0 : index
    %c0_8 = arith.constant 0 : index
    %c1 = arith.constant 1 : index
    %c0_9 = arith.constant 0 : index
    %3 = vector.load %arg6[%c0_7, %c0_8, %c1, %c0_9] : memref<2x4x18x16xf32, #tpu.memory_space<vmem>>, vector<2x4x16x16xf32>
    tpu.vector_store %arg6[%c0_7, %c0_8, %c1, %c0_9], %2 {strides = array<i32>} : memref<2x4x18x16xf32, #tpu.memory_space<vmem>>, vector<2x4x16x16xf32>,
    %c0_10 = arith.constant 0 : index
    %c0_11 = arith.constant 0 : index
    %c0_12 = arith.constant 0 : index
    %c0_13 = arith.constant 0 : index
    %4 = vector.load %arg6[%c0_10, %c0_11, %c0_12, %c0_13] : memref<2x4x18x16xf32, #tpu.memory_space<vmem>>, vector<2x4x18x16xf32>
    %5 = vector.extract_strided_slice %4 {offsets = [0, 0, 0, 0], sizes = [2, 1, 16, 16], strides = [1, 1, 1, 1]} : vector<2x4x18x16xf32> to vector<2x1x16x16xf32>
    %6 = vector.shape_cast %5 : vector<2x1x16x16xf32> to vector<2x16x16xf32>
    %7 = vector.shape_cast %6 : vector<2x16x16xf32> to vector<32x16xf32>
    %8 = vector.extract_strided_slice %4 {offsets = [0, 0, 1, 0], sizes = [2, 1, 16, 16], strides = [1, 1, 1, 1]} : vector<2x4x18x16xf32> to vector<2x1x16x16xf32>
    %9 = vector.shape_cast %8 : vector<2x1x16x16xf32> to vector<2x16x16xf32>
    %10 = vector.shape_cast %9 : vector<2x16x16xf32> to vector<32x16xf32>
    %11 = vector.extract_strided_slice %4 {offsets = [0, 0, 2, 0], sizes = [2, 1, 16, 16], strides = [1, 1, 1, 1]} : vector<2x4x18x16xf32> to vector<2x1x16x16xf32>
    %12 = vector.shape_cast %11 : vector<2x1x16x16xf32> to vector<2x16x16xf32>
    %13 = vector.shape_cast %12 : vector<2x16x16xf32> to vector<32x16xf32>
    %14 = vector.extract_strided_slice %4 {offsets = [0, 1, 0, 0], sizes = [2, 1, 16, 16], strides = [1, 1, 1, 1]} : vector<2x4x18x16xf32> to vector<2x1x16x16xf32>
    %15 = vector.shape_cast %14 : vector<2x1x16x16xf32> to vector<2x16x16xf32>
    %16 = vector.shape_cast %15 : vector<2x16x16xf32> to vector<32x16xf32>
    %17 = vector.extract_strided_slice %4 {offsets = [0, 1, 1, 0], sizes = [2, 1, 16, 16], strides = [1, 1, 1, 1]} : vector<2x4x18x16xf32> to vector<2x1x16x16xf32>
    %18 = vector.shape_cast %17 : vector<2x1x16x16xf32> to vector<2x16x16xf32>
    %19 = vector.shape_cast %18 : vector<2x16x16xf32> to vector<32x16xf32>
    %20 = vector.extract_strided_slice %4 {offsets = [0, 1, 2, 0], sizes = [2, 1, 16, 16], strides = [1, 1, 1, 1]} : vector<2x4x18x16xf32> to vector<2x1x16x16xf32>
    %21 = vector.shape_cast %20 : vector<2x1x16x16xf32> to vector<2x16x16xf32>
    %22 = vector.shape_cast %21 : vector<2x16x16xf32> to vector<32x16xf32>
    %23 = vector.extract_strided_slice %4 {offsets = [0, 2, 0, 0], sizes = [2, 1, 16, 16], strides = [1, 1, 1, 1]} : vector<2x4x18x16xf32> to vector<2x1x16x16xf32>
    %24 = vector.shape_cast %23 : vector<2x1x16x16xf32> to vector<2x16x16xf32>
    %25 = vector.shape_cast %24 : vector<2x16x16xf32> to vector<32x16xf32>
    %26 = vector.extract_strided_slice %4 {offsets = [0, 2, 1, 0], sizes = [2, 1, 16, 16], strides = [1, 1, 1, 1]} : vector<2x4x18x16xf32> to vector<2x1x16x16xf32>
    %27 = vector.shape_cast %26 : vector<2x1x16x16xf32> to vector<2x16x16xf32>
    %28 = vector.shape_cast %27 : vector<2x16x16xf32> to vector<32x16xf32>
    %29 = vector.extract_strided_slice %4 {offsets = [0, 2, 2, 0], sizes = [2, 1, 16, 16], strides = [1, 1, 1, 1]} : vector<2x4x18x16xf32> to vector<2x1x16x16xf32>
    %30 = vector.shape_cast %29 : vector<2x1x16x16xf32> to vector<2x16x16xf32>
    %31 = vector.shape_cast %30 : vector<2x16x16xf32> to vector<32x16xf32>
    %32 = vector.extract_strided_slice %4 {offsets = [0, 3, 0, 0], sizes = [2, 1, 16, 16], strides = [1, 1, 1, 1]} : vector<2x4x18x16xf32> to vector<2x1x16x16xf32>
    %33 = vector.shape_cast %32 : vector<2x1x16x16xf32> to vector<2x16x16xf32>
    %34 = vector.shape_cast %33 : vector<2x16x16xf32> to vector<32x16xf32>
    %35 = vector.extract_strided_slice %4 {offsets = [0, 3, 1, 0], sizes = [2, 1, 16, 16], strides = [1, 1, 1, 1]} : vector<2x4x18x16xf32> to vector<2x1x16x16xf32>
    %36 = vector.shape_cast %35 : vector<2x1x16x16xf32> to vector<2x16x16xf32>
    %37 = vector.shape_cast %36 : vector<2x16x16xf32> to vector<32x16xf32>
    %38 = vector.extract_strided_slice %4 {offsets = [0, 3, 2, 0], sizes = [2, 1, 16, 16], strides = [1, 1, 1, 1]} : vector<2x4x18x16xf32> to vector<2x1x16x16xf32>
    %39 = vector.shape_cast %38 : vector<2x1x16x16xf32> to vector<2x16x16xf32>
    %40 = vector.shape_cast %39 : vector<2x16x16xf32> to vector<32x16xf32>
    %41 = tpu.concatenate %7, %10, %13, %16, %19, %22, %25, %28, %31, %34, %37, %40 in 1 : vector<32x16xf32>, vector<32x16xf32>, vector<32x16xf32>, vector<32x16xf32>, vector<32x16xf32>, vector<32x16xf32>, vector<32x16xf32>, vector<32x16xf32>, vector<32x16xf32>, vector<32x16xf32>, vector<32x16xf32>, vector<32x16xf32> -> vector<32x192xf32>
    %c0_14 = arith.constant 0 : index
    %c0_15 = arith.constant 0 : index
    %42 = vector.load %arg1[%c0_14, %c0_15] : memref<192x128xf32, #tpu.memory_space<vmem>>, vector<192x128xf32>
    %cst_16 = arith.constant dense<0.000000e+00> : vector<32x128xf32>
    %43 = tpu.matmul %41, %42, %cst_16 {dimension_numbers = #tpu.dot_dimension_numbers<[1], [0], [0], [1], [0, 0, 1, 1], [], []>, precision = #tpu.contract_precision<fp32>} : vector<32x192xf32>, vector<192x128xf32>, vector<32x128xf32> -> vector<32x128xf32>
    %c0_17 = arith.constant 0 : index
    %c0_18 = arith.constant 0 : index
    %44 = vector.load %arg2[%c0_17, %c0_18] : memref<1x128xf32, #tpu.memory_space<vmem>>, vector<1x128xf32>
    %45 = vector.broadcast %44 : vector<1x128xf32> to vector<32x128xf32>
    %46 = arith.addf %43, %45 : vector<32x128xf32>
    %cst_19 = arith.constant 0.000000e+00 : f32
    %47 = vector.broadcast %cst_19 : f32 to vector<32x128xf32>
    %48 = arith.maximumf %46, %47 : vector<32x128xf32>
    %c0_20 = arith.constant 0 : index
    %c0_21 = arith.constant 0 : index
    %49 = vector.load %arg3[%c0_20, %c0_21] : memref<128x512xf32, #tpu.memory_space<vmem>>, vector<128x512xf32>
    %cst_22 = arith.constant dense<0.000000e+00> : vector<32x512xf32>
    %50 = tpu.matmul %48, %49, %cst_22 {dimension_numbers = #tpu.dot_dimension_numbers<[1], [0], [0], [1], [0, 0, 1, 1], [], []>, precision = #tpu.contract_precision<fp32>} : vector<32x128xf32>, vector<128x512xf32>, vector<32x512xf32> -> vector<32x512xf32>
    %51 = tpu.iota {dimensions = array<i32: 0>} : vector<32x512xi32>
    %52 = tpu.iota {dimensions = array<i32: 1>} : vector<32x512xi32>
    %c15_i32 = arith.constant 15 : i32
    %53 = vector.broadcast %c15_i32 : i32 to vector<32x512xi32>
    %54 = arith.andi %51, %53 : vector<32x512xi32>
    %c15_i32_23 = arith.constant 15 : i32
    %55 = vector.broadcast %c15_i32_23 : i32 to vector<32x512xi32>
    %56 = arith.andi %52, %55 : vector<32x512xi32>
    %57 = arith.cmpi eq, %54, %56 : vector<32x512xi32>
    %cst_24 = arith.constant 0.000000e+00 : f32
    %58 = vector.broadcast %cst_24 : f32 to vector<32x512xf32>
    %59 = arith.select %57, %50, %58 : vector<32x512xi1>, vector<32x512xf32>
    %60 = tpu.iota {dimensions = array<i32: 1>} : vector<2x32xi32>
    %c4_i32 = arith.constant 4 : i32
    %61 = vector.broadcast %c4_i32 : i32 to vector<2x32xi32>
    %62 = arith.shrsi %60, %61 : vector<2x32xi32>
    %63 = tpu.iota {dimensions = array<i32: 0>} : vector<2x32xi32>
    %64 = arith.cmpi eq, %62, %63 : vector<2x32xi32>
    %65 = arith.extui %64 : vector<2x32xi1> to vector<2x32xi32>
    %66 = arith.sitofp %65 : vector<2x32xi32> to vector<2x32xf32>
    %67 = tpu.iota {dimensions = array<i32: 0>} : vector<512x32xi32>
    %c4_i32_25 = arith.constant 4 : i32
    %68 = vector.broadcast %c4_i32_25 : i32 to vector<512x32xi32>
    %69 = arith.shrsi %67, %68 : vector<512x32xi32>
    %70 = tpu.iota {dimensions = array<i32: 1>} : vector<512x32xi32>
    %71 = arith.cmpi eq, %69, %70 : vector<512x32xi32>
    %72 = arith.extui %71 : vector<512x32xi1> to vector<512x32xi32>
    %73 = arith.sitofp %72 : vector<512x32xi32> to vector<512x32xf32>
    %cst_26 = arith.constant dense<0.000000e+00> : vector<2x512xf32>
    %74 = tpu.matmul %66, %59, %cst_26 {dimension_numbers = #tpu.dot_dimension_numbers<[1], [0], [0], [1], [0, 0, 1, 1], [], []>, precision = #tpu.contract_precision<fp32>} : vector<2x32xf32>, vector<32x512xf32>, vector<2x512xf32> -> vector<2x512xf32>
    %cst_27 = arith.constant dense<0.000000e+00> : vector<2x32xf32>
    %75 = tpu.matmul %74, %73, %cst_27 {dimension_numbers = #tpu.dot_dimension_numbers<[1], [0], [0], [1], [0, 0, 1, 1], [], []>, precision = #tpu.contract_precision<fp32>} : vector<2x512xf32>, vector<512x32xf32>, vector<2x32xf32> -> vector<2x32xf32>
    %c0_28 = arith.constant 0 : index
    %c0_29 = arith.constant 0 : index
    %76 = vector.load %arg4[%c0_28, %c0_29] : memref<1x32xf32, #tpu.memory_space<vmem>>, vector<1x32xf32>
    %77 = vector.broadcast %76 : vector<1x32xf32> to vector<2x32xf32>
    %78 = arith.addf %75, %77 : vector<2x32xf32>
    %cst_30 = arith.constant 0.000000e+00 : f32
    %79 = vector.broadcast %cst_30 : f32 to vector<2x32xf32>
    %80 = arith.maximumf %78, %79 : vector<2x32xf32>
    %c0_31 = arith.constant 0 : index
    %c0_32 = arith.constant 0 : index
    %81 = vector.load %arg5[%c0_31, %c0_32] : memref<2x32xf32, #tpu.memory_space<vmem>>, vector<2x32xf32>
    tpu.vector_store %arg5[%c0_31, %c0_32], %80 {strides = array<i32>} : memref<2x32xf32, #tpu.memory_space<vmem>>, vector<2x32xf32>,
    return
  }
}

</mosaic_0001>

<llo_original>
// kernel: net_forward.1
$region0: #{net_forward.1}
  #allocation0 [shape = 'u32[]', space=smem, size = 0x4, offset = 0x4, fixed_abs, tag = 'smem constant byte address 0x4 - core index']
  #allocation1 [shape = 'u32[144,128]{1,0:T(1,128)}', space=vmem, size = 0x12000, scoped, tag = 'internal scratch']
  #allocation2 [shape = 'f32[2,4,18,16]{3,2,1,0:T(8,128)}', space=vmem, size = 0x18000, scoped, tag = 'scratch operand']
  %s0 = inlined_call_operand.hbm [shape: f32[2,4,16,16], index: 0, kind: input, shape index: {}]
  %s1 = inlined_call_operand.hbm [shape: f32[192,128], index: 1, kind: input, shape index: {}]
  %s2 = inlined_call_operand.vmem [shape: f32[1,128], index: 2, kind: input, shape index: {}]
  %s3 = inlined_call_operand.hbm [shape: f32[128,512], index: 3, kind: input, shape index: {}]
  %s4 = inlined_call_operand.vmem [shape: f32[1,32], index: 4, kind: input, shape index: {}]
  %s5 = inlined_call_operand.hbm [shape: f32[2,32], index: 5, kind: output, shape index: {}]
  %s6 = sld [smem:[#allocation0]]
  $region42: #{net_forward.1} parent=0
    _
  %s8 = ssub.s32 1, %s6
  %s9 = scalar_select 0, %s8, %s6
  $region1: #{net_forward.1} parent=0
    #allocation3 [shape = 'u8[65536]{0}', space=vmem, size = 0x10000, scoped, tag = 'input window, operand 0, single buffered']
    #allocation4 [shape = 's32[1]{0}', space=sflag, size = 0x4, scoped, tag = 'scoped memory for net_forward.1']
    #allocation5 [shape = 's32[1]{0}', space=sflag, size = 0x4, scoped, tag = 'scoped memory for net_forward.1']
    #allocation6 [shape = 'u8[98304]{0}', space=vmem, size = 0x18000, scoped, tag = 'input window, operand 1, single buffered']
    #allocation7 [shape = 's32[1]{0}', space=sflag, size = 0x4, scoped, tag = 'scoped memory for net_forward.1']
    #allocation8 [shape = 'u8[262144]{0}', space=vmem, size = 0x40000, scoped, tag = 'input window, operand 3, single buffered']
    #allocation9 [shape = 'u8[1024]{0}', space=vmem, size = 0x400, scoped, tag = 'output window, operand 0, single buffered']
    %10 = vsyncpa [#allocation4], 0
    %11 = vsyncpa [#allocation7], 0
    %12 = vsyncpa [#allocation5], 0
    // Predicated region
    $region2: #{net_forward.1} parent=1 // pred_check
      _
    $region3: #{net_forward.1} parent=1 // pred_check_branch
      %14 = sbr.rel (0) target = $region5
    $region4: #{net_forward.1} parent=1 // pred_region
      %s16 = ssub.s32 2048, 2048
      %17 = vsyncadd [#allocation4], %s16
      %s18 = sshll.u32 [#allocation3], 4
      %s19 = int_to_ptr.vmem [resolvable:$true] %s18
      %24 = dma.hbm_to_vmem [thread:$0]  %s0, 2048, %s19, [#allocation4], 128, 128, 8
    $region5: #{net_forward.1} parent=1 // pred_fallthru
      _
    // Predicated region
    $region6: #{net_forward.1} parent=1 // pred_check
      _
    $region7: #{net_forward.1} parent=1 // pred_check_branch
      %26 = sbr.rel (0) target = $region9
    $region8: #{net_forward.1} parent=1 // pred_region
      %s28 = ssub.s32 3072, 3072
      %29 = vsyncadd [#allocation7], %s28
      %s30 = sshll.u32 [#allocation6], 4
      %s31 = int_to_ptr.vmem [resolvable:$true] %s30
      %36 = dma.hbm_to_vmem [thread:$0]  %s1, 3072, %s31, [#allocation7], 128, 128, 8
    $region9: #{net_forward.1} parent=1 // pred_fallthru
      _
    // Predicated region
    $region10: #{net_forward.1} parent=1 // pred_check
      _
    $region11: #{net_forward.1} parent=1 // pred_check_branch
      %38 = sbr.rel (0) target = $region13
    $region12: #{net_forward.1} parent=1 // pred_region
      _
    $region13: #{net_forward.1} parent=1 // pred_fallthru
      _
    // Predicated region
    $region14: #{net_forward.1} parent=1 // pred_check
      _
    $region15: #{net_forward.1} parent=1 // pred_check_branch
      %40 = sbr.rel (0) target = $region17
    $region16: #{net_forward.1} parent=1 // pred_region
      %s42 = ssub.s32 8192, 8192
      %43 = vsyncadd [#allocation7], %s42
      %s44 = sshll.u32 [#allocation8], 4
      %s45 = int_to_ptr.vmem [resolvable:$true] %s44
      %50 = dma.hbm_to_vmem [thread:$0]  %s3, 8192, %s45, [#allocation7], 512, 512, 32
    $region17: #{net_forward.1} parent=1 // pred_fallthru
      _
    // Predicated region
    $region18: #{net_forward.1} parent=1 // pred_check
      _
    $region19: #{net_forward.1} parent=1 // pred_check_branch
      %52 = sbr.rel (0) target = $region21
    $region20: #{net_forward.1} parent=1 // pred_region
      _
    $region21: #{net_forward.1} parent=1 // pred_fallthru
      _
    // Predicated region
    $region22: #{net_forward.1} parent=1 // pred_check
      _
    $region23: #{net_forward.1} parent=1 // pred_check_branch
      %54 = sbr.rel (0) target = $region25
    $region24: #{net_forward.1} parent=1 // pred_region
      %55 = dma.done [#allocation4], 2048
    $region25: #{net_forward.1} parent=1 // pred_fallthru
      _
    // Predicated region
    $region26: #{net_forward.1} parent=1 // pred_check
      _
    $region27: #{net_forward.1} parent=1 // pred_check_branch
      %57 = sbr.rel (0) target = $region29
    $region28: #{net_forward.1} parent=1 // pred_region
      %58 = dma.done [#allocation7], 3072
    $region29: #{net_forward.1} parent=1 // pred_fallthru
      _
    // Predicated region
    $region30: #{net_forward.1} parent=1 // pred_check
      _
    $region31: #{net_forward.1} parent=1 // pred_check_branch
      %60 = sbr.rel (0) target = $region33
    $region32: #{net_forward.1} parent=1 // pred_region
      %61 = dma.done [#allocation7], 8192
    $region33: #{net_forward.1} parent=1 // pred_fallthru
      _
    %vm62 = vcmask 130048
    %63 = vst.msk [vmem:[#allocation2] sm:$0xff] %vm62, 0.0
    %64 = vst.msk [vmem:[#allocation2 + $0x8] sm:$0xff] %vm62, 0.0
    %vm65 = vcmask 123904
    %66 = vst.msk [vmem:[#allocation2 + $0x10] sm:$0x3] %vm65, 0.0
    %67 = vst.msk [vmem:[#allocation2 + $0x18] sm:$0xff] %vm62, 0.0
    %68 = vst.msk [vmem:[#allocation2 + $0x20] sm:$0xff] %vm62, 0.0
    %69 = vst.msk [vmem:[#allocation2 + $0x28] sm:$0x3] %vm65, 0.0
    %70 = vst.msk [vmem:[#allocation2 + $0x30] sm:$0xff] %vm62, 0.0
    %71 = vst.msk [vmem:[#allocation2 + $0x38] sm:$0xff] %vm62, 0.0
    %72 = vst.msk [vmem:[#allocation2 + $0x40] sm:$0x3] %vm65, 0.0
    %73 = vst.msk [vmem:[#allocation2 + $0x48] sm:$0xff] %vm62, 0.0
    %74 = vst.msk [vmem:[#allocation2 + $0x50] sm:$0xff] %vm62, 0.0
    %75 = vst.msk [vmem:[#allocation2 + $0x58] sm:$0x3] %vm65, 0.0
    %76 = vst.msk [vmem:[#allocation2 + $0x60] sm:$0xff] %vm62, 0.0
    %77 = vst.msk [vmem:[#allocation2 + $0x68] sm:$0xff] %vm62, 0.0
    %78 = vst.msk [vmem:[#allocation2 + $0x70] sm:$0x3] %vm65, 0.0
    %79 = vst.msk [vmem:[#allocation2 + $0x78] sm:$0xff] %vm62, 0.0
    %80 = vst.msk [vmem:[#allocation2 + $0x80] sm:$0xff] %vm62, 0.0
    %81 = vst.msk [vmem:[#allocation2 + $0x88] sm:$0x3] %vm65, 0.0
    %82 = vst.msk [vmem:[#allocation2 + $0x90] sm:$0xff] %vm62, 0.0
    %83 = vst.msk [vmem:[#allocation2 + $0x98] sm:$0xff] %vm62, 0.0
    %84 = vst.msk [vmem:[#allocation2 + $0xa0] sm:$0x3] %vm65, 0.0
    %85 = vst.msk [vmem:[#allocation2 + $0xa8] sm:$0xff] %vm62, 0.0
    %86 = vst.msk [vmem:[#allocation2 + $0xb0] sm:$0xff] %vm62, 0.0
    %87 = vst.msk [vmem:[#allocation2 + $0xb8] sm:$0x3] %vm65, 0.0
    %v88 = vld [vmem:[#allocation3] sm:$0xff]
    %v89 = vld [vmem:[#allocation3 + $0x8] sm:$0xff]
    %v90 = vld [vmem:[#allocation3 + $0x10] sm:$0xff]
    %v91 = vld [vmem:[#allocation3 + $0x18] sm:$0xff]
    %v92 = vld [vmem:[#allocation3 + $0x20] sm:$0xff]
    %v93 = vld [vmem:[#allocation3 + $0x28] sm:$0xff]
    %v94 = vld [vmem:[#allocation3 + $0x30] sm:$0xff]
    %v95 = vld [vmem:[#allocation3 + $0x38] sm:$0xff]
    %v96 = vld [vmem:[#allocation3 + $0x40] sm:$0xff]
    %v97 = vld [vmem:[#allocation3 + $0x48] sm:$0xff]
    %v98 = vld [vmem:[#allocation3 + $0x50] sm:$0xff]
    %v99 = vld [vmem:[#allocation3 + $0x58] sm:$0xff]
    %v100 = vld [vmem:[#allocation3 + $0x60] sm:$0xff]
    %v101 = vld [vmem:[#allocation3 + $0x68] sm:$0xff]
    %v102 = vld [vmem:[#allocation3 + $0x70] sm:$0xff]
    %v103 = vld [vmem:[#allocation3 + $0x78] sm:$0xff]
    %104 = vst.msk [vmem:[#allocation2 + $0x1] sm:$0xff] %vm62, %v88
    %105 = vst.msk [vmem:[#allocation2 + $0x9] sm:$0xff] %vm62, %v89
    %106 = vst.msk [vmem:[#allocation2 + $0x19] sm:$0xff] %vm62, %v90
    %107 = vst.msk [vmem:[#allocation2 + $0x21] sm:$0xff] %vm62, %v91
    %108 = vst.msk [vmem:[#allocation2 + $0x31] sm:$0xff] %vm62, %v92
    %109 = vst.msk [vmem:[#allocation2 + $0x39] sm:$0xff] %vm62, %v93
    %110 = vst.msk [vmem:[#allocation2 + $0x49] sm:$0xff] %vm62, %v94
    %111 = vst.msk [vmem:[#allocation2 + $0x51] sm:$0xff] %vm62, %v95
    %112 = vst.msk [vmem:[#allocation2 + $0x61] sm:$0xff] %vm62, %v96
    %113 = vst.msk [vmem:[#allocation2 + $0x69] sm:$0xff] %vm62, %v97
    %114 = vst.msk [vmem:[#allocation2 + $0x79] sm:$0xff] %vm62, %v98
    %115 = vst.msk [vmem:[#allocation2 + $0x81] sm:$0xff] %vm62, %v99
    %116 = vst.msk [vmem:[#allocation2 + $0x91] sm:$0xff] %vm62, %v100
    %117 = vst.msk [vmem:[#allocation2 + $0x99] sm:$0xff] %vm62, %v101
    %118 = vst.msk [vmem:[#allocation2 + $0xa9] sm:$0xff] %vm62, %v102
    %119 = vst.msk [vmem:[#allocation2 + $0xb1] sm:$0xff] %vm62, %v103
    %v120 = vld [vmem:[#allocation2] sm:$0xff]
    %v121 = vld [vmem:[#allocation2 + $0x8] sm:$0xff]
    %v122 = vld [vmem:[#allocation2 + $0x10] sm:$0x3]
    %v123 = vld [vmem:[#allocation2 + $0x18] sm:$0xff]
    %v124 = vld [vmem:[#allocation2 + $0x20] sm:$0xff]
    %v125 = vld [vmem:[#allocation2 + $0x28] sm:$0x3]
    %v126 = vld [vmem:[#allocation2 + $0x30] sm:$0xff]
    %v127 = vld [vmem:[#allocation2 + $0x38] sm:$0xff]
    %v128 = vld [vmem:[#allocation2 + $0x40] sm:$0x3]
    %v129 = vld [vmem:[#allocation2 + $0x48] sm:$0xff]
    %v130 = vld [vmem:[#allocation2 + $0x50] sm:$0xff]
    %v131 = vld [vmem:[#allocation2 + $0x58] sm:$0x3]
    %v132 = vld [vmem:[#allocation2 + $0x60] sm:$0xff]
    %v133 = vld [vmem:[#allocation2 + $0x68] sm:$0xff]
    %v134 = vld [vmem:[#allocation2 + $0x70] sm:$0x3]
    %v135 = vld [vmem:[#allocation2 + $0x78] sm:$0xff]
    %v136 = vld [vmem:[#allocation2 + $0x80] sm:$0xff]
    %v137 = vld [vmem:[#allocation2 + $0x88] sm:$0x3]
    %v138 = vld [vmem:[#allocation2 + $0x90] sm:$0xff]
    %v139 = vld [vmem:[#allocation2 + $0x98] sm:$0xff]
    %v140 = vld [vmem:[#allocation2 + $0xa0] sm:$0x3]
    %v141 = vld [vmem:[#allocation2 + $0xa8] sm:$0xff]
    %v142 = vld [vmem:[#allocation2 + $0xb0] sm:$0xff]
    %v143 = vld [vmem:[#allocation2 + $0xb8] sm:$0x3]
    %vm150 = vcmask 1046528
    %v151 = vrot.slane %v120, 1
    %v152 = vrot.slane %v121, 1
    %v153 = vsel %vm150, %v151, %v152
    %v154 = vrot.slane %v122, 1
    %v155 = vsel %vm150, %v152, %v154
    %v156 = vrot.slane %v132, 1
    %v157 = vrot.slane %v133, 1
    %v158 = vsel %vm150, %v156, %v157
    %v159 = vrot.slane %v134, 1
    %v160 = vsel %vm150, %v157, %v159
    %vm161 = vcmask 1045504
    %v162 = vrot.slane %v120, 2
    %v163 = vrot.slane %v121, 2
    %v164 = vsel %vm161, %v162, %v163
    %v165 = vrot.slane %v122, 2
    %v166 = vsel %vm161, %v163, %v165
    %v167 = vrot.slane %v132, 2
    %v168 = vrot.slane %v133, 2
    %v169 = vsel %vm161, %v167, %v168
    %v170 = vrot.slane %v134, 2
    %v171 = vsel %vm161, %v168, %v170
    %v178 = vrot.slane %v123, 1
    %v179 = vrot.slane %v124, 1
    %v180 = vsel %vm150, %v178, %v179
    %v181 = vrot.slane %v125, 1
    %v182 = vsel %vm150, %v179, %v181
    %v183 = vrot.slane %v135, 1
    %v184 = vrot.slane %v136, 1
    %v185 = vsel %vm150, %v183, %v184
    %v186 = vrot.slane %v137, 1
    %v187 = vsel %vm150, %v184, %v186
    %v188 = vrot.slane %v123, 2
    %v189 = vrot.slane %v124, 2
    %v190 = vsel %vm161, %v188, %v189
    %v191 = vrot.slane %v125, 2
    %v192 = vsel %vm161, %v189, %v191
    %v193 = vrot.slane %v135, 2
    %v194 = vrot.slane %v136, 2
    %v195 = vsel %vm161, %v193, %v194
    %v196 = vrot.slane %v137, 2
    %v197 = vsel %vm161, %v194, %v196
    %v204 = vrot.slane %v126, 1
    %v205 = vrot.slane %v127, 1
    %v206 = vsel %vm150, %v204, %v205
    %v207 = vrot.slane %v128, 1
    %v208 = vsel %vm150, %v205, %v207
    %v209 = vrot.slane %v138, 1
    %v210 = vrot.slane %v139, 1
    %v211 = vsel %vm150, %v209, %v210
    %v212 = vrot.slane %v140, 1
    %v213 = vsel %vm150, %v210, %v212
    %v214 = vrot.slane %v126, 2
    %v215 = vrot.slane %v127, 2
    %v216 = vsel %vm161, %v214, %v215
    %v217 = vrot.slane %v128, 2
    %v218 = vsel %vm161, %v215, %v217
    %v219 = vrot.slane %v138, 2
    %v220 = vrot.slane %v139, 2
    %v221 = vsel %vm161, %v219, %v220
    %v222 = vrot.slane %v140, 2
    %v223 = vsel %vm161, %v220, %v222
    %v234 = vrot.slane %v129, 1
    %v235 = vrot.slane %v130, 1
    %v236 = vsel %vm150, %v234, %v235
    %v237 = vrot.slane %v131, 1
    %v238 = vsel %vm150, %v235, %v237
    %v239 = vrot.slane %v141, 1
    %v240 = vrot.slane %v142, 1
    %v241 = vsel %vm150, %v239, %v240
    %v242 = vrot.slane %v143, 1
    %v243 = vsel %vm150, %v240, %v242
    %v244 = vrot.slane %v129, 2
    %v245 = vrot.slane %v130, 2
    %v246 = vsel %vm161, %v244, %v245
    %v247 = vrot.slane %v131, 2
    %v248 = vsel %vm161, %v245, %v247
    %v249 = vrot.slane %v141, 2
    %v250 = vrot.slane %v142, 2
    %v251 = vsel %vm161, %v249, %v250
    %v252 = vrot.slane %v143, 2
    %v253 = vsel %vm161, %v250, %v252
    %254 = vrot.lane.b32.xlu0 %v153, 16
    %v255 = vpop.permute.xlu0 %254
    %256 = vrot.lane.b32.xlu0 %v155, 16
    %v257 = vpop.permute.xlu0 %256
    %258 = vrot.lane.b32.xlu0 %v158, 16
    %v259 = vpop.permute.xlu0 %258
    %260 = vrot.lane.b32.xlu0 %v160, 16
    %v261 = vpop.permute.xlu0 %260
    %266 = vrot.lane.b32.xlu0 %v164, 32
    %v267 = vpop.permute.xlu0 %266
    %268 = vrot.lane.b32.xlu0 %v166, 32
    %v269 = vpop.permute.xlu0 %268
    %270 = vrot.lane.b32.xlu0 %v169, 32
    %v271 = vpop.permute.xlu0 %270
    %272 = vrot.lane.b32.xlu0 %v171, 32
    %v273 = vpop.permute.xlu0 %272
    %278 = vrot.lane.b32.xlu0 %v123, 48
    %v279 = vpop.permute.xlu0 %278
    %280 = vrot.lane.b32.xlu0 %v124, 48
    %v281 = vpop.permute.xlu0 %280
    %282 = vrot.lane.b32.xlu0 %v135, 48
    %v283 = vpop.permute.xlu0 %282
    %284 = vrot.lane.b32.xlu0 %v136, 48
    %v285 = vpop.permute.xlu0 %284
    %290 = vrot.lane.b32.xlu0 %v180, 64
    %v291 = vpop.permute.xlu0 %290
    %292 = vrot.lane.b32.xlu0 %v182, 64
    %v293 = vpop.permute.xlu0 %292
    %294 = vrot.lane.b32.xlu0 %v185, 64
    %v295 = vpop.permute.xlu0 %294
    %296 = vrot.lane.b32.xlu0 %v187, 64
    %v297 = vpop.permute.xlu0 %296
    %302 = vrot.lane.b32.xlu0 %v190, 80
    %v303 = vpop.permute.xlu0 %302
    %304 = vrot.lane.b32.xlu0 %v192, 80
    %v305 = vpop.permute.xlu0 %304
    %306 = vrot.lane.b32.xlu0 %v195, 80
    %v307 = vpop.permute.xlu0 %306
    %308 = vrot.lane.b32.xlu0 %v197, 80
    %v309 = vpop.permute.xlu0 %308
    %314 = vrot.lane.b32.xlu0 %v126, 96
    %v315 = vpop.permute.xlu0 %314
    %316 = vrot.lane.b32.xlu0 %v127, 96
    %v317 = vpop.permute.xlu0 %316
    %318 = vrot.lane.b32.xlu0 %v138, 96
    %v319 = vpop.permute.xlu0 %318
    %320 = vrot.lane.b32.xlu0 %v139, 96
    %v321 = vpop.permute.xlu0 %320
    %326 = vrot.lane.b32.xlu0 %v206, 112
    %v327 = vpop.permute.xlu0 %326
    %328 = vrot.lane.b32.xlu0 %v208, 112
    %v329 = vpop.permute.xlu0 %328
    %330 = vrot.lane.b32.xlu0 %v211, 112
    %v331 = vpop.permute.xlu0 %330
    %332 = vrot.lane.b32.xlu0 %v213, 112
    %v333 = vpop.permute.xlu0 %332
    %338 = vrot.lane.b32.xlu0 %v129, 16
    %v339 = vpop.permute.xlu0 %338
    %340 = vrot.lane.b32.xlu0 %v130, 16
    %v341 = vpop.permute.xlu0 %340
    %342 = vrot.lane.b32.xlu0 %v141, 16
    %v343 = vpop.permute.xlu0 %342
    %344 = vrot.lane.b32.xlu0 %v142, 16
    %v345 = vpop.permute.xlu0 %344
    %350 = vrot.lane.b32.xlu0 %v236, 32
    %v351 = vpop.permute.xlu0 %350
    %352 = vrot.lane.b32.xlu0 %v238, 32
    %v353 = vpop.permute.xlu0 %352
    %354 = vrot.lane.b32.xlu0 %v241, 32
    %v355 = vpop.permute.xlu0 %354
    %356 = vrot.lane.b32.xlu0 %v243, 32
    %v357 = vpop.permute.xlu0 %356
    %362 = vrot.lane.b32.xlu0 %v246, 48
    %v363 = vpop.permute.xlu0 %362
    %364 = vrot.lane.b32.xlu0 %v248, 48
    %v365 = vpop.permute.xlu0 %364
    %366 = vrot.lane.b32.xlu0 %v251, 48
    %v367 = vpop.permute.xlu0 %366
    %368 = vrot.lane.b32.xlu0 %v253, 48
    %v369 = vpop.permute.xlu0 %368
    %v374 = vsel %vm62, %v120, %v255
    %v375 = vsel %vm62, %v121, %v257
    %v376 = vsel %vm62, %v132, %v259
    %v377 = vsel %vm62, %v133, %v261
    %vm378 = vcmask 261120
    %v379 = vsel %vm378, %v374, %v267
    %v380 = vsel %vm378, %v375, %v269
    %v381 = vsel %vm378, %v376, %v271
    %v382 = vsel %vm378, %v377, %v273
    %vm383 = vcmask 392192
    %v384 = vsel %vm383, %v379, %v279
    %v385 = vsel %vm383, %v380, %v281
    %v386 = vsel %vm383, %v381, %v283
    %v387 = vsel %vm383, %v382, %v285
    %vm388 = vcmask 523264
    %v389 = vsel %vm388, %v384, %v291
    %v390 = vsel %vm388, %v385, %v293
    %v391 = vsel %vm388, %v386, %v295
    %v392 = vsel %vm388, %v387, %v297
    %vm393 = vcmask 654336
    %v394 = vsel %vm393, %v389, %v303
    %v395 = vsel %vm393, %v390, %v305
    %v396 = vsel %vm393, %v391, %v307
    %v397 = vsel %vm393, %v392, %v309
    %vm398 = vcmask 785408
    %v399 = vsel %vm398, %v394, %v315
    %v400 = vsel %vm398, %v395, %v317
    %v401 = vsel %vm398, %v396, %v319
    %v402 = vsel %vm398, %v397, %v321
    %vm403 = vcmask 916480
    %v404 = vsel %vm403, %v399, %v327
    %v405 = vsel %vm403, %v400, %v329
    %v406 = vsel %vm403, %v401, %v331
    %v407 = vsel %vm403, %v402, %v333
    %v408 = vsel %vm62, %v216, %v339
    %v409 = vsel %vm62, %v218, %v341
    %v410 = vsel %vm62, %v221, %v343
    %v411 = vsel %vm62, %v223, %v345
    %v412 = vsel %vm378, %v408, %v351
    %v413 = vsel %vm378, %v409, %v353
    %v414 = vsel %vm378, %v410, %v355
    %v415 = vsel %vm378, %v411, %v357
    %v416 = vsel %vm383, %v412, %v363
    %v417 = vsel %vm383, %v413, %v365
    %v418 = vsel %vm383, %v414, %v367
    %v419 = vsel %vm383, %v415, %v369
    %v420 = vld [vmem:[#allocation6] sm:$0xff]
    %v421 = vld [vmem:[#allocation6 + $0x8] sm:$0xff]
    %v422 = vld [vmem:[#allocation6 + $0x10] sm:$0xff]
    %v423 = vld [vmem:[#allocation6 + $0x18] sm:$0xff]
    %v424 = vld [vmem:[#allocation6 + $0x20] sm:$0xff]
    %v425 = vld [vmem:[#allocation6 + $0x28] sm:$0xff]
    %v426 = vld [vmem:[#allocation6 + $0x30] sm:$0xff]
    %v427 = vld [vmem:[#allocation6 + $0x38] sm:$0xff]
    %v428 = vld [vmem:[#allocation6 + $0x40] sm:$0xff]
    %v429 = vld [vmem:[#allocation6 + $0x48] sm:$0xff]
    %v430 = vld [vmem:[#allocation6 + $0x50] sm:$0xff]
    %v431 = vld [vmem:[#allocation6 + $0x58] sm:$0xff]
    %v432 = vld [vmem:[#allocation6 + $0x60] sm:$0xff]
    %v433 = vld [vmem:[#allocation6 + $0x68] sm:$0xff]
    %v434 = vld [vmem:[#allocation6 + $0x70] sm:$0xff]
    %v435 = vld [vmem:[#allocation6 + $0x78] sm:$0xff]
    %v436 = vld [vmem:[#allocation6 + $0x80] sm:$0xff]
    %v437 = vld [vmem:[#allocation6 + $0x88] sm:$0xff]
    %v438 = vld [vmem:[#allocation6 + $0x90] sm:$0xff]
    %v439 = vld [vmem:[#allocation6 + $0x98] sm:$0xff]
    %v440 = vld [vmem:[#allocation6 + $0xa0] sm:$0xff]
    %v441 = vld [vmem:[#allocation6 + $0xa8] sm:$0xff]
    %v442 = vld [vmem:[#allocation6 + $0xb0] sm:$0xff]
    %v443 = vld [vmem:[#allocation6 + $0xb8] sm:$0xff]
    %v444 = vld [vmem:[%s2] sm:$0x1]
    %v446 = vlaneseq
    %v447 = vshrl.u32 %v446, 7
    %v448 = vsub.s32 0, %v447
    %v449 = vrot.slane %v444, %v448
    %v452 = vsel %vm388, %v416, 0
    %v455 = vsel %vm388, %v417, 0
    %v458 = vsel %vm388, %v418, 0
    %v461 = vsel %vm388, %v419, 0
    %463 = vmatprep.subr.mxu0 0.0
    %v464 = vand.u32 %v420, 4294901760
    %465 = vmatpush1.msra.mxu0 %v464
    %466 = vmatprep.subr.mxu0 0.0
    %v467 = vand.u32 %v421, 4294901760
    %468 = vmatpush1.msra.mxu0 %v467
    %469 = vmatprep.subr.mxu0 0.0
    %v470 = vand.u32 %v422, 4294901760
    %471 = vmatpush1.msra.mxu0 %v470
    %472 = vmatprep.subr.mxu0 0.0
    %v473 = vand.u32 %v423, 4294901760
    %474 = vmatpush1.msra.mxu0 %v473
    %475 = vmatprep.subr.mxu0 0.0
    %v476 = vand.u32 %v424, 4294901760
    %477 = vmatpush1.msra.mxu0 %v476
    %478 = vmatprep.subr.mxu0 0.0
    %v479 = vand.u32 %v425, 4294901760
    %480 = vmatpush1.msra.mxu0 %v479
    %481 = vmatprep.subr.mxu0 0.0
    %v482 = vand.u32 %v426, 4294901760
    %483 = vmatpush1.msra.mxu0 %v482
    %484 = vmatprep.subr.mxu0 0.0
    %v485 = vand.u32 %v427, 4294901760
    %486 = vmatpush1.msra.mxu0 %v485
    %487 = vmatprep.subr.mxu0 0.0
    %v488 = vand.u32 %v428, 4294901760
    %489 = vmatpush1.msra.mxu0 %v488
    %490 = vmatprep.subr.mxu0 0.0
    %v491 = vand.u32 %v429, 4294901760
    %492 = vmatpush1.msra.mxu0 %v491
    %493 = vmatprep.subr.mxu0 0.0
    %v494 = vand.u32 %v430, 4294901760
    %495 = vmatpush1.msra.mxu0 %v494
    %496 = vmatprep.subr.mxu0 0.0
    %v497 = vand.u32 %v431, 4294901760
    %498 = vmatpush1.msra.mxu0 %v497
    %499 = vmatprep.subr.mxu0 0.0
    %v500 = vand.u32 %v432, 4294901760
    %501 = vmatpush1.msra.mxu0 %v500
    %502 = vmatprep.subr.mxu0 0.0
    %v503 = vand.u32 %v433, 4294901760
    %504 = vmatpush1.msra.mxu0 %v503
    %505 = vmatprep.subr.mxu0 0.0
    %v506 = vand.u32 %v434, 4294901760
    %507 = vmatpush1.msra.mxu0 %v506
    %508 = vmatprep.subr.mxu0 0.0
    %v509 = vand.u32 %v435, 4294901760
    %510 = vmatpush1.msra.mxu0 %v509
    %511 = vmatprep.subr.mxu0 0.0
    %v512 = vand.u32 %v436, 4294901760
    %513 = vmatpush1.msra.mxu0 %v512
    %514 = vmatprep.subr.mxu0 0.0
    %v515 = vand.u32 %v437, 4294901760
    %516 = vmatpush1.msra.mxu0 %v515
    %517 = vmatprep.subr.mxu0 0.0
    %v518 = vand.u32 %v438, 4294901760
    %519 = vmatpush1.msra.mxu0 %v518
    %520 = vmatprep.subr.mxu0 0.0
    %v521 = vand.u32 %v439, 4294901760
    %522 = vmatpush1.msra.mxu0 %v521
    %523 = vmatprep.subr.mxu0 0.0
    %v524 = vand.u32 %v440, 4294901760
    %525 = vmatpush1.msra.mxu0 %v524
    %526 = vmatprep.subr.mxu0 0.0
    %v527 = vand.u32 %v441, 4294901760
    %528 = vmatpush1.msra.mxu0 %v527
    %529 = vmatprep.subr.mxu0 0.0
    %v530 = vand.u32 %v442, 4294901760
    %531 = vmatpush1.msra.mxu0 %v530
    %532 = vmatprep.subr.mxu0 0.0
    %v533 = vand.u32 %v443, 4294901760
    %534 = vmatpush1.msra.mxu0 %v533
    %535 = vmatprep.subr.mxu0 0.0
    %536 = vmatpush1.msra.mxu0 0.0
    %537 = vmatprep.subr.mxu0 0.0
    %538 = vmatpush1.msra.mxu0 0.0
    %539 = vmatprep.subr.mxu0 0.0
    %540 = vmatpush1.msra.mxu0 0.0
    %541 = vmatprep.subr.mxu0 0.0
    %542 = vmatpush1.msra.mxu0 0.0
    %543 = vmatprep.subr.mxu0 0.0
    %544 = vmatpush1.msra.mxu0 0.0
    %545 = vmatprep.subr.mxu0 0.0
    %546 = vmatpush1.msra.mxu0 0.0
    %547 = vmatprep.subr.mxu0 0.0
    %548 = vmatpush1.msra.mxu0 0.0
    %549 = vmatprep.subr.mxu0 0.0
    %550 = vmatpush1.msra.mxu0 0.0
    %v551 = vand.u32 %v452, 4294901760
    %v552 = vsub.f32 %v452, %v551
    %v553 = vand.u32 %v552, 4294901760
    %v554 = vsub.f32 %v552, %v553
    %v555 = vand.u32 %v554, 4294901760
    %556 = vmatprep.mubr.f32.mxu0 %v555
    %v557 = vand.u32 %v404, 4294901760
    %v558 = vsub.f32 %v404, %v557
    %v559 = vand.u32 %v558, 4294901760
    %v560 = vsub.f32 %v558, %v559
    %v561 = vand.u32 %v560, 4294901760
    %562 = vmatmul.mubr.f32.gmra.mrb[0].mxu0 %v561
    %v563 = vpop.f32.mrb[0].mxu0
    %v564 = vadd.f32 %v449, %v563
    %v565 = vpop.f32.mrb[0].mxu0
    %v566 = vand.u32 %v455, 4294901760
    %v567 = vsub.f32 %v455, %v566
    %v568 = vand.u32 %v567, 4294901760
    %v569 = vsub.f32 %v567, %v568
    %v570 = vand.u32 %v569, 4294901760
    %571 = vmatprep.mubr.f32.mxu0 %v570
    %v572 = vand.u32 %v405, 4294901760
    %v573 = vsub.f32 %v405, %v572
    %v574 = vand.u32 %v573, 4294901760
    %v575 = vsub.f32 %v573, %v574
    %v576 = vand.u32 %v575, 4294901760
    %577 = vmatmul.mubr.f32.gmra.mrb[0].mxu0 %v576
    %v578 = vpop.f32.mrb[0].mxu0
    %v579 = vadd.f32 %v449, %v578
    %v580 = vpop.f32.mrb[0].mxu0
    %v581 = vand.u32 %v458, 4294901760
    %v582 = vsub.f32 %v458, %v581
    %v583 = vand.u32 %v582, 4294901760
    %v584 = vsub.f32 %v582, %v583
    %v585 = vand.u32 %v584, 4294901760
    %586 = vmatprep.mubr.f32.mxu0 %v585
    %v587 = vand.u32 %v406, 4294901760
    %v588 = vsub.f32 %v406, %v587
    %v589 = vand.u32 %v588, 4294901760
    %v590 = vsub.f32 %v588, %v589
    %v591 = vand.u32 %v590, 4294901760
    %592 = vmatmul.mubr.f32.gmra.mrb[0].mxu0 %v591
    %v593 = vpop.f32.mrb[0].mxu0
    %v594 = vadd.f32 %v449, %v593
    %v595 = vpop.f32.mrb[0].mxu0
    %v596 = vand.u32 %v461, 4294901760
    %v597 = vsub.f32 %v461, %v596
    %v598 = vand.u32 %v597, 4294901760
    %v599 = vsub.f32 %v597, %v598
    %v600 = vand.u32 %v599, 4294901760
    %601 = vmatprep.mubr.f32.mxu0 %v600
    %v602 = vand.u32 %v407, 4294901760
    %v603 = vsub.f32 %v407, %v602
    %v604 = vand.u32 %v603, 4294901760
    %v605 = vsub.f32 %v603, %v604
    %v606 = vand.u32 %v605, 4294901760
    %607 = vmatmul.mubr.f32.gmra.mrb[0].mxu0 %v606
    %v608 = vpop.f32.mrb[0].mxu0
    %v609 = vadd.f32 %v449, %v608
    %v610 = vpop.f32.mrb[0].mxu0
    %611 = vdwg.mxu0
    %612 = vmatprep.subr.mxu0 0.0
    %v613 = vand.u32 %v420, 4294901760
    %v614 = vsub.f32 %v420, %v613
    %v615 = vand.u32 %v614, 4294901760
    %v616 = vsub.f32 %v614, %v615
    %v617 = vand.u32 %v616, 4294901760
    %618 = vmatpush1.msra.mxu0 %v617
    %619 = vmatprep.subr.mxu0 0.0
    %v620 = vand.u32 %v421, 4294901760
    %v621 = vsub.f32 %v421, %v620
    %v622 = vand.u32 %v621, 4294901760
    %v623 = vsub.f32 %v621, %v622
    %v624 = vand.u32 %v623, 4294901760
    %625 = vmatpush1.msra.mxu0 %v624
    %626 = vmatprep.subr.mxu0 0.0
    %v627 = vand.u32 %v422, 4294901760
    %v628 = vsub.f32 %v422, %v627
    %v629 = vand.u32 %v628, 4294901760
    %v630 = vsub.f32 %v628, %v629
    %v631 = vand.u32 %v630, 4294901760
    %632 = vmatpush1.msra.mxu0 %v631
    %633 = vmatprep.subr.mxu0 0.0
    %v634 = vand.u32 %v423, 4294901760
    %v635 = vsub.f32 %v423, %v634
    %v636 = vand.u32 %v635, 4294901760
    %v637 = vsub.f32 %v635, %v636
    %v638 = vand.u32 %v637, 4294901760
    %639 = vmatpush1.msra.mxu0 %v638
    %640 = vmatprep.subr.mxu0 0.0
    %v641 = vand.u32 %v424, 4294901760
    %v642 = vsub.f32 %v424, %v641
    %v643 = vand.u32 %v642, 4294901760
    %v644 = vsub.f32 %v642, %v643
    %v645 = vand.u32 %v644, 4294901760
    %646 = vmatpush1.msra.mxu0 %v645
    %647 = vmatprep.subr.mxu0 0.0
    %v648 = vand.u32 %v425, 4294901760
    %v649 = vsub.f32 %v425, %v648
    %v650 = vand.u32 %v649, 4294901760
    %v651 = vsub.f32 %v649, %v650
    %v652 = vand.u32 %v651, 4294901760
    %653 = vmatpush1.msra.mxu0 %v652
    %654 = vmatprep.subr.mxu0 0.0
    %v655 = vand.u32 %v426, 4294901760
    %v656 = vsub.f32 %v426, %v655
    %v657 = vand.u32 %v656, 4294901760
    %v658 = vsub.f32 %v656, %v657
    %v659 = vand.u32 %v658, 4294901760
    %660 = vmatpush1.msra.mxu0 %v659
    %661 = vmatprep.subr.mxu0 0.0
    %v662 = vand.u32 %v427, 4294901760
    %v663 = vsub.f32 %v427, %v662
    %v664 = vand.u32 %v663, 4294901760
    %v665 = vsub.f32 %v663, %v664
    %v666 = vand.u32 %v665, 4294901760
    %667 = vmatpush1.msra.mxu0 %v666
    %668 = vmatprep.subr.mxu0 0.0
    %v669 = vand.u32 %v428, 4294901760
    %v670 = vsub.f32 %v428, %v669
    %v671 = vand.u32 %v670, 4294901760
    %v672 = vsub.f32 %v670, %v671
    %v673 = vand.u32 %v672, 4294901760
    %674 = vmatpush1.msra.mxu0 %v673
    %675 = vmatprep.subr.mxu0 0.0
    %v676 = vand.u32 %v429, 4294901760
    %v677 = vsub.f32 %v429, %v676
    %v678 = vand.u32 %v677, 4294901760
    %v679 = vsub.f32 %v677, %v678
    %v680 = vand.u32 %v679, 4294901760
    %681 = vmatpush1.msra.mxu0 %v680
    %682 = vmatprep.subr.mxu0 0.0
    %v683 = vand.u32 %v430, 4294901760
    %v684 = vsub.f32 %v430, %v683
    %v685 = vand.u32 %v684, 4294901760
    %v686 = vsub.f32 %v684, %v685
    %v687 = vand.u32 %v686, 4294901760
    %688 = vmatpush1.msra.mxu0 %v687
    %689 = vmatprep.subr.mxu0 0.0
    %v690 = vand.u32 %v431, 4294901760
    %v691 = vsub.f32 %v431, %v690
    %v692 = vand.u32 %v691, 4294901760
    %v693 = vsub.f32 %v691, %v692
    %v694 = vand.u32 %v693, 4294901760
    %695 = vmatpush1.msra.mxu0 %v694
    %696 = vmatprep.subr.mxu0 0.0
    %v697 = vand.u32 %v432, 4294901760
    %v698 = vsub.f32 %v432, %v697
    %v699 = vand.u32 %v698, 4294901760
    %v700 = vsub.f32 %v698, %v699
    %v701 = vand.u32 %v700, 4294901760
    %702 = vmatpush1.msra.mxu0 %v701
    %703 = vmatprep.subr.mxu0 0.0
    %v704 = vand.u32 %v433, 4294901760
    %v705 = vsub.f32 %v433, %v704
    %v706 = vand.u32 %v705, 4294901760
    %v707 = vsub.f32 %v705, %v706
    %v708 = vand.u32 %v707, 4294901760
    %709 = vmatpush1.msra.mxu0 %v708
    %710 = vmatprep.subr.mxu0 0.0
    %v711 = vand.u32 %v434, 4294901760
    %v712 = vsub.f32 %v434, %v711
    %v713 = vand.u32 %v712, 4294901760
    %v714 = vsub.f32 %v712, %v713
    %v715 = vand.u32 %v714, 4294901760
    %716 = vmatpush1.msra.mxu0 %v715
    %717 = vmatprep.subr.mxu0 0.0
    %v718 = vand.u32 %v435, 4294901760
    %v719 = vsub.f32 %v435, %v718
    %v720 = vand.u32 %v719, 4294901760
    %v721 = vsub.f32 %v719, %v720
    %v722 = vand.u32 %v721, 4294901760
    %723 = vmatpush1.msra.mxu0 %v722
    %724 = vmatprep.subr.mxu0 0.0
    %v725 = vand.u32 %v436, 4294901760
    %v726 = vsub.f32 %v436, %v725
    %v727 = vand.u32 %v726, 4294901760
    %v728 = vsub.f32 %v726, %v727
    %v729 = vand.u32 %v728, 4294901760
    %730 = vmatpush1.msra.mxu0 %v729
    %731 = vmatprep.subr.mxu0 0.0
    %v732 = vand.u32 %v437, 4294901760
    %v733 = vsub.f32 %v437, %v732
    %v734 = vand.u32 %v733, 4294901760
    %v735 = vsub.f32 %v733, %v734
    %v736 = vand.u32 %v735, 4294901760
    %737 = vmatpush1.msra.mxu0 %v736
    %738 = vmatprep.subr.mxu0 0.0
    %v739 = vand.u32 %v438, 4294901760
    %v740 = vsub.f32 %v438, %v739
    %v741 = vand.u32 %v740, 4294901760
    %v742 = vsub.f32 %v740, %v741
    %v743 = vand.u32 %v742, 4294901760
    %744 = vmatpush1.msra.mxu0 %v743
    %745 = vmatprep.subr.mxu0 0.0
    %v746 = vand.u32 %v439, 4294901760
    %v747 = vsub.f32 %v439, %v746
    %v748 = vand.u32 %v747, 4294901760
    %v749 = vsub.f32 %v747, %v748
    %v750 = vand.u32 %v749, 4294901760
    %751 = vmatpush1.msra.mxu0 %v750
    %752 = vmatprep.subr.mxu0 0.0
    %v753 = vand.u32 %v440, 4294901760
    %v754 = vsub.f32 %v440, %v753
    %v755 = vand.u32 %v754, 4294901760
    %v756 = vsub.f32 %v754, %v755
    %v757 = vand.u32 %v756, 4294901760
    %758 = vmatpush1.msra.mxu0 %v757
    %759 = vmatprep.subr.mxu0 0.0
    %v760 = vand.u32 %v441, 4294901760
    %v761 = vsub.f32 %v441, %v760
    %v762 = vand.u32 %v761, 4294901760
    %v763 = vsub.f32 %v761, %v762
    %v764 = vand.u32 %v763, 4294901760
    %765 = vmatpush1.msra.mxu0 %v764
    %766 = vmatprep.subr.mxu0 0.0
    %v767 = vand.u32 %v442, 4294901760
    %v768 = vsub.f32 %v442, %v767
    %v769 = vand.u32 %v768, 4294901760
    %v770 = vsub.f32 %v768, %v769
    %v771 = vand.u32 %v770, 4294901760
    %772 = vmatpush1.msra.mxu0 %v771
    %773 = vmatprep.subr.mxu0 0.0
    %v774 = vand.u32 %v443, 4294901760
    %v775 = vsub.f32 %v443, %v774
    %v776 = vand.u32 %v775, 4294901760
    %v777 = vsub.f32 %v775, %v776
    %v778 = vand.u32 %v777, 4294901760
    %779 = vmatpush1.msra.mxu0 %v778
    %780 = vmatprep.subr.mxu0 0.0
    %781 = vmatpush1.msra.mxu0 0.0
    %782 = vmatprep.subr.mxu0 0.0
    %783 = vmatpush1.msra.mxu0 0.0
    %784 = vmatprep.subr.mxu0 0.0
    %785 = vmatpush1.msra.mxu0 0.0
    %786 = vmatprep.subr.mxu0 0.0
    %787 = vmatpush1.msra.mxu0 0.0
    %788 = vmatprep.subr.mxu0 0.0
    %789 = vmatpush1.msra.mxu0 0.0
    %790 = vmatprep.subr.mxu0 0.0
    %791 = vmatpush1.msra.mxu0 0.0
    %792 = vmatprep.subr.mxu0 0.0
    %793 = vmatpush1.msra.mxu0 0.0
    %794 = vmatprep.subr.mxu0 0.0
    %795 = vmatpush1.msra.mxu0 0.0
    %v796 = vand.u32 %v452, 4294901760
    %797 = vmatprep.mubr.f32.mxu0 %v796
    %v798 = vand.u32 %v404, 4294901760
    %799 = vmatmul.mubr.f32.gmra.mrb[0].mxu0 %v798
    %v800 = vpop.f32.mrb[0].mxu0
    %v801 = vadd.f32 %v564, %v800
    %v802 = vpop.f32.mrb[0].mxu0
    %v803 = vand.u32 %v455, 4294901760
    %804 = vmatprep.mubr.f32.mxu0 %v803
    %v805 = vand.u32 %v405, 4294901760
    %806 = vmatmul.mubr.f32.gmra.mrb[0].mxu0 %v805
    %v807 = vpop.f32.mrb[0].mxu0
    %v808 = vadd.f32 %v579, %v807
    %v809 = vpop.f32.mrb[0].mxu0
    %v810 = vand.u32 %v458, 4294901760
    %811 = vmatprep.mubr.f32.mxu0 %v810
    %v812 = vand.u32 %v406, 4294901760
    %813 = vmatmul.mubr.f32.gmra.mrb[0].mxu0 %v812
    %v814 = vpop.f32.mrb[0].mxu0
    %v815 = vadd.f32 %v594, %v814
    %v816 = vpop.f32.mrb[0].mxu0
    %v817 = vand.u32 %v461, 4294901760
    %818 = vmatprep.mubr.f32.mxu0 %v817
    %v819 = vand.u32 %v407, 4294901760
    %820 = vmatmul.mubr.f32.gmra.mrb[0].mxu0 %v819
    %v821 = vpop.f32.mrb[0].mxu0
    %v822 = vadd.f32 %v609, %v821
    %v823 = vpop.f32.mrb[0].mxu0
    %824 = vdwg.mxu0
    %825 = vmatprep.subr.mxu0 0.0
    %v826 = vand.u32 %v420, 4294901760
    %v827 = vsub.f32 %v420, %v826
    %828 = vmatpush1.msra.mxu0 %v827
    %829 = vmatprep.subr.mxu0 0.0
    %v830 = vand.u32 %v421, 4294901760
    %v831 = vsub.f32 %v421, %v830
    %832 = vmatpush1.msra.mxu0 %v831
    %833 = vmatprep.subr.mxu0 0.0
    %v834 = vand.u32 %v422, 4294901760
    %v835 = vsub.f32 %v422, %v834
    %836 = vmatpush1.msra.mxu0 %v835
    %837 = vmatprep.subr.mxu0 0.0
    %v838 = vand.u32 %v423, 4294901760
    %v839 = vsub.f32 %v423, %v838
    %840 = vmatpush1.msra.mxu0 %v839
    %841 = vmatprep.subr.mxu0 0.0
    %v842 = vand.u32 %v424, 4294901760
    %v843 = vsub.f32 %v424, %v842
    %844 = vmatpush1.msra.mxu0 %v843
    %845 = vmatprep.subr.mxu0 0.0
    %v846 = vand.u32 %v425, 4294901760
    %v847 = vsub.f32 %v425, %v846
    %848 = vmatpush1.msra.mxu0 %v847
    %849 = vmatprep.subr.mxu0 0.0
    %v850 = vand.u32 %v426, 4294901760
    %v851 = vsub.f32 %v426, %v850
    %852 = vmatpush1.msra.mxu0 %v851
    %853 = vmatprep.subr.mxu0 0.0
    %v854 = vand.u32 %v427, 4294901760
    %v855 = vsub.f32 %v427, %v854
    %856 = vmatpush1.msra.mxu0 %v855
    %857 = vmatprep.subr.mxu0 0.0
    %v858 = vand.u32 %v428, 4294901760
    %v859 = vsub.f32 %v428, %v858
    %860 = vmatpush1.msra.mxu0 %v859
    %861 = vmatprep.subr.mxu0 0.0
    %v862 = vand.u32 %v429, 4294901760
    %v863 = vsub.f32 %v429, %v862
    %864 = vmatpush1.msra.mxu0 %v863
    %865 = vmatprep.subr.mxu0 0.0
    %v866 = vand.u32 %v430, 4294901760
    %v867 = vsub.f32 %v430, %v866
    %868 = vmatpush1.msra.mxu0 %v867
    %869 = vmatprep.subr.mxu0 0.0
    %v870 = vand.u32 %v431, 4294901760
    %v871 = vsub.f32 %v431, %v870
    %872 = vmatpush1.msra.mxu0 %v871
    %873 = vmatprep.subr.mxu0 0.0
    %v874 = vand.u32 %v432, 4294901760
    %v875 = vsub.f32 %v432, %v874
    %876 = vmatpush1.msra.mxu0 %v875
    %877 = vmatprep.subr.mxu0 0.0
    %v878 = vand.u32 %v433, 4294901760
    %v879 = vsub.f32 %v433, %v878
    %880 = vmatpush1.msra.mxu0 %v879
    %881 = vmatprep.subr.mxu0 0.0
    %v882 = vand.u32 %v434, 4294901760
    %v883 = vsub.f32 %v434, %v882
    %884 = vmatpush1.msra.mxu0 %v883
    %885 = vmatprep.subr.mxu0 0.0
    %v886 = vand.u32 %v435, 4294901760
    %v887 = vsub.f32 %v435, %v886
    %888 = vmatpush1.msra.mxu0 %v887
    %889 = vmatprep.subr.mxu0 0.0
    %v890 = vand.u32 %v436, 4294901760
    %v891 = vsub.f32 %v436, %v890
    %892 = vmatpush1.msra.mxu0 %v891
    %893 = vmatprep.subr.mxu0 0.0
    %v894 = vand.u32 %v437, 4294901760
    %v895 = vsub.f32 %v437, %v894
    %896 = vmatpush1.msra.mxu0 %v895
    %897 = vmatprep.subr.mxu0 0.0
    %v898 = vand.u32 %v438, 4294901760
    %v899 = vsub.f32 %v438, %v898
    %900 = vmatpush1.msra.mxu0 %v899
    %901 = vmatprep.subr.mxu0 0.0
    %v902 = vand.u32 %v439, 4294901760
    %v903 = vsub.f32 %v439, %v902
    %904 = vmatpush1.msra.mxu0 %v903
    %905 = vmatprep.subr.mxu0 0.0
    %v906 = vand.u32 %v440, 4294901760
    %v907 = vsub.f32 %v440, %v906
    %908 = vmatpush1.msra.mxu0 %v907
    %909 = vmatprep.subr.mxu0 0.0
    %v910 = vand.u32 %v441, 4294901760
    %v911 = vsub.f32 %v441, %v910
    %912 = vmatpush1.msra.mxu0 %v911
    %913 = vmatprep.subr.mxu0 0.0
    %v914 = vand.u32 %v442, 4294901760
    %v915 = vsub.f32 %v442, %v914
    %916 = vmatpush1.msra.mxu0 %v915
    %917 = vmatprep.subr.mxu0 0.0
    %v918 = vand.u32 %v443, 4294901760
    %v919 = vsub.f32 %v443, %v918
    %920 = vmatpush1.msra.mxu0 %v919
    %921 = vmatprep.subr.mxu0 0.0
    %922 = vmatpush1.msra.mxu0 0.0
    %923 = vmatprep.subr.mxu0 0.0
    %924 = vmatpush1.msra.mxu0 0.0
    %925 = vmatprep.subr.mxu0 0.0
    %926 = vmatpush1.msra.mxu0 0.0
    %927 = vmatprep.subr.mxu0 0.0
    %928 = vmatpush1.msra.mxu0 0.0
    %929 = vmatprep.subr.mxu0 0.0
    %930 = vmatpush1.msra.mxu0 0.0
    %931 = vmatprep.subr.mxu0 0.0
    %932 = vmatpush1.msra.mxu0 0.0
    %933 = vmatprep.subr.mxu0 0.0
    %934 = vmatpush1.msra.mxu0 0.0
    %935 = vmatprep.subr.mxu0 0.0
    %936 = vmatpush1.msra.mxu0 0.0
    %v937 = vand.u32 %v452, 4294901760
    %v938 = vsub.f32 %v452, %v937
    %939 = vmatprep.mubr.f32.mxu0 %v938
    %v940 = vand.u32 %v404, 4294901760
    %v941 = vsub.f32 %v404, %v940
    %942 = vmatmul.mubr.f32.gmra.mrb[0].mxu0 %v941
    %v943 = vpop.f32.mrb[0].mxu0
    %v944 = vadd.f32 %v801, %v943
    %v945 = vpop.f32.mrb[0].mxu0
    %v946 = vand.u32 %v455, 4294901760
    %v947 = vsub.f32 %v455, %v946
    %948 = vmatprep.mubr.f32.mxu0 %v947
    %v949 = vand.u32 %v405, 4294901760
    %v950 = vsub.f32 %v405, %v949
    %951 = vmatmul.mubr.f32.gmra.mrb[0].mxu0 %v950
    %v952 = vpop.f32.mrb[0].mxu0
    %v953 = vadd.f32 %v808, %v952
    %v954 = vpop.f32.mrb[0].mxu0
    %v955 = vand.u32 %v458, 4294901760
    %v956 = vsub.f32 %v458, %v955
    %957 = vmatprep.mubr.f32.mxu0 %v956
    %v958 = vand.u32 %v406, 4294901760
    %v959 = vsub.f32 %v406, %v958
    %960 = vmatmul.mubr.f32.gmra.mrb[0].mxu0 %v959
    %v961 = vpop.f32.mrb[0].mxu0
    %v962 = vadd.f32 %v815, %v961
    %v963 = vpop.f32.mrb[0].mxu0
    %v964 = vand.u32 %v461, 4294901760
    %v965 = vsub.f32 %v461, %v964
    %966 = vmatprep.mubr.f32.mxu0 %v965
    %v967 = vand.u32 %v407, 4294901760
    %v968 = vsub.f32 %v407, %v967
    %969 = vmatmul.mubr.f32.gmra.mrb[0].mxu0 %v968
    %v970 = vpop.f32.mrb[0].mxu0
    %v971 = vadd.f32 %v822, %v970
    %v972 = vpop.f32.mrb[0].mxu0
    %973 = vdwg.mxu0
    %974 = vmatprep.subr.mxu0 0.0
    %v975 = vand.u32 %v420, 4294901760
    %976 = vmatpush1.msra.mxu0 %v975
    %977 = vmatprep.subr.mxu0 0.0
    %v978 = vand.u32 %v421, 4294901760
    %979 = vmatpush1.msra.mxu0 %v978
    %980 = vmatprep.subr.mxu0 0.0
    %v981 = vand.u32 %v422, 4294901760
    %982 = vmatpush1.msra.mxu0 %v981
    %983 = vmatprep.subr.mxu0 0.0
    %v984 = vand.u32 %v423, 4294901760
    %985 = vmatpush1.msra.mxu0 %v984
    %986 = vmatprep.subr.mxu0 0.0
    %v987 = vand.u32 %v424, 4294901760
    %988 = vmatpush1.msra.mxu0 %v987
    %989 = vmatprep.subr.mxu0 0.0
    %v990 = vand.u32 %v425, 4294901760
    %991 = vmatpush1.msra.mxu0 %v990
    %992 = vmatprep.subr.mxu0 0.0
    %v993 = vand.u32 %v426, 4294901760
    %994 = vmatpush1.msra.mxu0 %v993
    %995 = vmatprep.subr.mxu0 0.0
    %v996 = vand.u32 %v427, 4294901760
    %997 = vmatpush1.msra.mxu0 %v996
    %998 = vmatprep.subr.mxu0 0.0
    %v999 = vand.u32 %v428, 4294901760
    %1000 = vmatpush1.msra.mxu0 %v999
    %1001 = vmatprep.subr.mxu0 0.0
    %v1002 = vand.u32 %v429, 4294901760
    %1003 = vmatpush1.msra.mxu0 %v1002
    %1004 = vmatprep.subr.mxu0 0.0
    %v1005 = vand.u32 %v430, 4294901760
    %1006 = vmatpush1.msra.mxu0 %v1005
    %1007 = vmatprep.subr.mxu0 0.0
    %v1008 = vand.u32 %v431, 4294901760
    %1009 = vmatpush1.msra.mxu0 %v1008
    %1010 = vmatprep.subr.mxu0 0.0
    %v1011 = vand.u32 %v432, 4294901760
    %1012 = vmatpush1.msra.mxu0 %v1011
    %1013 = vmatprep.subr.mxu0 0.0
    %v1014 = vand.u32 %v433, 4294901760
    %1015 = vmatpush1.msra.mxu0 %v1014
    %1016 = vmatprep.subr.mxu0 0.0
    %v1017 = vand.u32 %v434, 4294901760
    %1018 = vmatpush1.msra.mxu0 %v1017
    %1019 = vmatprep.subr.mxu0 0.0
    %v1020 = vand.u32 %v435, 4294901760
    %1021 = vmatpush1.msra.mxu0 %v1020
    %1022 = vmatprep.subr.mxu0 0.0
    %v1023 = vand.u32 %v436, 4294901760
    %1024 = vmatpush1.msra.mxu0 %v1023
    %1025 = vmatprep.subr.mxu0 0.0
    %v1026 = vand.u32 %v437, 4294901760
    %1027 = vmatpush1.msra.mxu0 %v1026
    %1028 = vmatprep.subr.mxu0 0.0
    %v1029 = vand.u32 %v438, 4294901760
    %1030 = vmatpush1.msra.mxu0 %v1029
    %1031 = vmatprep.subr.mxu0 0.0
    %v1032 = vand.u32 %v439, 4294901760
    %1033 = vmatpush1.msra.mxu0 %v1032
    %1034 = vmatprep.subr.mxu0 0.0
    %v1035 = vand.u32 %v440, 4294901760
    %1036 = vmatpush1.msra.mxu0 %v1035
    %1037 = vmatprep.subr.mxu0 0.0
    %v1038 = vand.u32 %v441, 4294901760
    %1039 = vmatpush1.msra.mxu0 %v1038
    %1040 = vmatprep.subr.mxu0 0.0
    %v1041 = vand.u32 %v442, 4294901760
    %1042 = vmatpush1.msra.mxu0 %v1041
    %1043 = vmatprep.subr.mxu0 0.0
    %v1044 = vand.u32 %v443, 4294901760
    %1045 = vmatpush1.msra.mxu0 %v1044
    %1046 = vmatprep.subr.mxu0 0.0
    %1047 = vmatpush1.msra.mxu0 0.0
    %1048 = vmatprep.subr.mxu0 0.0
    %1049 = vmatpush1.msra.mxu0 0.0
    %1050 = vmatprep.subr.mxu0 0.0
    %1051 = vmatpush1.msra.mxu0 0.0
    %1052 = vmatprep.subr.mxu0 0.0
    %1053 = vmatpush1.msra.mxu0 0.0
    %1054 = vmatprep.subr.mxu0 0.0
    %1055 = vmatpush1.msra.mxu0 0.0
    %1056 = vmatprep.subr.mxu0 0.0
    %1057 = vmatpush1.msra.mxu0 0.0
    %1058 = vmatprep.subr.mxu0 0.0
    %1059 = vmatpush1.msra.mxu0 0.0
    %1060 = vmatprep.subr.mxu0 0.0
    %1061 = vmatpush1.msra.mxu0 0.0
    %v1062 = vand.u32 %v452, 4294901760
    %v1063 = vsub.f32 %v452, %v1062
    %v1064 = vand.u32 %v1063, 4294901760
    %1065 = vmatprep.mubr.f32.mxu0 %v1064
    %v1066 = vand.u32 %v404, 4294901760
    %v1067 = vsub.f32 %v404, %v1066
    %v1068 = vand.u32 %v1067, 4294901760
    %1069 = vmatmul.mubr.f32.gmra.mrb[0].mxu0 %v1068
    %v1070 = vpop.f32.mrb[0].mxu0
    %v1071 = vadd.f32 %v944, %v1070
    %v1072 = vpop.f32.mrb[0].mxu0
    %v1073 = vand.u32 %v455, 4294901760
    %v1074 = vsub.f32 %v455, %v1073
    %v1075 = vand.u32 %v1074, 4294901760
    %1076 = vmatprep.mubr.f32.mxu0 %v1075
    %v1077 = vand.u32 %v405, 4294901760
    %v1078 = vsub.f32 %v405, %v1077
    %v1079 = vand.u32 %v1078, 4294901760
    %1080 = vmatmul.mubr.f32.gmra.mrb[0].mxu0 %v1079
    %v1081 = vpop.f32.mrb[0].mxu0
    %v1082 = vadd.f32 %v953, %v1081
    %v1083 = vpop.f32.mrb[0].mxu0
    %v1084 = vand.u32 %v458, 4294901760
    %v1085 = vsub.f32 %v458, %v1084
    %v1086 = vand.u32 %v1085, 4294901760
    %1087 = vmatprep.mubr.f32.mxu0 %v1086
    %v1088 = vand.u32 %v406, 4294901760
    %v1089 = vsub.f32 %v406, %v1088
    %v1090 = vand.u32 %v1089, 4294901760
    %1091 = vmatmul.mubr.f32.gmra.mrb[0].mxu0 %v1090
    %v1092 = vpop.f32.mrb[0].mxu0
    %v1093 = vadd.f32 %v962, %v1092
    %v1094 = vpop.f32.mrb[0].mxu0
    %v1095 = vand.u32 %v461, 4294901760
    %v1096 = vsub.f32 %v461, %v1095
    %v1097 = vand.u32 %v1096, 4294901760
    %1098 = vmatprep.mubr.f32.mxu0 %v1097
    %v1099 = vand.u32 %v407, 4294901760
    %v1100 = vsub.f32 %v407, %v1099
    %v1101 = vand.u32 %v1100, 4294901760
    %1102 = vmatmul.mubr.f32.gmra.mrb[0].mxu0 %v1101
    %v1103 = vpop.f32.mrb[0].mxu0
    %v1104 = vadd.f32 %v971, %v1103
    %v1105 = vpop.f32.mrb[0].mxu0
    %1106 = vdwg.mxu0
    %1107 = vmatprep.subr.mxu0 0.0
    %v1108 = vand.u32 %v420, 4294901760
    %v1109 = vsub.f32 %v420, %v1108
    %v1110 = vand.u32 %v1109, 4294901760
    %1111 = vmatpush1.msra.mxu0 %v1110
    %1112 = vmatprep.subr.mxu0 0.0
    %v1113 = vand.u32 %v421, 4294901760
    %v1114 = vsub.f32 %v421, %v1113
    %v1115 = vand.u32 %v1114, 4294901760
    %1116 = vmatpush1.msra.mxu0 %v1115
    %1117 = vmatprep.subr.mxu0 0.0
    %v1118 = vand.u32 %v422, 4294901760
    %v1119 = vsub.f32 %v422, %v1118
    %v1120 = vand.u32 %v1119, 4294901760
    %1121 = vmatpush1.msra.mxu0 %v1120
    %1122 = vmatprep.subr.mxu0 0.0
    %v1123 = vand.u32 %v423, 4294901760
    %v1124 = vsub.f32 %v423, %v1123
    %v1125 = vand.u32 %v1124, 4294901760
    %1126 = vmatpush1.msra.mxu0 %v1125
    %1127 = vmatprep.subr.mxu0 0.0
    %v1128 = vand.u32 %v424, 4294901760
    %v1129 = vsub.f32 %v424, %v1128
    %v1130 = vand.u32 %v1129, 4294901760
    %1131 = vmatpush1.msra.mxu0 %v1130
    %1132 = vmatprep.subr.mxu0 0.0
    %v1133 = vand.u32 %v425, 4294901760
    %v1134 = vsub.f32 %v425, %v1133
    %v1135 = vand.u32 %v1134, 4294901760
    %1136 = vmatpush1.msra.mxu0 %v1135
    %1137 = vmatprep.subr.mxu0 0.0
    %v1138 = vand.u32 %v426, 4294901760
    %v1139 = vsub.f32 %v426, %v1138
    %v1140 = vand.u32 %v1139, 4294901760
    %1141 = vmatpush1.msra.mxu0 %v1140
    %1142 = vmatprep.subr.mxu0 0.0
    %v1143 = vand.u32 %v427, 4294901760
    %v1144 = vsub.f32 %v427, %v1143
    %v1145 = vand.u32 %v1144, 4294901760
    %1146 = vmatpush1.msra.mxu0 %v1145
    %1147 = vmatprep.subr.mxu0 0.0
    %v1148 = vand.u32 %v428, 4294901760
    %v1149 = vsub.f32 %v428, %v1148
    %v1150 = vand.u32 %v1149, 4294901760
    %1151 = vmatpush1.msra.mxu0 %v1150
    %1152 = vmatprep.subr.mxu0 0.0
    %v1153 = vand.u32 %v429, 4294901760
    %v1154 = vsub.f32 %v429, %v1153
    %v1155 = vand.u32 %v1154, 4294901760
    %1156 = vmatpush1.msra.mxu0 %v1155
    %1157 = vmatprep.subr.mxu0 0.0
    %v1158 = vand.u32 %v430, 4294901760
    %v1159 = vsub.f32 %v430, %v1158
    %v1160 = vand.u32 %v1159, 4294901760
    %1161 = vmatpush1.msra.mxu0 %v1160
    %1162 = vmatprep.subr.mxu0 0.0
    %v1163 = vand.u32 %v431, 4294901760
    %v1164 = vsub.f32 %v431, %v1163
    %v1165 = vand.u32 %v1164, 4294901760
    %1166 = vmatpush1.msra.mxu0 %v1165
    %1167 = vmatprep.subr.mxu0 0.0
    %v1168 = vand.u32 %v432, 4294901760
    %v1169 = vsub.f32 %v432, %v1168
    %v1170 = vand.u32 %v1169, 4294901760
    %1171 = vmatpush1.msra.mxu0 %v1170
    %1172 = vmatprep.subr.mxu0 0.0
    %v1173 = vand.u32 %v433, 4294901760
    %v1174 = vsub.f32 %v433, %v1173
    %v1175 = vand.u32 %v1174, 4294901760
    %1176 = vmatpush1.msra.mxu0 %v1175
    %1177 = vmatprep.subr.mxu0 0.0
    %v1178 = vand.u32 %v434, 4294901760
    %v1179 = vsub.f32 %v434, %v1178
    %v1180 = vand.u32 %v1179, 4294901760
    %1181 = vmatpush1.msra.mxu0 %v1180
    %1182 = vmatprep.subr.mxu0 0.0
    %v1183 = vand.u32 %v435, 4294901760
    %v1184 = vsub.f32 %v435, %v1183
    %v1185 = vand.u32 %v1184, 4294901760
    %1186 = vmatpush1.msra.mxu0 %v1185
    %1187 = vmatprep.subr.mxu0 0.0
    %v1188 = vand.u32 %v436, 4294901760
    %v1189 = vsub.f32 %v436, %v1188
    %v1190 = vand.u32 %v1189, 4294901760
    %1191 = vmatpush1.msra.mxu0 %v1190
    %1192 = vmatprep.subr.mxu0 0.0
    %v1193 = vand.u32 %v437, 4294901760
    %v1194 = vsub.f32 %v437, %v1193
    %v1195 = vand.u32 %v1194, 4294901760
    %1196 = vmatpush1.msra.mxu0 %v1195
    %1197 = vmatprep.subr.mxu0 0.0
    %v1198 = vand.u32 %v438, 4294901760
    %v1199 = vsub.f32 %v438, %v1198
    %v1200 = vand.u32 %v1199, 4294901760
    %1201 = vmatpush1.msra.mxu0 %v1200
    %1202 = vmatprep.subr.mxu0 0.0
    %v1203 = vand.u32 %v439, 4294901760
    %v1204 = vsub.f32 %v439, %v1203
    %v1205 = vand.u32 %v1204, 4294901760
    %1206 = vmatpush1.msra.mxu0 %v1205
    %1207 = vmatprep.subr.mxu0 0.0
    %v1208 = vand.u32 %v440, 4294901760
    %v1209 = vsub.f32 %v440, %v1208
    %v1210 = vand.u32 %v1209, 4294901760
    %1211 = vmatpush1.msra.mxu0 %v1210
    %1212 = vmatprep.subr.mxu0 0.0
    %v1213 = vand.u32 %v441, 4294901760
    %v1214 = vsub.f32 %v441, %v1213
    %v1215 = vand.u32 %v1214, 4294901760
    %1216 = vmatpush1.msra.mxu0 %v1215
    %1217 = vmatprep.subr.mxu0 0.0
    %v1218 = vand.u32 %v442, 4294901760
    %v1219 = vsub.f32 %v442, %v1218
    %v1220 = vand.u32 %v1219, 4294901760
    %1221 = vmatpush1.msra.mxu0 %v1220
    %1222 = vmatprep.subr.mxu0 0.0
    %v1223 = vand.u32 %v443, 4294901760
    %v1224 = vsub.f32 %v443, %v1223
    %v1225 = vand.u32 %v1224, 4294901760
    %1226 = vmatpush1.msra.mxu0 %v1225
    %1227 = vmatprep.subr.mxu0 0.0
    %1228 = vmatpush1.msra.mxu0 0.0
    %1229 = vmatprep.subr.mxu0 0.0
    %1230 = vmatpush1.msra.mxu0 0.0
    %1231 = vmatprep.subr.mxu0 0.0
    %1232 = vmatpush1.msra.mxu0 0.0
    %1233 = vmatprep.subr.mxu0 0.0
    %1234 = vmatpush1.msra.mxu0 0.0
    %1235 = vmatprep.subr.mxu0 0.0
    %1236 = vmatpush1.msra.mxu0 0.0
    %1237 = vmatprep.subr.mxu0 0.0
    %1238 = vmatpush1.msra.mxu0 0.0
    %1239 = vmatprep.subr.mxu0 0.0
    %1240 = vmatpush1.msra.mxu0 0.0
    %1241 = vmatprep.subr.mxu0 0.0
    %1242 = vmatpush1.msra.mxu0 0.0
    %v1243 = vand.u32 %v452, 4294901760
    %1244 = vmatprep.mubr.f32.mxu0 %v1243
    %v1245 = vand.u32 %v404, 4294901760
    %1246 = vmatmul.mubr.f32.gmra.mrb[0].mxu0 %v1245
    %v1247 = vpop.f32.mrb[0].mxu0
    %v1248 = vadd.f32 %v1071, %v1247
    %v1249 = vpop.f32.mrb[0].mxu0
    %v1250 = vand.u32 %v455, 4294901760
    %1251 = vmatprep.mubr.f32.mxu0 %v1250
    %v1252 = vand.u32 %v405, 4294901760
    %1253 = vmatmul.mubr.f32.gmra.mrb[0].mxu0 %v1252
    %v1254 = vpop.f32.mrb[0].mxu0
    %v1255 = vadd.f32 %v1082, %v1254
    %v1256 = vpop.f32.mrb[0].mxu0
    %v1257 = vand.u32 %v458, 4294901760
    %1258 = vmatprep.mubr.f32.mxu0 %v1257
    %v1259 = vand.u32 %v406, 4294901760
    %1260 = vmatmul.mubr.f32.gmra.mrb[0].mxu0 %v1259
    %v1261 = vpop.f32.mrb[0].mxu0
    %v1262 = vadd.f32 %v1093, %v1261
    %v1263 = vpop.f32.mrb[0].mxu0
    %v1264 = vand.u32 %v461, 4294901760
    %1265 = vmatprep.mubr.f32.mxu0 %v1264
    %v1266 = vand.u32 %v407, 4294901760
    %1267 = vmatmul.mubr.f32.gmra.mrb[0].mxu0 %v1266
    %v1268 = vpop.f32.mrb[0].mxu0
    %v1269 = vadd.f32 %v1104, %v1268
    %v1270 = vpop.f32.mrb[0].mxu0
    %1271 = vdwg.mxu0
    %1272 = vmatprep.subr.mxu0 0.0
    %v1273 = vand.u32 %v420, 4294901760
    %1274 = vmatpush1.msra.mxu0 %v1273
    %1275 = vmatprep.subr.mxu0 0.0
    %v1276 = vand.u32 %v421, 4294901760
    %1277 = vmatpush1.msra.mxu0 %v1276
    %1278 = vmatprep.subr.mxu0 0.0
    %v1279 = vand.u32 %v422, 4294901760
    %1280 = vmatpush1.msra.mxu0 %v1279
    %1281 = vmatprep.subr.mxu0 0.0
    %v1282 = vand.u32 %v423, 4294901760
    %1283 = vmatpush1.msra.mxu0 %v1282
    %1284 = vmatprep.subr.mxu0 0.0
    %v1285 = vand.u32 %v424, 4294901760
    %1286 = vmatpush1.msra.mxu0 %v1285
    %1287 = vmatprep.subr.mxu0 0.0
    %v1288 = vand.u32 %v425, 4294901760
    %1289 = vmatpush1.msra.mxu0 %v1288
    %1290 = vmatprep.subr.mxu0 0.0
    %v1291 = vand.u32 %v426, 4294901760
    %1292 = vmatpush1.msra.mxu0 %v1291
    %1293 = vmatprep.subr.mxu0 0.0
    %v1294 = vand.u32 %v427, 4294901760
    %1295 = vmatpush1.msra.mxu0 %v1294
    %1296 = vmatprep.subr.mxu0 0.0
    %v1297 = vand.u32 %v428, 4294901760
    %1298 = vmatpush1.msra.mxu0 %v1297
    %1299 = vmatprep.subr.mxu0 0.0
    %v1300 = vand.u32 %v429, 4294901760
    %1301 = vmatpush1.msra.mxu0 %v1300
    %1302 = vmatprep.subr.mxu0 0.0
    %v1303 = vand.u32 %v430, 4294901760
    %1304 = vmatpush1.msra.mxu0 %v1303
    %1305 = vmatprep.subr.mxu0 0.0
    %v1306 = vand.u32 %v431, 4294901760
    %1307 = vmatpush1.msra.mxu0 %v1306
    %1308 = vmatprep.subr.mxu0 0.0
    %v1309 = vand.u32 %v432, 4294901760
    %1310 = vmatpush1.msra.mxu0 %v1309
    %1311 = vmatprep.subr.mxu0 0.0
    %v1312 = vand.u32 %v433, 4294901760
    %1313 = vmatpush1.msra.mxu0 %v1312
    %1314 = vmatprep.subr.mxu0 0.0
    %v1315 = vand.u32 %v434, 4294901760
    %1316 = vmatpush1.msra.mxu0 %v1315
    %1317 = vmatprep.subr.mxu0 0.0
    %v1318 = vand.u32 %v435, 4294901760
    %1319 = vmatpush1.msra.mxu0 %v1318
    %1320 = vmatprep.subr.mxu0 0.0
    %v1321 = vand.u32 %v436, 4294901760
    %1322 = vmatpush1.msra.mxu0 %v1321
    %1323 = vmatprep.subr.mxu0 0.0
    %v1324 = vand.u32 %v437, 4294901760
    %1325 = vmatpush1.msra.mxu0 %v1324
    %1326 = vmatprep.subr.mxu0 0.0
    %v1327 = vand.u32 %v438, 4294901760
    %1328 = vmatpush1.msra.mxu0 %v1327
    %1329 = vmatprep.subr.mxu0 0.0
    %v1330 = vand.u32 %v439, 4294901760
    %1331 = vmatpush1.msra.mxu0 %v1330
    %1332 = vmatprep.subr.mxu0 0.0
    %v1333 = vand.u32 %v440, 4294901760
    %1334 = vmatpush1.msra.mxu0 %v1333
    %1335 = vmatprep.subr.mxu0 0.0
    %v1336 = vand.u32 %v441, 4294901760
    %1337 = vmatpush1.msra.mxu0 %v1336
    %1338 = vmatprep.subr.mxu0 0.0
    %v1339 = vand.u32 %v442, 4294901760
    %1340 = vmatpush1.msra.mxu0 %v1339
    %1341 = vmatprep.subr.mxu0 0.0
    %v1342 = vand.u32 %v443, 4294901760
    %1343 = vmatpush1.msra.mxu0 %v1342
    %1344 = vmatprep.subr.mxu0 0.0
    %1345 = vmatpush1.msra.mxu0 0.0
    %1346 = vmatprep.subr.mxu0 0.0
    %1347 = vmatpush1.msra.mxu0 0.0
    %1348 = vmatprep.subr.mxu0 0.0
    %1349 = vmatpush1.msra.mxu0 0.0
    %1350 = vmatprep.subr.mxu0 0.0
    %1351 = vmatpush1.msra.mxu0 0.0
    %1352 = vmatprep.subr.mxu0 0.0
    %1353 = vmatpush1.msra.mxu0 0.0
    %1354 = vmatprep.subr.mxu0 0.0
    %1355 = vmatpush1.msra.mxu0 0.0
    %1356 = vmatprep.subr.mxu0 0.0
    %1357 = vmatpush1.msra.mxu0 0.0
    %1358 = vmatprep.subr.mxu0 0.0
    %1359 = vmatpush1.msra.mxu0 0.0
    %v1360 = vand.u32 %v452, 4294901760
    %1361 = vmatprep.mubr.f32.mxu0 %v1360
    %v1362 = vand.u32 %v404, 4294901760
    %1363 = vmatmul.mubr.f32.gmra.mrb[0].mxu0 %v1362
    %v1364 = vpop.f32.mrb[0].mxu0
    %v1365 = vadd.f32 %v1248, %v1364
    %v1366 = vpop.f32.mrb[0].mxu0
    %v1367 = vand.u32 %v455, 4294901760
    %1368 = vmatprep.mubr.f32.mxu0 %v1367
    %v1369 = vand.u32 %v405, 4294901760
    %1370 = vmatmul.mubr.f32.gmra.mrb[0].mxu0 %v1369
    %v1371 = vpop.f32.mrb[0].mxu0
    %v1372 = vadd.f32 %v1255, %v1371
    %v1373 = vpop.f32.mrb[0].mxu0
    %v1374 = vand.u32 %v458, 4294901760
    %1375 = vmatprep.mubr.f32.mxu0 %v1374
    %v1376 = vand.u32 %v406, 4294901760
    %1377 = vmatmul.mubr.f32.gmra.mrb[0].mxu0 %v1376
    %v1378 = vpop.f32.mrb[0].mxu0
    %v1379 = vadd.f32 %v1262, %v1378
    %v1380 = vpop.f32.mrb[0].mxu0
    %v1381 = vand.u32 %v461, 4294901760
    %1382 = vmatprep.mubr.f32.mxu0 %v1381
    %v1383 = vand.u32 %v407, 4294901760
    %1384 = vmatmul.mubr.f32.gmra.mrb[0].mxu0 %v1383
    %v1385 = vpop.f32.mrb[0].mxu0
    %v1386 = vadd.f32 %v1269, %v1385
    %v1387 = vpop.f32.mrb[0].mxu0
    %1388 = vdwg.mxu0
    %v1389 = vmax.f32 %v1365, 0.0
    %v1390 = vmax.f32 %v1372, 0.0
    %v1391 = vmax.f32 %v1379, 0.0
    %v1392 = vmax.f32 %v1386, 0.0
    %v1393 = vld [vmem:[#allocation8] sm:$0xff]
    %v1394 = vld [vmem:[#allocation8 + $0x8] sm:$0xff]
    %v1395 = vld [vmem:[#allocation8 + $0x10] sm:$0xff]
    %v1396 = vld [vmem:[#allocation8 + $0x18] sm:$0xff]
    %v1397 = vld [vmem:[#allocation8 + $0x20] sm:$0xff]
    %v1398 = vld [vmem:[#allocation8 + $0x28] sm:$0xff]
    %v1399 = vld [vmem:[#allocation8 + $0x30] sm:$0xff]
    %v1400 = vld [vmem:[#allocation8 + $0x38] sm:$0xff]
    %v1401 = vld [vmem:[#allocation8 + $0x40] sm:$0xff]
    %v1402 = vld [vmem:[#allocation8 + $0x48] sm:$0xff]
    %v1403 = vld [vmem:[#allocation8 + $0x50] sm:$0xff]
    %v1404 = vld [vmem:[#allocation8 + $0x58] sm:$0xff]
    %v1405 = vld [vmem:[#allocation8 + $0x60] sm:$0xff]
    %v1406 = vld [vmem:[#allocation8 + $0x68] sm:$0xff]
    %v1407 = vld [vmem:[#allocation8 + $0x70] sm:$0xff]
    %v1408 = vld [vmem:[#allocation8 + $0x78] sm:$0xff]
    %v1409 = vld [vmem:[#allocation8 + $0x80] sm:$0xff]
    %v1410 = vld [vmem:[#allocation8 + $0x88] sm:$0xff]
    %v1411 = vld [vmem:[#allocation8 + $0x90] sm:$0xff]
    %v1412 = vld [vmem:[#allocation8 + $0x98] sm:$0xff]
    %v1413 = vld [vmem:[#allocation8 + $0xa0] sm:$0xff]
    %v1414 = vld [vmem:[#allocation8 + $0xa8] sm:$0xff]
    %v1415 = vld [vmem:[#allocation8 + $0xb0] sm:$0xff]
    %v1416 = vld [vmem:[#allocation8 + $0xb8] sm:$0xff]
    %v1417 = vld [vmem:[#allocation8 + $0xc0] sm:$0xff]
    %v1418 = vld [vmem:[#allocation8 + $0xc8] sm:$0xff]
    %v1419 = vld [vmem:[#allocation8 + $0xd0] sm:$0xff]
    %v1420 = vld [vmem:[#allocation8 + $0xd8] sm:$0xff]
    %v1421 = vld [vmem:[#allocation8 + $0xe0] sm:$0xff]
    %v1422 = vld [vmem:[#allocation8 + $0xe8] sm:$0xff]
    %v1423 = vld [vmem:[#allocation8 + $0xf0] sm:$0xff]
    %v1424 = vld [vmem:[#allocation8 + $0xf8] sm:$0xff]
    %v1425 = vld [vmem:[#allocation8 + $0x100] sm:$0xff]
    %v1426 = vld [vmem:[#allocation8 + $0x108] sm:$0xff]
    %v1427 = vld [vmem:[#allocation8 + $0x110] sm:$0xff]
    %v1428 = vld [vmem:[#allocation8 + $0x118] sm:$0xff]
    %v1429 = vld [vmem:[#allocation8 + $0x120] sm:$0xff]
    %v1430 = vld [vmem:[#allocation8 + $0x128] sm:$0xff]
    %v1431 = vld [vmem:[#allocation8 + $0x130] sm:$0xff]
    %v1432 = vld [vmem:[#allocation8 + $0x138] sm:$0xff]
    %v1433 = vld [vmem:[#allocation8 + $0x140] sm:$0xff]
    %v1434 = vld [vmem:[#allocation8 + $0x148] sm:$0xff]
    %v1435 = vld [vmem:[#allocation8 + $0x150] sm:$0xff]
    %v1436 = vld [vmem:[#allocation8 + $0x158] sm:$0xff]
    %v1437 = vld [vmem:[#allocation8 + $0x160] sm:$0xff]
    %v1438 = vld [vmem:[#allocation8 + $0x168] sm:$0xff]
    %v1439 = vld [vmem:[#allocation8 + $0x170] sm:$0xff]
    %v1440 = vld [vmem:[#allocation8 + $0x178] sm:$0xff]
    %v1441 = vld [vmem:[#allocation8 + $0x180] sm:$0xff]
    %v1442 = vld [vmem:[#allocation8 + $0x188] sm:$0xff]
    %v1443 = vld [vmem:[#allocation8 + $0x190] sm:$0xff]
    %v1444 = vld [vmem:[#allocation8 + $0x198] sm:$0xff]
    %v1445 = vld [vmem:[#allocation8 + $0x1a0] sm:$0xff]
    %v1446 = vld [vmem:[#allocation8 + $0x1a8] sm:$0xff]
    %v1447 = vld [vmem:[#allocation8 + $0x1b0] sm:$0xff]
    %v1448 = vld [vmem:[#allocation8 + $0x1b8] sm:$0xff]
    %v1449 = vld [vmem:[#allocation8 + $0x1c0] sm:$0xff]
    %v1450 = vld [vmem:[#allocation8 + $0x1c8] sm:$0xff]
    %v1451 = vld [vmem:[#allocation8 + $0x1d0] sm:$0xff]
    %v1452 = vld [vmem:[#allocation8 + $0x1d8] sm:$0xff]
    %v1453 = vld [vmem:[#allocation8 + $0x1e0] sm:$0xff]
    %v1454 = vld [vmem:[#allocation8 + $0x1e8] sm:$0xff]
    %v1455 = vld [vmem:[#allocation8 + $0x1f0] sm:$0xff]
    %v1456 = vld [vmem:[#allocation8 + $0x1f8] sm:$0xff]
    %v1457 = vand.u32 %v1394, 4294901760
    %1458 = vmatprep.subr.mxu0 %v1457
    %v1459 = vand.u32 %v1393, 4294901760
    %1460 = vmatpush1.msra.mxu0 %v1459
    %v1461 = vand.u32 %v1398, 4294901760
    %1462 = vmatprep.subr.mxu0 %v1461
    %v1463 = vand.u32 %v1397, 4294901760
    %1464 = vmatpush1.msra.mxu0 %v1463
    %v1465 = vand.u32 %v1402, 4294901760
    %1466 = vmatprep.subr.mxu0 %v1465
    %v1467 = vand.u32 %v1401, 4294901760
    %1468 = vmatpush1.msra.mxu0 %v1467
    %v1469 = vand.u32 %v1406, 4294901760
    %1470 = vmatprep.subr.mxu0 %v1469
    %v1471 = vand.u32 %v1405, 4294901760
    %1472 = vmatpush1.msra.mxu0 %v1471
    %v1473 = vand.u32 %v1410, 4294901760
    %1474 = vmatprep.subr.mxu0 %v1473
    %v1475 = vand.u32 %v1409, 4294901760
    %1476 = vmatpush1.msra.mxu0 %v1475
    %v1477 = vand.u32 %v1414, 4294901760
    %1478 = vmatprep.subr.mxu0 %v1477
    %v1479 = vand.u32 %v1413, 4294901760
    %1480 = vmatpush1.msra.mxu0 %v1479
    %v1481 = vand.u32 %v1418, 4294901760
    %1482 = vmatprep.subr.mxu0 %v1481
    %v1483 = vand.u32 %v1417, 4294901760
    %1484 = vmatpush1.msra.mxu0 %v1483
    %v1485 = vand.u32 %v1422, 4294901760
    %1486 = vmatprep.subr.mxu0 %v1485
    %v1487 = vand.u32 %v1421, 4294901760
    %1488 = vmatpush1.msra.mxu0 %v1487
    %v1489 = vand.u32 %v1426, 4294901760
    %1490 = vmatprep.subr.mxu0 %v1489
    %v1491 = vand.u32 %v1425, 4294901760
    %1492 = vmatpush1.msra.mxu0 %v1491
    %v1493 = vand.u32 %v1430, 4294901760
    %1494 = vmatprep.subr.mxu0 %v1493
    %v1495 = vand.u32 %v1429, 4294901760
    %1496 = vmatpush1.msra.mxu0 %v1495
    %v1497 = vand.u32 %v1434, 4294901760
    %1498 = vmatprep.subr.mxu0 %v1497
    %v1499 = vand.u32 %v1433, 4294901760
    %1500 = vmatpush1.msra.mxu0 %v1499
    %v1501 = vand.u32 %v1438, 4294901760
    %1502 = vmatprep.subr.mxu0 %v1501
    %v1503 = vand.u32 %v1437, 4294901760
    %1504 = vmatpush1.msra.mxu0 %v1503
    %v1505 = vand.u32 %v1442, 4294901760
    %1506 = vmatprep.subr.mxu0 %v1505
    %v1507 = vand.u32 %v1441, 4294901760
    %1508 = vmatpush1.msra.mxu0 %v1507
    %v1509 = vand.u32 %v1446, 4294901760
    %1510 = vmatprep.subr.mxu0 %v1509
    %v1511 = vand.u32 %v1445, 4294901760
    %1512 = vmatpush1.msra.mxu0 %v1511
    %v1513 = vand.u32 %v1450, 4294901760
    %1514 = vmatprep.subr.mxu0 %v1513
    %v1515 = vand.u32 %v1449, 4294901760
    %1516 = vmatpush1.msra.mxu0 %v1515
    %v1517 = vand.u32 %v1454, 4294901760
    %1518 = vmatprep.subr.mxu0 %v1517
    %v1519 = vand.u32 %v1453, 4294901760
    %1520 = vmatpush1.msra.mxu0 %v1519
    %1521 = vmatprep.subr.mxu0 0.0
    %1522 = vmatpush1.msra.mxu0 0.0
    %1523 = vmatprep.subr.mxu0 0.0
    %1524 = vmatpush1.msra.mxu0 0.0
    %1525 = vmatprep.subr.mxu0 0.0
    %1526 = vmatpush1.msra.mxu0 0.0
    %1527 = vmatprep.subr.mxu0 0.0
    %1528 = vmatpush1.msra.mxu0 0.0
    %1529 = vmatprep.subr.mxu0 0.0
    %1530 = vmatpush1.msra.mxu0 0.0
    %1531 = vmatprep.subr.mxu0 0.0
    %1532 = vmatpush1.msra.mxu0 0.0
    %1533 = vmatprep.subr.mxu0 0.0
    %1534 = vmatpush1.msra.mxu0 0.0
    %1535 = vmatprep.subr.mxu0 0.0
    %1536 = vmatpush1.msra.mxu0 0.0
    %1537 = vmatprep.subr.mxu0 0.0
    %1538 = vmatpush1.msra.mxu0 0.0
    %1539 = vmatprep.subr.mxu0 0.0
    %1540 = vmatpush1.msra.mxu0 0.0
    %1541 = vmatprep.subr.mxu0 0.0
    %1542 = vmatpush1.msra.mxu0 0.0
    %1543 = vmatprep.subr.mxu0 0.0
    %1544 = vmatpush1.msra.mxu0 0.0
    %1545 = vmatprep.subr.mxu0 0.0
    %1546 = vmatpush1.msra.mxu0 0.0
    %1547 = vmatprep.subr.mxu0 0.0
    %1548 = vmatpush1.msra.mxu0 0.0
    %1549 = vmatprep.subr.mxu0 0.0
    %1550 = vmatpush1.msra.mxu0 0.0
    %1551 = vmatprep.subr.mxu0 0.0
    %1552 = vmatpush1.msra.mxu0 0.0
    %1553 = vmatprep.mubr.f32.mxu0 0.0
    %v1554 = vand.u32 %v1389, 4294901760
    %v1555 = vsub.f32 %v1389, %v1554
    %v1556 = vand.u32 %v1555, 4294901760
    %v1557 = vsub.f32 %v1555, %v1556
    %v1558 = vand.u32 %v1557, 4294901760
    %1559 = vmatmul.mubr.f32.gmra.mrb[0].mxu0 %v1558
    %v1560 = vpop.f32.mrb[0].mxu0
    %v1561 = vadd.f32 0.0, %v1560
    %v1562 = vpop.f32.mrb[0].mxu0
    %v1563 = vadd.f32 0.0, %v1562
    %1564 = vmatprep.mubr.f32.mxu0 0.0
    %v1565 = vand.u32 %v1390, 4294901760
    %v1566 = vsub.f32 %v1390, %v1565
    %v1567 = vand.u32 %v1566, 4294901760
    %v1568 = vsub.f32 %v1566, %v1567
    %v1569 = vand.u32 %v1568, 4294901760
    %1570 = vmatmul.mubr.f32.gmra.mrb[0].mxu0 %v1569
    %v1571 = vpop.f32.mrb[0].mxu0
    %v1572 = vadd.f32 0.0, %v1571
    %v1573 = vpop.f32.mrb[0].mxu0
    %v1574 = vadd.f32 0.0, %v1573
    %1575 = vmatprep.mubr.f32.mxu0 0.0
    %v1576 = vand.u32 %v1391, 4294901760
    %v1577 = vsub.f32 %v1391, %v1576
    %v1578 = vand.u32 %v1577, 4294901760
    %v1579 = vsub.f32 %v1577, %v1578
    %v1580 = vand.u32 %v1579, 4294901760
    %1581 = vmatmul.mubr.f32.gmra.mrb[0].mxu0 %v1580
    %v1582 = vpop.f32.mrb[0].mxu0
    %v1583 = vadd.f32 0.0, %v1582
    %v1584 = vpop.f32.mrb[0].mxu0
    %v1585 = vadd.f32 0.0, %v1584
    %1586 = vmatprep.mubr.f32.mxu0 0.0
    %v1587 = vand.u32 %v1392, 4294901760
    %v1588 = vsub.f32 %v1392, %v1587
    %v1589 = vand.u32 %v1588, 4294901760
    %v1590 = vsub.f32 %v1588, %v1589
    %v1591 = vand.u32 %v1590, 4294901760
    %1592 = vmatmul.mubr.f32.gmra.mrb[0].mxu0 %v1591
    %v1593 = vpop.f32.mrb[0].mxu0
    %v1594 = vadd.f32 0.0, %v1593
    %v1595 = vpop.f32.mrb[0].mxu0
    %v1596 = vadd.f32 0.0, %v1595
    %1597 = vdwg.mxu0
    %v1598 = vand.u32 %v1394, 4294901760
    %v1599 = vsub.f32 %v1394, %v1598
    %v1600 = vand.u32 %v1599, 4294901760
    %v1601 = vsub.f32 %v1599, %v1600
    %v1602 = vand.u32 %v1601, 4294901760
    %1603 = vmatprep.subr.mxu0 %v1602
    %v1604 = vand.u32 %v1393, 4294901760
    %v1605 = vsub.f32 %v1393, %v1604
    %v1606 = vand.u32 %v1605, 4294901760
    %v1607 = vsub.f32 %v1605, %v1606
    %v1608 = vand.u32 %v1607, 4294901760
    %1609 = vmatpush1.msra.mxu0 %v1608
    %v1610 = vand.u32 %v1398, 4294901760
    %v1611 = vsub.f32 %v1398, %v1610
    %v1612 = vand.u32 %v1611, 4294901760
    %v1613 = vsub.f32 %v1611, %v1612
    %v1614 = vand.u32 %v1613, 4294901760
    %1615 = vmatprep.subr.mxu0 %v1614
    %v1616 = vand.u32 %v1397, 4294901760
    %v1617 = vsub.f32 %v1397, %v1616
    %v1618 = vand.u32 %v1617, 4294901760
    %v1619 = vsub.f32 %v1617, %v1618
    %v1620 = vand.u32 %v1619, 4294901760
    %1621 = vmatpush1.msra.mxu0 %v1620
    %v1622 = vand.u32 %v1402, 4294901760
    %v1623 = vsub.f32 %v1402, %v1622
    %v1624 = vand.u32 %v1623, 4294901760
    %v1625 = vsub.f32 %v1623, %v1624
    %v1626 = vand.u32 %v1625, 4294901760
    %1627 = vmatprep.subr.mxu0 %v1626
    %v1628 = vand.u32 %v1401, 4294901760
    %v1629 = vsub.f32 %v1401, %v1628
    %v1630 = vand.u32 %v1629, 4294901760
    %v1631 = vsub.f32 %v1629, %v1630
    %v1632 = vand.u32 %v1631, 4294901760
    %1633 = vmatpush1.msra.mxu0 %v1632
    %v1634 = vand.u32 %v1406, 4294901760
    %v1635 = vsub.f32 %v1406, %v1634
    %v1636 = vand.u32 %v1635, 4294901760
    %v1637 = vsub.f32 %v1635, %v1636
    %v1638 = vand.u32 %v1637, 4294901760
    %1639 = vmatprep.subr.mxu0 %v1638
    %v1640 = vand.u32 %v1405, 4294901760
    %v1641 = vsub.f32 %v1405, %v1640
    %v1642 = vand.u32 %v1641, 4294901760
    %v1643 = vsub.f32 %v1641, %v1642
    %v1644 = vand.u32 %v1643, 4294901760
    %1645 = vmatpush1.msra.mxu0 %v1644
    %v1646 = vand.u32 %v1410, 4294901760
    %v1647 = vsub.f32 %v1410, %v1646
    %v1648 = vand.u32 %v1647, 4294901760
    %v1649 = vsub.f32 %v1647, %v1648
    %v1650 = vand.u32 %v1649, 4294901760
    %1651 = vmatprep.subr.mxu0 %v1650
    %v1652 = vand.u32 %v1409, 4294901760
    %v1653 = vsub.f32 %v1409, %v1652
    %v1654 = vand.u32 %v1653, 4294901760
    %v1655 = vsub.f32 %v1653, %v1654
    %v1656 = vand.u32 %v1655, 4294901760
    %1657 = vmatpush1.msra.mxu0 %v1656
    %v1658 = vand.u32 %v1414, 4294901760
    %v1659 = vsub.f32 %v1414, %v1658
    %v1660 = vand.u32 %v1659, 4294901760
    %v1661 = vsub.f32 %v1659, %v1660
    %v1662 = vand.u32 %v1661, 4294901760
    %1663 = vmatprep.subr.mxu0 %v1662
    %v1664 = vand.u32 %v1413, 4294901760
    %v1665 = vsub.f32 %v1413, %v1664
    %v1666 = vand.u32 %v1665, 4294901760
    %v1667 = vsub.f32 %v1665, %v1666
    %v1668 = vand.u32 %v1667, 4294901760
    %1669 = vmatpush1.msra.mxu0 %v1668
    %v1670 = vand.u32 %v1418, 4294901760
    %v1671 = vsub.f32 %v1418, %v1670
    %v1672 = vand.u32 %v1671, 4294901760
    %v1673 = vsub.f32 %v1671, %v1672
    %v1674 = vand.u32 %v1673, 4294901760
    %1675 = vmatprep.subr.mxu0 %v1674
    %v1676 = vand.u32 %v1417, 4294901760
    %v1677 = vsub.f32 %v1417, %v1676
    %v1678 = vand.u32 %v1677, 4294901760
    %v1679 = vsub.f32 %v1677, %v1678
    %v1680 = vand.u32 %v1679, 4294901760
    %1681 = vmatpush1.msra.mxu0 %v1680
    %v1682 = vand.u32 %v1422, 4294901760
    %v1683 = vsub.f32 %v1422, %v1682
    %v1684 = vand.u32 %v1683, 4294901760
    %v1685 = vsub.f32 %v1683, %v1684
    %v1686 = vand.u32 %v1685, 4294901760
    %1687 = vmatprep.subr.mxu0 %v1686
    %v1688 = vand.u32 %v1421, 4294901760
    %v1689 = vsub.f32 %v1421, %v1688
    %v1690 = vand.u32 %v1689, 4294901760
    %v1691 = vsub.f32 %v1689, %v1690
    %v1692 = vand.u32 %v1691, 4294901760
    %1693 = vmatpush1.msra.mxu0 %v1692
    %v1694 = vand.u32 %v1426, 4294901760
    %v1695 = vsub.f32 %v1426, %v1694
    %v1696 = vand.u32 %v1695, 4294901760
    %v1697 = vsub.f32 %v1695, %v1696
    %v1698 = vand.u32 %v1697, 4294901760
    %1699 = vmatprep.subr.mxu0 %v1698
    %v1700 = vand.u32 %v1425, 4294901760
    %v1701 = vsub.f32 %v1425, %v1700
    %v1702 = vand.u32 %v1701, 4294901760
    %v1703 = vsub.f32 %v1701, %v1702
    %v1704 = vand.u32 %v1703, 4294901760
    %1705 = vmatpush1.msra.mxu0 %v1704
    %v1706 = vand.u32 %v1430, 4294901760
    %v1707 = vsub.f32 %v1430, %v1706
    %v1708 = vand.u32 %v1707, 4294901760
    %v1709 = vsub.f32 %v1707, %v1708
    %v1710 = vand.u32 %v1709, 4294901760
    %1711 = vmatprep.subr.mxu0 %v1710
    %v1712 = vand.u32 %v1429, 4294901760
    %v1713 = vsub.f32 %v1429, %v1712
    %v1714 = vand.u32 %v1713, 4294901760
    %v1715 = vsub.f32 %v1713, %v1714
    %v1716 = vand.u32 %v1715, 4294901760
    %1717 = vmatpush1.msra.mxu0 %v1716
    %v1718 = vand.u32 %v1434, 4294901760
    %v1719 = vsub.f32 %v1434, %v1718
    %v1720 = vand.u32 %v1719, 4294901760
    %v1721 = vsub.f32 %v1719, %v1720
    %v1722 = vand.u32 %v1721, 4294901760
    %1723 = vmatprep.subr.mxu0 %v1722
    %v1724 = vand.u32 %v1433, 4294901760
    %v1725 = vsub.f32 %v1433, %v1724
    %v1726 = vand.u32 %v1725, 4294901760
    %v1727 = vsub.f32 %v1725, %v1726
    %v1728 = vand.u32 %v1727, 4294901760
    %1729 = vmatpush1.msra.mxu0 %v1728
    %v1730 = vand.u32 %v1438, 4294901760
    %v1731 = vsub.f32 %v1438, %v1730
    %v1732 = vand.u32 %v1731, 4294901760
    %v1733 = vsub.f32 %v1731, %v1732
    %v1734 = vand.u32 %v1733, 4294901760
    %1735 = vmatprep.subr.mxu0 %v1734
    %v1736 = vand.u32 %v1437, 4294901760
    %v1737 = vsub.f32 %v1437, %v1736
    %v1738 = vand.u32 %v1737, 4294901760
    %v1739 = vsub.f32 %v1737, %v1738
    %v1740 = vand.u32 %v1739, 4294901760
    %1741 = vmatpush1.msra.mxu0 %v1740
    %v1742 = vand.u32 %v1442, 4294901760
    %v1743 = vsub.f32 %v1442, %v1742
    %v1744 = vand.u32 %v1743, 4294901760
    %v1745 = vsub.f32 %v1743, %v1744
    %v1746 = vand.u32 %v1745, 4294901760
    %1747 = vmatprep.subr.mxu0 %v1746
    %v1748 = vand.u32 %v1441, 4294901760
    %v1749 = vsub.f32 %v1441, %v1748
    %v1750 = vand.u32 %v1749, 4294901760
    %v1751 = vsub.f32 %v1749, %v1750
    %v1752 = vand.u32 %v1751, 4294901760
    %1753 = vmatpush1.msra.mxu0 %v1752
    %v1754 = vand.u32 %v1446, 4294901760
    %v1755 = vsub.f32 %v1446, %v1754
    %v1756 = vand.u32 %v1755, 4294901760
    %v1757 = vsub.f32 %v1755, %v1756
    %v1758 = vand.u32 %v1757, 4294901760
    %1759 = vmatprep.subr.mxu0 %v1758
    %v1760 = vand.u32 %v1445, 4294901760
    %v1761 = vsub.f32 %v1445, %v1760
    %v1762 = vand.u32 %v1761, 4294901760
    %v1763 = vsub.f32 %v1761, %v1762
    %v1764 = vand.u32 %v1763, 4294901760
    %1765 = vmatpush1.msra.mxu0 %v1764
    %v1766 = vand.u32 %v1450, 4294901760
    %v1767 = vsub.f32 %v1450, %v1766
    %v1768 = vand.u32 %v1767, 4294901760
    %v1769 = vsub.f32 %v1767, %v1768
    %v1770 = vand.u32 %v1769, 4294901760
    %1771 = vmatprep.subr.mxu0 %v1770
    %v1772 = vand.u32 %v1449, 4294901760
    %v1773 = vsub.f32 %v1449, %v1772
    %v1774 = vand.u32 %v1773, 4294901760
    %v1775 = vsub.f32 %v1773, %v1774
    %v1776 = vand.u32 %v1775, 4294901760
    %1777 = vmatpush1.msra.mxu0 %v1776
    %v1778 = vand.u32 %v1454, 4294901760
    %v1779 = vsub.f32 %v1454, %v1778
    %v1780 = vand.u32 %v1779, 4294901760
    %v1781 = vsub.f32 %v1779, %v1780
    %v1782 = vand.u32 %v1781, 4294901760
    %1783 = vmatprep.subr.mxu0 %v1782
    %v1784 = vand.u32 %v1453, 4294901760
    %v1785 = vsub.f32 %v1453, %v1784
    %v1786 = vand.u32 %v1785, 4294901760
    %v1787 = vsub.f32 %v1785, %v1786
    %v1788 = vand.u32 %v1787, 4294901760
    %1789 = vmatpush1.msra.mxu0 %v1788
    %1790 = vmatprep.subr.mxu0 0.0
    %1791 = vmatpush1.msra.mxu0 0.0
    %1792 = vmatprep.subr.mxu0 0.0
    %1793 = vmatpush1.msra.mxu0 0.0
    %1794 = vmatprep.subr.mxu0 0.0
    %1795 = vmatpush1.msra.mxu0 0.0
    %1796 = vmatprep.subr.mxu0 0.0
    %1797 = vmatpush1.msra.mxu0 0.0
    %1798 = vmatprep.subr.mxu0 0.0
    %1799 = vmatpush1.msra.mxu0 0.0
    %1800 = vmatprep.subr.mxu0 0.0
    %1801 = vmatpush1.msra.mxu0 0.0
    %1802 = vmatprep.subr.mxu0 0.0
    %1803 = vmatpush1.msra.mxu0 0.0
    %1804 = vmatprep.subr.mxu0 0.0
    %1805 = vmatpush1.msra.mxu0 0.0
    %1806 = vmatprep.subr.mxu0 0.0
    %1807 = vmatpush1.msra.mxu0 0.0
    %1808 = vmatprep.subr.mxu0 0.0
    %1809 = vmatpush1.msra.mxu0 0.0
    %1810 = vmatprep.subr.mxu0 0.0
    %1811 = vmatpush1.msra.mxu0 0.0
    %1812 = vmatprep.subr.mxu0 0.0
    %1813 = vmatpush1.msra.mxu0 0.0
    %1814 = vmatprep.subr.mxu0 0.0
    %1815 = vmatpush1.msra.mxu0 0.0
    %1816 = vmatprep.subr.mxu0 0.0
    %1817 = vmatpush1.msra.mxu0 0.0
    %1818 = vmatprep.subr.mxu0 0.0
    %1819 = vmatpush1.msra.mxu0 0.0
    %1820 = vmatprep.subr.mxu0 0.0
    %1821 = vmatpush1.msra.mxu0 0.0
    %1822 = vmatprep.mubr.f32.mxu0 0.0
    %v1823 = vand.u32 %v1389, 4294901760
    %1824 = vmatmul.mubr.f32.gmra.mrb[0].mxu0 %v1823
    %v1825 = vpop.f32.mrb[0].mxu0
    %v1826 = vadd.f32 %v1561, %v1825
    %v1827 = vpop.f32.mrb[0].mxu0
    %v1828 = vadd.f32 %v1563, %v1827
    %1829 = vmatprep.mubr.f32.mxu0 0.0
    %v1830 = vand.u32 %v1390, 4294901760
    %1831 = vmatmul.mubr.f32.gmra.mrb[0].mxu0 %v1830
    %v1832 = vpop.f32.mrb[0].mxu0
    %v1833 = vadd.f32 %v1572, %v1832
    %v1834 = vpop.f32.mrb[0].mxu0
    %v1835 = vadd.f32 %v1574, %v1834
    %1836 = vmatprep.mubr.f32.mxu0 0.0
    %v1837 = vand.u32 %v1391, 4294901760
    %1838 = vmatmul.mubr.f32.gmra.mrb[0].mxu0 %v1837
    %v1839 = vpop.f32.mrb[0].mxu0
    %v1840 = vadd.f32 %v1583, %v1839
    %v1841 = vpop.f32.mrb[0].mxu0
    %v1842 = vadd.f32 %v1585, %v1841
    %1843 = vmatprep.mubr.f32.mxu0 0.0
    %v1844 = vand.u32 %v1392, 4294901760
    %1845 = vmatmul.mubr.f32.gmra.mrb[0].mxu0 %v1844
    %v1846 = vpop.f32.mrb[0].mxu0
    %v1847 = vadd.f32 %v1594, %v1846
    %v1848 = vpop.f32.mrb[0].mxu0
    %v1849 = vadd.f32 %v1596, %v1848
    %1850 = vdwg.mxu0
    %v1851 = vand.u32 %v1394, 4294901760
    %v1852 = vsub.f32 %v1394, %v1851
    %1853 = vmatprep.subr.mxu0 %v1852
    %v1854 = vand.u32 %v1393, 4294901760
    %v1855 = vsub.f32 %v1393, %v1854
    %1856 = vmatpush1.msra.mxu0 %v1855
    %v1857 = vand.u32 %v1398, 4294901760
    %v1858 = vsub.f32 %v1398, %v1857
    %1859 = vmatprep.subr.mxu0 %v1858
    %v1860 = vand.u32 %v1397, 4294901760
    %v1861 = vsub.f32 %v1397, %v1860
    %1862 = vmatpush1.msra.mxu0 %v1861
    %v1863 = vand.u32 %v1402, 4294901760
    %v1864 = vsub.f32 %v1402, %v1863
    %1865 = vmatprep.subr.mxu0 %v1864
    %v1866 = vand.u32 %v1401, 4294901760
    %v1867 = vsub.f32 %v1401, %v1866
    %1868 = vmatpush1.msra.mxu0 %v1867
    %v1869 = vand.u32 %v1406, 4294901760
    %v1870 = vsub.f32 %v1406, %v1869
    %1871 = vmatprep.subr.mxu0 %v1870
    %v1872 = vand.u32 %v1405, 4294901760
    %v1873 = vsub.f32 %v1405, %v1872
    %1874 = vmatpush1.msra.mxu0 %v1873
    %v1875 = vand.u32 %v1410, 4294901760
    %v1876 = vsub.f32 %v1410, %v1875
    %1877 = vmatprep.subr.mxu0 %v1876
    %v1878 = vand.u32 %v1409, 4294901760
    %v1879 = vsub.f32 %v1409, %v1878
    %1880 = vmatpush1.msra.mxu0 %v1879
    %v1881 = vand.u32 %v1414, 4294901760
    %v1882 = vsub.f32 %v1414, %v1881
    %1883 = vmatprep.subr.mxu0 %v1882
    %v1884 = vand.u32 %v1413, 4294901760
    %v1885 = vsub.f32 %v1413, %v1884
    %1886 = vmatpush1.msra.mxu0 %v1885
    %v1887 = vand.u32 %v1418, 4294901760
    %v1888 = vsub.f32 %v1418, %v1887
    %1889 = vmatprep.subr.mxu0 %v1888
    %v1890 = vand.u32 %v1417, 4294901760
    %v1891 = vsub.f32 %v1417, %v1890
    %1892 = vmatpush1.msra.mxu0 %v1891
    %v1893 = vand.u32 %v1422, 4294901760
    %v1894 = vsub.f32 %v1422, %v1893
    %1895 = vmatprep.subr.mxu0 %v1894
    %v1896 = vand.u32 %v1421, 4294901760
    %v1897 = vsub.f32 %v1421, %v1896
    %1898 = vmatpush1.msra.mxu0 %v1897
    %v1899 = vand.u32 %v1426, 4294901760
    %v1900 = vsub.f32 %v1426, %v1899
    %1901 = vmatprep.subr.mxu0 %v1900
    %v1902 = vand.u32 %v1425, 4294901760
    %v1903 = vsub.f32 %v1425, %v1902
    %1904 = vmatpush1.msra.mxu0 %v1903
    %v1905 = vand.u32 %v1430, 4294901760
    %v1906 = vsub.f32 %v1430, %v1905
    %1907 = vmatprep.subr.mxu0 %v1906
    %v1908 = vand.u32 %v1429, 4294901760
    %v1909 = vsub.f32 %v1429, %v1908
    %1910 = vmatpush1.msra.mxu0 %v1909
    %v1911 = vand.u32 %v1434, 4294901760
    %v1912 = vsub.f32 %v1434, %v1911
    %1913 = vmatprep.subr.mxu0 %v1912
    %v1914 = vand.u32 %v1433, 4294901760
    %v1915 = vsub.f32 %v1433, %v1914
    %1916 = vmatpush1.msra.mxu0 %v1915
    %v1917 = vand.u32 %v1438, 4294901760
    %v1918 = vsub.f32 %v1438, %v1917
    %1919 = vmatprep.subr.mxu0 %v1918
    %v1920 = vand.u32 %v1437, 4294901760
    %v1921 = vsub.f32 %v1437, %v1920
    %1922 = vmatpush1.msra.mxu0 %v1921
    %v1923 = vand.u32 %v1442, 4294901760
    %v1924 = vsub.f32 %v1442, %v1923
    %1925 = vmatprep.subr.mxu0 %v1924
    %v1926 = vand.u32 %v1441, 4294901760
    %v1927 = vsub.f32 %v1441, %v1926
    %1928 = vmatpush1.msra.mxu0 %v1927
    %v1929 = vand.u32 %v1446, 4294901760
    %v1930 = vsub.f32 %v1446, %v1929
    %1931 = vmatprep.subr.mxu0 %v1930
    %v1932 = vand.u32 %v1445, 4294901760
    %v1933 = vsub.f32 %v1445, %v1932
    %1934 = vmatpush1.msra.mxu0 %v1933
    %v1935 = vand.u32 %v1450, 4294901760
    %v1936 = vsub.f32 %v1450, %v1935
    %1937 = vmatprep.subr.mxu0 %v1936
    %v1938 = vand.u32 %v1449, 4294901760
    %v1939 = vsub.f32 %v1449, %v1938
    %1940 = vmatpush1.msra.mxu0 %v1939
    %v1941 = vand.u32 %v1454, 4294901760
    %v1942 = vsub.f32 %v1454, %v1941
    %1943 = vmatprep.subr.mxu0 %v1942
    %v1944 = vand.u32 %v1453, 4294901760
    %v1945 = vsub.f32 %v1453, %v1944
    %1946 = vmatpush1.msra.mxu0 %v1945
    %1947 = vmatprep.subr.mxu0 0.0
    %1948 = vmatpush1.msra.mxu0 0.0
    %1949 = vmatprep.subr.mxu0 0.0
    %1950 = vmatpush1.msra.mxu0 0.0
    %1951 = vmatprep.subr.mxu0 0.0
    %1952 = vmatpush1.msra.mxu0 0.0
    %1953 = vmatprep.subr.mxu0 0.0
    %1954 = vmatpush1.msra.mxu0 0.0
    %1955 = vmatprep.subr.mxu0 0.0
    %1956 = vmatpush1.msra.mxu0 0.0
    %1957 = vmatprep.subr.mxu0 0.0
    %1958 = vmatpush1.msra.mxu0 0.0
    %1959 = vmatprep.subr.mxu0 0.0
    %1960 = vmatpush1.msra.mxu0 0.0
    %1961 = vmatprep.subr.mxu0 0.0
    %1962 = vmatpush1.msra.mxu0 0.0
    %1963 = vmatprep.subr.mxu0 0.0
    %1964 = vmatpush1.msra.mxu0 0.0
    %1965 = vmatprep.subr.mxu0 0.0
    %1966 = vmatpush1.msra.mxu0 0.0
    %1967 = vmatprep.subr.mxu0 0.0
    %1968 = vmatpush1.msra.mxu0 0.0
    %1969 = vmatprep.subr.mxu0 0.0
    %1970 = vmatpush1.msra.mxu0 0.0
    %1971 = vmatprep.subr.mxu0 0.0
    %1972 = vmatpush1.msra.mxu0 0.0
    %1973 = vmatprep.subr.mxu0 0.0
    %1974 = vmatpush1.msra.mxu0 0.0
    %1975 = vmatprep.subr.mxu0 0.0
    %1976 = vmatpush1.msra.mxu0 0.0
    %1977 = vmatprep.subr.mxu0 0.0
    %1978 = vmatpush1.msra.mxu0 0.0
    %1979 = vmatprep.mubr.f32.mxu0 0.0
    %v1980 = vand.u32 %v1389, 4294901760
    %v1981 = vsub.f32 %v1389, %v1980
    %1982 = vmatmul.mubr.f32.gmra.mrb[0].mxu0 %v1981
    %v1983 = vpop.f32.mrb[0].mxu0
    %v1984 = vadd.f32 %v1826, %v1983
    %v1985 = vpop.f32.mrb[0].mxu0
    %v1986 = vadd.f32 %v1828, %v1985
    %1987 = vmatprep.mubr.f32.mxu0 0.0
    %v1988 = vand.u32 %v1390, 4294901760
    %v1989 = vsub.f32 %v1390, %v1988
    %1990 = vmatmul.mubr.f32.gmra.mrb[0].mxu0 %v1989
    %v1991 = vpop.f32.mrb[0].mxu0
    %v1992 = vadd.f32 %v1833, %v1991
    %v1993 = vpop.f32.mrb[0].mxu0
    %v1994 = vadd.f32 %v1835, %v1993
    %1995 = vmatprep.mubr.f32.mxu0 0.0
    %v1996 = vand.u32 %v1391, 4294901760
    %v1997 = vsub.f32 %v1391, %v1996
    %1998 = vmatmul.mubr.f32.gmra.mrb[0].mxu0 %v1997
    %v1999 = vpop.f32.mrb[0].mxu0
    %v2000 = vadd.f32 %v1840, %v1999
    %v2001 = vpop.f32.mrb[0].mxu0
    %v2002 = vadd.f32 %v1842, %v2001
    %2003 = vmatprep.mubr.f32.mxu0 0.0
    %v2004 = vand.u32 %v1392, 4294901760
    %v2005 = vsub.f32 %v1392, %v2004
    %2006 = vmatmul.mubr.f32.gmra.mrb[0].mxu0 %v2005
    %v2007 = vpop.f32.mrb[0].mxu0
    %v2008 = vadd.f32 %v1847, %v2007
    %v2009 = vpop.f32.mrb[0].mxu0
    %v2010 = vadd.f32 %v1849, %v2009
    %2011 = vdwg.mxu0
    %v2012 = vand.u32 %v1394, 4294901760
    %2013 = vmatprep.subr.mxu0 %v2012
    %v2014 = vand.u32 %v1393, 4294901760
    %2015 = vmatpush1.msra.mxu0 %v2014
    %v2016 = vand.u32 %v1398, 4294901760
    %2017 = vmatprep.subr.mxu0 %v2016
    %v2018 = vand.u32 %v1397, 4294901760
    %2019 = vmatpush1.msra.mxu0 %v2018
    %v2020 = vand.u32 %v1402, 4294901760
    %2021 = vmatprep.subr.mxu0 %v2020
    %v2022 = vand.u32 %v1401, 4294901760
    %2023 = vmatpush1.msra.mxu0 %v2022
    %v2024 = vand.u32 %v1406, 4294901760
    %2025 = vmatprep.subr.mxu0 %v2024
    %v2026 = vand.u32 %v1405, 4294901760
    %2027 = vmatpush1.msra.mxu0 %v2026
    %v2028 = vand.u32 %v1410, 4294901760
    %2029 = vmatprep.subr.mxu0 %v2028
    %v2030 = vand.u32 %v1409, 4294901760
    %2031 = vmatpush1.msra.mxu0 %v2030
    %v2032 = vand.u32 %v1414, 4294901760
    %2033 = vmatprep.subr.mxu0 %v2032
    %v2034 = vand.u32 %v1413, 4294901760
    %2035 = vmatpush1.msra.mxu0 %v2034
    %v2036 = vand.u32 %v1418, 4294901760
    %2037 = vmatprep.subr.mxu0 %v2036
    %v2038 = vand.u32 %v1417, 4294901760
    %2039 = vmatpush1.msra.mxu0 %v2038
    %v2040 = vand.u32 %v1422, 4294901760
    %2041 = vmatprep.subr.mxu0 %v2040
    %v2042 = vand.u32 %v1421, 4294901760
    %2043 = vmatpush1.msra.mxu0 %v2042
    %v2044 = vand.u32 %v1426, 4294901760
    %2045 = vmatprep.subr.mxu0 %v2044
    %v2046 = vand.u32 %v1425, 4294901760
    %2047 = vmatpush1.msra.mxu0 %v2046
    %v2048 = vand.u32 %v1430, 4294901760
    %2049 = vmatprep.subr.mxu0 %v2048
    %v2050 = vand.u32 %v1429, 4294901760
    %2051 = vmatpush1.msra.mxu0 %v2050
    %v2052 = vand.u32 %v1434, 4294901760
    %2053 = vmatprep.subr.mxu0 %v2052
    %v2054 = vand.u32 %v1433, 4294901760
    %2055 = vmatpush1.msra.mxu0 %v2054
    %v2056 = vand.u32 %v1438, 4294901760
    %2057 = vmatprep.subr.mxu0 %v2056
    %v2058 = vand.u32 %v1437, 4294901760
    %2059 = vmatpush1.msra.mxu0 %v2058
    %v2060 = vand.u32 %v1442, 4294901760
    %2061 = vmatprep.subr.mxu0 %v2060
    %v2062 = vand.u32 %v1441, 4294901760
    %2063 = vmatpush1.msra.mxu0 %v2062
    %v2064 = vand.u32 %v1446, 4294901760
    %2065 = vmatprep.subr.mxu0 %v2064
    %v2066 = vand.u32 %v1445, 4294901760
    %2067 = vmatpush1.msra.mxu0 %v2066
    %v2068 = vand.u32 %v1450, 4294901760
    %2069 = vmatprep.subr.mxu0 %v2068
    %v2070 = vand.u32 %v1449, 4294901760
    %2071 = vmatpush1.msra.mxu0 %v2070
    %v2072 = vand.u32 %v1454, 4294901760
    %2073 = vmatprep.subr.mxu0 %v2072
    %v2074 = vand.u32 %v1453, 4294901760
    %2075 = vmatpush1.msra.mxu0 %v2074
    %2076 = vmatprep.subr.mxu0 0.0
    %2077 = vmatpush1.msra.mxu0 0.0
    %2078 = vmatprep.subr.mxu0 0.0
    %2079 = vmatpush1.msra.mxu0 0.0
    %2080 = vmatprep.subr.mxu0 0.0
    %2081 = vmatpush1.msra.mxu0 0.0
    %2082 = vmatprep.subr.mxu0 0.0
    %2083 = vmatpush1.msra.mxu0 0.0
    %2084 = vmatprep.subr.mxu0 0.0
    %2085 = vmatpush1.msra.mxu0 0.0
    %2086 = vmatprep.subr.mxu0 0.0
    %2087 = vmatpush1.msra.mxu0 0.0
    %2088 = vmatprep.subr.mxu0 0.0
    %2089 = vmatpush1.msra.mxu0 0.0
    %2090 = vmatprep.subr.mxu0 0.0
    %2091 = vmatpush1.msra.mxu0 0.0
    %2092 = vmatprep.subr.mxu0 0.0
    %2093 = vmatpush1.msra.mxu0 0.0
    %2094 = vmatprep.subr.mxu0 0.0
    %2095 = vmatpush1.msra.mxu0 0.0
    %2096 = vmatprep.subr.mxu0 0.0
    %2097 = vmatpush1.msra.mxu0 0.0
    %2098 = vmatprep.subr.mxu0 0.0
    %2099 = vmatpush1.msra.mxu0 0.0
    %2100 = vmatprep.subr.mxu0 0.0
    %2101 = vmatpush1.msra.mxu0 0.0
    %2102 = vmatprep.subr.mxu0 0.0
    %2103 = vmatpush1.msra.mxu0 0.0
    %2104 = vmatprep.subr.mxu0 0.0
    %2105 = vmatpush1.msra.mxu0 0.0
    %2106 = vmatprep.subr.mxu0 0.0
    %2107 = vmatpush1.msra.mxu0 0.0
    %2108 = vmatprep.mubr.f32.mxu0 0.0
    %v2109 = vand.u32 %v1389, 4294901760
    %v2110 = vsub.f32 %v1389, %v2109
    %v2111 = vand.u32 %v2110, 4294901760
    %2112 = vmatmul.mubr.f32.gmra.mrb[0].mxu0 %v2111
    %v2113 = vpop.f32.mrb[0].mxu0
    %v2114 = vadd.f32 %v1984, %v2113
    %v2115 = vpop.f32.mrb[0].mxu0
    %v2116 = vadd.f32 %v1986, %v2115
    %2117 = vmatprep.mubr.f32.mxu0 0.0
    %v2118 = vand.u32 %v1390, 4294901760
    %v2119 = vsub.f32 %v1390, %v2118
    %v2120 = vand.u32 %v2119, 4294901760
    %2121 = vmatmul.mubr.f32.gmra.mrb[0].mxu0 %v2120
    %v2122 = vpop.f32.mrb[0].mxu0
    %v2123 = vadd.f32 %v1992, %v2122
    %v2124 = vpop.f32.mrb[0].mxu0
    %v2125 = vadd.f32 %v1994, %v2124
    %2126 = vmatprep.mubr.f32.mxu0 0.0
    %v2127 = vand.u32 %v1391, 4294901760
    %v2128 = vsub.f32 %v1391, %v2127
    %v2129 = vand.u32 %v2128, 4294901760
    %2130 = vmatmul.mubr.f32.gmra.mrb[0].mxu0 %v2129
    %v2131 = vpop.f32.mrb[0].mxu0
    %v2132 = vadd.f32 %v2000, %v2131
    %v2133 = vpop.f32.mrb[0].mxu0
    %v2134 = vadd.f32 %v2002, %v2133
    %2135 = vmatprep.mubr.f32.mxu0 0.0
    %v2136 = vand.u32 %v1392, 4294901760
    %v2137 = vsub.f32 %v1392, %v2136
    %v2138 = vand.u32 %v2137, 4294901760
    %2139 = vmatmul.mubr.f32.gmra.mrb[0].mxu0 %v2138
    %v2140 = vpop.f32.mrb[0].mxu0
    %v2141 = vadd.f32 %v2008, %v2140
    %v2142 = vpop.f32.mrb[0].mxu0
    %v2143 = vadd.f32 %v2010, %v2142
    %2144 = vdwg.mxu0
    %v2145 = vand.u32 %v1394, 4294901760
    %v2146 = vsub.f32 %v1394, %v2145
    %v2147 = vand.u32 %v2146, 4294901760
    %2148 = vmatprep.subr.mxu0 %v2147
    %v2149 = vand.u32 %v1393, 4294901760
    %v2150 = vsub.f32 %v1393, %v2149
    %v2151 = vand.u32 %v2150, 4294901760
    %2152 = vmatpush1.msra.mxu0 %v2151
    %v2153 = vand.u32 %v1398, 4294901760
    %v2154 = vsub.f32 %v1398, %v2153
    %v2155 = vand.u32 %v2154, 4294901760
    %2156 = vmatprep.subr.mxu0 %v2155
    %v2157 = vand.u32 %v1397, 4294901760
    %v2158 = vsub.f32 %v1397, %v2157
    %v2159 = vand.u32 %v2158, 4294901760
    %2160 = vmatpush1.msra.mxu0 %v2159
    %v2161 = vand.u32 %v1402, 4294901760
    %v2162 = vsub.f32 %v1402, %v2161
    %v2163 = vand.u32 %v2162, 4294901760
    %2164 = vmatprep.subr.mxu0 %v2163
    %v2165 = vand.u32 %v1401, 4294901760
    %v2166 = vsub.f32 %v1401, %v2165
    %v2167 = vand.u32 %v2166, 4294901760
    %2168 = vmatpush1.msra.mxu0 %v2167
    %v2169 = vand.u32 %v1406, 4294901760
    %v2170 = vsub.f32 %v1406, %v2169
    %v2171 = vand.u32 %v2170, 4294901760
    %2172 = vmatprep.subr.mxu0 %v2171
    %v2173 = vand.u32 %v1405, 4294901760
    %v2174 = vsub.f32 %v1405, %v2173
    %v2175 = vand.u32 %v2174, 4294901760
    %2176 = vmatpush1.msra.mxu0 %v2175
    %v2177 = vand.u32 %v1410, 4294901760
    %v2178 = vsub.f32 %v1410, %v2177
    %v2179 = vand.u32 %v2178, 4294901760
    %2180 = vmatprep.subr.mxu0 %v2179
    %v2181 = vand.u32 %v1409, 4294901760
    %v2182 = vsub.f32 %v1409, %v2181
    %v2183 = vand.u32 %v2182, 4294901760
    %2184 = vmatpush1.msra.mxu0 %v2183
    %v2185 = vand.u32 %v1414, 4294901760
    %v2186 = vsub.f32 %v1414, %v2185
    %v2187 = vand.u32 %v2186, 4294901760
    %2188 = vmatprep.subr.mxu0 %v2187
    %v2189 = vand.u32 %v1413, 4294901760
    %v2190 = vsub.f32 %v1413, %v2189
    %v2191 = vand.u32 %v2190, 4294901760
    %2192 = vmatpush1.msra.mxu0 %v2191
    %v2193 = vand.u32 %v1418, 4294901760
    %v2194 = vsub.f32 %v1418, %v2193
    %v2195 = vand.u32 %v2194, 4294901760
    %2196 = vmatprep.subr.mxu0 %v2195
    %v2197 = vand.u32 %v1417, 4294901760
    %v2198 = vsub.f32 %v1417, %v2197
    %v2199 = vand.u32 %v2198, 4294901760
    %2200 = vmatpush1.msra.mxu0 %v2199
    %v2201 = vand.u32 %v1422, 4294901760
    %v2202 = vsub.f32 %v1422, %v2201
    %v2203 = vand.u32 %v2202, 4294901760
    %2204 = vmatprep.subr.mxu0 %v2203
    %v2205 = vand.u32 %v1421, 4294901760
    %v2206 = vsub.f32 %v1421, %v2205
    %v2207 = vand.u32 %v2206, 4294901760
    %2208 = vmatpush1.msra.mxu0 %v2207
    %v2209 = vand.u32 %v1426, 4294901760
    %v2210 = vsub.f32 %v1426, %v2209
    %v2211 = vand.u32 %v2210, 4294901760
    %2212 = vmatprep.subr.mxu0 %v2211
    %v2213 = vand.u32 %v1425, 4294901760
    %v2214 = vsub.f32 %v1425, %v2213
    %v2215 = vand.u32 %v2214, 4294901760
    %2216 = vmatpush1.msra.mxu0 %v2215
    %v2217 = vand.u32 %v1430, 4294901760
    %v2218 = vsub.f32 %v1430, %v2217
    %v2219 = vand.u32 %v2218, 4294901760
    %2220 = vmatprep.subr.mxu0 %v2219
    %v2221 = vand.u32 %v1429, 4294901760
    %v2222 = vsub.f32 %v1429, %v2221
    %v2223 = vand.u32 %v2222, 4294901760
    %2224 = vmatpush1.msra.mxu0 %v2223
    %v2225 = vand.u32 %v1434, 4294901760
    %v2226 = vsub.f32 %v1434, %v2225
    %v2227 = vand.u32 %v2226, 4294901760
    %2228 = vmatprep.subr.mxu0 %v2227
    %v2229 = vand.u32 %v1433, 4294901760
    %v2230 = vsub.f32 %v1433, %v2229
    %v2231 = vand.u32 %v2230, 4294901760
    %2232 = vmatpush1.msra.mxu0 %v2231
    %v2233 = vand.u32 %v1438, 4294901760
    %v2234 = vsub.f32 %v1438, %v2233
    %v2235 = vand.u32 %v2234, 4294901760
    %2236 = vmatprep.subr.mxu0 %v2235
    %v2237 = vand.u32 %v1437, 4294901760
    %v2238 = vsub.f32 %v1437, %v2237
    %v2239 = vand.u32 %v2238, 4294901760
    %2240 = vmatpush1.msra.mxu0 %v2239
    %v2241 = vand.u32 %v1442, 4294901760
    %v2242 = vsub.f32 %v1442, %v2241
    %v2243 = vand.u32 %v2242, 4294901760
    %2244 = vmatprep.subr.mxu0 %v2243
    %v2245 = vand.u32 %v1441, 4294901760
    %v2246 = vsub.f32 %v1441, %v2245
    %v2247 = vand.u32 %v2246, 4294901760
    %2248 = vmatpush1.msra.mxu0 %v2247
    %v2249 = vand.u32 %v1446, 4294901760
    %v2250 = vsub.f32 %v1446, %v2249
    %v2251 = vand.u32 %v2250, 4294901760
    %2252 = vmatprep.subr.mxu0 %v2251
    %v2253 = vand.u32 %v1445, 4294901760
    %v2254 = vsub.f32 %v1445, %v2253
    %v2255 = vand.u32 %v2254, 4294901760
    %2256 = vmatpush1.msra.mxu0 %v2255
    %v2257 = vand.u32 %v1450, 4294901760
    %v2258 = vsub.f32 %v1450, %v2257
    %v2259 = vand.u32 %v2258, 4294901760
    %2260 = vmatprep.subr.mxu0 %v2259
    %v2261 = vand.u32 %v1449, 4294901760
    %v2262 = vsub.f32 %v1449, %v2261
    %v2263 = vand.u32 %v2262, 4294901760
    %2264 = vmatpush1.msra.mxu0 %v2263
    %v2265 = vand.u32 %v1454, 4294901760
    %v2266 = vsub.f32 %v1454, %v2265
    %v2267 = vand.u32 %v2266, 4294901760
    %2268 = vmatprep.subr.mxu0 %v2267
    %v2269 = vand.u32 %v1453, 4294901760
    %v2270 = vsub.f32 %v1453, %v2269
    %v2271 = vand.u32 %v2270, 4294901760
    %2272 = vmatpush1.msra.mxu0 %v2271
    %2273 = vmatprep.subr.mxu0 0.0
    %2274 = vmatpush1.msra.mxu0 0.0
    %2275 = vmatprep.subr.mxu0 0.0
    %2276 = vmatpush1.msra.mxu0 0.0
    %2277 = vmatprep.subr.mxu0 0.0
    %2278 = vmatpush1.msra.mxu0 0.0
    %2279 = vmatprep.subr.mxu0 0.0
    %2280 = vmatpush1.msra.mxu0 0.0
    %2281 = vmatprep.subr.mxu0 0.0
    %2282 = vmatpush1.msra.mxu0 0.0
    %2283 = vmatprep.subr.mxu0 0.0
    %2284 = vmatpush1.msra.mxu0 0.0
    %2285 = vmatprep.subr.mxu0 0.0
    %2286 = vmatpush1.msra.mxu0 0.0
    %2287 = vmatprep.subr.mxu0 0.0
    %2288 = vmatpush1.msra.mxu0 0.0
    %2289 = vmatprep.subr.mxu0 0.0
    %2290 = vmatpush1.msra.mxu0 0.0
    %2291 = vmatprep.subr.mxu0 0.0
    %2292 = vmatpush1.msra.mxu0 0.0
    %2293 = vmatprep.subr.mxu0 0.0
    %2294 = vmatpush1.msra.mxu0 0.0
    %2295 = vmatprep.subr.mxu0 0.0
    %2296 = vmatpush1.msra.mxu0 0.0
    %2297 = vmatprep.subr.mxu0 0.0
    %2298 = vmatpush1.msra.mxu0 0.0
    %2299 = vmatprep.subr.mxu0 0.0
    %2300 = vmatpush1.msra.mxu0 0.0
    %2301 = vmatprep.subr.mxu0 0.0
    %2302 = vmatpush1.msra.mxu0 0.0
    %2303 = vmatprep.subr.mxu0 0.0
    %2304 = vmatpush1.msra.mxu0 0.0
    %2305 = vmatprep.mubr.f32.mxu0 0.0
    %v2306 = vand.u32 %v1389, 4294901760
    %2307 = vmatmul.mubr.f32.gmra.mrb[0].mxu0 %v2306
    %v2308 = vpop.f32.mrb[0].mxu0
    %v2309 = vadd.f32 %v2114, %v2308
    %v2310 = vpop.f32.mrb[0].mxu0
    %v2311 = vadd.f32 %v2116, %v2310
    %2312 = vmatprep.mubr.f32.mxu0 0.0
    %v2313 = vand.u32 %v1390, 4294901760
    %2314 = vmatmul.mubr.f32.gmra.mrb[0].mxu0 %v2313
    %v2315 = vpop.f32.mrb[0].mxu0
    %v2316 = vadd.f32 %v2123, %v2315
    %v2317 = vpop.f32.mrb[0].mxu0
    %v2318 = vadd.f32 %v2125, %v2317
    %2319 = vmatprep.mubr.f32.mxu0 0.0
    %v2320 = vand.u32 %v1391, 4294901760
    %2321 = vmatmul.mubr.f32.gmra.mrb[0].mxu0 %v2320
    %v2322 = vpop.f32.mrb[0].mxu0
    %v2323 = vadd.f32 %v2132, %v2322
    %v2324 = vpop.f32.mrb[0].mxu0
    %v2325 = vadd.f32 %v2134, %v2324
    %2326 = vmatprep.mubr.f32.mxu0 0.0
    %v2327 = vand.u32 %v1392, 4294901760
    %2328 = vmatmul.mubr.f32.gmra.mrb[0].mxu0 %v2327
    %v2329 = vpop.f32.mrb[0].mxu0
    %v2330 = vadd.f32 %v2141, %v2329
    %v2331 = vpop.f32.mrb[0].mxu0
    %v2332 = vadd.f32 %v2143, %v2331
    %2333 = vdwg.mxu0
    %v2334 = vand.u32 %v1394, 4294901760
    %2335 = vmatprep.subr.mxu0 %v2334
    %v2336 = vand.u32 %v1393, 4294901760
    %2337 = vmatpush1.msra.mxu0 %v2336
    %v2338 = vand.u32 %v1398, 4294901760
    %2339 = vmatprep.subr.mxu0 %v2338
    %v2340 = vand.u32 %v1397, 4294901760
    %2341 = vmatpush1.msra.mxu0 %v2340
    %v2342 = vand.u32 %v1402, 4294901760
    %2343 = vmatprep.subr.mxu0 %v2342
    %v2344 = vand.u32 %v1401, 4294901760
    %2345 = vmatpush1.msra.mxu0 %v2344
    %v2346 = vand.u32 %v1406, 4294901760
    %2347 = vmatprep.subr.mxu0 %v2346
    %v2348 = vand.u32 %v1405, 4294901760
    %2349 = vmatpush1.msra.mxu0 %v2348
    %v2350 = vand.u32 %v1410, 4294901760
    %2351 = vmatprep.subr.mxu0 %v2350
    %v2352 = vand.u32 %v1409, 4294901760
    %2353 = vmatpush1.msra.mxu0 %v2352
    %v2354 = vand.u32 %v1414, 4294901760
    %2355 = vmatprep.subr.mxu0 %v2354
    %v2356 = vand.u32 %v1413, 4294901760
    %2357 = vmatpush1.msra.mxu0 %v2356
    %v2358 = vand.u32 %v1418, 4294901760
    %2359 = vmatprep.subr.mxu0 %v2358
    %v2360 = vand.u32 %v1417, 4294901760
    %2361 = vmatpush1.msra.mxu0 %v2360
    %v2362 = vand.u32 %v1422, 4294901760
    %2363 = vmatprep.subr.mxu0 %v2362
    %v2364 = vand.u32 %v1421, 4294901760
    %2365 = vmatpush1.msra.mxu0 %v2364
    %v2366 = vand.u32 %v1426, 4294901760
    %2367 = vmatprep.subr.mxu0 %v2366
    %v2368 = vand.u32 %v1425, 4294901760
    %2369 = vmatpush1.msra.mxu0 %v2368
    %v2370 = vand.u32 %v1430, 4294901760
    %2371 = vmatprep.subr.mxu0 %v2370
    %v2372 = vand.u32 %v1429, 4294901760
    %2373 = vmatpush1.msra.mxu0 %v2372
    %v2374 = vand.u32 %v1434, 4294901760
    %2375 = vmatprep.subr.mxu0 %v2374
    %v2376 = vand.u32 %v1433, 4294901760
    %2377 = vmatpush1.msra.mxu0 %v2376
    %v2378 = vand.u32 %v1438, 4294901760
    %2379 = vmatprep.subr.mxu0 %v2378
    %v2380 = vand.u32 %v1437, 4294901760
    %2381 = vmatpush1.msra.mxu0 %v2380
    %v2382 = vand.u32 %v1442, 4294901760
    %2383 = vmatprep.subr.mxu0 %v2382
    %v2384 = vand.u32 %v1441, 4294901760
    %2385 = vmatpush1.msra.mxu0 %v2384
    %v2386 = vand.u32 %v1446, 4294901760
    %2387 = vmatprep.subr.mxu0 %v2386
    %v2388 = vand.u32 %v1445, 4294901760
    %2389 = vmatpush1.msra.mxu0 %v2388
    %v2390 = vand.u32 %v1450, 4294901760
    %2391 = vmatprep.subr.mxu0 %v2390
    %v2392 = vand.u32 %v1449, 4294901760
    %2393 = vmatpush1.msra.mxu0 %v2392
    %v2394 = vand.u32 %v1454, 4294901760
    %2395 = vmatprep.subr.mxu0 %v2394
    %v2396 = vand.u32 %v1453, 4294901760
    %2397 = vmatpush1.msra.mxu0 %v2396
    %2398 = vmatprep.subr.mxu0 0.0
    %2399 = vmatpush1.msra.mxu0 0.0
    %2400 = vmatprep.subr.mxu0 0.0
    %2401 = vmatpush1.msra.mxu0 0.0
    %2402 = vmatprep.subr.mxu0 0.0
    %2403 = vmatpush1.msra.mxu0 0.0
    %2404 = vmatprep.subr.mxu0 0.0
    %2405 = vmatpush1.msra.mxu0 0.0
    %2406 = vmatprep.subr.mxu0 0.0
    %2407 = vmatpush1.msra.mxu0 0.0
    %2408 = vmatprep.subr.mxu0 0.0
    %2409 = vmatpush1.msra.mxu0 0.0
    %2410 = vmatprep.subr.mxu0 0.0
    %2411 = vmatpush1.msra.mxu0 0.0
    %2412 = vmatprep.subr.mxu0 0.0
    %2413 = vmatpush1.msra.mxu0 0.0
    %2414 = vmatprep.subr.mxu0 0.0
    %2415 = vmatpush1.msra.mxu0 0.0
    %2416 = vmatprep.subr.mxu0 0.0
    %2417 = vmatpush1.msra.mxu0 0.0
    %2418 = vmatprep.subr.mxu0 0.0
    %2419 = vmatpush1.msra.mxu0 0.0
    %2420 = vmatprep.subr.mxu0 0.0
    %2421 = vmatpush1.msra.mxu0 0.0
    %2422 = vmatprep.subr.mxu0 0.0
    %2423 = vmatpush1.msra.mxu0 0.0
    %2424 = vmatprep.subr.mxu0 0.0
    %2425 = vmatpush1.msra.mxu0 0.0
    %2426 = vmatprep.subr.mxu0 0.0
    %2427 = vmatpush1.msra.mxu0 0.0
    %2428 = vmatprep.subr.mxu0 0.0
    %2429 = vmatpush1.msra.mxu0 0.0
    %2430 = vmatprep.mubr.f32.mxu0 0.0
    %v2431 = vand.u32 %v1389, 4294901760
    %2432 = vmatmul.mubr.f32.gmra.mrb[0].mxu0 %v2431
    %v2433 = vpop.f32.mrb[0].mxu0
    %v2434 = vadd.f32 %v2309, %v2433
    %v2435 = vpop.f32.mrb[0].mxu0
    %v2436 = vadd.f32 %v2311, %v2435
    %2437 = vmatprep.mubr.f32.mxu0 0.0
    %v2438 = vand.u32 %v1390, 4294901760
    %2439 = vmatmul.mubr.f32.gmra.mrb[0].mxu0 %v2438
    %v2440 = vpop.f32.mrb[0].mxu0
    %v2441 = vadd.f32 %v2316, %v2440
    %v2442 = vpop.f32.mrb[0].mxu0
    %v2443 = vadd.f32 %v2318, %v2442
    %2444 = vmatprep.mubr.f32.mxu0 0.0
    %v2445 = vand.u32 %v1391, 4294901760
    %2446 = vmatmul.mubr.f32.gmra.mrb[0].mxu0 %v2445
    %v2447 = vpop.f32.mrb[0].mxu0
    %v2448 = vadd.f32 %v2323, %v2447
    %v2449 = vpop.f32.mrb[0].mxu0
    %v2450 = vadd.f32 %v2325, %v2449
    %2451 = vmatprep.mubr.f32.mxu0 0.0
    %v2452 = vand.u32 %v1392, 4294901760
    %2453 = vmatmul.mubr.f32.gmra.mrb[0].mxu0 %v2452
    %v2454 = vpop.f32.mrb[0].mxu0
    %v2455 = vadd.f32 %v2330, %v2454
    %v2456 = vpop.f32.mrb[0].mxu0
    %v2457 = vadd.f32 %v2332, %v2456
    %2458 = vdwg.mxu0
    %v2459 = vand.u32 %v1396, 4294901760
    %2460 = vmatprep.subr.mxu0 %v2459
    %v2461 = vand.u32 %v1395, 4294901760
    %2462 = vmatpush1.msra.mxu0 %v2461
    %v2463 = vand.u32 %v1400, 4294901760
    %2464 = vmatprep.subr.mxu0 %v2463
    %v2465 = vand.u32 %v1399, 4294901760
    %2466 = vmatpush1.msra.mxu0 %v2465
    %v2467 = vand.u32 %v1404, 4294901760
    %2468 = vmatprep.subr.mxu0 %v2467
    %v2469 = vand.u32 %v1403, 4294901760
    %2470 = vmatpush1.msra.mxu0 %v2469
    %v2471 = vand.u32 %v1408, 4294901760
    %2472 = vmatprep.subr.mxu0 %v2471
    %v2473 = vand.u32 %v1407, 4294901760
    %2474 = vmatpush1.msra.mxu0 %v2473
    %v2475 = vand.u32 %v1412, 4294901760
    %2476 = vmatprep.subr.mxu0 %v2475
    %v2477 = vand.u32 %v1411, 4294901760
    %2478 = vmatpush1.msra.mxu0 %v2477
    %v2479 = vand.u32 %v1416, 4294901760
    %2480 = vmatprep.subr.mxu0 %v2479
    %v2481 = vand.u32 %v1415, 4294901760
    %2482 = vmatpush1.msra.mxu0 %v2481
    %v2483 = vand.u32 %v1420, 4294901760
    %2484 = vmatprep.subr.mxu0 %v2483
    %v2485 = vand.u32 %v1419, 4294901760
    %2486 = vmatpush1.msra.mxu0 %v2485
    %v2487 = vand.u32 %v1424, 4294901760
    %2488 = vmatprep.subr.mxu0 %v2487
    %v2489 = vand.u32 %v1423, 4294901760
    %2490 = vmatpush1.msra.mxu0 %v2489
    %v2491 = vand.u32 %v1428, 4294901760
    %2492 = vmatprep.subr.mxu0 %v2491
    %v2493 = vand.u32 %v1427, 4294901760
    %2494 = vmatpush1.msra.mxu0 %v2493
    %v2495 = vand.u32 %v1432, 4294901760
    %2496 = vmatprep.subr.mxu0 %v2495
    %v2497 = vand.u32 %v1431, 4294901760
    %2498 = vmatpush1.msra.mxu0 %v2497
    %v2499 = vand.u32 %v1436, 4294901760
    %2500 = vmatprep.subr.mxu0 %v2499
    %v2501 = vand.u32 %v1435, 4294901760
    %2502 = vmatpush1.msra.mxu0 %v2501
    %v2503 = vand.u32 %v1440, 4294901760
    %2504 = vmatprep.subr.mxu0 %v2503
    %v2505 = vand.u32 %v1439, 4294901760
    %2506 = vmatpush1.msra.mxu0 %v2505
    %v2507 = vand.u32 %v1444, 4294901760
    %2508 = vmatprep.subr.mxu0 %v2507
    %v2509 = vand.u32 %v1443, 4294901760
    %2510 = vmatpush1.msra.mxu0 %v2509
    %v2511 = vand.u32 %v1448, 4294901760
    %2512 = vmatprep.subr.mxu0 %v2511
    %v2513 = vand.u32 %v1447, 4294901760
    %2514 = vmatpush1.msra.mxu0 %v2513
    %v2515 = vand.u32 %v1452, 4294901760
    %2516 = vmatprep.subr.mxu0 %v2515
    %v2517 = vand.u32 %v1451, 4294901760
    %2518 = vmatpush1.msra.mxu0 %v2517
    %v2519 = vand.u32 %v1456, 4294901760
    %2520 = vmatprep.subr.mxu0 %v2519
    %v2521 = vand.u32 %v1455, 4294901760
    %2522 = vmatpush1.msra.mxu0 %v2521
    %2523 = vmatprep.subr.mxu0 0.0
    %2524 = vmatpush1.msra.mxu0 0.0
    %2525 = vmatprep.subr.mxu0 0.0
    %2526 = vmatpush1.msra.mxu0 0.0
    %2527 = vmatprep.subr.mxu0 0.0
    %2528 = vmatpush1.msra.mxu0 0.0
    %2529 = vmatprep.subr.mxu0 0.0
    %2530 = vmatpush1.msra.mxu0 0.0
    %2531 = vmatprep.subr.mxu0 0.0
    %2532 = vmatpush1.msra.mxu0 0.0
    %2533 = vmatprep.subr.mxu0 0.0
    %2534 = vmatpush1.msra.mxu0 0.0
    %2535 = vmatprep.subr.mxu0 0.0
    %2536 = vmatpush1.msra.mxu0 0.0
    %2537 = vmatprep.subr.mxu0 0.0
    %2538 = vmatpush1.msra.mxu0 0.0
    %2539 = vmatprep.subr.mxu0 0.0
    %2540 = vmatpush1.msra.mxu0 0.0
    %2541 = vmatprep.subr.mxu0 0.0
    %2542 = vmatpush1.msra.mxu0 0.0
    %2543 = vmatprep.subr.mxu0 0.0
    %2544 = vmatpush1.msra.mxu0 0.0
    %2545 = vmatprep.subr.mxu0 0.0
    %2546 = vmatpush1.msra.mxu0 0.0
    %2547 = vmatprep.subr.mxu0 0.0
    %2548 = vmatpush1.msra.mxu0 0.0
    %2549 = vmatprep.subr.mxu0 0.0
    %2550 = vmatpush1.msra.mxu0 0.0
    %2551 = vmatprep.subr.mxu0 0.0
    %2552 = vmatpush1.msra.mxu0 0.0
    %2553 = vmatprep.subr.mxu0 0.0
    %2554 = vmatpush1.msra.mxu0 0.0
    %2555 = vmatprep.mubr.f32.mxu0 0.0
    %v2556 = vand.u32 %v1389, 4294901760
    %v2557 = vsub.f32 %v1389, %v2556
    %v2558 = vand.u32 %v2557, 4294901760
    %v2559 = vsub.f32 %v2557, %v2558
    %v2560 = vand.u32 %v2559, 4294901760
    %2561 = vmatmul.mubr.f32.gmra.mrb[0].mxu0 %v2560
    %v2562 = vpop.f32.mrb[0].mxu0
    %v2563 = vadd.f32 0.0, %v2562
    %v2564 = vpop.f32.mrb[0].mxu0
    %v2565 = vadd.f32 0.0, %v2564
    %2566 = vmatprep.mubr.f32.mxu0 0.0
    %v2567 = vand.u32 %v1390, 4294901760
    %v2568 = vsub.f32 %v1390, %v2567
    %v2569 = vand.u32 %v2568, 4294901760
    %v2570 = vsub.f32 %v2568, %v2569
    %v2571 = vand.u32 %v2570, 4294901760
    %2572 = vmatmul.mubr.f32.gmra.mrb[0].mxu0 %v2571
    %v2573 = vpop.f32.mrb[0].mxu0
    %v2574 = vadd.f32 0.0, %v2573
    %v2575 = vpop.f32.mrb[0].mxu0
    %v2576 = vadd.f32 0.0, %v2575
    %2577 = vmatprep.mubr.f32.mxu0 0.0
    %v2578 = vand.u32 %v1391, 4294901760
    %v2579 = vsub.f32 %v1391, %v2578
    %v2580 = vand.u32 %v2579, 4294901760
    %v2581 = vsub.f32 %v2579, %v2580
    %v2582 = vand.u32 %v2581, 4294901760
    %2583 = vmatmul.mubr.f32.gmra.mrb[0].mxu0 %v2582
    %v2584 = vpop.f32.mrb[0].mxu0
    %v2585 = vadd.f32 0.0, %v2584
    %v2586 = vpop.f32.mrb[0].mxu0
    %v2587 = vadd.f32 0.0, %v2586
    %2588 = vmatprep.mubr.f32.mxu0 0.0
    %v2589 = vand.u32 %v1392, 4294901760
    %v2590 = vsub.f32 %v1392, %v2589
    %v2591 = vand.u32 %v2590, 4294901760
    %v2592 = vsub.f32 %v2590, %v2591
    %v2593 = vand.u32 %v2592, 4294901760
    %2594 = vmatmul.mubr.f32.gmra.mrb[0].mxu0 %v2593
    %v2595 = vpop.f32.mrb[0].mxu0
    %v2596 = vadd.f32 0.0, %v2595
    %v2597 = vpop.f32.mrb[0].mxu0
    %v2598 = vadd.f32 0.0, %v2597
    %2599 = vdwg.mxu0
    %v2600 = vand.u32 %v1396, 4294901760
    %v2601 = vsub.f32 %v1396, %v2600
    %v2602 = vand.u32 %v2601, 4294901760
    %v2603 = vsub.f32 %v2601, %v2602
    %v2604 = vand.u32 %v2603, 4294901760
    %2605 = vmatprep.subr.mxu0 %v2604
    %v2606 = vand.u32 %v1395, 4294901760
    %v2607 = vsub.f32 %v1395, %v2606
    %v2608 = vand.u32 %v2607, 4294901760
    %v2609 = vsub.f32 %v2607, %v2608
    %v2610 = vand.u32 %v2609, 4294901760
    %2611 = vmatpush1.msra.mxu0 %v2610
    %v2612 = vand.u32 %v1400, 4294901760
    %v2613 = vsub.f32 %v1400, %v2612
    %v2614 = vand.u32 %v2613, 4294901760
    %v2615 = vsub.f32 %v2613, %v2614
    %v2616 = vand.u32 %v2615, 4294901760
    %2617 = vmatprep.subr.mxu0 %v2616
    %v2618 = vand.u32 %v1399, 4294901760
    %v2619 = vsub.f32 %v1399, %v2618
    %v2620 = vand.u32 %v2619, 4294901760
    %v2621 = vsub.f32 %v2619, %v2620
    %v2622 = vand.u32 %v2621, 4294901760
    %2623 = vmatpush1.msra.mxu0 %v2622
    %v2624 = vand.u32 %v1404, 4294901760
    %v2625 = vsub.f32 %v1404, %v2624
    %v2626 = vand.u32 %v2625, 4294901760
    %v2627 = vsub.f32 %v2625, %v2626
    %v2628 = vand.u32 %v2627, 4294901760
    %2629 = vmatprep.subr.mxu0 %v2628
    %v2630 = vand.u32 %v1403, 4294901760
    %v2631 = vsub.f32 %v1403, %v2630
    %v2632 = vand.u32 %v2631, 4294901760
    %v2633 = vsub.f32 %v2631, %v2632
    %v2634 = vand.u32 %v2633, 4294901760
    %2635 = vmatpush1.msra.mxu0 %v2634
    %v2636 = vand.u32 %v1408, 4294901760
    %v2637 = vsub.f32 %v1408, %v2636
    %v2638 = vand.u32 %v2637, 4294901760
    %v2639 = vsub.f32 %v2637, %v2638
    %v2640 = vand.u32 %v2639, 4294901760
    %2641 = vmatprep.subr.mxu0 %v2640
    %v2642 = vand.u32 %v1407, 4294901760
    %v2643 = vsub.f32 %v1407, %v2642
    %v2644 = vand.u32 %v2643, 4294901760
    %v2645 = vsub.f32 %v2643, %v2644
    %v2646 = vand.u32 %v2645, 4294901760
    %2647 = vmatpush1.msra.mxu0 %v2646
    %v2648 = vand.u32 %v1412, 4294901760
    %v2649 = vsub.f32 %v1412, %v2648
    %v2650 = vand.u32 %v2649, 4294901760
    %v2651 = vsub.f32 %v2649, %v2650
    %v2652 = vand.u32 %v2651, 4294901760
    %2653 = vmatprep.subr.mxu0 %v2652
    %v2654 = vand.u32 %v1411, 4294901760
    %v2655 = vsub.f32 %v1411, %v2654
    %v2656 = vand.u32 %v2655, 4294901760
    %v2657 = vsub.f32 %v2655, %v2656
    %v2658 = vand.u32 %v2657, 4294901760
    %2659 = vmatpush1.msra.mxu0 %v2658
    %v2660 = vand.u32 %v1416, 4294901760
    %v2661 = vsub.f32 %v1416, %v2660
    %v2662 = vand.u32 %v2661, 4294901760
    %v2663 = vsub.f32 %v2661, %v2662
    %v2664 = vand.u32 %v2663, 4294901760
    %2665 = vmatprep.subr.mxu0 %v2664
    %v2666 = vand.u32 %v1415, 4294901760
    %v2667 = vsub.f32 %v1415, %v2666
    %v2668 = vand.u32 %v2667, 4294901760
    %v2669 = vsub.f32 %v2667, %v2668
    %v2670 = vand.u32 %v2669, 4294901760
    %2671 = vmatpush1.msra.mxu0 %v2670
    %v2672 = vand.u32 %v1420, 4294901760
    %v2673 = vsub.f32 %v1420, %v2672
    %v2674 = vand.u32 %v2673, 4294901760
    %v2675 = vsub.f32 %v2673, %v2674
    %v2676 = vand.u32 %v2675, 4294901760
    %2677 = vmatprep.subr.mxu0 %v2676
    %v2678 = vand.u32 %v1419, 4294901760
    %v2679 = vsub.f32 %v1419, %v2678
    %v2680 = vand.u32 %v2679, 4294901760
    %v2681 = vsub.f32 %v2679, %v2680
    %v2682 = vand.u32 %v2681, 4294901760
    %2683 = vmatpush1.msra.mxu0 %v2682
    %v2684 = vand.u32 %v1424, 4294901760
    %v2685 = vsub.f32 %v1424, %v2684
    %v2686 = vand.u32 %v2685, 4294901760
    %v2687 = vsub.f32 %v2685, %v2686
    %v2688 = vand.u32 %v2687, 4294901760
    %2689 = vmatprep.subr.mxu0 %v2688
    %v2690 = vand.u32 %v1423, 4294901760
    %v2691 = vsub.f32 %v1423, %v2690
    %v2692 = vand.u32 %v2691, 4294901760
    %v2693 = vsub.f32 %v2691, %v2692
    %v2694 = vand.u32 %v2693, 4294901760
    %2695 = vmatpush1.msra.mxu0 %v2694
    %v2696 = vand.u32 %v1428, 4294901760
    %v2697 = vsub.f32 %v1428, %v2696
    %v2698 = vand.u32 %v2697, 4294901760
    %v2699 = vsub.f32 %v2697, %v2698
    %v2700 = vand.u32 %v2699, 4294901760
    %2701 = vmatprep.subr.mxu0 %v2700
    %v2702 = vand.u32 %v1427, 4294901760
    %v2703 = vsub.f32 %v1427, %v2702
    %v2704 = vand.u32 %v2703, 4294901760
    %v2705 = vsub.f32 %v2703, %v2704
    %v2706 = vand.u32 %v2705, 4294901760
    %2707 = vmatpush1.msra.mxu0 %v2706
    %v2708 = vand.u32 %v1432, 4294901760
    %v2709 = vsub.f32 %v1432, %v2708
    %v2710 = vand.u32 %v2709, 4294901760
    %v2711 = vsub.f32 %v2709, %v2710
    %v2712 = vand.u32 %v2711, 4294901760
    %2713 = vmatprep.subr.mxu0 %v2712
    %v2714 = vand.u32 %v1431, 4294901760
    %v2715 = vsub.f32 %v1431, %v2714
    %v2716 = vand.u32 %v2715, 4294901760
    %v2717 = vsub.f32 %v2715, %v2716
    %v2718 = vand.u32 %v2717, 4294901760
    %2719 = vmatpush1.msra.mxu0 %v2718
    %v2720 = vand.u32 %v1436, 4294901760
    %v2721 = vsub.f32 %v1436, %v2720
    %v2722 = vand.u32 %v2721, 4294901760
    %v2723 = vsub.f32 %v2721, %v2722
    %v2724 = vand.u32 %v2723, 4294901760
    %2725 = vmatprep.subr.mxu0 %v2724
    %v2726 = vand.u32 %v1435, 4294901760
    %v2727 = vsub.f32 %v1435, %v2726
    %v2728 = vand.u32 %v2727, 4294901760
    %v2729 = vsub.f32 %v2727, %v2728
    %v2730 = vand.u32 %v2729, 4294901760
    %2731 = vmatpush1.msra.mxu0 %v2730
    %v2732 = vand.u32 %v1440, 4294901760
    %v2733 = vsub.f32 %v1440, %v2732
    %v2734 = vand.u32 %v2733, 4294901760
    %v2735 = vsub.f32 %v2733, %v2734
    %v2736 = vand.u32 %v2735, 4294901760
    %2737 = vmatprep.subr.mxu0 %v2736
    %v2738 = vand.u32 %v1439, 4294901760
    %v2739 = vsub.f32 %v1439, %v2738
    %v2740 = vand.u32 %v2739, 4294901760
    %v2741 = vsub.f32 %v2739, %v2740
    %v2742 = vand.u32 %v2741, 4294901760
    %2743 = vmatpush1.msra.mxu0 %v2742
    %v2744 = vand.u32 %v1444, 4294901760
    %v2745 = vsub.f32 %v1444, %v2744
    %v2746 = vand.u32 %v2745, 4294901760
    %v2747 = vsub.f32 %v2745, %v2746
    %v2748 = vand.u32 %v2747, 4294901760
    %2749 = vmatprep.subr.mxu0 %v2748
    %v2750 = vand.u32 %v1443, 4294901760
    %v2751 = vsub.f32 %v1443, %v2750
    %v2752 = vand.u32 %v2751, 4294901760
    %v2753 = vsub.f32 %v2751, %v2752
    %v2754 = vand.u32 %v2753, 4294901760
    %2755 = vmatpush1.msra.mxu0 %v2754
    %v2756 = vand.u32 %v1448, 4294901760
    %v2757 = vsub.f32 %v1448, %v2756
    %v2758 = vand.u32 %v2757, 4294901760
    %v2759 = vsub.f32 %v2757, %v2758
    %v2760 = vand.u32 %v2759, 4294901760
    %2761 = vmatprep.subr.mxu0 %v2760
    %v2762 = vand.u32 %v1447, 4294901760
    %v2763 = vsub.f32 %v1447, %v2762
    %v2764 = vand.u32 %v2763, 4294901760
    %v2765 = vsub.f32 %v2763, %v2764
    %v2766 = vand.u32 %v2765, 4294901760
    %2767 = vmatpush1.msra.mxu0 %v2766
    %v2768 = vand.u32 %v1452, 4294901760
    %v2769 = vsub.f32 %v1452, %v2768
    %v2770 = vand.u32 %v2769, 4294901760
    %v2771 = vsub.f32 %v2769, %v2770
    %v2772 = vand.u32 %v2771, 4294901760
    %2773 = vmatprep.subr.mxu0 %v2772
    %v2774 = vand.u32 %v1451, 4294901760
    %v2775 = vsub.f32 %v1451, %v2774
    %v2776 = vand.u32 %v2775, 4294901760
    %v2777 = vsub.f32 %v2775, %v2776
    %v2778 = vand.u32 %v2777, 4294901760
    %2779 = vmatpush1.msra.mxu0 %v2778
    %v2780 = vand.u32 %v1456, 4294901760
    %v2781 = vsub.f32 %v1456, %v2780
    %v2782 = vand.u32 %v2781, 4294901760
    %v2783 = vsub.f32 %v2781, %v2782
    %v2784 = vand.u32 %v2783, 4294901760
    %2785 = vmatprep.subr.mxu0 %v2784
    %v2786 = vand.u32 %v1455, 4294901760
    %v2787 = vsub.f32 %v1455, %v2786
    %v2788 = vand.u32 %v2787, 4294901760
    %v2789 = vsub.f32 %v2787, %v2788
    %v2790 = vand.u32 %v2789, 4294901760
    %2791 = vmatpush1.msra.mxu0 %v2790
    %2792 = vmatprep.subr.mxu0 0.0
    %2793 = vmatpush1.msra.mxu0 0.0
    %2794 = vmatprep.subr.mxu0 0.0
    %2795 = vmatpush1.msra.mxu0 0.0
    %2796 = vmatprep.subr.mxu0 0.0
    %2797 = vmatpush1.msra.mxu0 0.0
    %2798 = vmatprep.subr.mxu0 0.0
    %2799 = vmatpush1.msra.mxu0 0.0
    %2800 = vmatprep.subr.mxu0 0.0
    %2801 = vmatpush1.msra.mxu0 0.0
    %2802 = vmatprep.subr.mxu0 0.0
    %2803 = vmatpush1.msra.mxu0 0.0
    %2804 = vmatprep.subr.mxu0 0.0
    %2805 = vmatpush1.msra.mxu0 0.0
    %2806 = vmatprep.subr.mxu0 0.0
    %2807 = vmatpush1.msra.mxu0 0.0
    %2808 = vmatprep.subr.mxu0 0.0
    %2809 = vmatpush1.msra.mxu0 0.0
    %2810 = vmatprep.subr.mxu0 0.0
    %2811 = vmatpush1.msra.mxu0 0.0
    %2812 = vmatprep.subr.mxu0 0.0
    %2813 = vmatpush1.msra.mxu0 0.0
    %2814 = vmatprep.subr.mxu0 0.0
    %2815 = vmatpush1.msra.mxu0 0.0
    %2816 = vmatprep.subr.mxu0 0.0
    %2817 = vmatpush1.msra.mxu0 0.0
    %2818 = vmatprep.subr.mxu0 0.0
    %2819 = vmatpush1.msra.mxu0 0.0
    %2820 = vmatprep.subr.mxu0 0.0
    %2821 = vmatpush1.msra.mxu0 0.0
    %2822 = vmatprep.subr.mxu0 0.0
    %2823 = vmatpush1.msra.mxu0 0.0
    %2824 = vmatprep.mubr.f32.mxu0 0.0
    %v2825 = vand.u32 %v1389, 4294901760
    %2826 = vmatmul.mubr.f32.gmra.mrb[0].mxu0 %v2825
    %v2827 = vpop.f32.mrb[0].mxu0
    %v2828 = vadd.f32 %v2563, %v2827
    %v2829 = vpop.f32.mrb[0].mxu0
    %v2830 = vadd.f32 %v2565, %v2829
    %2831 = vmatprep.mubr.f32.mxu0 0.0
    %v2832 = vand.u32 %v1390, 4294901760
    %2833 = vmatmul.mubr.f32.gmra.mrb[0].mxu0 %v2832
    %v2834 = vpop.f32.mrb[0].mxu0
    %v2835 = vadd.f32 %v2574, %v2834
    %v2836 = vpop.f32.mrb[0].mxu0
    %v2837 = vadd.f32 %v2576, %v2836
    %2838 = vmatprep.mubr.f32.mxu0 0.0
    %v2839 = vand.u32 %v1391, 4294901760
    %2840 = vmatmul.mubr.f32.gmra.mrb[0].mxu0 %v2839
    %v2841 = vpop.f32.mrb[0].mxu0
    %v2842 = vadd.f32 %v2585, %v2841
    %v2843 = vpop.f32.mrb[0].mxu0
    %v2844 = vadd.f32 %v2587, %v2843
    %2845 = vmatprep.mubr.f32.mxu0 0.0
    %v2846 = vand.u32 %v1392, 4294901760
    %2847 = vmatmul.mubr.f32.gmra.mrb[0].mxu0 %v2846
    %v2848 = vpop.f32.mrb[0].mxu0
    %v2849 = vadd.f32 %v2596, %v2848
    %v2850 = vpop.f32.mrb[0].mxu0
    %v2851 = vadd.f32 %v2598, %v2850
    %2852 = vdwg.mxu0
    %v2853 = vand.u32 %v1396, 4294901760
    %v2854 = vsub.f32 %v1396, %v2853
    %2855 = vmatprep.subr.mxu0 %v2854
    %v2856 = vand.u32 %v1395, 4294901760
    %v2857 = vsub.f32 %v1395, %v2856
    %2858 = vmatpush1.msra.mxu0 %v2857
    %v2859 = vand.u32 %v1400, 4294901760
    %v2860 = vsub.f32 %v1400, %v2859
    %2861 = vmatprep.subr.mxu0 %v2860
    %v2862 = vand.u32 %v1399, 4294901760
    %v2863 = vsub.f32 %v1399, %v2862
    %2864 = vmatpush1.msra.mxu0 %v2863
    %v2865 = vand.u32 %v1404, 4294901760
    %v2866 = vsub.f32 %v1404, %v2865
    %2867 = vmatprep.subr.mxu0 %v2866
    %v2868 = vand.u32 %v1403, 4294901760
    %v2869 = vsub.f32 %v1403, %v2868
    %2870 = vmatpush1.msra.mxu0 %v2869
    %v2871 = vand.u32 %v1408, 4294901760
    %v2872 = vsub.f32 %v1408, %v2871
    %2873 = vmatprep.subr.mxu0 %v2872
    %v2874 = vand.u32 %v1407, 4294901760
    %v2875 = vsub.f32 %v1407, %v2874
    %2876 = vmatpush1.msra.mxu0 %v2875
    %v2877 = vand.u32 %v1412, 4294901760
    %v2878 = vsub.f32 %v1412, %v2877
    %2879 = vmatprep.subr.mxu0 %v2878
    %v2880 = vand.u32 %v1411, 4294901760
    %v2881 = vsub.f32 %v1411, %v2880
    %2882 = vmatpush1.msra.mxu0 %v2881
    %v2883 = vand.u32 %v1416, 4294901760
    %v2884 = vsub.f32 %v1416, %v2883
    %2885 = vmatprep.subr.mxu0 %v2884
    %v2886 = vand.u32 %v1415, 4294901760
    %v2887 = vsub.f32 %v1415, %v2886
    %2888 = vmatpush1.msra.mxu0 %v2887
    %v2889 = vand.u32 %v1420, 4294901760
    %v2890 = vsub.f32 %v1420, %v2889
    %2891 = vmatprep.subr.mxu0 %v2890
    %v2892 = vand.u32 %v1419, 4294901760
    %v2893 = vsub.f32 %v1419, %v2892
    %2894 = vmatpush1.msra.mxu0 %v2893
    %v2895 = vand.u32 %v1424, 4294901760
    %v2896 = vsub.f32 %v1424, %v2895
    %2897 = vmatprep.subr.mxu0 %v2896
    %v2898 = vand.u32 %v1423, 4294901760
    %v2899 = vsub.f32 %v1423, %v2898
    %2900 = vmatpush1.msra.mxu0 %v2899
    %v2901 = vand.u32 %v1428, 4294901760
    %v2902 = vsub.f32 %v1428, %v2901
    %2903 = vmatprep.subr.mxu0 %v2902
    %v2904 = vand.u32 %v1427, 4294901760
    %v2905 = vsub.f32 %v1427, %v2904
    %2906 = vmatpush1.msra.mxu0 %v2905
    %v2907 = vand.u32 %v1432, 4294901760
    %v2908 = vsub.f32 %v1432, %v2907
    %2909 = vmatprep.subr.mxu0 %v2908
    %v2910 = vand.u32 %v1431, 4294901760
    %v2911 = vsub.f32 %v1431, %v2910
    %2912 = vmatpush1.msra.mxu0 %v2911
    %v2913 = vand.u32 %v1436, 4294901760
    %v2914 = vsub.f32 %v1436, %v2913
    %2915 = vmatprep.subr.mxu0 %v2914
    %v2916 = vand.u32 %v1435, 4294901760
    %v2917 = vsub.f32 %v1435, %v2916
    %2918 = vmatpush1.msra.mxu0 %v2917
    %v2919 = vand.u32 %v1440, 4294901760
    %v2920 = vsub.f32 %v1440, %v2919
    %2921 = vmatprep.subr.mxu0 %v2920
    %v2922 = vand.u32 %v1439, 4294901760
    %v2923 = vsub.f32 %v1439, %v2922
    %2924 = vmatpush1.msra.mxu0 %v2923
    %v2925 = vand.u32 %v1444, 4294901760
    %v2926 = vsub.f32 %v1444, %v2925
    %2927 = vmatprep.subr.mxu0 %v2926
    %v2928 = vand.u32 %v1443, 4294901760
    %v2929 = vsub.f32 %v1443, %v2928
    %2930 = vmatpush1.msra.mxu0 %v2929
    %v2931 = vand.u32 %v1448, 4294901760
    %v2932 = vsub.f32 %v1448, %v2931
    %2933 = vmatprep.subr.mxu0 %v2932
    %v2934 = vand.u32 %v1447, 4294901760
    %v2935 = vsub.f32 %v1447, %v2934
    %2936 = vmatpush1.msra.mxu0 %v2935
    %v2937 = vand.u32 %v1452, 4294901760
    %v2938 = vsub.f32 %v1452, %v2937
    %2939 = vmatprep.subr.mxu0 %v2938
    %v2940 = vand.u32 %v1451, 4294901760
    %v2941 = vsub.f32 %v1451, %v2940
    %2942 = vmatpush1.msra.mxu0 %v2941
    %v2943 = vand.u32 %v1456, 4294901760
    %v2944 = vsub.f32 %v1456, %v2943
    %2945 = vmatprep.subr.mxu0 %v2944
    %v2946 = vand.u32 %v1455, 4294901760
    %v2947 = vsub.f32 %v1455, %v2946
    %2948 = vmatpush1.msra.mxu0 %v2947
    %2949 = vmatprep.subr.mxu0 0.0
    %2950 = vmatpush1.msra.mxu0 0.0
    %2951 = vmatprep.subr.mxu0 0.0
    %2952 = vmatpush1.msra.mxu0 0.0
    %2953 = vmatprep.subr.mxu0 0.0
    %2954 = vmatpush1.msra.mxu0 0.0
    %2955 = vmatprep.subr.mxu0 0.0
    %2956 = vmatpush1.msra.mxu0 0.0
    %2957 = vmatprep.subr.mxu0 0.0
    %2958 = vmatpush1.msra.mxu0 0.0
    %2959 = vmatprep.subr.mxu0 0.0
    %2960 = vmatpush1.msra.mxu0 0.0
    %2961 = vmatprep.subr.mxu0 0.0
    %2962 = vmatpush1.msra.mxu0 0.0
    %2963 = vmatprep.subr.mxu0 0.0
    %2964 = vmatpush1.msra.mxu0 0.0
    %2965 = vmatprep.subr.mxu0 0.0
    %2966 = vmatpush1.msra.mxu0 0.0
    %2967 = vmatprep.subr.mxu0 0.0
    %2968 = vmatpush1.msra.mxu0 0.0
    %2969 = vmatprep.subr.mxu0 0.0
    %2970 = vmatpush1.msra.mxu0 0.0
    %2971 = vmatprep.subr.mxu0 0.0
    %2972 = vmatpush1.msra.mxu0 0.0
    %2973 = vmatprep.subr.mxu0 0.0
    %2974 = vmatpush1.msra.mxu0 0.0
    %2975 = vmatprep.subr.mxu0 0.0
    %2976 = vmatpush1.msra.mxu0 0.0
    %2977 = vmatprep.subr.mxu0 0.0
    %2978 = vmatpush1.msra.mxu0 0.0
    %2979 = vmatprep.subr.mxu0 0.0
    %2980 = vmatpush1.msra.mxu0 0.0
    %2981 = vmatprep.mubr.f32.mxu0 0.0
    %v2982 = vand.u32 %v1389, 4294901760
    %v2983 = vsub.f32 %v1389, %v2982
    %2984 = vmatmul.mubr.f32.gmra.mrb[0].mxu0 %v2983
    %v2985 = vpop.f32.mrb[0].mxu0
    %v2986 = vadd.f32 %v2828, %v2985
    %v2987 = vpop.f32.mrb[0].mxu0
    %v2988 = vadd.f32 %v2830, %v2987
    %2989 = vmatprep.mubr.f32.mxu0 0.0
    %v2990 = vand.u32 %v1390, 4294901760
    %v2991 = vsub.f32 %v1390, %v2990
    %2992 = vmatmul.mubr.f32.gmra.mrb[0].mxu0 %v2991
    %v2993 = vpop.f32.mrb[0].mxu0
    %v2994 = vadd.f32 %v2835, %v2993
    %v2995 = vpop.f32.mrb[0].mxu0
    %v2996 = vadd.f32 %v2837, %v2995
    %2997 = vmatprep.mubr.f32.mxu0 0.0
    %v2998 = vand.u32 %v1391, 4294901760
    %v2999 = vsub.f32 %v1391, %v2998
    %3000 = vmatmul.mubr.f32.gmra.mrb[0].mxu0 %v2999
    %v3001 = vpop.f32.mrb[0].mxu0
    %v3002 = vadd.f32 %v2842, %v3001
    %v3003 = vpop.f32.mrb[0].mxu0
    %v3004 = vadd.f32 %v2844, %v3003
    %3005 = vmatprep.mubr.f32.mxu0 0.0
    %v3006 = vand.u32 %v1392, 4294901760
    %v3007 = vsub.f32 %v1392, %v3006
    %3008 = vmatmul.mubr.f32.gmra.mrb[0].mxu0 %v3007
    %v3009 = vpop.f32.mrb[0].mxu0
    %v3010 = vadd.f32 %v2849, %v3009
    %v3011 = vpop.f32.mrb[0].mxu0
    %v3012 = vadd.f32 %v2851, %v3011
    %3013 = vdwg.mxu0
    %v3014 = vand.u32 %v1396, 4294901760
    %3015 = vmatprep.subr.mxu0 %v3014
    %v3016 = vand.u32 %v1395, 4294901760
    %3017 = vmatpush1.msra.mxu0 %v3016
    %v3018 = vand.u32 %v1400, 4294901760
    %3019 = vmatprep.subr.mxu0 %v3018
    %v3020 = vand.u32 %v1399, 4294901760
    %3021 = vmatpush1.msra.mxu0 %v3020
    %v3022 = vand.u32 %v1404, 4294901760
    %3023 = vmatprep.subr.mxu0 %v3022
    %v3024 = vand.u32 %v1403, 4294901760
    %3025 = vmatpush1.msra.mxu0 %v3024
    %v3026 = vand.u32 %v1408, 4294901760
    %3027 = vmatprep.subr.mxu0 %v3026
    %v3028 = vand.u32 %v1407, 4294901760
    %3029 = vmatpush1.msra.mxu0 %v3028
    %v3030 = vand.u32 %v1412, 4294901760
    %3031 = vmatprep.subr.mxu0 %v3030
    %v3032 = vand.u32 %v1411, 4294901760
    %3033 = vmatpush1.msra.mxu0 %v3032
    %v3034 = vand.u32 %v1416, 4294901760
    %3035 = vmatprep.subr.mxu0 %v3034
    %v3036 = vand.u32 %v1415, 4294901760
    %3037 = vmatpush1.msra.mxu0 %v3036
    %v3038 = vand.u32 %v1420, 4294901760
    %3039 = vmatprep.subr.mxu0 %v3038
    %v3040 = vand.u32 %v1419, 4294901760
    %3041 = vmatpush1.msra.mxu0 %v3040
    %v3042 = vand.u32 %v1424, 4294901760
    %3043 = vmatprep.subr.mxu0 %v3042
    %v3044 = vand.u32 %v1423, 4294901760
    %3045 = vmatpush1.msra.mxu0 %v3044
    %v3046 = vand.u32 %v1428, 4294901760
    %3047 = vmatprep.subr.mxu0 %v3046
    %v3048 = vand.u32 %v1427, 4294901760
    %3049 = vmatpush1.msra.mxu0 %v3048
    %v3050 = vand.u32 %v1432, 4294901760
    %3051 = vmatprep.subr.mxu0 %v3050
    %v3052 = vand.u32 %v1431, 4294901760
    %3053 = vmatpush1.msra.mxu0 %v3052
    %v3054 = vand.u32 %v1436, 4294901760
    %3055 = vmatprep.subr.mxu0 %v3054
    %v3056 = vand.u32 %v1435, 4294901760
    %3057 = vmatpush1.msra.mxu0 %v3056
    %v3058 = vand.u32 %v1440, 4294901760
    %3059 = vmatprep.subr.mxu0 %v3058
    %v3060 = vand.u32 %v1439, 4294901760
    %3061 = vmatpush1.msra.mxu0 %v3060
    %v3062 = vand.u32 %v1444, 4294901760
    %3063 = vmatprep.subr.mxu0 %v3062
    %v3064 = vand.u32 %v1443, 4294901760
    %3065 = vmatpush1.msra.mxu0 %v3064
    %v3066 = vand.u32 %v1448, 4294901760
    %3067 = vmatprep.subr.mxu0 %v3066
    %v3068 = vand.u32 %v1447, 4294901760
    %3069 = vmatpush1.msra.mxu0 %v3068
    %v3070 = vand.u32 %v1452, 4294901760
    %3071 = vmatprep.subr.mxu0 %v3070
    %v3072 = vand.u32 %v1451, 4294901760
    %3073 = vmatpush1.msra.mxu0 %v3072
    %v3074 = vand.u32 %v1456, 4294901760
    %3075 = vmatprep.subr.mxu0 %v3074
    %v3076 = vand.u32 %v1455, 4294901760
    %3077 = vmatpush1.msra.mxu0 %v3076
    %3078 = vmatprep.subr.mxu0 0.0
    %3079 = vmatpush1.msra.mxu0 0.0
    %3080 = vmatprep.subr.mxu0 0.0
    %3081 = vmatpush1.msra.mxu0 0.0
    %3082 = vmatprep.subr.mxu0 0.0
    %3083 = vmatpush1.msra.mxu0 0.0
    %3084 = vmatprep.subr.mxu0 0.0
    %3085 = vmatpush1.msra.mxu0 0.0
    %3086 = vmatprep.subr.mxu0 0.0
    %3087 = vmatpush1.msra.mxu0 0.0
    %3088 = vmatprep.subr.mxu0 0.0
    %3089 = vmatpush1.msra.mxu0 0.0
    %3090 = vmatprep.subr.mxu0 0.0
    %3091 = vmatpush1.msra.mxu0 0.0
    %3092 = vmatprep.subr.mxu0 0.0
    %3093 = vmatpush1.msra.mxu0 0.0
    %3094 = vmatprep.subr.mxu0 0.0
    %3095 = vmatpush1.msra.mxu0 0.0
    %3096 = vmatprep.subr.mxu0 0.0
    %3097 = vmatpush1.msra.mxu0 0.0
    %3098 = vmatprep.subr.mxu0 0.0
    %3099 = vmatpush1.msra.mxu0 0.0
    %3100 = vmatprep.subr.mxu0 0.0
    %3101 = vmatpush1.msra.mxu0 0.0
    %3102 = vmatprep.subr.mxu0 0.0
    %3103 = vmatpush1.msra.mxu0 0.0
    %3104 = vmatprep.subr.mxu0 0.0
    %3105 = vmatpush1.msra.mxu0 0.0
    %3106 = vmatprep.subr.mxu0 0.0
    %3107 = vmatpush1.msra.mxu0 0.0
    %3108 = vmatprep.subr.mxu0 0.0
    %3109 = vmatpush1.msra.mxu0 0.0
    %3110 = vmatprep.mubr.f32.mxu0 0.0
    %v3111 = vand.u32 %v1389, 4294901760
    %v3112 = vsub.f32 %v1389, %v3111
    %v3113 = vand.u32 %v3112, 4294901760
    %3114 = vmatmul.mubr.f32.gmra.mrb[0].mxu0 %v3113
    %v3115 = vpop.f32.mrb[0].mxu0
    %v3116 = vadd.f32 %v2986, %v3115
    %v3117 = vpop.f32.mrb[0].mxu0
    %v3118 = vadd.f32 %v2988, %v3117
    %3119 = vmatprep.mubr.f32.mxu0 0.0
    %v3120 = vand.u32 %v1390, 4294901760
    %v3121 = vsub.f32 %v1390, %v3120
    %v3122 = vand.u32 %v3121, 4294901760
    %3123 = vmatmul.mubr.f32.gmra.mrb[0].mxu0 %v3122
    %v3124 = vpop.f32.mrb[0].mxu0
    %v3125 = vadd.f32 %v2994, %v3124
    %v3126 = vpop.f32.mrb[0].mxu0
    %v3127 = vadd.f32 %v2996, %v3126
    %3128 = vmatprep.mubr.f32.mxu0 0.0
    %v3129 = vand.u32 %v1391, 4294901760
    %v3130 = vsub.f32 %v1391, %v3129
    %v3131 = vand.u32 %v3130, 4294901760
    %3132 = vmatmul.mubr.f32.gmra.mrb[0].mxu0 %v3131
    %v3133 = vpop.f32.mrb[0].mxu0
    %v3134 = vadd.f32 %v3002, %v3133
    %v3135 = vpop.f32.mrb[0].mxu0
    %v3136 = vadd.f32 %v3004, %v3135
    %3137 = vmatprep.mubr.f32.mxu0 0.0
    %v3138 = vand.u32 %v1392, 4294901760
    %v3139 = vsub.f32 %v1392, %v3138
    %v3140 = vand.u32 %v3139, 4294901760
    %3141 = vmatmul.mubr.f32.gmra.mrb[0].mxu0 %v3140
    %v3142 = vpop.f32.mrb[0].mxu0
    %v3143 = vadd.f32 %v3010, %v3142
    %v3144 = vpop.f32.mrb[0].mxu0
    %v3145 = vadd.f32 %v3012, %v3144
    %3146 = vdwg.mxu0
    %v3147 = vand.u32 %v1396, 4294901760
    %v3148 = vsub.f32 %v1396, %v3147
    %v3149 = vand.u32 %v3148, 4294901760
    %3150 = vmatprep.subr.mxu0 %v3149
    %v3151 = vand.u32 %v1395, 4294901760
    %v3152 = vsub.f32 %v1395, %v3151
    %v3153 = vand.u32 %v3152, 4294901760
    %3154 = vmatpush1.msra.mxu0 %v3153
    %v3155 = vand.u32 %v1400, 4294901760
    %v3156 = vsub.f32 %v1400, %v3155
    %v3157 = vand.u32 %v3156, 4294901760
    %3158 = vmatprep.subr.mxu0 %v3157
    %v3159 = vand.u32 %v1399, 4294901760
    %v3160 = vsub.f32 %v1399, %v3159
    %v3161 = vand.u32 %v3160, 4294901760
    %3162 = vmatpush1.msra.mxu0 %v3161
    %v3163 = vand.u32 %v1404, 4294901760
    %v3164 = vsub.f32 %v1404, %v3163
    %v3165 = vand.u32 %v3164, 4294901760
    %3166 = vmatprep.subr.mxu0 %v3165
    %v3167 = vand.u32 %v1403, 4294901760
    %v3168 = vsub.f32 %v1403, %v3167
    %v3169 = vand.u32 %v3168, 4294901760
    %3170 = vmatpush1.msra.mxu0 %v3169
    %v3171 = vand.u32 %v1408, 4294901760
    %v3172 = vsub.f32 %v1408, %v3171
    %v3173 = vand.u32 %v3172, 4294901760
    %3174 = vmatprep.subr.mxu0 %v3173
    %v3175 = vand.u32 %v1407, 4294901760
    %v3176 = vsub.f32 %v1407, %v3175
    %v3177 = vand.u32 %v3176, 4294901760
    %3178 = vmatpush1.msra.mxu0 %v3177
    %v3179 = vand.u32 %v1412, 4294901760
    %v3180 = vsub.f32 %v1412, %v3179
    %v3181 = vand.u32 %v3180, 4294901760
    %3182 = vmatprep.subr.mxu0 %v3181
    %v3183 = vand.u32 %v1411, 4294901760
    %v3184 = vsub.f32 %v1411, %v3183
    %v3185 = vand.u32 %v3184, 4294901760
    %3186 = vmatpush1.msra.mxu0 %v3185
    %v3187 = vand.u32 %v1416, 4294901760
    %v3188 = vsub.f32 %v1416, %v3187
    %v3189 = vand.u32 %v3188, 4294901760
    %3190 = vmatprep.subr.mxu0 %v3189
    %v3191 = vand.u32 %v1415, 4294901760
    %v3192 = vsub.f32 %v1415, %v3191
    %v3193 = vand.u32 %v3192, 4294901760
    %3194 = vmatpush1.msra.mxu0 %v3193
    %v3195 = vand.u32 %v1420, 4294901760
    %v3196 = vsub.f32 %v1420, %v3195
    %v3197 = vand.u32 %v3196, 4294901760
    %3198 = vmatprep.subr.mxu0 %v3197
    %v3199 = vand.u32 %v1419, 4294901760
    %v3200 = vsub.f32 %v1419, %v3199
    %v3201 = vand.u32 %v3200, 4294901760
    %3202 = vmatpush1.msra.mxu0 %v3201
    %v3203 = vand.u32 %v1424, 4294901760
    %v3204 = vsub.f32 %v1424, %v3203
    %v3205 = vand.u32 %v3204, 4294901760
    %3206 = vmatprep.subr.mxu0 %v3205
    %v3207 = vand.u32 %v1423, 4294901760
    %v3208 = vsub.f32 %v1423, %v3207
    %v3209 = vand.u32 %v3208, 4294901760
    %3210 = vmatpush1.msra.mxu0 %v3209
    %v3211 = vand.u32 %v1428, 4294901760
    %v3212 = vsub.f32 %v1428, %v3211
    %v3213 = vand.u32 %v3212, 4294901760
    %3214 = vmatprep.subr.mxu0 %v3213
    %v3215 = vand.u32 %v1427, 4294901760
    %v3216 = vsub.f32 %v1427, %v3215
    %v3217 = vand.u32 %v3216, 4294901760
    %3218 = vmatpush1.msra.mxu0 %v3217
    %v3219 = vand.u32 %v1432, 4294901760
    %v3220 = vsub.f32 %v1432, %v3219
    %v3221 = vand.u32 %v3220, 4294901760
    %3222 = vmatprep.subr.mxu0 %v3221
    %v3223 = vand.u32 %v1431, 4294901760
    %v3224 = vsub.f32 %v1431, %v3223
    %v3225 = vand.u32 %v3224, 4294901760
    %3226 = vmatpush1.msra.mxu0 %v3225
    %v3227 = vand.u32 %v1436, 4294901760
    %v3228 = vsub.f32 %v1436, %v3227
    %v3229 = vand.u32 %v3228, 4294901760
    %3230 = vmatprep.subr.mxu0 %v3229
    %v3231 = vand.u32 %v1435, 4294901760
    %v3232 = vsub.f32 %v1435, %v3231
    %v3233 = vand.u32 %v3232, 4294901760
    %3234 = vmatpush1.msra.mxu0 %v3233
    %v3235 = vand.u32 %v1440, 4294901760
    %v3236 = vsub.f32 %v1440, %v3235
    %v3237 = vand.u32 %v3236, 4294901760
    %3238 = vmatprep.subr.mxu0 %v3237
    %v3239 = vand.u32 %v1439, 4294901760
    %v3240 = vsub.f32 %v1439, %v3239
    %v3241 = vand.u32 %v3240, 4294901760
    %3242 = vmatpush1.msra.mxu0 %v3241
    %v3243 = vand.u32 %v1444, 4294901760
    %v3244 = vsub.f32 %v1444, %v3243
    %v3245 = vand.u32 %v3244, 4294901760
    %3246 = vmatprep.subr.mxu0 %v3245
    %v3247 = vand.u32 %v1443, 4294901760
    %v3248 = vsub.f32 %v1443, %v3247
    %v3249 = vand.u32 %v3248, 4294901760
    %3250 = vmatpush1.msra.mxu0 %v3249
    %v3251 = vand.u32 %v1448, 4294901760
    %v3252 = vsub.f32 %v1448, %v3251
    %v3253 = vand.u32 %v3252, 4294901760
    %3254 = vmatprep.subr.mxu0 %v3253
    %v3255 = vand.u32 %v1447, 4294901760
    %v3256 = vsub.f32 %v1447, %v3255
    %v3257 = vand.u32 %v3256, 4294901760
    %3258 = vmatpush1.msra.mxu0 %v3257
    %v3259 = vand.u32 %v1452, 4294901760
    %v3260 = vsub.f32 %v1452, %v3259
    %v3261 = vand.u32 %v3260, 4294901760
    %3262 = vmatprep.subr.mxu0 %v3261
    %v3263 = vand.u32 %v1451, 4294901760
    %v3264 = vsub.f32 %v1451, %v3263
    %v3265 = vand.u32 %v3264, 4294901760
    %3266 = vmatpush1.msra.mxu0 %v3265
    %v3267 = vand.u32 %v1456, 4294901760
    %v3268 = vsub.f32 %v1456, %v3267
    %v3269 = vand.u32 %v3268, 4294901760
    %3270 = vmatprep.subr.mxu0 %v3269
    %v3271 = vand.u32 %v1455, 4294901760
    %v3272 = vsub.f32 %v1455, %v3271
    %v3273 = vand.u32 %v3272, 4294901760
    %3274 = vmatpush1.msra.mxu0 %v3273
    %3275 = vmatprep.subr.mxu0 0.0
    %3276 = vmatpush1.msra.mxu0 0.0
    %3277 = vmatprep.subr.mxu0 0.0
    %3278 = vmatpush1.msra.mxu0 0.0
    %3279 = vmatprep.subr.mxu0 0.0
    %3280 = vmatpush1.msra.mxu0 0.0
    %3281 = vmatprep.subr.mxu0 0.0
    %3282 = vmatpush1.msra.mxu0 0.0
    %3283 = vmatprep.subr.mxu0 0.0
    %3284 = vmatpush1.msra.mxu0 0.0
    %3285 = vmatprep.subr.mxu0 0.0
    %3286 = vmatpush1.msra.mxu0 0.0
    %3287 = vmatprep.subr.mxu0 0.0
    %3288 = vmatpush1.msra.mxu0 0.0
    %3289 = vmatprep.subr.mxu0 0.0
    %3290 = vmatpush1.msra.mxu0 0.0
    %3291 = vmatprep.subr.mxu0 0.0
    %3292 = vmatpush1.msra.mxu0 0.0
    %3293 = vmatprep.subr.mxu0 0.0
    %3294 = vmatpush1.msra.mxu0 0.0
    %3295 = vmatprep.subr.mxu0 0.0
    %3296 = vmatpush1.msra.mxu0 0.0
    %3297 = vmatprep.subr.mxu0 0.0
    %3298 = vmatpush1.msra.mxu0 0.0
    %3299 = vmatprep.subr.mxu0 0.0
    %3300 = vmatpush1.msra.mxu0 0.0
    %3301 = vmatprep.subr.mxu0 0.0
    %3302 = vmatpush1.msra.mxu0 0.0
    %3303 = vmatprep.subr.mxu0 0.0
    %3304 = vmatpush1.msra.mxu0 0.0
    %3305 = vmatprep.subr.mxu0 0.0
    %3306 = vmatpush1.msra.mxu0 0.0
    %3307 = vmatprep.mubr.f32.mxu0 0.0
    %v3308 = vand.u32 %v1389, 4294901760
    %3309 = vmatmul.mubr.f32.gmra.mrb[0].mxu0 %v3308
    %v3310 = vpop.f32.mrb[0].mxu0
    %v3311 = vadd.f32 %v3116, %v3310
    %v3312 = vpop.f32.mrb[0].mxu0
    %v3313 = vadd.f32 %v3118, %v3312
    %3314 = vmatprep.mubr.f32.mxu0 0.0
    %v3315 = vand.u32 %v1390, 4294901760
    %3316 = vmatmul.mubr.f32.gmra.mrb[0].mxu0 %v3315
    %v3317 = vpop.f32.mrb[0].mxu0
    %v3318 = vadd.f32 %v3125, %v3317
    %v3319 = vpop.f32.mrb[0].mxu0
    %v3320 = vadd.f32 %v3127, %v3319
    %3321 = vmatprep.mubr.f32.mxu0 0.0
    %v3322 = vand.u32 %v1391, 4294901760
    %3323 = vmatmul.mubr.f32.gmra.mrb[0].mxu0 %v3322
    %v3324 = vpop.f32.mrb[0].mxu0
    %v3325 = vadd.f32 %v3134, %v3324
    %v3326 = vpop.f32.mrb[0].mxu0
    %v3327 = vadd.f32 %v3136, %v3326
    %3328 = vmatprep.mubr.f32.mxu0 0.0
    %v3329 = vand.u32 %v1392, 4294901760
    %3330 = vmatmul.mubr.f32.gmra.mrb[0].mxu0 %v3329
    %v3331 = vpop.f32.mrb[0].mxu0
    %v3332 = vadd.f32 %v3143, %v3331
    %v3333 = vpop.f32.mrb[0].mxu0
    %v3334 = vadd.f32 %v3145, %v3333
    %3335 = vdwg.mxu0
    %v3336 = vand.u32 %v1396, 4294901760
    %3337 = vmatprep.subr.mxu0 %v3336
    %v3338 = vand.u32 %v1395, 4294901760
    %3339 = vmatpush1.msra.mxu0 %v3338
    %v3340 = vand.u32 %v1400, 4294901760
    %3341 = vmatprep.subr.mxu0 %v3340
    %v3342 = vand.u32 %v1399, 4294901760
    %3343 = vmatpush1.msra.mxu0 %v3342
    %v3344 = vand.u32 %v1404, 4294901760
    %3345 = vmatprep.subr.mxu0 %v3344
    %v3346 = vand.u32 %v1403, 4294901760
    %3347 = vmatpush1.msra.mxu0 %v3346
    %v3348 = vand.u32 %v1408, 4294901760
    %3349 = vmatprep.subr.mxu0 %v3348
    %v3350 = vand.u32 %v1407, 4294901760
    %3351 = vmatpush1.msra.mxu0 %v3350
    %v3352 = vand.u32 %v1412, 4294901760
    %3353 = vmatprep.subr.mxu0 %v3352
    %v3354 = vand.u32 %v1411, 4294901760
    %3355 = vmatpush1.msra.mxu0 %v3354
    %v3356 = vand.u32 %v1416, 4294901760
    %3357 = vmatprep.subr.mxu0 %v3356
    %v3358 = vand.u32 %v1415, 4294901760
    %3359 = vmatpush1.msra.mxu0 %v3358
    %v3360 = vand.u32 %v1420, 4294901760
    %3361 = vmatprep.subr.mxu0 %v3360
    %v3362 = vand.u32 %v1419, 4294901760
    %3363 = vmatpush1.msra.mxu0 %v3362
    %v3364 = vand.u32 %v1424, 4294901760
    %3365 = vmatprep.subr.mxu0 %v3364
    %v3366 = vand.u32 %v1423, 4294901760
    %3367 = vmatpush1.msra.mxu0 %v3366
    %v3368 = vand.u32 %v1428, 4294901760
    %3369 = vmatprep.subr.mxu0 %v3368
    %v3370 = vand.u32 %v1427, 4294901760
    %3371 = vmatpush1.msra.mxu0 %v3370
    %v3372 = vand.u32 %v1432, 4294901760
    %3373 = vmatprep.subr.mxu0 %v3372
    %v3374 = vand.u32 %v1431, 4294901760
    %3375 = vmatpush1.msra.mxu0 %v3374
    %v3376 = vand.u32 %v1436, 4294901760
    %3377 = vmatprep.subr.mxu0 %v3376
    %v3378 = vand.u32 %v1435, 4294901760
    %3379 = vmatpush1.msra.mxu0 %v3378
    %v3380 = vand.u32 %v1440, 4294901760
    %3381 = vmatprep.subr.mxu0 %v3380
    %v3382 = vand.u32 %v1439, 4294901760
    %3383 = vmatpush1.msra.mxu0 %v3382
    %v3384 = vand.u32 %v1444, 4294901760
    %3385 = vmatprep.subr.mxu0 %v3384
    %v3386 = vand.u32 %v1443, 4294901760
    %3387 = vmatpush1.msra.mxu0 %v3386
    %v3388 = vand.u32 %v1448, 4294901760
    %3389 = vmatprep.subr.mxu0 %v3388
    %v3390 = vand.u32 %v1447, 4294901760
    %3391 = vmatpush1.msra.mxu0 %v3390
    %v3392 = vand.u32 %v1452, 4294901760
    %3393 = vmatprep.subr.mxu0 %v3392
    %v3394 = vand.u32 %v1451, 4294901760
    %3395 = vmatpush1.msra.mxu0 %v3394
    %v3396 = vand.u32 %v1456, 4294901760
    %3397 = vmatprep.subr.mxu0 %v3396
    %v3398 = vand.u32 %v1455, 4294901760
    %3399 = vmatpush1.msra.mxu0 %v3398
    %3400 = vmatprep.subr.mxu0 0.0
    %3401 = vmatpush1.msra.mxu0 0.0
    %3402 = vmatprep.subr.mxu0 0.0
    %3403 = vmatpush1.msra.mxu0 0.0
    %3404 = vmatprep.subr.mxu0 0.0
    %3405 = vmatpush1.msra.mxu0 0.0
    %3406 = vmatprep.subr.mxu0 0.0
    %3407 = vmatpush1.msra.mxu0 0.0
    %3408 = vmatprep.subr.mxu0 0.0
    %3409 = vmatpush1.msra.mxu0 0.0
    %3410 = vmatprep.subr.mxu0 0.0
    %3411 = vmatpush1.msra.mxu0 0.0
    %3412 = vmatprep.subr.mxu0 0.0
    %3413 = vmatpush1.msra.mxu0 0.0
    %3414 = vmatprep.subr.mxu0 0.0
    %3415 = vmatpush1.msra.mxu0 0.0
    %3416 = vmatprep.subr.mxu0 0.0
    %3417 = vmatpush1.msra.mxu0 0.0
    %3418 = vmatprep.subr.mxu0 0.0
    %3419 = vmatpush1.msra.mxu0 0.0
    %3420 = vmatprep.subr.mxu0 0.0
    %3421 = vmatpush1.msra.mxu0 0.0
    %3422 = vmatprep.subr.mxu0 0.0
    %3423 = vmatpush1.msra.mxu0 0.0
    %3424 = vmatprep.subr.mxu0 0.0
    %3425 = vmatpush1.msra.mxu0 0.0
    %3426 = vmatprep.subr.mxu0 0.0
    %3427 = vmatpush1.msra.mxu0 0.0
    %3428 = vmatprep.subr.mxu0 0.0
    %3429 = vmatpush1.msra.mxu0 0.0
    %3430 = vmatprep.subr.mxu0 0.0
    %3431 = vmatpush1.msra.mxu0 0.0
    %3432 = vmatprep.mubr.f32.mxu0 0.0
    %v3433 = vand.u32 %v1389, 4294901760
    %3434 = vmatmul.mubr.f32.gmra.mrb[0].mxu0 %v3433
    %v3435 = vpop.f32.mrb[0].mxu0
    %v3436 = vadd.f32 %v3311, %v3435
    %v3437 = vpop.f32.mrb[0].mxu0
    %v3438 = vadd.f32 %v3313, %v3437
    %3439 = vmatprep.mubr.f32.mxu0 0.0
    %v3440 = vand.u32 %v1390, 4294901760
    %3441 = vmatmul.mubr.f32.gmra.mrb[0].mxu0 %v3440
    %v3442 = vpop.f32.mrb[0].mxu0
    %v3443 = vadd.f32 %v3318, %v3442
    %v3444 = vpop.f32.mrb[0].mxu0
    %v3445 = vadd.f32 %v3320, %v3444
    %3446 = vmatprep.mubr.f32.mxu0 0.0
    %v3447 = vand.u32 %v1391, 4294901760
    %3448 = vmatmul.mubr.f32.gmra.mrb[0].mxu0 %v3447
    %v3449 = vpop.f32.mrb[0].mxu0
    %v3450 = vadd.f32 %v3325, %v3449
    %v3451 = vpop.f32.mrb[0].mxu0
    %v3452 = vadd.f32 %v3327, %v3451
    %3453 = vmatprep.mubr.f32.mxu0 0.0
    %v3454 = vand.u32 %v1392, 4294901760
    %3455 = vmatmul.mubr.f32.gmra.mrb[0].mxu0 %v3454
    %v3456 = vpop.f32.mrb[0].mxu0
    %v3457 = vadd.f32 %v3332, %v3456
    %v3458 = vpop.f32.mrb[0].mxu0
    %v3459 = vadd.f32 %v3334, %v3458
    %3460 = vdwg.mxu0
    %v3461 = vlaneseq
    %v3462 = vshrl.u32 %v3461, 7
    %v3463 = vadd.s32 %v3462, 8
    %v3464 = vadd.s32 %v3462, 16
    %v3465 = vadd.s32 %v3462, 24
    %v3466 = vlaneseq
    %v3467 = vand.u32 %v3466, 127
    %v3468 = vadd.s32 %v3467, 128
    %v3469 = vadd.s32 %v3467, 256
    %v3470 = vadd.s32 %v3467, 384
    %v3471 = vand.u32 %v3462, 15
    %v3472 = vand.u32 %v3463, 15
    %v3473 = vand.u32 %v3464, 15
    %v3474 = vand.u32 %v3465, 15
    %v3475 = vand.u32 %v3467, 15
    %v3476 = vand.u32 %v3468, 15
    %v3477 = vand.u32 %v3469, 15
    %v3478 = vand.u32 %v3470, 15
    %vm3479 = vcmp.eq.s32.totalorder %v3471, %v3475
    %vm3480 = vcmp.eq.s32.totalorder %v3471, %v3476
    %vm3481 = vcmp.eq.s32.totalorder %v3471, %v3477
    %vm3482 = vcmp.eq.s32.totalorder %v3471, %v3478
    %vm3483 = vcmp.eq.s32.totalorder %v3472, %v3475
    %vm3484 = vcmp.eq.s32.totalorder %v3472, %v3476
    %vm3485 = vcmp.eq.s32.totalorder %v3472, %v3477
    %vm3486 = vcmp.eq.s32.totalorder %v3472, %v3478
    %vm3487 = vcmp.eq.s32.totalorder %v3473, %v3475
    %vm3488 = vcmp.eq.s32.totalorder %v3473, %v3476
    %vm3489 = vcmp.eq.s32.totalorder %v3473, %v3477
    %vm3490 = vcmp.eq.s32.totalorder %v3473, %v3478
    %vm3491 = vcmp.eq.s32.totalorder %v3474, %v3475
    %vm3492 = vcmp.eq.s32.totalorder %v3474, %v3476
    %vm3493 = vcmp.eq.s32.totalorder %v3474, %v3477
    %vm3494 = vcmp.eq.s32.totalorder %v3474, %v3478
    %v3495 = vsel %vm3479, %v2434, 0.0
    %v3496 = vsel %vm3480, %v2436, 0.0
    %v3497 = vsel %vm3481, %v3436, 0.0
    %v3498 = vsel %vm3482, %v3438, 0.0
    %v3499 = vsel %vm3483, %v2441, 0.0
    %v3500 = vsel %vm3484, %v2443, 0.0
    %v3501 = vsel %vm3485, %v3443, 0.0
    %v3502 = vsel %vm3486, %v3445, 0.0
    %v3503 = vsel %vm3487, %v2448, 0.0
    %v3504 = vsel %vm3488, %v2450, 0.0
    %v3505 = vsel %vm3489, %v3450, 0.0
    %v3506 = vsel %vm3490, %v3452, 0.0
    %v3507 = vsel %vm3491, %v2455, 0.0
    %v3508 = vsel %vm3492, %v2457, 0.0
    %v3509 = vsel %vm3493, %v3457, 0.0
    %v3510 = vsel %vm3494, %v3459, 0.0
    %v3511 = vshra.s32 %v3467, 4
    %vm3512 = vcmp.eq.s32.totalorder %v3511, %v3462
    %v3513 = vsel %vm3512, 1, 0
    %v3514 = vcvt.s32.f32 %v3513
    %v3515 = vadd.s32 %v3462, 32
    %v3516 = vadd.s32 %v3462, 40
    %v3517 = vadd.s32 %v3462, 48
    %v3518 = vadd.s32 %v3462, 56
    %v3519 = vadd.s32 %v3462, 64
    %v3520 = vadd.s32 %v3462, 72
    %v3521 = vadd.s32 %v3462, 80
    %v3522 = vadd.s32 %v3462, 88
    %v3523 = vadd.s32 %v3462, 96
    %v3524 = vadd.s32 %v3462, 104
    %v3525 = vadd.s32 %v3462, 112
    %v3526 = vadd.s32 %v3462, 120
    %v3527 = vadd.s32 %v3462, 128
    %v3528 = vadd.s32 %v3462, 136
    %v3529 = vadd.s32 %v3462, 144
    %v3530 = vadd.s32 %v3462, 152
    %v3531 = vadd.s32 %v3462, 160
    %v3532 = vadd.s32 %v3462, 168
    %v3533 = vadd.s32 %v3462, 176
    %v3534 = vadd.s32 %v3462, 184
    %v3535 = vadd.s32 %v3462, 192
    %v3536 = vadd.s32 %v3462, 200
    %v3537 = vadd.s32 %v3462, 208
    %v3538 = vadd.s32 %v3462, 216
    %v3539 = vadd.s32 %v3462, 224
    %v3540 = vadd.s32 %v3462, 232
    %v3541 = vadd.s32 %v3462, 240
    %v3542 = vadd.s32 %v3462, 248
    %v3543 = vadd.s32 %v3462, 256
    %v3544 = vadd.s32 %v3462, 264
    %v3545 = vadd.s32 %v3462, 272
    %v3546 = vadd.s32 %v3462, 280
    %v3547 = vadd.s32 %v3462, 288
    %v3548 = vadd.s32 %v3462, 296
    %v3549 = vadd.s32 %v3462, 304
    %v3550 = vadd.s32 %v3462, 312
    %v3551 = vadd.s32 %v3462, 320
    %v3552 = vadd.s32 %v3462, 328
    %v3553 = vadd.s32 %v3462, 336
    %v3554 = vadd.s32 %v3462, 344
    %v3555 = vadd.s32 %v3462, 352
    %v3556 = vadd.s32 %v3462, 360
    %v3557 = vadd.s32 %v3462, 368
    %v3558 = vadd.s32 %v3462, 376
    %v3559 = vadd.s32 %v3462, 384
    %v3560 = vadd.s32 %v3462, 392
    %v3561 = vadd.s32 %v3462, 400
    %v3562 = vadd.s32 %v3462, 408
    %v3563 = vadd.s32 %v3462, 416
    %v3564 = vadd.s32 %v3462, 424
    %v3565 = vadd.s32 %v3462, 432
    %v3566 = vadd.s32 %v3462, 440
    %v3567 = vadd.s32 %v3462, 448
    %v3568 = vadd.s32 %v3462, 456
    %v3569 = vadd.s32 %v3462, 464
    %v3570 = vadd.s32 %v3462, 472
    %v3571 = vadd.s32 %v3462, 480
    %v3572 = vadd.s32 %v3462, 488
    %v3573 = vadd.s32 %v3462, 496
    %v3574 = vadd.s32 %v3462, 504
    %v3575 = vshra.s32 %v3462, 4
    %v3576 = vshra.s32 %v3463, 4
    %v3577 = vshra.s32 %v3464, 4
    %v3578 = vshra.s32 %v3465, 4
    %v3579 = vshra.s32 %v3515, 4
    %v3580 = vshra.s32 %v3516, 4
    %v3581 = vshra.s32 %v3517, 4
    %v3582 = vshra.s32 %v3518, 4
    %v3583 = vshra.s32 %v3519, 4
    %v3584 = vshra.s32 %v3520, 4
    %v3585 = vshra.s32 %v3521, 4
    %v3586 = vshra.s32 %v3522, 4
    %v3587 = vshra.s32 %v3523, 4
    %v3588 = vshra.s32 %v3524, 4
    %v3589 = vshra.s32 %v3525, 4
    %v3590 = vshra.s32 %v3526, 4
    %v3591 = vshra.s32 %v3527, 4
    %v3592 = vshra.s32 %v3528, 4
    %v3593 = vshra.s32 %v3529, 4
    %v3594 = vshra.s32 %v3530, 4
    %v3595 = vshra.s32 %v3531, 4
    %v3596 = vshra.s32 %v3532, 4
    %v3597 = vshra.s32 %v3533, 4
    %v3598 = vshra.s32 %v3534, 4
    %v3599 = vshra.s32 %v3535, 4
    %v3600 = vshra.s32 %v3536, 4
    %v3601 = vshra.s32 %v3537, 4
    %v3602 = vshra.s32 %v3538, 4
    %v3603 = vshra.s32 %v3539, 4
    %v3604 = vshra.s32 %v3540, 4
    %v3605 = vshra.s32 %v3541, 4
    %v3606 = vshra.s32 %v3542, 4
    %v3607 = vshra.s32 %v3543, 4
    %v3608 = vshra.s32 %v3544, 4
    %v3609 = vshra.s32 %v3545, 4
    %v3610 = vshra.s32 %v3546, 4
    %v3611 = vshra.s32 %v3547, 4
    %v3612 = vshra.s32 %v3548, 4
    %v3613 = vshra.s32 %v3549, 4
    %v3614 = vshra.s32 %v3550, 4
    %v3615 = vshra.s32 %v3551, 4
    %v3616 = vshra.s32 %v3552, 4
    %v3617 = vshra.s32 %v3553, 4
    %v3618 = vshra.s32 %v3554, 4
    %v3619 = vshra.s32 %v3555, 4
    %v3620 = vshra.s32 %v3556, 4
    %v3621 = vshra.s32 %v3557, 4
    %v3622 = vshra.s32 %v3558, 4
    %v3623 = vshra.s32 %v3559, 4
    %v3624 = vshra.s32 %v3560, 4
    %v3625 = vshra.s32 %v3561, 4
    %v3626 = vshra.s32 %v3562, 4
    %v3627 = vshra.s32 %v3563, 4
    %v3628 = vshra.s32 %v3564, 4
    %v3629 = vshra.s32 %v3565, 4
    %v3630 = vshra.s32 %v3566, 4
    %v3631 = vshra.s32 %v3567, 4
    %v3632 = vshra.s32 %v3568, 4
    %v3633 = vshra.s32 %v3569, 4
    %v3634 = vshra.s32 %v3570, 4
    %v3635 = vshra.s32 %v3571, 4
    %v3636 = vshra.s32 %v3572, 4
    %v3637 = vshra.s32 %v3573, 4
    %v3638 = vshra.s32 %v3574, 4
    %vm3639 = vcmp.eq.s32.totalorder %v3575, %v3467
    %vm3640 = vcmp.eq.s32.totalorder %v3576, %v3467
    %vm3641 = vcmp.eq.s32.totalorder %v3577, %v3467
    %vm3642 = vcmp.eq.s32.totalorder %v3578, %v3467
    %vm3643 = vcmp.eq.s32.totalorder %v3579, %v3467
    %vm3644 = vcmp.eq.s32.totalorder %v3580, %v3467
    %vm3645 = vcmp.eq.s32.totalorder %v3581, %v3467
    %vm3646 = vcmp.eq.s32.totalorder %v3582, %v3467
    %vm3647 = vcmp.eq.s32.totalorder %v3583, %v3467
    %vm3648 = vcmp.eq.s32.totalorder %v3584, %v3467
    %vm3649 = vcmp.eq.s32.totalorder %v3585, %v3467
    %vm3650 = vcmp.eq.s32.totalorder %v3586, %v3467
    %vm3651 = vcmp.eq.s32.totalorder %v3587, %v3467
    %vm3652 = vcmp.eq.s32.totalorder %v3588, %v3467
    %vm3653 = vcmp.eq.s32.totalorder %v3589, %v3467
    %vm3654 = vcmp.eq.s32.totalorder %v3590, %v3467
    %vm3655 = vcmp.eq.s32.totalorder %v3591, %v3467
    %vm3656 = vcmp.eq.s32.totalorder %v3592, %v3467
    %vm3657 = vcmp.eq.s32.totalorder %v3593, %v3467
    %vm3658 = vcmp.eq.s32.totalorder %v3594, %v3467
    %vm3659 = vcmp.eq.s32.totalorder %v3595, %v3467
    %vm3660 = vcmp.eq.s32.totalorder %v3596, %v3467
    %vm3661 = vcmp.eq.s32.totalorder %v3597, %v3467
    %vm3662 = vcmp.eq.s32.totalorder %v3598, %v3467
    %vm3663 = vcmp.eq.s32.totalorder %v3599, %v3467
    %vm3664 = vcmp.eq.s32.totalorder %v3600, %v3467
    %vm3665 = vcmp.eq.s32.totalorder %v3601, %v3467
    %vm3666 = vcmp.eq.s32.totalorder %v3602, %v3467
    %vm3667 = vcmp.eq.s32.totalorder %v3603, %v3467
    %vm3668 = vcmp.eq.s32.totalorder %v3604, %v3467
    %vm3669 = vcmp.eq.s32.totalorder %v3605, %v3467
    %vm3670 = vcmp.eq.s32.totalorder %v3606, %v3467
    %vm3671 = vcmp.eq.s32.totalorder %v3607, %v3467
    %vm3672 = vcmp.eq.s32.totalorder %v3608, %v3467
    %vm3673 = vcmp.eq.s32.totalorder %v3609, %v3467
    %vm3674 = vcmp.eq.s32.totalorder %v3610, %v3467
    %vm3675 = vcmp.eq.s32.totalorder %v3611, %v3467
    %vm3676 = vcmp.eq.s32.totalorder %v3612, %v3467
    %vm3677 = vcmp.eq.s32.totalorder %v3613, %v3467
    %vm3678 = vcmp.eq.s32.totalorder %v3614, %v3467
    %vm3679 = vcmp.eq.s32.totalorder %v3615, %v3467
    %vm3680 = vcmp.eq.s32.totalorder %v3616, %v3467
    %vm3681 = vcmp.eq.s32.totalorder %v3617, %v3467
    %vm3682 = vcmp.eq.s32.totalorder %v3618, %v3467
    %vm3683 = vcmp.eq.s32.totalorder %v3619, %v3467
    %vm3684 = vcmp.eq.s32.totalorder %v3620, %v3467
    %vm3685 = vcmp.eq.s32.totalorder %v3621, %v3467
    %vm3686 = vcmp.eq.s32.totalorder %v3622, %v3467
    %vm3687 = vcmp.eq.s32.totalorder %v3623, %v3467
    %vm3688 = vcmp.eq.s32.totalorder %v3624, %v3467
    %vm3689 = vcmp.eq.s32.totalorder %v3625, %v3467
    %vm3690 = vcmp.eq.s32.totalorder %v3626, %v3467
    %vm3691 = vcmp.eq.s32.totalorder %v3627, %v3467
    %vm3692 = vcmp.eq.s32.totalorder %v3628, %v3467
    %vm3693 = vcmp.eq.s32.totalorder %v3629, %v3467
    %vm3694 = vcmp.eq.s32.totalorder %v3630, %v3467
    %vm3695 = vcmp.eq.s32.totalorder %v3631, %v3467
    %vm3696 = vcmp.eq.s32.totalorder %v3632, %v3467
    %vm3697 = vcmp.eq.s32.totalorder %v3633, %v3467
    %vm3698 = vcmp.eq.s32.totalorder %v3634, %v3467
    %vm3699 = vcmp.eq.s32.totalorder %v3635, %v3467
    %vm3700 = vcmp.eq.s32.totalorder %v3636, %v3467
    %vm3701 = vcmp.eq.s32.totalorder %v3637, %v3467
    %vm3702 = vcmp.eq.s32.totalorder %v3638, %v3467
    %v3703 = vsel %vm3639, 1, 0
    %v3704 = vsel %vm3640, 1, 0
    %v3705 = vsel %vm3641, 1, 0
    %v3706 = vsel %vm3642, 1, 0
    %v3707 = vsel %vm3643, 1, 0
    %v3708 = vsel %vm3644, 1, 0
    %v3709 = vsel %vm3645, 1, 0
    %v3710 = vsel %vm3646, 1, 0
    %v3711 = vsel %vm3647, 1, 0
    %v3712 = vsel %vm3648, 1, 0
    %v3713 = vsel %vm3649, 1, 0
    %v3714 = vsel %vm3650, 1, 0
    %v3715 = vsel %vm3651, 1, 0
    %v3716 = vsel %vm3652, 1, 0
    %v3717 = vsel %vm3653, 1, 0
    %v3718 = vsel %vm3654, 1, 0
    %v3719 = vsel %vm3655, 1, 0
    %v3720 = vsel %vm3656, 1, 0
    %v3721 = vsel %vm3657, 1, 0
    %v3722 = vsel %vm3658, 1, 0
    %v3723 = vsel %vm3659, 1, 0
    %v3724 = vsel %vm3660, 1, 0
    %v3725 = vsel %vm3661, 1, 0
    %v3726 = vsel %vm3662, 1, 0
    %v3727 = vsel %vm3663, 1, 0
    %v3728 = vsel %vm3664, 1, 0
    %v3729 = vsel %vm3665, 1, 0
    %v3730 = vsel %vm3666, 1, 0
    %v3731 = vsel %vm3667, 1, 0
    %v3732 = vsel %vm3668, 1, 0
    %v3733 = vsel %vm3669, 1, 0
    %v3734 = vsel %vm3670, 1, 0
    %v3735 = vsel %vm3671, 1, 0
    %v3736 = vsel %vm3672, 1, 0
    %v3737 = vsel %vm3673, 1, 0
    %v3738 = vsel %vm3674, 1, 0
    %v3739 = vsel %vm3675, 1, 0
    %v3740 = vsel %vm3676, 1, 0
    %v3741 = vsel %vm3677, 1, 0
    %v3742 = vsel %vm3678, 1, 0
    %v3743 = vsel %vm3679, 1, 0
    %v3744 = vsel %vm3680, 1, 0
    %v3745 = vsel %vm3681, 1, 0
    %v3746 = vsel %vm3682, 1, 0
    %v3747 = vsel %vm3683, 1, 0
    %v3748 = vsel %vm3684, 1, 0
    %v3749 = vsel %vm3685, 1, 0
    %v3750 = vsel %vm3686, 1, 0
    %v3751 = vsel %vm3687, 1, 0
    %v3752 = vsel %vm3688, 1, 0
    %v3753 = vsel %vm3689, 1, 0
    %v3754 = vsel %vm3690, 1, 0
    %v3755 = vsel %vm3691, 1, 0
    %v3756 = vsel %vm3692, 1, 0
    %v3757 = vsel %vm3693, 1, 0
    %v3758 = vsel %vm3694, 1, 0
    %v3759 = vsel %vm3695, 1, 0
    %v3760 = vsel %vm3696, 1, 0
    %v3761 = vsel %vm3697, 1, 0
    %v3762 = vsel %vm3698, 1, 0
    %v3763 = vsel %vm3699, 1, 0
    %v3764 = vsel %vm3700, 1, 0
    %v3765 = vsel %vm3701, 1, 0
    %v3766 = vsel %vm3702, 1, 0
    %v3767 = vcvt.s32.f32 %v3703
    %v3768 = vcvt.s32.f32 %v3704
    %v3769 = vcvt.s32.f32 %v3705
    %v3770 = vcvt.s32.f32 %v3706
    %v3771 = vcvt.s32.f32 %v3707
    %v3772 = vcvt.s32.f32 %v3708
    %v3773 = vcvt.s32.f32 %v3709
    %v3774 = vcvt.s32.f32 %v3710
    %v3775 = vcvt.s32.f32 %v3711
    %v3776 = vcvt.s32.f32 %v3712
    %v3777 = vcvt.s32.f32 %v3713
    %v3778 = vcvt.s32.f32 %v3714
    %v3779 = vcvt.s32.f32 %v3715
    %v3780 = vcvt.s32.f32 %v3716
    %v3781 = vcvt.s32.f32 %v3717
    %v3782 = vcvt.s32.f32 %v3718
    %v3783 = vcvt.s32.f32 %v3719
    %v3784 = vcvt.s32.f32 %v3720
    %v3785 = vcvt.s32.f32 %v3721
    %v3786 = vcvt.s32.f32 %v3722
    %v3787 = vcvt.s32.f32 %v3723
    %v3788 = vcvt.s32.f32 %v3724
    %v3789 = vcvt.s32.f32 %v3725
    %v3790 = vcvt.s32.f32 %v3726
    %v3791 = vcvt.s32.f32 %v3727
    %v3792 = vcvt.s32.f32 %v3728
    %v3793 = vcvt.s32.f32 %v3729
    %v3794 = vcvt.s32.f32 %v3730
    %v3795 = vcvt.s32.f32 %v3731
    %v3796 = vcvt.s32.f32 %v3732
    %v3797 = vcvt.s32.f32 %v3733
    %v3798 = vcvt.s32.f32 %v3734
    %v3799 = vcvt.s32.f32 %v3735
    %v3800 = vcvt.s32.f32 %v3736
    %v3801 = vcvt.s32.f32 %v3737
    %v3802 = vcvt.s32.f32 %v3738
    %v3803 = vcvt.s32.f32 %v3739
    %v3804 = vcvt.s32.f32 %v3740
    %v3805 = vcvt.s32.f32 %v3741
    %v3806 = vcvt.s32.f32 %v3742
    %v3807 = vcvt.s32.f32 %v3743
    %v3808 = vcvt.s32.f32 %v3744
    %v3809 = vcvt.s32.f32 %v3745
    %v3810 = vcvt.s32.f32 %v3746
    %v3811 = vcvt.s32.f32 %v3747
    %v3812 = vcvt.s32.f32 %v3748
    %v3813 = vcvt.s32.f32 %v3749
    %v3814 = vcvt.s32.f32 %v3750
    %v3815 = vcvt.s32.f32 %v3751
    %v3816 = vcvt.s32.f32 %v3752
    %v3817 = vcvt.s32.f32 %v3753
    %v3818 = vcvt.s32.f32 %v3754
    %v3819 = vcvt.s32.f32 %v3755
    %v3820 = vcvt.s32.f32 %v3756
    %v3821 = vcvt.s32.f32 %v3757
    %v3822 = vcvt.s32.f32 %v3758
    %v3823 = vcvt.s32.f32 %v3759
    %v3824 = vcvt.s32.f32 %v3760
    %v3825 = vcvt.s32.f32 %v3761
    %v3826 = vcvt.s32.f32 %v3762
    %v3827 = vcvt.s32.f32 %v3763
    %v3828 = vcvt.s32.f32 %v3764
    %v3829 = vcvt.s32.f32 %v3765
    %v3830 = vcvt.s32.f32 %v3766
    %v3832 = vsel %vm378, %v3514, 0
    %v3834 = vand.u32 %v3496, 4294901760
    %3835 = vmatprep.subr.mxu0 %v3834
    %v3836 = vand.u32 %v3495, 4294901760
    %3837 = vmatpush1.msra.mxu0 %v3836
    %v3838 = vand.u32 %v3500, 4294901760
    %3839 = vmatprep.subr.mxu0 %v3838
    %v3840 = vand.u32 %v3499, 4294901760
    %3841 = vmatpush1.msra.mxu0 %v3840
    %v3842 = vand.u32 %v3504, 4294901760
    %3843 = vmatprep.subr.mxu0 %v3842
    %v3844 = vand.u32 %v3503, 4294901760
    %3845 = vmatpush1.msra.mxu0 %v3844
    %v3846 = vand.u32 %v3508, 4294901760
    %3847 = vmatprep.subr.mxu0 %v3846
    %v3848 = vand.u32 %v3507, 4294901760
    %3849 = vmatpush1.msra.mxu0 %v3848
    %3850 = vmatprep.subr.mxu0 0.0
    %3851 = vmatpush1.msra.mxu0 0.0
    %3852 = vmatprep.subr.mxu0 0.0
    %3853 = vmatpush1.msra.mxu0 0.0
    %3854 = vmatprep.subr.mxu0 0.0
    %3855 = vmatpush1.msra.mxu0 0.0
    %3856 = vmatprep.subr.mxu0 0.0
    %3857 = vmatpush1.msra.mxu0 0.0
    %3858 = vmatprep.subr.mxu0 0.0
    %3859 = vmatpush1.msra.mxu0 0.0
    %3860 = vmatprep.subr.mxu0 0.0
    %3861 = vmatpush1.msra.mxu0 0.0
    %3862 = vmatprep.subr.mxu0 0.0
    %3863 = vmatpush1.msra.mxu0 0.0
    %3864 = vmatprep.subr.mxu0 0.0
    %3865 = vmatpush1.msra.mxu0 0.0
    %3866 = vmatprep.subr.mxu0 0.0
    %3867 = vmatpush1.msra.mxu0 0.0
    %3868 = vmatprep.subr.mxu0 0.0
    %3869 = vmatpush1.msra.mxu0 0.0
    %3870 = vmatprep.subr.mxu0 0.0
    %3871 = vmatpush1.msra.mxu0 0.0
    %3872 = vmatprep.subr.mxu0 0.0
    %3873 = vmatpush1.msra.mxu0 0.0
    %3874 = vmatprep.subr.mxu0 0.0
    %3875 = vmatpush1.msra.mxu0 0.0
    %3876 = vmatprep.subr.mxu0 0.0
    %3877 = vmatpush1.msra.mxu0 0.0
    %3878 = vmatprep.subr.mxu0 0.0
    %3879 = vmatpush1.msra.mxu0 0.0
    %3880 = vmatprep.subr.mxu0 0.0
    %3881 = vmatpush1.msra.mxu0 0.0
    %3882 = vmatprep.subr.mxu0 0.0
    %3883 = vmatpush1.msra.mxu0 0.0
    %3884 = vmatprep.subr.mxu0 0.0
    %3885 = vmatpush1.msra.mxu0 0.0
    %3886 = vmatprep.subr.mxu0 0.0
    %3887 = vmatpush1.msra.mxu0 0.0
    %3888 = vmatprep.subr.mxu0 0.0
    %3889 = vmatpush1.msra.mxu0 0.0
    %3890 = vmatprep.subr.mxu0 0.0
    %3891 = vmatpush1.msra.mxu0 0.0
    %3892 = vmatprep.subr.mxu0 0.0
    %3893 = vmatpush1.msra.mxu0 0.0
    %3894 = vmatprep.subr.mxu0 0.0
    %3895 = vmatpush1.msra.mxu0 0.0
    %3896 = vmatprep.subr.mxu0 0.0
    %3897 = vmatpush1.msra.mxu0 0.0
    %3898 = vmatprep.subr.mxu0 0.0
    %3899 = vmatpush1.msra.mxu0 0.0
    %3900 = vmatprep.subr.mxu0 0.0
    %3901 = vmatpush1.msra.mxu0 0.0
    %3902 = vmatprep.subr.mxu0 0.0
    %3903 = vmatpush1.msra.mxu0 0.0
    %3904 = vmatprep.subr.mxu0 0.0
    %3905 = vmatpush1.msra.mxu0 0.0
    %3906 = vmatprep.mubr.f32.mxu0 0.0
    %v3907 = vand.u32 %v3832, 4294901760
    %v3908 = vsub.f32 %v3832, %v3907
    %v3909 = vand.u32 %v3908, 4294901760
    %v3910 = vsub.f32 %v3908, %v3909
    %v3911 = vand.u32 %v3910, 4294901760
    %3912 = vmatmul.mubr.f32.gmra.mrb[0].mxu0 %v3911
    %v3913 = vpop.f32.mrb[0].mxu0
    %v3914 = vadd.f32 0.0, %v3913
    %v3915 = vpop.f32.mrb[0].mxu0
    %v3916 = vadd.f32 0.0, %v3915
    %3917 = vdwg.mxu0
    %v3918 = vand.u32 %v3496, 4294901760
    %v3919 = vsub.f32 %v3496, %v3918
    %v3920 = vand.u32 %v3919, 4294901760
    %v3921 = vsub.f32 %v3919, %v3920
    %v3922 = vand.u32 %v3921, 4294901760
    %3923 = vmatprep.subr.mxu0 %v3922
    %v3924 = vand.u32 %v3495, 4294901760
    %v3925 = vsub.f32 %v3495, %v3924
    %v3926 = vand.u32 %v3925, 4294901760
    %v3927 = vsub.f32 %v3925, %v3926
    %v3928 = vand.u32 %v3927, 4294901760
    %3929 = vmatpush1.msra.mxu0 %v3928
    %v3930 = vand.u32 %v3500, 4294901760
    %v3931 = vsub.f32 %v3500, %v3930
    %v3932 = vand.u32 %v3931, 4294901760
    %v3933 = vsub.f32 %v3931, %v3932
    %v3934 = vand.u32 %v3933, 4294901760
    %3935 = vmatprep.subr.mxu0 %v3934
    %v3936 = vand.u32 %v3499, 4294901760
    %v3937 = vsub.f32 %v3499, %v3936
    %v3938 = vand.u32 %v3937, 4294901760
    %v3939 = vsub.f32 %v3937, %v3938
    %v3940 = vand.u32 %v3939, 4294901760
    %3941 = vmatpush1.msra.mxu0 %v3940
    %v3942 = vand.u32 %v3504, 4294901760
    %v3943 = vsub.f32 %v3504, %v3942
    %v3944 = vand.u32 %v3943, 4294901760
    %v3945 = vsub.f32 %v3943, %v3944
    %v3946 = vand.u32 %v3945, 4294901760
    %3947 = vmatprep.subr.mxu0 %v3946
    %v3948 = vand.u32 %v3503, 4294901760
    %v3949 = vsub.f32 %v3503, %v3948
    %v3950 = vand.u32 %v3949, 4294901760
    %v3951 = vsub.f32 %v3949, %v3950
    %v3952 = vand.u32 %v3951, 4294901760
    %3953 = vmatpush1.msra.mxu0 %v3952
    %v3954 = vand.u32 %v3508, 4294901760
    %v3955 = vsub.f32 %v3508, %v3954
    %v3956 = vand.u32 %v3955, 4294901760
    %v3957 = vsub.f32 %v3955, %v3956
    %v3958 = vand.u32 %v3957, 4294901760
    %3959 = vmatprep.subr.mxu0 %v3958
    %v3960 = vand.u32 %v3507, 4294901760
    %v3961 = vsub.f32 %v3507, %v3960
    %v3962 = vand.u32 %v3961, 4294901760
    %v3963 = vsub.f32 %v3961, %v3962
    %v3964 = vand.u32 %v3963, 4294901760
    %3965 = vmatpush1.msra.mxu0 %v3964
    %3966 = vmatprep.subr.mxu0 0.0
    %3967 = vmatpush1.msra.mxu0 0.0
    %3968 = vmatprep.subr.mxu0 0.0
    %3969 = vmatpush1.msra.mxu0 0.0
    %3970 = vmatprep.subr.mxu0 0.0
    %3971 = vmatpush1.msra.mxu0 0.0
    %3972 = vmatprep.subr.mxu0 0.0
    %3973 = vmatpush1.msra.mxu0 0.0
    %3974 = vmatprep.subr.mxu0 0.0
    %3975 = vmatpush1.msra.mxu0 0.0
    %3976 = vmatprep.subr.mxu0 0.0
    %3977 = vmatpush1.msra.mxu0 0.0
    %3978 = vmatprep.subr.mxu0 0.0
    %3979 = vmatpush1.msra.mxu0 0.0
    %3980 = vmatprep.subr.mxu0 0.0
    %3981 = vmatpush1.msra.mxu0 0.0
    %3982 = vmatprep.subr.mxu0 0.0
    %3983 = vmatpush1.msra.mxu0 0.0
    %3984 = vmatprep.subr.mxu0 0.0
    %3985 = vmatpush1.msra.mxu0 0.0
    %3986 = vmatprep.subr.mxu0 0.0
    %3987 = vmatpush1.msra.mxu0 0.0
    %3988 = vmatprep.subr.mxu0 0.0
    %3989 = vmatpush1.msra.mxu0 0.0
    %3990 = vmatprep.subr.mxu0 0.0
    %3991 = vmatpush1.msra.mxu0 0.0
    %3992 = vmatprep.subr.mxu0 0.0
    %3993 = vmatpush1.msra.mxu0 0.0
    %3994 = vmatprep.subr.mxu0 0.0
    %3995 = vmatpush1.msra.mxu0 0.0
    %3996 = vmatprep.subr.mxu0 0.0
    %3997 = vmatpush1.msra.mxu0 0.0
    %3998 = vmatprep.subr.mxu0 0.0
    %3999 = vmatpush1.msra.mxu0 0.0
    %4000 = vmatprep.subr.mxu0 0.0
    %4001 = vmatpush1.msra.mxu0 0.0
    %4002 = vmatprep.subr.mxu0 0.0
    %4003 = vmatpush1.msra.mxu0 0.0
    %4004 = vmatprep.subr.mxu0 0.0
    %4005 = vmatpush1.msra.mxu0 0.0
    %4006 = vmatprep.subr.mxu0 0.0
    %4007 = vmatpush1.msra.mxu0 0.0
    %4008 = vmatprep.subr.mxu0 0.0
    %4009 = vmatpush1.msra.mxu0 0.0
    %4010 = vmatprep.subr.mxu0 0.0
    %4011 = vmatpush1.msra.mxu0 0.0
    %4012 = vmatprep.subr.mxu0 0.0
    %4013 = vmatpush1.msra.mxu0 0.0
    %4014 = vmatprep.subr.mxu0 0.0
    %4015 = vmatpush1.msra.mxu0 0.0
    %4016 = vmatprep.subr.mxu0 0.0
    %4017 = vmatpush1.msra.mxu0 0.0
    %4018 = vmatprep.subr.mxu0 0.0
    %4019 = vmatpush1.msra.mxu0 0.0
    %4020 = vmatprep.subr.mxu0 0.0
    %4021 = vmatpush1.msra.mxu0 0.0
    %4022 = vmatprep.mubr.f32.mxu0 0.0
    %v4023 = vand.u32 %v3832, 4294901760
    %4024 = vmatmul.mubr.f32.gmra.mrb[0].mxu0 %v4023
    %v4025 = vpop.f32.mrb[0].mxu0
    %v4026 = vadd.f32 %v3914, %v4025
    %v4027 = vpop.f32.mrb[0].mxu0
    %v4028 = vadd.f32 %v3916, %v4027
    %4029 = vdwg.mxu0
    %v4030 = vand.u32 %v3496, 4294901760
    %v4031 = vsub.f32 %v3496, %v4030
    %4032 = vmatprep.subr.mxu0 %v4031
    %v4033 = vand.u32 %v3495, 4294901760
    %v4034 = vsub.f32 %v3495, %v4033
    %4035 = vmatpush1.msra.mxu0 %v4034
    %v4036 = vand.u32 %v3500, 4294901760
    %v4037 = vsub.f32 %v3500, %v4036
    %4038 = vmatprep.subr.mxu0 %v4037
    %v4039 = vand.u32 %v3499, 4294901760
    %v4040 = vsub.f32 %v3499, %v4039
    %4041 = vmatpush1.msra.mxu0 %v4040
    %v4042 = vand.u32 %v3504, 4294901760
    %v4043 = vsub.f32 %v3504, %v4042
    %4044 = vmatprep.subr.mxu0 %v4043
    %v4045 = vand.u32 %v3503, 4294901760
    %v4046 = vsub.f32 %v3503, %v4045
    %4047 = vmatpush1.msra.mxu0 %v4046
    %v4048 = vand.u32 %v3508, 4294901760
    %v4049 = vsub.f32 %v3508, %v4048
    %4050 = vmatprep.subr.mxu0 %v4049
    %v4051 = vand.u32 %v3507, 4294901760
    %v4052 = vsub.f32 %v3507, %v4051
    %4053 = vmatpush1.msra.mxu0 %v4052
    %4054 = vmatprep.subr.mxu0 0.0
    %4055 = vmatpush1.msra.mxu0 0.0
    %4056 = vmatprep.subr.mxu0 0.0
    %4057 = vmatpush1.msra.mxu0 0.0
    %4058 = vmatprep.subr.mxu0 0.0
    %4059 = vmatpush1.msra.mxu0 0.0
    %4060 = vmatprep.subr.mxu0 0.0
    %4061 = vmatpush1.msra.mxu0 0.0
    %4062 = vmatprep.subr.mxu0 0.0
    %4063 = vmatpush1.msra.mxu0 0.0
    %4064 = vmatprep.subr.mxu0 0.0
    %4065 = vmatpush1.msra.mxu0 0.0
    %4066 = vmatprep.subr.mxu0 0.0
    %4067 = vmatpush1.msra.mxu0 0.0
    %4068 = vmatprep.subr.mxu0 0.0
    %4069 = vmatpush1.msra.mxu0 0.0
    %4070 = vmatprep.subr.mxu0 0.0
    %4071 = vmatpush1.msra.mxu0 0.0
    %4072 = vmatprep.subr.mxu0 0.0
    %4073 = vmatpush1.msra.mxu0 0.0
    %4074 = vmatprep.subr.mxu0 0.0
    %4075 = vmatpush1.msra.mxu0 0.0
    %4076 = vmatprep.subr.mxu0 0.0
    %4077 = vmatpush1.msra.mxu0 0.0
    %4078 = vmatprep.subr.mxu0 0.0
    %4079 = vmatpush1.msra.mxu0 0.0
    %4080 = vmatprep.subr.mxu0 0.0
    %4081 = vmatpush1.msra.mxu0 0.0
    %4082 = vmatprep.subr.mxu0 0.0
    %4083 = vmatpush1.msra.mxu0 0.0
    %4084 = vmatprep.subr.mxu0 0.0
    %4085 = vmatpush1.msra.mxu0 0.0
    %4086 = vmatprep.subr.mxu0 0.0
    %4087 = vmatpush1.msra.mxu0 0.0
    %4088 = vmatprep.subr.mxu0 0.0
    %4089 = vmatpush1.msra.mxu0 0.0
    %4090 = vmatprep.subr.mxu0 0.0
    %4091 = vmatpush1.msra.mxu0 0.0
    %4092 = vmatprep.subr.mxu0 0.0
    %4093 = vmatpush1.msra.mxu0 0.0
    %4094 = vmatprep.subr.mxu0 0.0
    %4095 = vmatpush1.msra.mxu0 0.0
    %4096 = vmatprep.subr.mxu0 0.0
    %4097 = vmatpush1.msra.mxu0 0.0
    %4098 = vmatprep.subr.mxu0 0.0
    %4099 = vmatpush1.msra.mxu0 0.0
    %4100 = vmatprep.subr.mxu0 0.0
    %4101 = vmatpush1.msra.mxu0 0.0
    %4102 = vmatprep.subr.mxu0 0.0
    %4103 = vmatpush1.msra.mxu0 0.0
    %4104 = vmatprep.subr.mxu0 0.0
    %4105 = vmatpush1.msra.mxu0 0.0
    %4106 = vmatprep.subr.mxu0 0.0
    %4107 = vmatpush1.msra.mxu0 0.0
    %4108 = vmatprep.subr.mxu0 0.0
    %4109 = vmatpush1.msra.mxu0 0.0
    %4110 = vmatprep.mubr.f32.mxu0 0.0
    %v4111 = vand.u32 %v3832, 4294901760
    %v4112 = vsub.f32 %v3832, %v4111
    %4113 = vmatmul.mubr.f32.gmra.mrb[0].mxu0 %v4112
    %v4114 = vpop.f32.mrb[0].mxu0
    %v4115 = vadd.f32 %v4026, %v4114
    %v4116 = vpop.f32.mrb[0].mxu0
    %v4117 = vadd.f32 %v4028, %v4116
    %4118 = vdwg.mxu0
    %v4119 = vand.u32 %v3496, 4294901760
    %4120 = vmatprep.subr.mxu0 %v4119
    %v4121 = vand.u32 %v3495, 4294901760
    %4122 = vmatpush1.msra.mxu0 %v4121
    %v4123 = vand.u32 %v3500, 4294901760
    %4124 = vmatprep.subr.mxu0 %v4123
    %v4125 = vand.u32 %v3499, 4294901760
    %4126 = vmatpush1.msra.mxu0 %v4125
    %v4127 = vand.u32 %v3504, 4294901760
    %4128 = vmatprep.subr.mxu0 %v4127
    %v4129 = vand.u32 %v3503, 4294901760
    %4130 = vmatpush1.msra.mxu0 %v4129
    %v4131 = vand.u32 %v3508, 4294901760
    %4132 = vmatprep.subr.mxu0 %v4131
    %v4133 = vand.u32 %v3507, 4294901760
    %4134 = vmatpush1.msra.mxu0 %v4133
    %4135 = vmatprep.subr.mxu0 0.0
    %4136 = vmatpush1.msra.mxu0 0.0
    %4137 = vmatprep.subr.mxu0 0.0
    %4138 = vmatpush1.msra.mxu0 0.0
    %4139 = vmatprep.subr.mxu0 0.0
    %4140 = vmatpush1.msra.mxu0 0.0
    %4141 = vmatprep.subr.mxu0 0.0
    %4142 = vmatpush1.msra.mxu0 0.0
    %4143 = vmatprep.subr.mxu0 0.0
    %4144 = vmatpush1.msra.mxu0 0.0
    %4145 = vmatprep.subr.mxu0 0.0
    %4146 = vmatpush1.msra.mxu0 0.0
    %4147 = vmatprep.subr.mxu0 0.0
    %4148 = vmatpush1.msra.mxu0 0.0
    %4149 = vmatprep.subr.mxu0 0.0
    %4150 = vmatpush1.msra.mxu0 0.0
    %4151 = vmatprep.subr.mxu0 0.0
    %4152 = vmatpush1.msra.mxu0 0.0
    %4153 = vmatprep.subr.mxu0 0.0
    %4154 = vmatpush1.msra.mxu0 0.0
    %4155 = vmatprep.subr.mxu0 0.0
    %4156 = vmatpush1.msra.mxu0 0.0
    %4157 = vmatprep.subr.mxu0 0.0
    %4158 = vmatpush1.msra.mxu0 0.0
    %4159 = vmatprep.subr.mxu0 0.0
    %4160 = vmatpush1.msra.mxu0 0.0
    %4161 = vmatprep.subr.mxu0 0.0
    %4162 = vmatpush1.msra.mxu0 0.0
    %4163 = vmatprep.subr.mxu0 0.0
    %4164 = vmatpush1.msra.mxu0 0.0
    %4165 = vmatprep.subr.mxu0 0.0
    %4166 = vmatpush1.msra.mxu0 0.0
    %4167 = vmatprep.subr.mxu0 0.0
    %4168 = vmatpush1.msra.mxu0 0.0
    %4169 = vmatprep.subr.mxu0 0.0
    %4170 = vmatpush1.msra.mxu0 0.0
    %4171 = vmatprep.subr.mxu0 0.0
    %4172 = vmatpush1.msra.mxu0 0.0
    %4173 = vmatprep.subr.mxu0 0.0
    %4174 = vmatpush1.msra.mxu0 0.0
    %4175 = vmatprep.subr.mxu0 0.0
    %4176 = vmatpush1.msra.mxu0 0.0
    %4177 = vmatprep.subr.mxu0 0.0
    %4178 = vmatpush1.msra.mxu0 0.0
    %4179 = vmatprep.subr.mxu0 0.0
    %4180 = vmatpush1.msra.mxu0 0.0
    %4181 = vmatprep.subr.mxu0 0.0
    %4182 = vmatpush1.msra.mxu0 0.0
    %4183 = vmatprep.subr.mxu0 0.0
    %4184 = vmatpush1.msra.mxu0 0.0
    %4185 = vmatprep.subr.mxu0 0.0
    %4186 = vmatpush1.msra.mxu0 0.0
    %4187 = vmatprep.subr.mxu0 0.0
    %4188 = vmatpush1.msra.mxu0 0.0
    %4189 = vmatprep.subr.mxu0 0.0
    %4190 = vmatpush1.msra.mxu0 0.0
    %4191 = vmatprep.mubr.f32.mxu0 0.0
    %v4192 = vand.u32 %v3832, 4294901760
    %v4193 = vsub.f32 %v3832, %v4192
    %v4194 = vand.u32 %v4193, 4294901760
    %4195 = vmatmul.mubr.f32.gmra.mrb[0].mxu0 %v4194
    %v4196 = vpop.f32.mrb[0].mxu0
    %v4197 = vadd.f32 %v4115, %v4196
    %v4198 = vpop.f32.mrb[0].mxu0
    %v4199 = vadd.f32 %v4117, %v4198
    %4200 = vdwg.mxu0
    %v4201 = vand.u32 %v3496, 4294901760
    %v4202 = vsub.f32 %v3496, %v4201
    %v4203 = vand.u32 %v4202, 4294901760
    %4204 = vmatprep.subr.mxu0 %v4203
    %v4205 = vand.u32 %v3495, 4294901760
    %v4206 = vsub.f32 %v3495, %v4205
    %v4207 = vand.u32 %v4206, 4294901760
    %4208 = vmatpush1.msra.mxu0 %v4207
    %v4209 = vand.u32 %v3500, 4294901760
    %v4210 = vsub.f32 %v3500, %v4209
    %v4211 = vand.u32 %v4210, 4294901760
    %4212 = vmatprep.subr.mxu0 %v4211
    %v4213 = vand.u32 %v3499, 4294901760
    %v4214 = vsub.f32 %v3499, %v4213
    %v4215 = vand.u32 %v4214, 4294901760
    %4216 = vmatpush1.msra.mxu0 %v4215
    %v4217 = vand.u32 %v3504, 4294901760
    %v4218 = vsub.f32 %v3504, %v4217
    %v4219 = vand.u32 %v4218, 4294901760
    %4220 = vmatprep.subr.mxu0 %v4219
    %v4221 = vand.u32 %v3503, 4294901760
    %v4222 = vsub.f32 %v3503, %v4221
    %v4223 = vand.u32 %v4222, 4294901760
    %4224 = vmatpush1.msra.mxu0 %v4223
    %v4225 = vand.u32 %v3508, 4294901760
    %v4226 = vsub.f32 %v3508, %v4225
    %v4227 = vand.u32 %v4226, 4294901760
    %4228 = vmatprep.subr.mxu0 %v4227
    %v4229 = vand.u32 %v3507, 4294901760
    %v4230 = vsub.f32 %v3507, %v4229
    %v4231 = vand.u32 %v4230, 4294901760
    %4232 = vmatpush1.msra.mxu0 %v4231
    %4233 = vmatprep.subr.mxu0 0.0
    %4234 = vmatpush1.msra.mxu0 0.0
    %4235 = vmatprep.subr.mxu0 0.0
    %4236 = vmatpush1.msra.mxu0 0.0
    %4237 = vmatprep.subr.mxu0 0.0
    %4238 = vmatpush1.msra.mxu0 0.0
    %4239 = vmatprep.subr.mxu0 0.0
    %4240 = vmatpush1.msra.mxu0 0.0
    %4241 = vmatprep.subr.mxu0 0.0
    %4242 = vmatpush1.msra.mxu0 0.0
    %4243 = vmatprep.subr.mxu0 0.0
    %4244 = vmatpush1.msra.mxu0 0.0
    %4245 = vmatprep.subr.mxu0 0.0
    %4246 = vmatpush1.msra.mxu0 0.0
    %4247 = vmatprep.subr.mxu0 0.0
    %4248 = vmatpush1.msra.mxu0 0.0
    %4249 = vmatprep.subr.mxu0 0.0
    %4250 = vmatpush1.msra.mxu0 0.0
    %4251 = vmatprep.subr.mxu0 0.0
    %4252 = vmatpush1.msra.mxu0 0.0
    %4253 = vmatprep.subr.mxu0 0.0
    %4254 = vmatpush1.msra.mxu0 0.0
    %4255 = vmatprep.subr.mxu0 0.0
    %4256 = vmatpush1.msra.mxu0 0.0
    %4257 = vmatprep.subr.mxu0 0.0
    %4258 = vmatpush1.msra.mxu0 0.0
    %4259 = vmatprep.subr.mxu0 0.0
    %4260 = vmatpush1.msra.mxu0 0.0
    %4261 = vmatprep.subr.mxu0 0.0
    %4262 = vmatpush1.msra.mxu0 0.0
    %4263 = vmatprep.subr.mxu0 0.0
    %4264 = vmatpush1.msra.mxu0 0.0
    %4265 = vmatprep.subr.mxu0 0.0
    %4266 = vmatpush1.msra.mxu0 0.0
    %4267 = vmatprep.subr.mxu0 0.0
    %4268 = vmatpush1.msra.mxu0 0.0
    %4269 = vmatprep.subr.mxu0 0.0
    %4270 = vmatpush1.msra.mxu0 0.0
    %4271 = vmatprep.subr.mxu0 0.0
    %4272 = vmatpush1.msra.mxu0 0.0
    %4273 = vmatprep.subr.mxu0 0.0
    %4274 = vmatpush1.msra.mxu0 0.0
    %4275 = vmatprep.subr.mxu0 0.0
    %4276 = vmatpush1.msra.mxu0 0.0
    %4277 = vmatprep.subr.mxu0 0.0
    %4278 = vmatpush1.msra.mxu0 0.0
    %4279 = vmatprep.subr.mxu0 0.0
    %4280 = vmatpush1.msra.mxu0 0.0
    %4281 = vmatprep.subr.mxu0 0.0
    %4282 = vmatpush1.msra.mxu0 0.0
    %4283 = vmatprep.subr.mxu0 0.0
    %4284 = vmatpush1.msra.mxu0 0.0
    %4285 = vmatprep.subr.mxu0 0.0
    %4286 = vmatpush1.msra.mxu0 0.0
    %4287 = vmatprep.subr.mxu0 0.0
    %4288 = vmatpush1.msra.mxu0 0.0
    %4289 = vmatprep.mubr.f32.mxu0 0.0
    %v4290 = vand.u32 %v3832, 4294901760
    %4291 = vmatmul.mubr.f32.gmra.mrb[0].mxu0 %v4290
    %v4292 = vpop.f32.mrb[0].mxu0
    %v4293 = vadd.f32 %v4197, %v4292
    %v4294 = vpop.f32.mrb[0].mxu0
    %v4295 = vadd.f32 %v4199, %v4294
    %4296 = vdwg.mxu0
    %v4297 = vand.u32 %v3496, 4294901760
    %4298 = vmatprep.subr.mxu0 %v4297
    %v4299 = vand.u32 %v3495, 4294901760
    %4300 = vmatpush1.msra.mxu0 %v4299
    %v4301 = vand.u32 %v3500, 4294901760
    %4302 = vmatprep.subr.mxu0 %v4301
    %v4303 = vand.u32 %v3499, 4294901760
    %4304 = vmatpush1.msra.mxu0 %v4303
    %v4305 = vand.u32 %v3504, 4294901760
    %4306 = vmatprep.subr.mxu0 %v4305
    %v4307 = vand.u32 %v3503, 4294901760
    %4308 = vmatpush1.msra.mxu0 %v4307
    %v4309 = vand.u32 %v3508, 4294901760
    %4310 = vmatprep.subr.mxu0 %v4309
    %v4311 = vand.u32 %v3507, 4294901760
    %4312 = vmatpush1.msra.mxu0 %v4311
    %4313 = vmatprep.subr.mxu0 0.0
    %4314 = vmatpush1.msra.mxu0 0.0
    %4315 = vmatprep.subr.mxu0 0.0
    %4316 = vmatpush1.msra.mxu0 0.0
    %4317 = vmatprep.subr.mxu0 0.0
    %4318 = vmatpush1.msra.mxu0 0.0
    %4319 = vmatprep.subr.mxu0 0.0
    %4320 = vmatpush1.msra.mxu0 0.0
    %4321 = vmatprep.subr.mxu0 0.0
    %4322 = vmatpush1.msra.mxu0 0.0
    %4323 = vmatprep.subr.mxu0 0.0
    %4324 = vmatpush1.msra.mxu0 0.0
    %4325 = vmatprep.subr.mxu0 0.0
    %4326 = vmatpush1.msra.mxu0 0.0
    %4327 = vmatprep.subr.mxu0 0.0
    %4328 = vmatpush1.msra.mxu0 0.0
    %4329 = vmatprep.subr.mxu0 0.0
    %4330 = vmatpush1.msra.mxu0 0.0
    %4331 = vmatprep.subr.mxu0 0.0
    %4332 = vmatpush1.msra.mxu0 0.0
    %4333 = vmatprep.subr.mxu0 0.0
    %4334 = vmatpush1.msra.mxu0 0.0
    %4335 = vmatprep.subr.mxu0 0.0
    %4336 = vmatpush1.msra.mxu0 0.0
    %4337 = vmatprep.subr.mxu0 0.0
    %4338 = vmatpush1.msra.mxu0 0.0
    %4339 = vmatprep.subr.mxu0 0.0
    %4340 = vmatpush1.msra.mxu0 0.0
    %4341 = vmatprep.subr.mxu0 0.0
    %4342 = vmatpush1.msra.mxu0 0.0
    %4343 = vmatprep.subr.mxu0 0.0
    %4344 = vmatpush1.msra.mxu0 0.0
    %4345 = vmatprep.subr.mxu0 0.0
    %4346 = vmatpush1.msra.mxu0 0.0
    %4347 = vmatprep.subr.mxu0 0.0
    %4348 = vmatpush1.msra.mxu0 0.0
    %4349 = vmatprep.subr.mxu0 0.0
    %4350 = vmatpush1.msra.mxu0 0.0
    %4351 = vmatprep.subr.mxu0 0.0
    %4352 = vmatpush1.msra.mxu0 0.0
    %4353 = vmatprep.subr.mxu0 0.0
    %4354 = vmatpush1.msra.mxu0 0.0
    %4355 = vmatprep.subr.mxu0 0.0
    %4356 = vmatpush1.msra.mxu0 0.0
    %4357 = vmatprep.subr.mxu0 0.0
    %4358 = vmatpush1.msra.mxu0 0.0
    %4359 = vmatprep.subr.mxu0 0.0
    %4360 = vmatpush1.msra.mxu0 0.0
    %4361 = vmatprep.subr.mxu0 0.0
    %4362 = vmatpush1.msra.mxu0 0.0
    %4363 = vmatprep.subr.mxu0 0.0
    %4364 = vmatpush1.msra.mxu0 0.0
    %4365 = vmatprep.subr.mxu0 0.0
    %4366 = vmatpush1.msra.mxu0 0.0
    %4367 = vmatprep.subr.mxu0 0.0
    %4368 = vmatpush1.msra.mxu0 0.0
    %4369 = vmatprep.mubr.f32.mxu0 0.0
    %v4370 = vand.u32 %v3832, 4294901760
    %4371 = vmatmul.mubr.f32.gmra.mrb[0].mxu0 %v4370
    %v4372 = vpop.f32.mrb[0].mxu0
    %v4373 = vadd.f32 %v4293, %v4372
    %v4374 = vpop.f32.mrb[0].mxu0
    %v4375 = vadd.f32 %v4295, %v4374
    %4376 = vdwg.mxu0
    %v4377 = vand.u32 %v3498, 4294901760
    %4378 = vmatprep.subr.mxu0 %v4377
    %v4379 = vand.u32 %v3497, 4294901760
    %4380 = vmatpush1.msra.mxu0 %v4379
    %v4381 = vand.u32 %v3502, 4294901760
    %4382 = vmatprep.subr.mxu0 %v4381
    %v4383 = vand.u32 %v3501, 4294901760
    %4384 = vmatpush1.msra.mxu0 %v4383
    %v4385 = vand.u32 %v3506, 4294901760
    %4386 = vmatprep.subr.mxu0 %v4385
    %v4387 = vand.u32 %v3505, 4294901760
    %4388 = vmatpush1.msra.mxu0 %v4387
    %v4389 = vand.u32 %v3510, 4294901760
    %4390 = vmatprep.subr.mxu0 %v4389
    %v4391 = vand.u32 %v3509, 4294901760
    %4392 = vmatpush1.msra.mxu0 %v4391
    %4393 = vmatprep.subr.mxu0 0.0
    %4394 = vmatpush1.msra.mxu0 0.0
    %4395 = vmatprep.subr.mxu0 0.0
    %4396 = vmatpush1.msra.mxu0 0.0
    %4397 = vmatprep.subr.mxu0 0.0
    %4398 = vmatpush1.msra.mxu0 0.0
    %4399 = vmatprep.subr.mxu0 0.0
    %4400 = vmatpush1.msra.mxu0 0.0
    %4401 = vmatprep.subr.mxu0 0.0
    %4402 = vmatpush1.msra.mxu0 0.0
    %4403 = vmatprep.subr.mxu0 0.0
    %4404 = vmatpush1.msra.mxu0 0.0
    %4405 = vmatprep.subr.mxu0 0.0
    %4406 = vmatpush1.msra.mxu0 0.0
    %4407 = vmatprep.subr.mxu0 0.0
    %4408 = vmatpush1.msra.mxu0 0.0
    %4409 = vmatprep.subr.mxu0 0.0
    %4410 = vmatpush1.msra.mxu0 0.0
    %4411 = vmatprep.subr.mxu0 0.0
    %4412 = vmatpush1.msra.mxu0 0.0
    %4413 = vmatprep.subr.mxu0 0.0
    %4414 = vmatpush1.msra.mxu0 0.0
    %4415 = vmatprep.subr.mxu0 0.0
    %4416 = vmatpush1.msra.mxu0 0.0
    %4417 = vmatprep.subr.mxu0 0.0
    %4418 = vmatpush1.msra.mxu0 0.0
    %4419 = vmatprep.subr.mxu0 0.0
    %4420 = vmatpush1.msra.mxu0 0.0
    %4421 = vmatprep.subr.mxu0 0.0
    %4422 = vmatpush1.msra.mxu0 0.0
    %4423 = vmatprep.subr.mxu0 0.0
    %4424 = vmatpush1.msra.mxu0 0.0
    %4425 = vmatprep.subr.mxu0 0.0
    %4426 = vmatpush1.msra.mxu0 0.0
    %4427 = vmatprep.subr.mxu0 0.0
    %4428 = vmatpush1.msra.mxu0 0.0
    %4429 = vmatprep.subr.mxu0 0.0
    %4430 = vmatpush1.msra.mxu0 0.0
    %4431 = vmatprep.subr.mxu0 0.0
    %4432 = vmatpush1.msra.mxu0 0.0
    %4433 = vmatprep.subr.mxu0 0.0
    %4434 = vmatpush1.msra.mxu0 0.0
    %4435 = vmatprep.subr.mxu0 0.0
    %4436 = vmatpush1.msra.mxu0 0.0
    %4437 = vmatprep.subr.mxu0 0.0
    %4438 = vmatpush1.msra.mxu0 0.0
    %4439 = vmatprep.subr.mxu0 0.0
    %4440 = vmatpush1.msra.mxu0 0.0
    %4441 = vmatprep.subr.mxu0 0.0
    %4442 = vmatpush1.msra.mxu0 0.0
    %4443 = vmatprep.subr.mxu0 0.0
    %4444 = vmatpush1.msra.mxu0 0.0
    %4445 = vmatprep.subr.mxu0 0.0
    %4446 = vmatpush1.msra.mxu0 0.0
    %4447 = vmatprep.subr.mxu0 0.0
    %4448 = vmatpush1.msra.mxu0 0.0
    %4449 = vmatprep.mubr.f32.mxu0 0.0
    %v4450 = vand.u32 %v3832, 4294901760
    %v4451 = vsub.f32 %v3832, %v4450
    %v4452 = vand.u32 %v4451, 4294901760
    %v4453 = vsub.f32 %v4451, %v4452
    %v4454 = vand.u32 %v4453, 4294901760
    %4455 = vmatmul.mubr.f32.gmra.mrb[0].mxu0 %v4454
    %v4456 = vpop.f32.mrb[0].mxu0
    %v4457 = vadd.f32 0.0, %v4456
    %v4458 = vpop.f32.mrb[0].mxu0
    %v4459 = vadd.f32 0.0, %v4458
    %4460 = vdwg.mxu0
    %v4461 = vand.u32 %v3498, 4294901760
    %v4462 = vsub.f32 %v3498, %v4461
    %v4463 = vand.u32 %v4462, 4294901760
    %v4464 = vsub.f32 %v4462, %v4463
    %v4465 = vand.u32 %v4464, 4294901760
    %4466 = vmatprep.subr.mxu0 %v4465
    %v4467 = vand.u32 %v3497, 4294901760
    %v4468 = vsub.f32 %v3497, %v4467
    %v4469 = vand.u32 %v4468, 4294901760
    %v4470 = vsub.f32 %v4468, %v4469
    %v4471 = vand.u32 %v4470, 4294901760
    %4472 = vmatpush1.msra.mxu0 %v4471
    %v4473 = vand.u32 %v3502, 4294901760
    %v4474 = vsub.f32 %v3502, %v4473
    %v4475 = vand.u32 %v4474, 4294901760
    %v4476 = vsub.f32 %v4474, %v4475
    %v4477 = vand.u32 %v4476, 4294901760
    %4478 = vmatprep.subr.mxu0 %v4477
    %v4479 = vand.u32 %v3501, 4294901760
    %v4480 = vsub.f32 %v3501, %v4479
    %v4481 = vand.u32 %v4480, 4294901760
    %v4482 = vsub.f32 %v4480, %v4481
    %v4483 = vand.u32 %v4482, 4294901760
    %4484 = vmatpush1.msra.mxu0 %v4483
    %v4485 = vand.u32 %v3506, 4294901760
    %v4486 = vsub.f32 %v3506, %v4485
    %v4487 = vand.u32 %v4486, 4294901760
    %v4488 = vsub.f32 %v4486, %v4487
    %v4489 = vand.u32 %v4488, 4294901760
    %4490 = vmatprep.subr.mxu0 %v4489
    %v4491 = vand.u32 %v3505, 4294901760
    %v4492 = vsub.f32 %v3505, %v4491
    %v4493 = vand.u32 %v4492, 4294901760
    %v4494 = vsub.f32 %v4492, %v4493
    %v4495 = vand.u32 %v4494, 4294901760
    %4496 = vmatpush1.msra.mxu0 %v4495
    %v4497 = vand.u32 %v3510, 4294901760
    %v4498 = vsub.f32 %v3510, %v4497
    %v4499 = vand.u32 %v4498, 4294901760
    %v4500 = vsub.f32 %v4498, %v4499
    %v4501 = vand.u32 %v4500, 4294901760
    %4502 = vmatprep.subr.mxu0 %v4501
    %v4503 = vand.u32 %v3509, 4294901760
    %v4504 = vsub.f32 %v3509, %v4503
    %v4505 = vand.u32 %v4504, 4294901760
    %v4506 = vsub.f32 %v4504, %v4505
    %v4507 = vand.u32 %v4506, 4294901760
    %4508 = vmatpush1.msra.mxu0 %v4507
    %4509 = vmatprep.subr.mxu0 0.0
    %4510 = vmatpush1.msra.mxu0 0.0
    %4511 = vmatprep.subr.mxu0 0.0
    %4512 = vmatpush1.msra.mxu0 0.0
    %4513 = vmatprep.subr.mxu0 0.0
    %4514 = vmatpush1.msra.mxu0 0.0
    %4515 = vmatprep.subr.mxu0 0.0
    %4516 = vmatpush1.msra.mxu0 0.0
    %4517 = vmatprep.subr.mxu0 0.0
    %4518 = vmatpush1.msra.mxu0 0.0
    %4519 = vmatprep.subr.mxu0 0.0
    %4520 = vmatpush1.msra.mxu0 0.0
    %4521 = vmatprep.subr.mxu0 0.0
    %4522 = vmatpush1.msra.mxu0 0.0
    %4523 = vmatprep.subr.mxu0 0.0
    %4524 = vmatpush1.msra.mxu0 0.0
    %4525 = vmatprep.subr.mxu0 0.0
    %4526 = vmatpush1.msra.mxu0 0.0
    %4527 = vmatprep.subr.mxu0 0.0
    %4528 = vmatpush1.msra.mxu0 0.0
    %4529 = vmatprep.subr.mxu0 0.0
    %4530 = vmatpush1.msra.mxu0 0.0
    %4531 = vmatprep.subr.mxu0 0.0
    %4532 = vmatpush1.msra.mxu0 0.0
    %4533 = vmatprep.subr.mxu0 0.0
    %4534 = vmatpush1.msra.mxu0 0.0
    %4535 = vmatprep.subr.mxu0 0.0
    %4536 = vmatpush1.msra.mxu0 0.0
    %4537 = vmatprep.subr.mxu0 0.0
    %4538 = vmatpush1.msra.mxu0 0.0
    %4539 = vmatprep.subr.mxu0 0.0
    %4540 = vmatpush1.msra.mxu0 0.0
    %4541 = vmatprep.subr.mxu0 0.0
    %4542 = vmatpush1.msra.mxu0 0.0
    %4543 = vmatprep.subr.mxu0 0.0
    %4544 = vmatpush1.msra.mxu0 0.0
    %4545 = vmatprep.subr.mxu0 0.0
    %4546 = vmatpush1.msra.mxu0 0.0
    %4547 = vmatprep.subr.mxu0 0.0
    %4548 = vmatpush1.msra.mxu0 0.0
    %4549 = vmatprep.subr.mxu0 0.0
    %4550 = vmatpush1.msra.mxu0 0.0
    %4551 = vmatprep.subr.mxu0 0.0
    %4552 = vmatpush1.msra.mxu0 0.0
    %4553 = vmatprep.subr.mxu0 0.0
    %4554 = vmatpush1.msra.mxu0 0.0
    %4555 = vmatprep.subr.mxu0 0.0
    %4556 = vmatpush1.msra.mxu0 0.0
    %4557 = vmatprep.subr.mxu0 0.0
    %4558 = vmatpush1.msra.mxu0 0.0
    %4559 = vmatprep.subr.mxu0 0.0
    %4560 = vmatpush1.msra.mxu0 0.0
    %4561 = vmatprep.subr.mxu0 0.0
    %4562 = vmatpush1.msra.mxu0 0.0
    %4563 = vmatprep.subr.mxu0 0.0
    %4564 = vmatpush1.msra.mxu0 0.0
    %4565 = vmatprep.mubr.f32.mxu0 0.0
    %v4566 = vand.u32 %v3832, 4294901760
    %4567 = vmatmul.mubr.f32.gmra.mrb[0].mxu0 %v4566
    %v4568 = vpop.f32.mrb[0].mxu0
    %v4569 = vadd.f32 %v4457, %v4568
    %v4570 = vpop.f32.mrb[0].mxu0
    %v4571 = vadd.f32 %v4459, %v4570
    %4572 = vdwg.mxu0
    %v4573 = vand.u32 %v3498, 4294901760
    %v4574 = vsub.f32 %v3498, %v4573
    %4575 = vmatprep.subr.mxu0 %v4574
    %v4576 = vand.u32 %v3497, 4294901760
    %v4577 = vsub.f32 %v3497, %v4576
    %4578 = vmatpush1.msra.mxu0 %v4577
    %v4579 = vand.u32 %v3502, 4294901760
    %v4580 = vsub.f32 %v3502, %v4579
    %4581 = vmatprep.subr.mxu0 %v4580
    %v4582 = vand.u32 %v3501, 4294901760
    %v4583 = vsub.f32 %v3501, %v4582
    %4584 = vmatpush1.msra.mxu0 %v4583
    %v4585 = vand.u32 %v3506, 4294901760
    %v4586 = vsub.f32 %v3506, %v4585
    %4587 = vmatprep.subr.mxu0 %v4586
    %v4588 = vand.u32 %v3505, 4294901760
    %v4589 = vsub.f32 %v3505, %v4588
    %4590 = vmatpush1.msra.mxu0 %v4589
    %v4591 = vand.u32 %v3510, 4294901760
    %v4592 = vsub.f32 %v3510, %v4591
    %4593 = vmatprep.subr.mxu0 %v4592
    %v4594 = vand.u32 %v3509, 4294901760
    %v4595 = vsub.f32 %v3509, %v4594
    %4596 = vmatpush1.msra.mxu0 %v4595
    %4597 = vmatprep.subr.mxu0 0.0
    %4598 = vmatpush1.msra.mxu0 0.0
    %4599 = vmatprep.subr.mxu0 0.0
    %4600 = vmatpush1.msra.mxu0 0.0
    %4601 = vmatprep.subr.mxu0 0.0
    %4602 = vmatpush1.msra.mxu0 0.0
    %4603 = vmatprep.subr.mxu0 0.0
    %4604 = vmatpush1.msra.mxu0 0.0
    %4605 = vmatprep.subr.mxu0 0.0
    %4606 = vmatpush1.msra.mxu0 0.0
    %4607 = vmatprep.subr.mxu0 0.0
    %4608 = vmatpush1.msra.mxu0 0.0
    %4609 = vmatprep.subr.mxu0 0.0
    %4610 = vmatpush1.msra.mxu0 0.0
    %4611 = vmatprep.subr.mxu0 0.0
    %4612 = vmatpush1.msra.mxu0 0.0
    %4613 = vmatprep.subr.mxu0 0.0
    %4614 = vmatpush1.msra.mxu0 0.0
    %4615 = vmatprep.subr.mxu0 0.0
    %4616 = vmatpush1.msra.mxu0 0.0
    %4617 = vmatprep.subr.mxu0 0.0
    %4618 = vmatpush1.msra.mxu0 0.0
    %4619 = vmatprep.subr.mxu0 0.0
    %4620 = vmatpush1.msra.mxu0 0.0
    %4621 = vmatprep.subr.mxu0 0.0
    %4622 = vmatpush1.msra.mxu0 0.0
    %4623 = vmatprep.subr.mxu0 0.0
    %4624 = vmatpush1.msra.mxu0 0.0
    %4625 = vmatprep.subr.mxu0 0.0
    %4626 = vmatpush1.msra.mxu0 0.0
    %4627 = vmatprep.subr.mxu0 0.0
    %4628 = vmatpush1.msra.mxu0 0.0
    %4629 = vmatprep.subr.mxu0 0.0
    %4630 = vmatpush1.msra.mxu0 0.0
    %4631 = vmatprep.subr.mxu0 0.0
    %4632 = vmatpush1.msra.mxu0 0.0
    %4633 = vmatprep.subr.mxu0 0.0
    %4634 = vmatpush1.msra.mxu0 0.0
    %4635 = vmatprep.subr.mxu0 0.0
    %4636 = vmatpush1.msra.mxu0 0.0
    %4637 = vmatprep.subr.mxu0 0.0
    %4638 = vmatpush1.msra.mxu0 0.0
    %4639 = vmatprep.subr.mxu0 0.0
    %4640 = vmatpush1.msra.mxu0 0.0
    %4641 = vmatprep.subr.mxu0 0.0
    %4642 = vmatpush1.msra.mxu0 0.0
    %4643 = vmatprep.subr.mxu0 0.0
    %4644 = vmatpush1.msra.mxu0 0.0
    %4645 = vmatprep.subr.mxu0 0.0
    %4646 = vmatpush1.msra.mxu0 0.0
    %4647 = vmatprep.subr.mxu0 0.0
    %4648 = vmatpush1.msra.mxu0 0.0
    %4649 = vmatprep.subr.mxu0 0.0
    %4650 = vmatpush1.msra.mxu0 0.0
    %4651 = vmatprep.subr.mxu0 0.0
    %4652 = vmatpush1.msra.mxu0 0.0
    %4653 = vmatprep.mubr.f32.mxu0 0.0
    %v4654 = vand.u32 %v3832, 4294901760
    %v4655 = vsub.f32 %v3832, %v4654
    %4656 = vmatmul.mubr.f32.gmra.mrb[0].mxu0 %v4655
    %v4657 = vpop.f32.mrb[0].mxu0
    %v4658 = vadd.f32 %v4569, %v4657
    %v4659 = vpop.f32.mrb[0].mxu0
    %v4660 = vadd.f32 %v4571, %v4659
    %4661 = vdwg.mxu0
    %v4662 = vand.u32 %v3498, 4294901760
    %4663 = vmatprep.subr.mxu0 %v4662
    %v4664 = vand.u32 %v3497, 4294901760
    %4665 = vmatpush1.msra.mxu0 %v4664
    %v4666 = vand.u32 %v3502, 4294901760
    %4667 = vmatprep.subr.mxu0 %v4666
    %v4668 = vand.u32 %v3501, 4294901760
    %4669 = vmatpush1.msra.mxu0 %v4668
    %v4670 = vand.u32 %v3506, 4294901760
    %4671 = vmatprep.subr.mxu0 %v4670
    %v4672 = vand.u32 %v3505, 4294901760
    %4673 = vmatpush1.msra.mxu0 %v4672
    %v4674 = vand.u32 %v3510, 4294901760
    %4675 = vmatprep.subr.mxu0 %v4674
    %v4676 = vand.u32 %v3509, 4294901760
    %4677 = vmatpush1.msra.mxu0 %v4676
    %4678 = vmatprep.subr.mxu0 0.0
    %4679 = vmatpush1.msra.mxu0 0.0
    %4680 = vmatprep.subr.mxu0 0.0
    %4681 = vmatpush1.msra.mxu0 0.0
    %4682 = vmatprep.subr.mxu0 0.0
    %4683 = vmatpush1.msra.mxu0 0.0
    %4684 = vmatprep.subr.mxu0 0.0
    %4685 = vmatpush1.msra.mxu0 0.0
    %4686 = vmatprep.subr.mxu0 0.0
    %4687 = vmatpush1.msra.mxu0 0.0
    %4688 = vmatprep.subr.mxu0 0.0
    %4689 = vmatpush1.msra.mxu0 0.0
    %4690 = vmatprep.subr.mxu0 0.0
    %4691 = vmatpush1.msra.mxu0 0.0
    %4692 = vmatprep.subr.mxu0 0.0
    %4693 = vmatpush1.msra.mxu0 0.0
    %4694 = vmatprep.subr.mxu0 0.0
    %4695 = vmatpush1.msra.mxu0 0.0
    %4696 = vmatprep.subr.mxu0 0.0
    %4697 = vmatpush1.msra.mxu0 0.0
    %4698 = vmatprep.subr.mxu0 0.0
    %4699 = vmatpush1.msra.mxu0 0.0
    %4700 = vmatprep.subr.mxu0 0.0
    %4701 = vmatpush1.msra.mxu0 0.0
    %4702 = vmatprep.subr.mxu0 0.0
    %4703 = vmatpush1.msra.mxu0 0.0
    %4704 = vmatprep.subr.mxu0 0.0
    %4705 = vmatpush1.msra.mxu0 0.0
    %4706 = vmatprep.subr.mxu0 0.0
    %4707 = vmatpush1.msra.mxu0 0.0
    %4708 = vmatprep.subr.mxu0 0.0
    %4709 = vmatpush1.msra.mxu0 0.0
    %4710 = vmatprep.subr.mxu0 0.0
    %4711 = vmatpush1.msra.mxu0 0.0
    %4712 = vmatprep.subr.mxu0 0.0
    %4713 = vmatpush1.msra.mxu0 0.0
    %4714 = vmatprep.subr.mxu0 0.0
    %4715 = vmatpush1.msra.mxu0 0.0
    %4716 = vmatprep.subr.mxu0 0.0
    %4717 = vmatpush1.msra.mxu0 0.0
    %4718 = vmatprep.subr.mxu0 0.0
    %4719 = vmatpush1.msra.mxu0 0.0
    %4720 = vmatprep.subr.mxu0 0.0
    %4721 = vmatpush1.msra.mxu0 0.0
    %4722 = vmatprep.subr.mxu0 0.0
    %4723 = vmatpush1.msra.mxu0 0.0
    %4724 = vmatprep.subr.mxu0 0.0
    %4725 = vmatpush1.msra.mxu0 0.0
    %4726 = vmatprep.subr.mxu0 0.0
    %4727 = vmatpush1.msra.mxu0 0.0
    %4728 = vmatprep.subr.mxu0 0.0
    %4729 = vmatpush1.msra.mxu0 0.0
    %4730 = vmatprep.subr.mxu0 0.0
    %4731 = vmatpush1.msra.mxu0 0.0
    %4732 = vmatprep.subr.mxu0 0.0
    %4733 = vmatpush1.msra.mxu0 0.0
    %4734 = vmatprep.mubr.f32.mxu0 0.0
    %v4735 = vand.u32 %v3832, 4294901760
    %v4736 = vsub.f32 %v3832, %v4735
    %v4737 = vand.u32 %v4736, 4294901760
    %4738 = vmatmul.mubr.f32.gmra.mrb[0].mxu0 %v4737
    %v4739 = vpop.f32.mrb[0].mxu0
    %v4740 = vadd.f32 %v4658, %v4739
    %v4741 = vpop.f32.mrb[0].mxu0
    %v4742 = vadd.f32 %v4660, %v4741
    %4743 = vdwg.mxu0
    %v4744 = vand.u32 %v3498, 4294901760
    %v4745 = vsub.f32 %v3498, %v4744
    %v4746 = vand.u32 %v4745, 4294901760
    %4747 = vmatprep.subr.mxu0 %v4746
    %v4748 = vand.u32 %v3497, 4294901760
    %v4749 = vsub.f32 %v3497, %v4748
    %v4750 = vand.u32 %v4749, 4294901760
    %4751 = vmatpush1.msra.mxu0 %v4750
    %v4752 = vand.u32 %v3502, 4294901760
    %v4753 = vsub.f32 %v3502, %v4752
    %v4754 = vand.u32 %v4753, 4294901760
    %4755 = vmatprep.subr.mxu0 %v4754
    %v4756 = vand.u32 %v3501, 4294901760
    %v4757 = vsub.f32 %v3501, %v4756
    %v4758 = vand.u32 %v4757, 4294901760
    %4759 = vmatpush1.msra.mxu0 %v4758
    %v4760 = vand.u32 %v3506, 4294901760
    %v4761 = vsub.f32 %v3506, %v4760
    %v4762 = vand.u32 %v4761, 4294901760
    %4763 = vmatprep.subr.mxu0 %v4762
    %v4764 = vand.u32 %v3505, 4294901760
    %v4765 = vsub.f32 %v3505, %v4764
    %v4766 = vand.u32 %v4765, 4294901760
    %4767 = vmatpush1.msra.mxu0 %v4766
    %v4768 = vand.u32 %v3510, 4294901760
    %v4769 = vsub.f32 %v3510, %v4768
    %v4770 = vand.u32 %v4769, 4294901760
    %4771 = vmatprep.subr.mxu0 %v4770
    %v4772 = vand.u32 %v3509, 4294901760
    %v4773 = vsub.f32 %v3509, %v4772
    %v4774 = vand.u32 %v4773, 4294901760
    %4775 = vmatpush1.msra.mxu0 %v4774
    %4776 = vmatprep.subr.mxu0 0.0
    %4777 = vmatpush1.msra.mxu0 0.0
    %4778 = vmatprep.subr.mxu0 0.0
    %4779 = vmatpush1.msra.mxu0 0.0
    %4780 = vmatprep.subr.mxu0 0.0
    %4781 = vmatpush1.msra.mxu0 0.0
    %4782 = vmatprep.subr.mxu0 0.0
    %4783 = vmatpush1.msra.mxu0 0.0
    %4784 = vmatprep.subr.mxu0 0.0
    %4785 = vmatpush1.msra.mxu0 0.0
    %4786 = vmatprep.subr.mxu0 0.0
    %4787 = vmatpush1.msra.mxu0 0.0
    %4788 = vmatprep.subr.mxu0 0.0
    %4789 = vmatpush1.msra.mxu0 0.0
    %4790 = vmatprep.subr.mxu0 0.0
    %4791 = vmatpush1.msra.mxu0 0.0
    %4792 = vmatprep.subr.mxu0 0.0
    %4793 = vmatpush1.msra.mxu0 0.0
    %4794 = vmatprep.subr.mxu0 0.0
    %4795 = vmatpush1.msra.mxu0 0.0
    %4796 = vmatprep.subr.mxu0 0.0
    %4797 = vmatpush1.msra.mxu0 0.0
    %4798 = vmatprep.subr.mxu0 0.0
    %4799 = vmatpush1.msra.mxu0 0.0
    %4800 = vmatprep.subr.mxu0 0.0
    %4801 = vmatpush1.msra.mxu0 0.0
    %4802 = vmatprep.subr.mxu0 0.0
    %4803 = vmatpush1.msra.mxu0 0.0
    %4804 = vmatprep.subr.mxu0 0.0
    %4805 = vmatpush1.msra.mxu0 0.0
    %4806 = vmatprep.subr.mxu0 0.0
    %4807 = vmatpush1.msra.mxu0 0.0
    %4808 = vmatprep.subr.mxu0 0.0
    %4809 = vmatpush1.msra.mxu0 0.0
    %4810 = vmatprep.subr.mxu0 0.0
    %4811 = vmatpush1.msra.mxu0 0.0
    %4812 = vmatprep.subr.mxu0 0.0
    %4813 = vmatpush1.msra.mxu0 0.0
    %4814 = vmatprep.subr.mxu0 0.0
    %4815 = vmatpush1.msra.mxu0 0.0
    %4816 = vmatprep.subr.mxu0 0.0
    %4817 = vmatpush1.msra.mxu0 0.0
    %4818 = vmatprep.subr.mxu0 0.0
    %4819 = vmatpush1.msra.mxu0 0.0
    %4820 = vmatprep.subr.mxu0 0.0
    %4821 = vmatpush1.msra.mxu0 0.0
    %4822 = vmatprep.subr.mxu0 0.0
    %4823 = vmatpush1.msra.mxu0 0.0
    %4824 = vmatprep.subr.mxu0 0.0
    %4825 = vmatpush1.msra.mxu0 0.0
    %4826 = vmatprep.subr.mxu0 0.0
    %4827 = vmatpush1.msra.mxu0 0.0
    %4828 = vmatprep.subr.mxu0 0.0
    %4829 = vmatpush1.msra.mxu0 0.0
    %4830 = vmatprep.subr.mxu0 0.0
    %4831 = vmatpush1.msra.mxu0 0.0
    %4832 = vmatprep.mubr.f32.mxu0 0.0
    %v4833 = vand.u32 %v3832, 4294901760
    %4834 = vmatmul.mubr.f32.gmra.mrb[0].mxu0 %v4833
    %v4835 = vpop.f32.mrb[0].mxu0
    %v4836 = vadd.f32 %v4740, %v4835
    %v4837 = vpop.f32.mrb[0].mxu0
    %v4838 = vadd.f32 %v4742, %v4837
    %4839 = vdwg.mxu0
    %v4840 = vand.u32 %v3498, 4294901760
    %4841 = vmatprep.subr.mxu0 %v4840
    %v4842 = vand.u32 %v3497, 4294901760
    %4843 = vmatpush1.msra.mxu0 %v4842
    %v4844 = vand.u32 %v3502, 4294901760
    %4845 = vmatprep.subr.mxu0 %v4844
    %v4846 = vand.u32 %v3501, 4294901760
    %4847 = vmatpush1.msra.mxu0 %v4846
    %v4848 = vand.u32 %v3506, 4294901760
    %4849 = vmatprep.subr.mxu0 %v4848
    %v4850 = vand.u32 %v3505, 4294901760
    %4851 = vmatpush1.msra.mxu0 %v4850
    %v4852 = vand.u32 %v3510, 4294901760
    %4853 = vmatprep.subr.mxu0 %v4852
    %v4854 = vand.u32 %v3509, 4294901760
    %4855 = vmatpush1.msra.mxu0 %v4854
    %4856 = vmatprep.subr.mxu0 0.0
    %4857 = vmatpush1.msra.mxu0 0.0
    %4858 = vmatprep.subr.mxu0 0.0
    %4859 = vmatpush1.msra.mxu0 0.0
    %4860 = vmatprep.subr.mxu0 0.0
    %4861 = vmatpush1.msra.mxu0 0.0
    %4862 = vmatprep.subr.mxu0 0.0
    %4863 = vmatpush1.msra.mxu0 0.0
    %4864 = vmatprep.subr.mxu0 0.0
    %4865 = vmatpush1.msra.mxu0 0.0
    %4866 = vmatprep.subr.mxu0 0.0
    %4867 = vmatpush1.msra.mxu0 0.0
    %4868 = vmatprep.subr.mxu0 0.0
    %4869 = vmatpush1.msra.mxu0 0.0
    %4870 = vmatprep.subr.mxu0 0.0
    %4871 = vmatpush1.msra.mxu0 0.0
    %4872 = vmatprep.subr.mxu0 0.0
    %4873 = vmatpush1.msra.mxu0 0.0
    %4874 = vmatprep.subr.mxu0 0.0
    %4875 = vmatpush1.msra.mxu0 0.0
    %4876 = vmatprep.subr.mxu0 0.0
    %4877 = vmatpush1.msra.mxu0 0.0
    %4878 = vmatprep.subr.mxu0 0.0
    %4879 = vmatpush1.msra.mxu0 0.0
    %4880 = vmatprep.subr.mxu0 0.0
    %4881 = vmatpush1.msra.mxu0 0.0
    %4882 = vmatprep.subr.mxu0 0.0
    %4883 = vmatpush1.msra.mxu0 0.0
    %4884 = vmatprep.subr.mxu0 0.0
    %4885 = vmatpush1.msra.mxu0 0.0
    %4886 = vmatprep.subr.mxu0 0.0
    %4887 = vmatpush1.msra.mxu0 0.0
    %4888 = vmatprep.subr.mxu0 0.0
    %4889 = vmatpush1.msra.mxu0 0.0
    %4890 = vmatprep.subr.mxu0 0.0
    %4891 = vmatpush1.msra.mxu0 0.0
    %4892 = vmatprep.subr.mxu0 0.0
    %4893 = vmatpush1.msra.mxu0 0.0
    %4894 = vmatprep.subr.mxu0 0.0
    %4895 = vmatpush1.msra.mxu0 0.0
    %4896 = vmatprep.subr.mxu0 0.0
    %4897 = vmatpush1.msra.mxu0 0.0
    %4898 = vmatprep.subr.mxu0 0.0
    %4899 = vmatpush1.msra.mxu0 0.0
    %4900 = vmatprep.subr.mxu0 0.0
    %4901 = vmatpush1.msra.mxu0 0.0
    %4902 = vmatprep.subr.mxu0 0.0
    %4903 = vmatpush1.msra.mxu0 0.0
    %4904 = vmatprep.subr.mxu0 0.0
    %4905 = vmatpush1.msra.mxu0 0.0
    %4906 = vmatprep.subr.mxu0 0.0
    %4907 = vmatpush1.msra.mxu0 0.0
    %4908 = vmatprep.subr.mxu0 0.0
    %4909 = vmatpush1.msra.mxu0 0.0
    %4910 = vmatprep.subr.mxu0 0.0
    %4911 = vmatpush1.msra.mxu0 0.0
    %4912 = vmatprep.mubr.f32.mxu0 0.0
    %v4913 = vand.u32 %v3832, 4294901760
    %4914 = vmatmul.mubr.f32.gmra.mrb[0].mxu0 %v4913
    %v4915 = vpop.f32.mrb[0].mxu0
    %v4916 = vadd.f32 %v4836, %v4915
    %v4917 = vpop.f32.mrb[0].mxu0
    %v4918 = vadd.f32 %v4838, %v4917
    %4919 = vdwg.mxu0
    %v4920 = vld [vmem:[%s4] sm:$0x1]
    %v4922 = vlaneseq
    %v4923 = vshrl.u32 %v4922, 7
    %v4924 = vsub.s32 0, %v4923
    %v4925 = vrot.slane %v4920, %v4924
    %4927 = vmatprep.subr.mxu0 0.0
    %v4928 = vand.u32 %v3767, 4294901760
    %4929 = vmatpush1.msra.mxu0 %v4928
    %4930 = vmatprep.subr.mxu0 0.0
    %v4931 = vand.u32 %v3768, 4294901760
    %4932 = vmatpush1.msra.mxu0 %v4931
    %4933 = vmatprep.subr.mxu0 0.0
    %v4934 = vand.u32 %v3769, 4294901760
    %4935 = vmatpush1.msra.mxu0 %v4934
    %4936 = vmatprep.subr.mxu0 0.0
    %v4937 = vand.u32 %v3770, 4294901760
    %4938 = vmatpush1.msra.mxu0 %v4937
    %4939 = vmatprep.subr.mxu0 0.0
    %v4940 = vand.u32 %v3771, 4294901760
    %4941 = vmatpush1.msra.mxu0 %v4940
    %4942 = vmatprep.subr.mxu0 0.0
    %v4943 = vand.u32 %v3772, 4294901760
    %4944 = vmatpush1.msra.mxu0 %v4943
    %4945 = vmatprep.subr.mxu0 0.0
    %v4946 = vand.u32 %v3773, 4294901760
    %4947 = vmatpush1.msra.mxu0 %v4946
    %4948 = vmatprep.subr.mxu0 0.0
    %v4949 = vand.u32 %v3774, 4294901760
    %4950 = vmatpush1.msra.mxu0 %v4949
    %4951 = vmatprep.subr.mxu0 0.0
    %v4952 = vand.u32 %v3775, 4294901760
    %4953 = vmatpush1.msra.mxu0 %v4952
    %4954 = vmatprep.subr.mxu0 0.0
    %v4955 = vand.u32 %v3776, 4294901760
    %4956 = vmatpush1.msra.mxu0 %v4955
    %4957 = vmatprep.subr.mxu0 0.0
    %v4958 = vand.u32 %v3777, 4294901760
    %4959 = vmatpush1.msra.mxu0 %v4958
    %4960 = vmatprep.subr.mxu0 0.0
    %v4961 = vand.u32 %v3778, 4294901760
    %4962 = vmatpush1.msra.mxu0 %v4961
    %4963 = vmatprep.subr.mxu0 0.0
    %v4964 = vand.u32 %v3779, 4294901760
    %4965 = vmatpush1.msra.mxu0 %v4964
    %4966 = vmatprep.subr.mxu0 0.0
    %v4967 = vand.u32 %v3780, 4294901760
    %4968 = vmatpush1.msra.mxu0 %v4967
    %4969 = vmatprep.subr.mxu0 0.0
    %v4970 = vand.u32 %v3781, 4294901760
    %4971 = vmatpush1.msra.mxu0 %v4970
    %4972 = vmatprep.subr.mxu0 0.0
    %v4973 = vand.u32 %v3782, 4294901760
    %4974 = vmatpush1.msra.mxu0 %v4973
    %4975 = vmatprep.subr.mxu0 0.0
    %v4976 = vand.u32 %v3783, 4294901760
    %4977 = vmatpush1.msra.mxu0 %v4976
    %4978 = vmatprep.subr.mxu0 0.0
    %v4979 = vand.u32 %v3784, 4294901760
    %4980 = vmatpush1.msra.mxu0 %v4979
    %4981 = vmatprep.subr.mxu0 0.0
    %v4982 = vand.u32 %v3785, 4294901760
    %4983 = vmatpush1.msra.mxu0 %v4982
    %4984 = vmatprep.subr.mxu0 0.0
    %v4985 = vand.u32 %v3786, 4294901760
    %4986 = vmatpush1.msra.mxu0 %v4985
    %4987 = vmatprep.subr.mxu0 0.0
    %v4988 = vand.u32 %v3787, 4294901760
    %4989 = vmatpush1.msra.mxu0 %v4988
    %4990 = vmatprep.subr.mxu0 0.0
    %v4991 = vand.u32 %v3788, 4294901760
    %4992 = vmatpush1.msra.mxu0 %v4991
    %4993 = vmatprep.subr.mxu0 0.0
    %v4994 = vand.u32 %v3789, 4294901760
    %4995 = vmatpush1.msra.mxu0 %v4994
    %4996 = vmatprep.subr.mxu0 0.0
    %v4997 = vand.u32 %v3790, 4294901760
    %4998 = vmatpush1.msra.mxu0 %v4997
    %4999 = vmatprep.subr.mxu0 0.0
    %v5000 = vand.u32 %v3791, 4294901760
    %5001 = vmatpush1.msra.mxu0 %v5000
    %5002 = vmatprep.subr.mxu0 0.0
    %v5003 = vand.u32 %v3792, 4294901760
    %5004 = vmatpush1.msra.mxu0 %v5003
    %5005 = vmatprep.subr.mxu0 0.0
    %v5006 = vand.u32 %v3793, 4294901760
    %5007 = vmatpush1.msra.mxu0 %v5006
    %5008 = vmatprep.subr.mxu0 0.0
    %v5009 = vand.u32 %v3794, 4294901760
    %5010 = vmatpush1.msra.mxu0 %v5009
    %5011 = vmatprep.subr.mxu0 0.0
    %v5012 = vand.u32 %v3795, 4294901760
    %5013 = vmatpush1.msra.mxu0 %v5012
    %5014 = vmatprep.subr.mxu0 0.0
    %v5015 = vand.u32 %v3796, 4294901760
    %5016 = vmatpush1.msra.mxu0 %v5015
    %5017 = vmatprep.subr.mxu0 0.0
    %v5018 = vand.u32 %v3797, 4294901760
    %5019 = vmatpush1.msra.mxu0 %v5018
    %5020 = vmatprep.subr.mxu0 0.0
    %v5021 = vand.u32 %v3798, 4294901760
    %5022 = vmatpush1.msra.mxu0 %v5021
    %v5023 = vand.u32 %v4375, 4294901760
    %v5024 = vsub.f32 %v4375, %v5023
    %v5025 = vand.u32 %v5024, 4294901760
    %v5026 = vsub.f32 %v5024, %v5025
    %v5027 = vand.u32 %v5026, 4294901760
    %5028 = vmatprep.mubr.f32.mxu0 %v5027
    %v5029 = vand.u32 %v4373, 4294901760
    %v5030 = vsub.f32 %v4373, %v5029
    %v5031 = vand.u32 %v5030, 4294901760
    %v5032 = vsub.f32 %v5030, %v5031
    %v5033 = vand.u32 %v5032, 4294901760
    %5034 = vmatmul.mubr.f32.gmra.mrb[0].mxu0 %v5033
    %v5035 = vpop.f32.mrb[0].mxu0
    %v5036 = vadd.f32 %v4925, %v5035
    %v5037 = vpop.f32.mrb[0].mxu0
    %5038 = vdwg.mxu0
    %5039 = vmatprep.subr.mxu0 0.0
    %v5040 = vand.u32 %v3767, 4294901760
    %v5041 = vsub.f32 %v3767, %v5040
    %v5042 = vand.u32 %v5041, 4294901760
    %v5043 = vsub.f32 %v5041, %v5042
    %v5044 = vand.u32 %v5043, 4294901760
    %5045 = vmatpush1.msra.mxu0 %v5044
    %5046 = vmatprep.subr.mxu0 0.0
    %v5047 = vand.u32 %v3768, 4294901760
    %v5048 = vsub.f32 %v3768, %v5047
    %v5049 = vand.u32 %v5048, 4294901760
    %v5050 = vsub.f32 %v5048, %v5049
    %v5051 = vand.u32 %v5050, 4294901760
    %5052 = vmatpush1.msra.mxu0 %v5051
    %5053 = vmatprep.subr.mxu0 0.0
    %v5054 = vand.u32 %v3769, 4294901760
    %v5055 = vsub.f32 %v3769, %v5054
    %v5056 = vand.u32 %v5055, 4294901760
    %v5057 = vsub.f32 %v5055, %v5056
    %v5058 = vand.u32 %v5057, 4294901760
    %5059 = vmatpush1.msra.mxu0 %v5058
    %5060 = vmatprep.subr.mxu0 0.0
    %v5061 = vand.u32 %v3770, 4294901760
    %v5062 = vsub.f32 %v3770, %v5061
    %v5063 = vand.u32 %v5062, 4294901760
    %v5064 = vsub.f32 %v5062, %v5063
    %v5065 = vand.u32 %v5064, 4294901760
    %5066 = vmatpush1.msra.mxu0 %v5065
    %5067 = vmatprep.subr.mxu0 0.0
    %v5068 = vand.u32 %v3771, 4294901760
    %v5069 = vsub.f32 %v3771, %v5068
    %v5070 = vand.u32 %v5069, 4294901760
    %v5071 = vsub.f32 %v5069, %v5070
    %v5072 = vand.u32 %v5071, 4294901760
    %5073 = vmatpush1.msra.mxu0 %v5072
    %5074 = vmatprep.subr.mxu0 0.0
    %v5075 = vand.u32 %v3772, 4294901760
    %v5076 = vsub.f32 %v3772, %v5075
    %v5077 = vand.u32 %v5076, 4294901760
    %v5078 = vsub.f32 %v5076, %v5077
    %v5079 = vand.u32 %v5078, 4294901760
    %5080 = vmatpush1.msra.mxu0 %v5079
    %5081 = vmatprep.subr.mxu0 0.0
    %v5082 = vand.u32 %v3773, 4294901760
    %v5083 = vsub.f32 %v3773, %v5082
    %v5084 = vand.u32 %v5083, 4294901760
    %v5085 = vsub.f32 %v5083, %v5084
    %v5086 = vand.u32 %v5085, 4294901760
    %5087 = vmatpush1.msra.mxu0 %v5086
    %5088 = vmatprep.subr.mxu0 0.0
    %v5089 = vand.u32 %v3774, 4294901760
    %v5090 = vsub.f32 %v3774, %v5089
    %v5091 = vand.u32 %v5090, 4294901760
    %v5092 = vsub.f32 %v5090, %v5091
    %v5093 = vand.u32 %v5092, 4294901760
    %5094 = vmatpush1.msra.mxu0 %v5093
    %5095 = vmatprep.subr.mxu0 0.0
    %v5096 = vand.u32 %v3775, 4294901760
    %v5097 = vsub.f32 %v3775, %v5096
    %v5098 = vand.u32 %v5097, 4294901760
    %v5099 = vsub.f32 %v5097, %v5098
    %v5100 = vand.u32 %v5099, 4294901760
    %5101 = vmatpush1.msra.mxu0 %v5100
    %5102 = vmatprep.subr.mxu0 0.0
    %v5103 = vand.u32 %v3776, 4294901760
    %v5104 = vsub.f32 %v3776, %v5103
    %v5105 = vand.u32 %v5104, 4294901760
    %v5106 = vsub.f32 %v5104, %v5105
    %v5107 = vand.u32 %v5106, 4294901760
    %5108 = vmatpush1.msra.mxu0 %v5107
    %5109 = vmatprep.subr.mxu0 0.0
    %v5110 = vand.u32 %v3777, 4294901760
    %v5111 = vsub.f32 %v3777, %v5110
    %v5112 = vand.u32 %v5111, 4294901760
    %v5113 = vsub.f32 %v5111, %v5112
    %v5114 = vand.u32 %v5113, 4294901760
    %5115 = vmatpush1.msra.mxu0 %v5114
    %5116 = vmatprep.subr.mxu0 0.0
    %v5117 = vand.u32 %v3778, 4294901760
    %v5118 = vsub.f32 %v3778, %v5117
    %v5119 = vand.u32 %v5118, 4294901760
    %v5120 = vsub.f32 %v5118, %v5119
    %v5121 = vand.u32 %v5120, 4294901760
    %5122 = vmatpush1.msra.mxu0 %v5121
    %5123 = vmatprep.subr.mxu0 0.0
    %v5124 = vand.u32 %v3779, 4294901760
    %v5125 = vsub.f32 %v3779, %v5124
    %v5126 = vand.u32 %v5125, 4294901760
    %v5127 = vsub.f32 %v5125, %v5126
    %v5128 = vand.u32 %v5127, 4294901760
    %5129 = vmatpush1.msra.mxu0 %v5128
    %5130 = vmatprep.subr.mxu0 0.0
    %v5131 = vand.u32 %v3780, 4294901760
    %v5132 = vsub.f32 %v3780, %v5131
    %v5133 = vand.u32 %v5132, 4294901760
    %v5134 = vsub.f32 %v5132, %v5133
    %v5135 = vand.u32 %v5134, 4294901760
    %5136 = vmatpush1.msra.mxu0 %v5135
    %5137 = vmatprep.subr.mxu0 0.0
    %v5138 = vand.u32 %v3781, 4294901760
    %v5139 = vsub.f32 %v3781, %v5138
    %v5140 = vand.u32 %v5139, 4294901760
    %v5141 = vsub.f32 %v5139, %v5140
    %v5142 = vand.u32 %v5141, 4294901760
    %5143 = vmatpush1.msra.mxu0 %v5142
    %5144 = vmatprep.subr.mxu0 0.0
    %v5145 = vand.u32 %v3782, 4294901760
    %v5146 = vsub.f32 %v3782, %v5145
    %v5147 = vand.u32 %v5146, 4294901760
    %v5148 = vsub.f32 %v5146, %v5147
    %v5149 = vand.u32 %v5148, 4294901760
    %5150 = vmatpush1.msra.mxu0 %v5149
    %5151 = vmatprep.subr.mxu0 0.0
    %v5152 = vand.u32 %v3783, 4294901760
    %v5153 = vsub.f32 %v3783, %v5152
    %v5154 = vand.u32 %v5153, 4294901760
    %v5155 = vsub.f32 %v5153, %v5154
    %v5156 = vand.u32 %v5155, 4294901760
    %5157 = vmatpush1.msra.mxu0 %v5156
    %5158 = vmatprep.subr.mxu0 0.0
    %v5159 = vand.u32 %v3784, 4294901760
    %v5160 = vsub.f32 %v3784, %v5159
    %v5161 = vand.u32 %v5160, 4294901760
    %v5162 = vsub.f32 %v5160, %v5161
    %v5163 = vand.u32 %v5162, 4294901760
    %5164 = vmatpush1.msra.mxu0 %v5163
    %5165 = vmatprep.subr.mxu0 0.0
    %v5166 = vand.u32 %v3785, 4294901760
    %v5167 = vsub.f32 %v3785, %v5166
    %v5168 = vand.u32 %v5167, 4294901760
    %v5169 = vsub.f32 %v5167, %v5168
    %v5170 = vand.u32 %v5169, 4294901760
    %5171 = vmatpush1.msra.mxu0 %v5170
    %5172 = vmatprep.subr.mxu0 0.0
    %v5173 = vand.u32 %v3786, 4294901760
    %v5174 = vsub.f32 %v3786, %v5173
    %v5175 = vand.u32 %v5174, 4294901760
    %v5176 = vsub.f32 %v5174, %v5175
    %v5177 = vand.u32 %v5176, 4294901760
    %5178 = vmatpush1.msra.mxu0 %v5177
    %5179 = vmatprep.subr.mxu0 0.0
    %v5180 = vand.u32 %v3787, 4294901760
    %v5181 = vsub.f32 %v3787, %v5180
    %v5182 = vand.u32 %v5181, 4294901760
    %v5183 = vsub.f32 %v5181, %v5182
    %v5184 = vand.u32 %v5183, 4294901760
    %5185 = vmatpush1.msra.mxu0 %v5184
    %5186 = vmatprep.subr.mxu0 0.0
    %v5187 = vand.u32 %v3788, 4294901760
    %v5188 = vsub.f32 %v3788, %v5187
    %v5189 = vand.u32 %v5188, 4294901760
    %v5190 = vsub.f32 %v5188, %v5189
    %v5191 = vand.u32 %v5190, 4294901760
    %5192 = vmatpush1.msra.mxu0 %v5191
    %5193 = vmatprep.subr.mxu0 0.0
    %v5194 = vand.u32 %v3789, 4294901760
    %v5195 = vsub.f32 %v3789, %v5194
    %v5196 = vand.u32 %v5195, 4294901760
    %v5197 = vsub.f32 %v5195, %v5196
    %v5198 = vand.u32 %v5197, 4294901760
    %5199 = vmatpush1.msra.mxu0 %v5198
    %5200 = vmatprep.subr.mxu0 0.0
    %v5201 = vand.u32 %v3790, 4294901760
    %v5202 = vsub.f32 %v3790, %v5201
    %v5203 = vand.u32 %v5202, 4294901760
    %v5204 = vsub.f32 %v5202, %v5203
    %v5205 = vand.u32 %v5204, 4294901760
    %5206 = vmatpush1.msra.mxu0 %v5205
    %5207 = vmatprep.subr.mxu0 0.0
    %v5208 = vand.u32 %v3791, 4294901760
    %v5209 = vsub.f32 %v3791, %v5208
    %v5210 = vand.u32 %v5209, 4294901760
    %v5211 = vsub.f32 %v5209, %v5210
    %v5212 = vand.u32 %v5211, 4294901760
    %5213 = vmatpush1.msra.mxu0 %v5212
    %5214 = vmatprep.subr.mxu0 0.0
    %v5215 = vand.u32 %v3792, 4294901760
    %v5216 = vsub.f32 %v3792, %v5215
    %v5217 = vand.u32 %v5216, 4294901760
    %v5218 = vsub.f32 %v5216, %v5217
    %v5219 = vand.u32 %v5218, 4294901760
    %5220 = vmatpush1.msra.mxu0 %v5219
    %5221 = vmatprep.subr.mxu0 0.0
    %v5222 = vand.u32 %v3793, 4294901760
    %v5223 = vsub.f32 %v3793, %v5222
    %v5224 = vand.u32 %v5223, 4294901760
    %v5225 = vsub.f32 %v5223, %v5224
    %v5226 = vand.u32 %v5225, 4294901760
    %5227 = vmatpush1.msra.mxu0 %v5226
    %5228 = vmatprep.subr.mxu0 0.0
    %v5229 = vand.u32 %v3794, 4294901760
    %v5230 = vsub.f32 %v3794, %v5229
    %v5231 = vand.u32 %v5230, 4294901760
    %v5232 = vsub.f32 %v5230, %v5231
    %v5233 = vand.u32 %v5232, 4294901760
    %5234 = vmatpush1.msra.mxu0 %v5233
    %5235 = vmatprep.subr.mxu0 0.0
    %v5236 = vand.u32 %v3795, 4294901760
    %v5237 = vsub.f32 %v3795, %v5236
    %v5238 = vand.u32 %v5237, 4294901760
    %v5239 = vsub.f32 %v5237, %v5238
    %v5240 = vand.u32 %v5239, 4294901760
    %5241 = vmatpush1.msra.mxu0 %v5240
    %5242 = vmatprep.subr.mxu0 0.0
    %v5243 = vand.u32 %v3796, 4294901760
    %v5244 = vsub.f32 %v3796, %v5243
    %v5245 = vand.u32 %v5244, 4294901760
    %v5246 = vsub.f32 %v5244, %v5245
    %v5247 = vand.u32 %v5246, 4294901760
    %5248 = vmatpush1.msra.mxu0 %v5247
    %5249 = vmatprep.subr.mxu0 0.0
    %v5250 = vand.u32 %v3797, 4294901760
    %v5251 = vsub.f32 %v3797, %v5250
    %v5252 = vand.u32 %v5251, 4294901760
    %v5253 = vsub.f32 %v5251, %v5252
    %v5254 = vand.u32 %v5253, 4294901760
    %5255 = vmatpush1.msra.mxu0 %v5254
    %5256 = vmatprep.subr.mxu0 0.0
    %v5257 = vand.u32 %v3798, 4294901760
    %v5258 = vsub.f32 %v3798, %v5257
    %v5259 = vand.u32 %v5258, 4294901760
    %v5260 = vsub.f32 %v5258, %v5259
    %v5261 = vand.u32 %v5260, 4294901760
    %5262 = vmatpush1.msra.mxu0 %v5261
    %v5263 = vand.u32 %v4375, 4294901760
    %5264 = vmatprep.mubr.f32.mxu0 %v5263
    %v5265 = vand.u32 %v4373, 4294901760
    %5266 = vmatmul.mubr.f32.gmra.mrb[0].mxu0 %v5265
    %v5267 = vpop.f32.mrb[0].mxu0
    %v5268 = vadd.f32 %v5036, %v5267
    %v5269 = vpop.f32.mrb[0].mxu0
    %5270 = vdwg.mxu0
    %5271 = vmatprep.subr.mxu0 0.0
    %v5272 = vand.u32 %v3767, 4294901760
    %v5273 = vsub.f32 %v3767, %v5272
    %5274 = vmatpush1.msra.mxu0 %v5273
    %5275 = vmatprep.subr.mxu0 0.0
    %v5276 = vand.u32 %v3768, 4294901760
    %v5277 = vsub.f32 %v3768, %v5276
    %5278 = vmatpush1.msra.mxu0 %v5277
    %5279 = vmatprep.subr.mxu0 0.0
    %v5280 = vand.u32 %v3769, 4294901760
    %v5281 = vsub.f32 %v3769, %v5280
    %5282 = vmatpush1.msra.mxu0 %v5281
    %5283 = vmatprep.subr.mxu0 0.0
    %v5284 = vand.u32 %v3770, 4294901760
    %v5285 = vsub.f32 %v3770, %v5284
    %5286 = vmatpush1.msra.mxu0 %v5285
    %5287 = vmatprep.subr.mxu0 0.0
    %v5288 = vand.u32 %v3771, 4294901760
    %v5289 = vsub.f32 %v3771, %v5288
    %5290 = vmatpush1.msra.mxu0 %v5289
    %5291 = vmatprep.subr.mxu0 0.0
    %v5292 = vand.u32 %v3772, 4294901760
    %v5293 = vsub.f32 %v3772, %v5292
    %5294 = vmatpush1.msra.mxu0 %v5293
    %5295 = vmatprep.subr.mxu0 0.0
    %v5296 = vand.u32 %v3773, 4294901760
    %v5297 = vsub.f32 %v3773, %v5296
    %5298 = vmatpush1.msra.mxu0 %v5297
    %5299 = vmatprep.subr.mxu0 0.0
    %v5300 = vand.u32 %v3774, 4294901760
    %v5301 = vsub.f32 %v3774, %v5300
    %5302 = vmatpush1.msra.mxu0 %v5301
    %5303 = vmatprep.subr.mxu0 0.0
    %v5304 = vand.u32 %v3775, 4294901760
    %v5305 = vsub.f32 %v3775, %v5304
    %5306 = vmatpush1.msra.mxu0 %v5305
    %5307 = vmatprep.subr.mxu0 0.0
    %v5308 = vand.u32 %v3776, 4294901760
    %v5309 = vsub.f32 %v3776, %v5308
    %5310 = vmatpush1.msra.mxu0 %v5309
    %5311 = vmatprep.subr.mxu0 0.0
    %v5312 = vand.u32 %v3777, 4294901760
    %v5313 = vsub.f32 %v3777, %v5312
    %5314 = vmatpush1.msra.mxu0 %v5313
    %5315 = vmatprep.subr.mxu0 0.0
    %v5316 = vand.u32 %v3778, 4294901760
    %v5317 = vsub.f32 %v3778, %v5316
    %5318 = vmatpush1.msra.mxu0 %v5317
    %5319 = vmatprep.subr.mxu0 0.0
    %v5320 = vand.u32 %v3779, 4294901760
    %v5321 = vsub.f32 %v3779, %v5320
    %5322 = vmatpush1.msra.mxu0 %v5321
    %5323 = vmatprep.subr.mxu0 0.0
    %v5324 = vand.u32 %v3780, 4294901760
    %v5325 = vsub.f32 %v3780, %v5324
    %5326 = vmatpush1.msra.mxu0 %v5325
    %5327 = vmatprep.subr.mxu0 0.0
    %v5328 = vand.u32 %v3781, 4294901760
    %v5329 = vsub.f32 %v3781, %v5328
    %5330 = vmatpush1.msra.mxu0 %v5329
    %5331 = vmatprep.subr.mxu0 0.0
    %v5332 = vand.u32 %v3782, 4294901760
    %v5333 = vsub.f32 %v3782, %v5332
    %5334 = vmatpush1.msra.mxu0 %v5333
    %5335 = vmatprep.subr.mxu0 0.0
    %v5336 = vand.u32 %v3783, 4294901760
    %v5337 = vsub.f32 %v3783, %v5336
    %5338 = vmatpush1.msra.mxu0 %v5337
    %5339 = vmatprep.subr.mxu0 0.0
    %v5340 = vand.u32 %v3784, 4294901760
    %v5341 = vsub.f32 %v3784, %v5340
    %5342 = vmatpush1.msra.mxu0 %v5341
    %5343 = vmatprep.subr.mxu0 0.0
    %v5344 = vand.u32 %v3785, 4294901760
    %v5345 = vsub.f32 %v3785, %v5344
    %5346 = vmatpush1.msra.mxu0 %v5345
    %5347 = vmatprep.subr.mxu0 0.0
    %v5348 = vand.u32 %v3786, 4294901760
    %v5349 = vsub.f32 %v3786, %v5348
    %5350 = vmatpush1.msra.mxu0 %v5349
    %5351 = vmatprep.subr.mxu0 0.0
    %v5352 = vand.u32 %v3787, 4294901760
    %v5353 = vsub.f32 %v3787, %v5352
    %5354 = vmatpush1.msra.mxu0 %v5353
    %5355 = vmatprep.subr.mxu0 0.0
    %v5356 = vand.u32 %v3788, 4294901760
    %v5357 = vsub.f32 %v3788, %v5356
    %5358 = vmatpush1.msra.mxu0 %v5357
    %5359 = vmatprep.subr.mxu0 0.0
    %v5360 = vand.u32 %v3789, 4294901760
    %v5361 = vsub.f32 %v3789, %v5360
    %5362 = vmatpush1.msra.mxu0 %v5361
    %5363 = vmatprep.subr.mxu0 0.0
    %v5364 = vand.u32 %v3790, 4294901760
    %v5365 = vsub.f32 %v3790, %v5364
    %5366 = vmatpush1.msra.mxu0 %v5365
    %5367 = vmatprep.subr.mxu0 0.0
    %v5368 = vand.u32 %v3791, 4294901760
    %v5369 = vsub.f32 %v3791, %v5368
    %5370 = vmatpush1.msra.mxu0 %v5369
    %5371 = vmatprep.subr.mxu0 0.0
    %v5372 = vand.u32 %v3792, 4294901760
    %v5373 = vsub.f32 %v3792, %v5372
    %5374 = vmatpush1.msra.mxu0 %v5373
    %5375 = vmatprep.subr.mxu0 0.0
    %v5376 = vand.u32 %v3793, 4294901760
    %v5377 = vsub.f32 %v3793, %v5376
    %5378 = vmatpush1.msra.mxu0 %v5377
    %5379 = vmatprep.subr.mxu0 0.0
    %v5380 = vand.u32 %v3794, 4294901760
    %v5381 = vsub.f32 %v3794, %v5380
    %5382 = vmatpush1.msra.mxu0 %v5381
    %5383 = vmatprep.subr.mxu0 0.0
    %v5384 = vand.u32 %v3795, 4294901760
    %v5385 = vsub.f32 %v3795, %v5384
    %5386 = vmatpush1.msra.mxu0 %v5385
    %5387 = vmatprep.subr.mxu0 0.0
    %v5388 = vand.u32 %v3796, 4294901760
    %v5389 = vsub.f32 %v3796, %v5388
    %5390 = vmatpush1.msra.mxu0 %v5389
    %5391 = vmatprep.subr.mxu0 0.0
    %v5392 = vand.u32 %v3797, 4294901760
    %v5393 = vsub.f32 %v3797, %v5392
    %5394 = vmatpush1.msra.mxu0 %v5393
    %5395 = vmatprep.subr.mxu0 0.0
    %v5396 = vand.u32 %v3798, 4294901760
    %v5397 = vsub.f32 %v3798, %v5396
    %5398 = vmatpush1.msra.mxu0 %v5397
    %v5399 = vand.u32 %v4375, 4294901760
    %v5400 = vsub.f32 %v4375, %v5399
    %5401 = vmatprep.mubr.f32.mxu0 %v5400
    %v5402 = vand.u32 %v4373, 4294901760
    %v5403 = vsub.f32 %v4373, %v5402
    %5404 = vmatmul.mubr.f32.gmra.mrb[0].mxu0 %v5403
    %v5405 = vpop.f32.mrb[0].mxu0
    %v5406 = vadd.f32 %v5268, %v5405
    %v5407 = vpop.f32.mrb[0].mxu0
    %5408 = vdwg.mxu0
    %5409 = vmatprep.subr.mxu0 0.0
    %v5410 = vand.u32 %v3767, 4294901760
    %5411 = vmatpush1.msra.mxu0 %v5410
    %5412 = vmatprep.subr.mxu0 0.0
    %v5413 = vand.u32 %v3768, 4294901760
    %5414 = vmatpush1.msra.mxu0 %v5413
    %5415 = vmatprep.subr.mxu0 0.0
    %v5416 = vand.u32 %v3769, 4294901760
    %5417 = vmatpush1.msra.mxu0 %v5416
    %5418 = vmatprep.subr.mxu0 0.0
    %v5419 = vand.u32 %v3770, 4294901760
    %5420 = vmatpush1.msra.mxu0 %v5419
    %5421 = vmatprep.subr.mxu0 0.0
    %v5422 = vand.u32 %v3771, 4294901760
    %5423 = vmatpush1.msra.mxu0 %v5422
    %5424 = vmatprep.subr.mxu0 0.0
    %v5425 = vand.u32 %v3772, 4294901760
    %5426 = vmatpush1.msra.mxu0 %v5425
    %5427 = vmatprep.subr.mxu0 0.0
    %v5428 = vand.u32 %v3773, 4294901760
    %5429 = vmatpush1.msra.mxu0 %v5428
    %5430 = vmatprep.subr.mxu0 0.0
    %v5431 = vand.u32 %v3774, 4294901760
    %5432 = vmatpush1.msra.mxu0 %v5431
    %5433 = vmatprep.subr.mxu0 0.0
    %v5434 = vand.u32 %v3775, 4294901760
    %5435 = vmatpush1.msra.mxu0 %v5434
    %5436 = vmatprep.subr.mxu0 0.0
    %v5437 = vand.u32 %v3776, 4294901760
    %5438 = vmatpush1.msra.mxu0 %v5437
    %5439 = vmatprep.subr.mxu0 0.0
    %v5440 = vand.u32 %v3777, 4294901760
    %5441 = vmatpush1.msra.mxu0 %v5440
    %5442 = vmatprep.subr.mxu0 0.0
    %v5443 = vand.u32 %v3778, 4294901760
    %5444 = vmatpush1.msra.mxu0 %v5443
    %5445 = vmatprep.subr.mxu0 0.0
    %v5446 = vand.u32 %v3779, 4294901760
    %5447 = vmatpush1.msra.mxu0 %v5446
    %5448 = vmatprep.subr.mxu0 0.0
    %v5449 = vand.u32 %v3780, 4294901760
    %5450 = vmatpush1.msra.mxu0 %v5449
    %5451 = vmatprep.subr.mxu0 0.0
    %v5452 = vand.u32 %v3781, 4294901760
    %5453 = vmatpush1.msra.mxu0 %v5452
    %5454 = vmatprep.subr.mxu0 0.0
    %v5455 = vand.u32 %v3782, 4294901760
    %5456 = vmatpush1.msra.mxu0 %v5455
    %5457 = vmatprep.subr.mxu0 0.0
    %v5458 = vand.u32 %v3783, 4294901760
    %5459 = vmatpush1.msra.mxu0 %v5458
    %5460 = vmatprep.subr.mxu0 0.0
    %v5461 = vand.u32 %v3784, 4294901760
    %5462 = vmatpush1.msra.mxu0 %v5461
    %5463 = vmatprep.subr.mxu0 0.0
    %v5464 = vand.u32 %v3785, 4294901760
    %5465 = vmatpush1.msra.mxu0 %v5464
    %5466 = vmatprep.subr.mxu0 0.0
    %v5467 = vand.u32 %v3786, 4294901760
    %5468 = vmatpush1.msra.mxu0 %v5467
    %5469 = vmatprep.subr.mxu0 0.0
    %v5470 = vand.u32 %v3787, 4294901760
    %5471 = vmatpush1.msra.mxu0 %v5470
    %5472 = vmatprep.subr.mxu0 0.0
    %v5473 = vand.u32 %v3788, 4294901760
    %5474 = vmatpush1.msra.mxu0 %v5473
    %5475 = vmatprep.subr.mxu0 0.0
    %v5476 = vand.u32 %v3789, 4294901760
    %5477 = vmatpush1.msra.mxu0 %v5476
    %5478 = vmatprep.subr.mxu0 0.0
    %v5479 = vand.u32 %v3790, 4294901760
    %5480 = vmatpush1.msra.mxu0 %v5479
    %5481 = vmatprep.subr.mxu0 0.0
    %v5482 = vand.u32 %v3791, 4294901760
    %5483 = vmatpush1.msra.mxu0 %v5482
    %5484 = vmatprep.subr.mxu0 0.0
    %v5485 = vand.u32 %v3792, 4294901760
    %5486 = vmatpush1.msra.mxu0 %v5485
    %5487 = vmatprep.subr.mxu0 0.0
    %v5488 = vand.u32 %v3793, 4294901760
    %5489 = vmatpush1.msra.mxu0 %v5488
    %5490 = vmatprep.subr.mxu0 0.0
    %v5491 = vand.u32 %v3794, 4294901760
    %5492 = vmatpush1.msra.mxu0 %v5491
    %5493 = vmatprep.subr.mxu0 0.0
    %v5494 = vand.u32 %v3795, 4294901760
    %5495 = vmatpush1.msra.mxu0 %v5494
    %5496 = vmatprep.subr.mxu0 0.0
    %v5497 = vand.u32 %v3796, 4294901760
    %5498 = vmatpush1.msra.mxu0 %v5497
    %5499 = vmatprep.subr.mxu0 0.0
    %v5500 = vand.u32 %v3797, 4294901760
    %5501 = vmatpush1.msra.mxu0 %v5500
    %5502 = vmatprep.subr.mxu0 0.0
    %v5503 = vand.u32 %v3798, 4294901760
    %5504 = vmatpush1.msra.mxu0 %v5503
    %v5505 = vand.u32 %v4375, 4294901760
    %v5506 = vsub.f32 %v4375, %v5505
    %v5507 = vand.u32 %v5506, 4294901760
    %5508 = vmatprep.mubr.f32.mxu0 %v5507
    %v5509 = vand.u32 %v4373, 4294901760
    %v5510 = vsub.f32 %v4373, %v5509
    %v5511 = vand.u32 %v5510, 4294901760
    %5512 = vmatmul.mubr.f32.gmra.mrb[0].mxu0 %v5511
    %v5513 = vpop.f32.mrb[0].mxu0
    %v5514 = vadd.f32 %v5406, %v5513
    %v5515 = vpop.f32.mrb[0].mxu0
    %5516 = vdwg.mxu0
    %5517 = vmatprep.subr.mxu0 0.0
    %v5518 = vand.u32 %v3767, 4294901760
    %v5519 = vsub.f32 %v3767, %v5518
    %v5520 = vand.u32 %v5519, 4294901760
    %5521 = vmatpush1.msra.mxu0 %v5520
    %5522 = vmatprep.subr.mxu0 0.0
    %v5523 = vand.u32 %v3768, 4294901760
    %v5524 = vsub.f32 %v3768, %v5523
    %v5525 = vand.u32 %v5524, 4294901760
    %5526 = vmatpush1.msra.mxu0 %v5525
    %5527 = vmatprep.subr.mxu0 0.0
    %v5528 = vand.u32 %v3769, 4294901760
    %v5529 = vsub.f32 %v3769, %v5528
    %v5530 = vand.u32 %v5529, 4294901760
    %5531 = vmatpush1.msra.mxu0 %v5530
    %5532 = vmatprep.subr.mxu0 0.0
    %v5533 = vand.u32 %v3770, 4294901760
    %v5534 = vsub.f32 %v3770, %v5533
    %v5535 = vand.u32 %v5534, 4294901760
    %5536 = vmatpush1.msra.mxu0 %v5535
    %5537 = vmatprep.subr.mxu0 0.0
    %v5538 = vand.u32 %v3771, 4294901760
    %v5539 = vsub.f32 %v3771, %v5538
    %v5540 = vand.u32 %v5539, 4294901760
    %5541 = vmatpush1.msra.mxu0 %v5540
    %5542 = vmatprep.subr.mxu0 0.0
    %v5543 = vand.u32 %v3772, 4294901760
    %v5544 = vsub.f32 %v3772, %v5543
    %v5545 = vand.u32 %v5544, 4294901760
    %5546 = vmatpush1.msra.mxu0 %v5545
    %5547 = vmatprep.subr.mxu0 0.0
    %v5548 = vand.u32 %v3773, 4294901760
    %v5549 = vsub.f32 %v3773, %v5548
    %v5550 = vand.u32 %v5549, 4294901760
    %5551 = vmatpush1.msra.mxu0 %v5550
    %5552 = vmatprep.subr.mxu0 0.0
    %v5553 = vand.u32 %v3774, 4294901760
    %v5554 = vsub.f32 %v3774, %v5553
    %v5555 = vand.u32 %v5554, 4294901760
    %5556 = vmatpush1.msra.mxu0 %v5555
    %5557 = vmatprep.subr.mxu0 0.0
    %v5558 = vand.u32 %v3775, 4294901760
    %v5559 = vsub.f32 %v3775, %v5558
    %v5560 = vand.u32 %v5559, 4294901760
    %5561 = vmatpush1.msra.mxu0 %v5560
    %5562 = vmatprep.subr.mxu0 0.0
    %v5563 = vand.u32 %v3776, 4294901760
    %v5564 = vsub.f32 %v3776, %v5563
    %v5565 = vand.u32 %v5564, 4294901760
    %5566 = vmatpush1.msra.mxu0 %v5565
    %5567 = vmatprep.subr.mxu0 0.0
    %v5568 = vand.u32 %v3777, 4294901760
    %v5569 = vsub.f32 %v3777, %v5568
    %v5570 = vand.u32 %v5569, 4294901760
    %5571 = vmatpush1.msra.mxu0 %v5570
    %5572 = vmatprep.subr.mxu0 0.0
    %v5573 = vand.u32 %v3778, 4294901760
    %v5574 = vsub.f32 %v3778, %v5573
    %v5575 = vand.u32 %v5574, 4294901760
    %5576 = vmatpush1.msra.mxu0 %v5575
    %5577 = vmatprep.subr.mxu0 0.0
    %v5578 = vand.u32 %v3779, 4294901760
    %v5579 = vsub.f32 %v3779, %v5578
    %v5580 = vand.u32 %v5579, 4294901760
    %5581 = vmatpush1.msra.mxu0 %v5580
    %5582 = vmatprep.subr.mxu0 0.0
    %v5583 = vand.u32 %v3780, 4294901760
    %v5584 = vsub.f32 %v3780, %v5583
    %v5585 = vand.u32 %v5584, 4294901760
    %5586 = vmatpush1.msra.mxu0 %v5585
    %5587 = vmatprep.subr.mxu0 0.0
    %v5588 = vand.u32 %v3781, 4294901760
    %v5589 = vsub.f32 %v3781, %v5588
    %v5590 = vand.u32 %v5589, 4294901760
    %5591 = vmatpush1.msra.mxu0 %v5590
    %5592 = vmatprep.subr.mxu0 0.0
    %v5593 = vand.u32 %v3782, 4294901760
    %v5594 = vsub.f32 %v3782, %v5593
    %v5595 = vand.u32 %v5594, 4294901760
    %5596 = vmatpush1.msra.mxu0 %v5595
    %5597 = vmatprep.subr.mxu0 0.0
    %v5598 = vand.u32 %v3783, 4294901760
    %v5599 = vsub.f32 %v3783, %v5598
    %v5600 = vand.u32 %v5599, 4294901760
    %5601 = vmatpush1.msra.mxu0 %v5600
    %5602 = vmatprep.subr.mxu0 0.0
    %v5603 = vand.u32 %v3784, 4294901760
    %v5604 = vsub.f32 %v3784, %v5603
    %v5605 = vand.u32 %v5604, 4294901760
    %5606 = vmatpush1.msra.mxu0 %v5605
    %5607 = vmatprep.subr.mxu0 0.0
    %v5608 = vand.u32 %v3785, 4294901760
    %v5609 = vsub.f32 %v3785, %v5608
    %v5610 = vand.u32 %v5609, 4294901760
    %5611 = vmatpush1.msra.mxu0 %v5610
    %5612 = vmatprep.subr.mxu0 0.0
    %v5613 = vand.u32 %v3786, 4294901760
    %v5614 = vsub.f32 %v3786, %v5613
    %v5615 = vand.u32 %v5614, 4294901760
    %5616 = vmatpush1.msra.mxu0 %v5615
    %5617 = vmatprep.subr.mxu0 0.0
    %v5618 = vand.u32 %v3787, 4294901760
    %v5619 = vsub.f32 %v3787, %v5618
    %v5620 = vand.u32 %v5619, 4294901760
    %5621 = vmatpush1.msra.mxu0 %v5620
    %5622 = vmatprep.subr.mxu0 0.0
    %v5623 = vand.u32 %v3788, 4294901760
    %v5624 = vsub.f32 %v3788, %v5623
    %v5625 = vand.u32 %v5624, 4294901760
    %5626 = vmatpush1.msra.mxu0 %v5625
    %5627 = vmatprep.subr.mxu0 0.0
    %v5628 = vand.u32 %v3789, 4294901760
    %v5629 = vsub.f32 %v3789, %v5628
    %v5630 = vand.u32 %v5629, 4294901760
    %5631 = vmatpush1.msra.mxu0 %v5630
    %5632 = vmatprep.subr.mxu0 0.0
    %v5633 = vand.u32 %v3790, 4294901760
    %v5634 = vsub.f32 %v3790, %v5633
    %v5635 = vand.u32 %v5634, 4294901760
    %5636 = vmatpush1.msra.mxu0 %v5635
    %5637 = vmatprep.subr.mxu0 0.0
    %v5638 = vand.u32 %v3791, 4294901760
    %v5639 = vsub.f32 %v3791, %v5638
    %v5640 = vand.u32 %v5639, 4294901760
    %5641 = vmatpush1.msra.mxu0 %v5640
    %5642 = vmatprep.subr.mxu0 0.0
    %v5643 = vand.u32 %v3792, 4294901760
    %v5644 = vsub.f32 %v3792, %v5643
    %v5645 = vand.u32 %v5644, 4294901760
    %5646 = vmatpush1.msra.mxu0 %v5645
    %5647 = vmatprep.subr.mxu0 0.0
    %v5648 = vand.u32 %v3793, 4294901760
    %v5649 = vsub.f32 %v3793, %v5648
    %v5650 = vand.u32 %v5649, 4294901760
    %5651 = vmatpush1.msra.mxu0 %v5650
    %5652 = vmatprep.subr.mxu0 0.0
    %v5653 = vand.u32 %v3794, 4294901760
    %v5654 = vsub.f32 %v3794, %v5653
    %v5655 = vand.u32 %v5654, 4294901760
    %5656 = vmatpush1.msra.mxu0 %v5655
    %5657 = vmatprep.subr.mxu0 0.0
    %v5658 = vand.u32 %v3795, 4294901760
    %v5659 = vsub.f32 %v3795, %v5658
    %v5660 = vand.u32 %v5659, 4294901760
    %5661 = vmatpush1.msra.mxu0 %v5660
    %5662 = vmatprep.subr.mxu0 0.0
    %v5663 = vand.u32 %v3796, 4294901760
    %v5664 = vsub.f32 %v3796, %v5663
    %v5665 = vand.u32 %v5664, 4294901760
    %5666 = vmatpush1.msra.mxu0 %v5665
    %5667 = vmatprep.subr.mxu0 0.0
    %v5668 = vand.u32 %v3797, 4294901760
    %v5669 = vsub.f32 %v3797, %v5668
    %v5670 = vand.u32 %v5669, 4294901760
    %5671 = vmatpush1.msra.mxu0 %v5670
    %5672 = vmatprep.subr.mxu0 0.0
    %v5673 = vand.u32 %v3798, 4294901760
    %v5674 = vsub.f32 %v3798, %v5673
    %v5675 = vand.u32 %v5674, 4294901760
    %5676 = vmatpush1.msra.mxu0 %v5675
    %v5677 = vand.u32 %v4375, 4294901760
    %5678 = vmatprep.mubr.f32.mxu0 %v5677
    %v5679 = vand.u32 %v4373, 4294901760
    %5680 = vmatmul.mubr.f32.gmra.mrb[0].mxu0 %v5679
    %v5681 = vpop.f32.mrb[0].mxu0
    %v5682 = vadd.f32 %v5514, %v5681
    %v5683 = vpop.f32.mrb[0].mxu0
    %5684 = vdwg.mxu0
    %5685 = vmatprep.subr.mxu0 0.0
    %v5686 = vand.u32 %v3767, 4294901760
    %5687 = vmatpush1.msra.mxu0 %v5686
    %5688 = vmatprep.subr.mxu0 0.0
    %v5689 = vand.u32 %v3768, 4294901760
    %5690 = vmatpush1.msra.mxu0 %v5689
    %5691 = vmatprep.subr.mxu0 0.0
    %v5692 = vand.u32 %v3769, 4294901760
    %5693 = vmatpush1.msra.mxu0 %v5692
    %5694 = vmatprep.subr.mxu0 0.0
    %v5695 = vand.u32 %v3770, 4294901760
    %5696 = vmatpush1.msra.mxu0 %v5695
    %5697 = vmatprep.subr.mxu0 0.0
    %v5698 = vand.u32 %v3771, 4294901760
    %5699 = vmatpush1.msra.mxu0 %v5698
    %5700 = vmatprep.subr.mxu0 0.0
    %v5701 = vand.u32 %v3772, 4294901760
    %5702 = vmatpush1.msra.mxu0 %v5701
    %5703 = vmatprep.subr.mxu0 0.0
    %v5704 = vand.u32 %v3773, 4294901760
    %5705 = vmatpush1.msra.mxu0 %v5704
    %5706 = vmatprep.subr.mxu0 0.0
    %v5707 = vand.u32 %v3774, 4294901760
    %5708 = vmatpush1.msra.mxu0 %v5707
    %5709 = vmatprep.subr.mxu0 0.0
    %v5710 = vand.u32 %v3775, 4294901760
    %5711 = vmatpush1.msra.mxu0 %v5710
    %5712 = vmatprep.subr.mxu0 0.0
    %v5713 = vand.u32 %v3776, 4294901760
    %5714 = vmatpush1.msra.mxu0 %v5713
    %5715 = vmatprep.subr.mxu0 0.0
    %v5716 = vand.u32 %v3777, 4294901760
    %5717 = vmatpush1.msra.mxu0 %v5716
    %5718 = vmatprep.subr.mxu0 0.0
    %v5719 = vand.u32 %v3778, 4294901760
    %5720 = vmatpush1.msra.mxu0 %v5719
    %5721 = vmatprep.subr.mxu0 0.0
    %v5722 = vand.u32 %v3779, 4294901760
    %5723 = vmatpush1.msra.mxu0 %v5722
    %5724 = vmatprep.subr.mxu0 0.0
    %v5725 = vand.u32 %v3780, 4294901760
    %5726 = vmatpush1.msra.mxu0 %v5725
    %5727 = vmatprep.subr.mxu0 0.0
    %v5728 = vand.u32 %v3781, 4294901760
    %5729 = vmatpush1.msra.mxu0 %v5728
    %5730 = vmatprep.subr.mxu0 0.0
    %v5731 = vand.u32 %v3782, 4294901760
    %5732 = vmatpush1.msra.mxu0 %v5731
    %5733 = vmatprep.subr.mxu0 0.0
    %v5734 = vand.u32 %v3783, 4294901760
    %5735 = vmatpush1.msra.mxu0 %v5734
    %5736 = vmatprep.subr.mxu0 0.0
    %v5737 = vand.u32 %v3784, 4294901760
    %5738 = vmatpush1.msra.mxu0 %v5737
    %5739 = vmatprep.subr.mxu0 0.0
    %v5740 = vand.u32 %v3785, 4294901760
    %5741 = vmatpush1.msra.mxu0 %v5740
    %5742 = vmatprep.subr.mxu0 0.0
    %v5743 = vand.u32 %v3786, 4294901760
    %5744 = vmatpush1.msra.mxu0 %v5743
    %5745 = vmatprep.subr.mxu0 0.0
    %v5746 = vand.u32 %v3787, 4294901760
    %5747 = vmatpush1.msra.mxu0 %v5746
    %5748 = vmatprep.subr.mxu0 0.0
    %v5749 = vand.u32 %v3788, 4294901760
    %5750 = vmatpush1.msra.mxu0 %v5749
    %5751 = vmatprep.subr.mxu0 0.0
    %v5752 = vand.u32 %v3789, 4294901760
    %5753 = vmatpush1.msra.mxu0 %v5752
    %5754 = vmatprep.subr.mxu0 0.0
    %v5755 = vand.u32 %v3790, 4294901760
    %5756 = vmatpush1.msra.mxu0 %v5755
    %5757 = vmatprep.subr.mxu0 0.0
    %v5758 = vand.u32 %v3791, 4294901760
    %5759 = vmatpush1.msra.mxu0 %v5758
    %5760 = vmatprep.subr.mxu0 0.0
    %v5761 = vand.u32 %v3792, 4294901760
    %5762 = vmatpush1.msra.mxu0 %v5761
    %5763 = vmatprep.subr.mxu0 0.0
    %v5764 = vand.u32 %v3793, 4294901760
    %5765 = vmatpush1.msra.mxu0 %v5764
    %5766 = vmatprep.subr.mxu0 0.0
    %v5767 = vand.u32 %v3794, 4294901760
    %5768 = vmatpush1.msra.mxu0 %v5767
    %5769 = vmatprep.subr.mxu0 0.0
    %v5770 = vand.u32 %v3795, 4294901760
    %5771 = vmatpush1.msra.mxu0 %v5770
    %5772 = vmatprep.subr.mxu0 0.0
    %v5773 = vand.u32 %v3796, 4294901760
    %5774 = vmatpush1.msra.mxu0 %v5773
    %5775 = vmatprep.subr.mxu0 0.0
    %v5776 = vand.u32 %v3797, 4294901760
    %5777 = vmatpush1.msra.mxu0 %v5776
    %5778 = vmatprep.subr.mxu0 0.0
    %v5779 = vand.u32 %v3798, 4294901760
    %5780 = vmatpush1.msra.mxu0 %v5779
    %v5781 = vand.u32 %v4375, 4294901760
    %5782 = vmatprep.mubr.f32.mxu0 %v5781
    %v5783 = vand.u32 %v4373, 4294901760
    %5784 = vmatmul.mubr.f32.gmra.mrb[0].mxu0 %v5783
    %v5785 = vpop.f32.mrb[0].mxu0
    %v5786 = vadd.f32 %v5682, %v5785
    %v5787 = vpop.f32.mrb[0].mxu0
    %5788 = vdwg.mxu0
    %5789 = vmatprep.subr.mxu0 0.0
    %v5790 = vand.u32 %v3799, 4294901760
    %5791 = vmatpush1.msra.mxu0 %v5790
    %5792 = vmatprep.subr.mxu0 0.0
    %v5793 = vand.u32 %v3800, 4294901760
    %5794 = vmatpush1.msra.mxu0 %v5793
    %5795 = vmatprep.subr.mxu0 0.0
    %v5796 = vand.u32 %v3801, 4294901760
    %5797 = vmatpush1.msra.mxu0 %v5796
    %5798 = vmatprep.subr.mxu0 0.0
    %v5799 = vand.u32 %v3802, 4294901760
    %5800 = vmatpush1.msra.mxu0 %v5799
    %5801 = vmatprep.subr.mxu0 0.0
    %v5802 = vand.u32 %v3803, 4294901760
    %5803 = vmatpush1.msra.mxu0 %v5802
    %5804 = vmatprep.subr.mxu0 0.0
    %v5805 = vand.u32 %v3804, 4294901760
    %5806 = vmatpush1.msra.mxu0 %v5805
    %5807 = vmatprep.subr.mxu0 0.0
    %v5808 = vand.u32 %v3805, 4294901760
    %5809 = vmatpush1.msra.mxu0 %v5808
    %5810 = vmatprep.subr.mxu0 0.0
    %v5811 = vand.u32 %v3806, 4294901760
    %5812 = vmatpush1.msra.mxu0 %v5811
    %5813 = vmatprep.subr.mxu0 0.0
    %v5814 = vand.u32 %v3807, 4294901760
    %5815 = vmatpush1.msra.mxu0 %v5814
    %5816 = vmatprep.subr.mxu0 0.0
    %v5817 = vand.u32 %v3808, 4294901760
    %5818 = vmatpush1.msra.mxu0 %v5817
    %5819 = vmatprep.subr.mxu0 0.0
    %v5820 = vand.u32 %v3809, 4294901760
    %5821 = vmatpush1.msra.mxu0 %v5820
    %5822 = vmatprep.subr.mxu0 0.0
    %v5823 = vand.u32 %v3810, 4294901760
    %5824 = vmatpush1.msra.mxu0 %v5823
    %5825 = vmatprep.subr.mxu0 0.0
    %v5826 = vand.u32 %v3811, 4294901760
    %5827 = vmatpush1.msra.mxu0 %v5826
    %5828 = vmatprep.subr.mxu0 0.0
    %v5829 = vand.u32 %v3812, 4294901760
    %5830 = vmatpush1.msra.mxu0 %v5829
    %5831 = vmatprep.subr.mxu0 0.0
    %v5832 = vand.u32 %v3813, 4294901760
    %5833 = vmatpush1.msra.mxu0 %v5832
    %5834 = vmatprep.subr.mxu0 0.0
    %v5835 = vand.u32 %v3814, 4294901760
    %5836 = vmatpush1.msra.mxu0 %v5835
    %5837 = vmatprep.subr.mxu0 0.0
    %v5838 = vand.u32 %v3815, 4294901760
    %5839 = vmatpush1.msra.mxu0 %v5838
    %5840 = vmatprep.subr.mxu0 0.0
    %v5841 = vand.u32 %v3816, 4294901760
    %5842 = vmatpush1.msra.mxu0 %v5841
    %5843 = vmatprep.subr.mxu0 0.0
    %v5844 = vand.u32 %v3817, 4294901760
    %5845 = vmatpush1.msra.mxu0 %v5844
    %5846 = vmatprep.subr.mxu0 0.0
    %v5847 = vand.u32 %v3818, 4294901760
    %5848 = vmatpush1.msra.mxu0 %v5847
    %5849 = vmatprep.subr.mxu0 0.0
    %v5850 = vand.u32 %v3819, 4294901760
    %5851 = vmatpush1.msra.mxu0 %v5850
    %5852 = vmatprep.subr.mxu0 0.0
    %v5853 = vand.u32 %v3820, 4294901760
    %5854 = vmatpush1.msra.mxu0 %v5853
    %5855 = vmatprep.subr.mxu0 0.0
    %v5856 = vand.u32 %v3821, 4294901760
    %5857 = vmatpush1.msra.mxu0 %v5856
    %5858 = vmatprep.subr.mxu0 0.0
    %v5859 = vand.u32 %v3822, 4294901760
    %5860 = vmatpush1.msra.mxu0 %v5859
    %5861 = vmatprep.subr.mxu0 0.0
    %v5862 = vand.u32 %v3823, 4294901760
    %5863 = vmatpush1.msra.mxu0 %v5862
    %5864 = vmatprep.subr.mxu0 0.0
    %v5865 = vand.u32 %v3824, 4294901760
    %5866 = vmatpush1.msra.mxu0 %v5865
    %5867 = vmatprep.subr.mxu0 0.0
    %v5868 = vand.u32 %v3825, 4294901760
    %5869 = vmatpush1.msra.mxu0 %v5868
    %5870 = vmatprep.subr.mxu0 0.0
    %v5871 = vand.u32 %v3826, 4294901760
    %5872 = vmatpush1.msra.mxu0 %v5871
    %5873 = vmatprep.subr.mxu0 0.0
    %v5874 = vand.u32 %v3827, 4294901760
    %5875 = vmatpush1.msra.mxu0 %v5874
    %5876 = vmatprep.subr.mxu0 0.0
    %v5877 = vand.u32 %v3828, 4294901760
    %5878 = vmatpush1.msra.mxu0 %v5877
    %5879 = vmatprep.subr.mxu0 0.0
    %v5880 = vand.u32 %v3829, 4294901760
    %5881 = vmatpush1.msra.mxu0 %v5880
    %5882 = vmatprep.subr.mxu0 0.0
    %v5883 = vand.u32 %v3830, 4294901760
    %5884 = vmatpush1.msra.mxu0 %v5883
    %v5885 = vand.u32 %v4918, 4294901760
    %v5886 = vsub.f32 %v4918, %v5885
    %v5887 = vand.u32 %v5886, 4294901760
    %v5888 = vsub.f32 %v5886, %v5887
    %v5889 = vand.u32 %v5888, 4294901760
    %5890 = vmatprep.mubr.f32.mxu0 %v5889
    %v5891 = vand.u32 %v4916, 4294901760
    %v5892 = vsub.f32 %v4916, %v5891
    %v5893 = vand.u32 %v5892, 4294901760
    %v5894 = vsub.f32 %v5892, %v5893
    %v5895 = vand.u32 %v5894, 4294901760
    %5896 = vmatmul.mubr.f32.gmra.mrb[0].mxu0 %v5895
    %v5897 = vpop.f32.mrb[0].mxu0
    %v5898 = vadd.f32 %v5786, %v5897
    %v5899 = vpop.f32.mrb[0].mxu0
    %5900 = vdwg.mxu0
    %5901 = vmatprep.subr.mxu0 0.0
    %v5902 = vand.u32 %v3799, 4294901760
    %v5903 = vsub.f32 %v3799, %v5902
    %v5904 = vand.u32 %v5903, 4294901760
    %v5905 = vsub.f32 %v5903, %v5904
    %v5906 = vand.u32 %v5905, 4294901760
    %5907 = vmatpush1.msra.mxu0 %v5906
    %5908 = vmatprep.subr.mxu0 0.0
    %v5909 = vand.u32 %v3800, 4294901760
    %v5910 = vsub.f32 %v3800, %v5909
    %v5911 = vand.u32 %v5910, 4294901760
    %v5912 = vsub.f32 %v5910, %v5911
    %v5913 = vand.u32 %v5912, 4294901760
    %5914 = vmatpush1.msra.mxu0 %v5913
    %5915 = vmatprep.subr.mxu0 0.0
    %v5916 = vand.u32 %v3801, 4294901760
    %v5917 = vsub.f32 %v3801, %v5916
    %v5918 = vand.u32 %v5917, 4294901760
    %v5919 = vsub.f32 %v5917, %v5918
    %v5920 = vand.u32 %v5919, 4294901760
    %5921 = vmatpush1.msra.mxu0 %v5920
    %5922 = vmatprep.subr.mxu0 0.0
    %v5923 = vand.u32 %v3802, 4294901760
    %v5924 = vsub.f32 %v3802, %v5923
    %v5925 = vand.u32 %v5924, 4294901760
    %v5926 = vsub.f32 %v5924, %v5925
    %v5927 = vand.u32 %v5926, 4294901760
    %5928 = vmatpush1.msra.mxu0 %v5927
    %5929 = vmatprep.subr.mxu0 0.0
    %v5930 = vand.u32 %v3803, 4294901760
    %v5931 = vsub.f32 %v3803, %v5930
    %v5932 = vand.u32 %v5931, 4294901760
    %v5933 = vsub.f32 %v5931, %v5932
    %v5934 = vand.u32 %v5933, 4294901760
    %5935 = vmatpush1.msra.mxu0 %v5934
    %5936 = vmatprep.subr.mxu0 0.0
    %v5937 = vand.u32 %v3804, 4294901760
    %v5938 = vsub.f32 %v3804, %v5937
    %v5939 = vand.u32 %v5938, 4294901760
    %v5940 = vsub.f32 %v5938, %v5939
    %v5941 = vand.u32 %v5940, 4294901760
    %5942 = vmatpush1.msra.mxu0 %v5941
    %5943 = vmatprep.subr.mxu0 0.0
    %v5944 = vand.u32 %v3805, 4294901760
    %v5945 = vsub.f32 %v3805, %v5944
    %v5946 = vand.u32 %v5945, 4294901760
    %v5947 = vsub.f32 %v5945, %v5946
    %v5948 = vand.u32 %v5947, 4294901760
    %5949 = vmatpush1.msra.mxu0 %v5948
    %5950 = vmatprep.subr.mxu0 0.0
    %v5951 = vand.u32 %v3806, 4294901760
    %v5952 = vsub.f32 %v3806, %v5951
    %v5953 = vand.u32 %v5952, 4294901760
    %v5954 = vsub.f32 %v5952, %v5953
    %v5955 = vand.u32 %v5954, 4294901760
    %5956 = vmatpush1.msra.mxu0 %v5955
    %5957 = vmatprep.subr.mxu0 0.0
    %v5958 = vand.u32 %v3807, 4294901760
    %v5959 = vsub.f32 %v3807, %v5958
    %v5960 = vand.u32 %v5959, 4294901760
    %v5961 = vsub.f32 %v5959, %v5960
    %v5962 = vand.u32 %v5961, 4294901760
    %5963 = vmatpush1.msra.mxu0 %v5962
    %5964 = vmatprep.subr.mxu0 0.0
    %v5965 = vand.u32 %v3808, 4294901760
    %v5966 = vsub.f32 %v3808, %v5965
    %v5967 = vand.u32 %v5966, 4294901760
    %v5968 = vsub.f32 %v5966, %v5967
    %v5969 = vand.u32 %v5968, 4294901760
    %5970 = vmatpush1.msra.mxu0 %v5969
    %5971 = vmatprep.subr.mxu0 0.0
    %v5972 = vand.u32 %v3809, 4294901760
    %v5973 = vsub.f32 %v3809, %v5972
    %v5974 = vand.u32 %v5973, 4294901760
    %v5975 = vsub.f32 %v5973, %v5974
    %v5976 = vand.u32 %v5975, 4294901760
    %5977 = vmatpush1.msra.mxu0 %v5976
    %5978 = vmatprep.subr.mxu0 0.0
    %v5979 = vand.u32 %v3810, 4294901760
    %v5980 = vsub.f32 %v3810, %v5979
    %v5981 = vand.u32 %v5980, 4294901760
    %v5982 = vsub.f32 %v5980, %v5981
    %v5983 = vand.u32 %v5982, 4294901760
    %5984 = vmatpush1.msra.mxu0 %v5983
    %5985 = vmatprep.subr.mxu0 0.0
    %v5986 = vand.u32 %v3811, 4294901760
    %v5987 = vsub.f32 %v3811, %v5986
    %v5988 = vand.u32 %v5987, 4294901760
    %v5989 = vsub.f32 %v5987, %v5988
    %v5990 = vand.u32 %v5989, 4294901760
    %5991 = vmatpush1.msra.mxu0 %v5990
    %5992 = vmatprep.subr.mxu0 0.0
    %v5993 = vand.u32 %v3812, 4294901760
    %v5994 = vsub.f32 %v3812, %v5993
    %v5995 = vand.u32 %v5994, 4294901760
    %v5996 = vsub.f32 %v5994, %v5995
    %v5997 = vand.u32 %v5996, 4294901760
    %5998 = vmatpush1.msra.mxu0 %v5997
    %5999 = vmatprep.subr.mxu0 0.0
    %v6000 = vand.u32 %v3813, 4294901760
    %v6001 = vsub.f32 %v3813, %v6000
    %v6002 = vand.u32 %v6001, 4294901760
    %v6003 = vsub.f32 %v6001, %v6002
    %v6004 = vand.u32 %v6003, 4294901760
    %6005 = vmatpush1.msra.mxu0 %v6004
    %6006 = vmatprep.subr.mxu0 0.0
    %v6007 = vand.u32 %v3814, 4294901760
    %v6008 = vsub.f32 %v3814, %v6007
    %v6009 = vand.u32 %v6008, 4294901760
    %v6010 = vsub.f32 %v6008, %v6009
    %v6011 = vand.u32 %v6010, 4294901760
    %6012 = vmatpush1.msra.mxu0 %v6011
    %6013 = vmatprep.subr.mxu0 0.0
    %v6014 = vand.u32 %v3815, 4294901760
    %v6015 = vsub.f32 %v3815, %v6014
    %v6016 = vand.u32 %v6015, 4294901760
    %v6017 = vsub.f32 %v6015, %v6016
    %v6018 = vand.u32 %v6017, 4294901760
    %6019 = vmatpush1.msra.mxu0 %v6018
    %6020 = vmatprep.subr.mxu0 0.0
    %v6021 = vand.u32 %v3816, 4294901760
    %v6022 = vsub.f32 %v3816, %v6021
    %v6023 = vand.u32 %v6022, 4294901760
    %v6024 = vsub.f32 %v6022, %v6023
    %v6025 = vand.u32 %v6024, 4294901760
    %6026 = vmatpush1.msra.mxu0 %v6025
    %6027 = vmatprep.subr.mxu0 0.0
    %v6028 = vand.u32 %v3817, 4294901760
    %v6029 = vsub.f32 %v3817, %v6028
    %v6030 = vand.u32 %v6029, 4294901760
    %v6031 = vsub.f32 %v6029, %v6030
    %v6032 = vand.u32 %v6031, 4294901760
    %6033 = vmatpush1.msra.mxu0 %v6032
    %6034 = vmatprep.subr.mxu0 0.0
    %v6035 = vand.u32 %v3818, 4294901760
    %v6036 = vsub.f32 %v3818, %v6035
    %v6037 = vand.u32 %v6036, 4294901760
    %v6038 = vsub.f32 %v6036, %v6037
    %v6039 = vand.u32 %v6038, 4294901760
    %6040 = vmatpush1.msra.mxu0 %v6039
    %6041 = vmatprep.subr.mxu0 0.0
    %v6042 = vand.u32 %v3819, 4294901760
    %v6043 = vsub.f32 %v3819, %v6042
    %v6044 = vand.u32 %v6043, 4294901760
    %v6045 = vsub.f32 %v6043, %v6044
    %v6046 = vand.u32 %v6045, 4294901760
    %6047 = vmatpush1.msra.mxu0 %v6046
    %6048 = vmatprep.subr.mxu0 0.0
    %v6049 = vand.u32 %v3820, 4294901760
    %v6050 = vsub.f32 %v3820, %v6049
    %v6051 = vand.u32 %v6050, 4294901760
    %v6052 = vsub.f32 %v6050, %v6051
    %v6053 = vand.u32 %v6052, 4294901760
    %6054 = vmatpush1.msra.mxu0 %v6053
    %6055 = vmatprep.subr.mxu0 0.0
    %v6056 = vand.u32 %v3821, 4294901760
    %v6057 = vsub.f32 %v3821, %v6056
    %v6058 = vand.u32 %v6057, 4294901760
    %v6059 = vsub.f32 %v6057, %v6058
    %v6060 = vand.u32 %v6059, 4294901760
    %6061 = vmatpush1.msra.mxu0 %v6060
    %6062 = vmatprep.subr.mxu0 0.0
    %v6063 = vand.u32 %v3822, 4294901760
    %v6064 = vsub.f32 %v3822, %v6063
    %v6065 = vand.u32 %v6064, 4294901760
    %v6066 = vsub.f32 %v6064, %v6065
    %v6067 = vand.u32 %v6066, 4294901760
    %6068 = vmatpush1.msra.mxu0 %v6067
    %6069 = vmatprep.subr.mxu0 0.0
    %v6070 = vand.u32 %v3823, 4294901760
    %v6071 = vsub.f32 %v3823, %v6070
    %v6072 = vand.u32 %v6071, 4294901760
    %v6073 = vsub.f32 %v6071, %v6072
    %v6074 = vand.u32 %v6073, 4294901760
    %6075 = vmatpush1.msra.mxu0 %v6074
    %6076 = vmatprep.subr.mxu0 0.0
    %v6077 = vand.u32 %v3824, 4294901760
    %v6078 = vsub.f32 %v3824, %v6077
    %v6079 = vand.u32 %v6078, 4294901760
    %v6080 = vsub.f32 %v6078, %v6079
    %v6081 = vand.u32 %v6080, 4294901760
    %6082 = vmatpush1.msra.mxu0 %v6081
    %6083 = vmatprep.subr.mxu0 0.0
    %v6084 = vand.u32 %v3825, 4294901760
    %v6085 = vsub.f32 %v3825, %v6084
    %v6086 = vand.u32 %v6085, 4294901760
    %v6087 = vsub.f32 %v6085, %v6086
    %v6088 = vand.u32 %v6087, 4294901760
    %6089 = vmatpush1.msra.mxu0 %v6088
    %6090 = vmatprep.subr.mxu0 0.0
    %v6091 = vand.u32 %v3826, 4294901760
    %v6092 = vsub.f32 %v3826, %v6091
    %v6093 = vand.u32 %v6092, 4294901760
    %v6094 = vsub.f32 %v6092, %v6093
    %v6095 = vand.u32 %v6094, 4294901760
    %6096 = vmatpush1.msra.mxu0 %v6095
    %6097 = vmatprep.subr.mxu0 0.0
    %v6098 = vand.u32 %v3827, 4294901760
    %v6099 = vsub.f32 %v3827, %v6098
    %v6100 = vand.u32 %v6099, 4294901760
    %v6101 = vsub.f32 %v6099, %v6100
    %v6102 = vand.u32 %v6101, 4294901760
    %6103 = vmatpush1.msra.mxu0 %v6102
    %6104 = vmatprep.subr.mxu0 0.0
    %v6105 = vand.u32 %v3828, 4294901760
    %v6106 = vsub.f32 %v3828, %v6105
    %v6107 = vand.u32 %v6106, 4294901760
    %v6108 = vsub.f32 %v6106, %v6107
    %v6109 = vand.u32 %v6108, 4294901760
    %6110 = vmatpush1.msra.mxu0 %v6109
    %6111 = vmatprep.subr.mxu0 0.0
    %v6112 = vand.u32 %v3829, 4294901760
    %v6113 = vsub.f32 %v3829, %v6112
    %v6114 = vand.u32 %v6113, 4294901760
    %v6115 = vsub.f32 %v6113, %v6114
    %v6116 = vand.u32 %v6115, 4294901760
    %6117 = vmatpush1.msra.mxu0 %v6116
    %6118 = vmatprep.subr.mxu0 0.0
    %v6119 = vand.u32 %v3830, 4294901760
    %v6120 = vsub.f32 %v3830, %v6119
    %v6121 = vand.u32 %v6120, 4294901760
    %v6122 = vsub.f32 %v6120, %v6121
    %v6123 = vand.u32 %v6122, 4294901760
    %6124 = vmatpush1.msra.mxu0 %v6123
    %v6125 = vand.u32 %v4918, 4294901760
    %6126 = vmatprep.mubr.f32.mxu0 %v6125
    %v6127 = vand.u32 %v4916, 4294901760
    %6128 = vmatmul.mubr.f32.gmra.mrb[0].mxu0 %v6127
    %v6129 = vpop.f32.mrb[0].mxu0
    %v6130 = vadd.f32 %v5898, %v6129
    %v6131 = vpop.f32.mrb[0].mxu0
    %6132 = vdwg.mxu0
    %6133 = vmatprep.subr.mxu0 0.0
    %v6134 = vand.u32 %v3799, 4294901760
    %v6135 = vsub.f32 %v3799, %v6134
    %6136 = vmatpush1.msra.mxu0 %v6135
    %6137 = vmatprep.subr.mxu0 0.0
    %v6138 = vand.u32 %v3800, 4294901760
    %v6139 = vsub.f32 %v3800, %v6138
    %6140 = vmatpush1.msra.mxu0 %v6139
    %6141 = vmatprep.subr.mxu0 0.0
    %v6142 = vand.u32 %v3801, 4294901760
    %v6143 = vsub.f32 %v3801, %v6142
    %6144 = vmatpush1.msra.mxu0 %v6143
    %6145 = vmatprep.subr.mxu0 0.0
    %v6146 = vand.u32 %v3802, 4294901760
    %v6147 = vsub.f32 %v3802, %v6146
    %6148 = vmatpush1.msra.mxu0 %v6147
    %6149 = vmatprep.subr.mxu0 0.0
    %v6150 = vand.u32 %v3803, 4294901760
    %v6151 = vsub.f32 %v3803, %v6150
    %6152 = vmatpush1.msra.mxu0 %v6151
    %6153 = vmatprep.subr.mxu0 0.0
    %v6154 = vand.u32 %v3804, 4294901760
    %v6155 = vsub.f32 %v3804, %v6154
    %6156 = vmatpush1.msra.mxu0 %v6155
    %6157 = vmatprep.subr.mxu0 0.0
    %v6158 = vand.u32 %v3805, 4294901760
    %v6159 = vsub.f32 %v3805, %v6158
    %6160 = vmatpush1.msra.mxu0 %v6159
    %6161 = vmatprep.subr.mxu0 0.0
    %v6162 = vand.u32 %v3806, 4294901760
    %v6163 = vsub.f32 %v3806, %v6162
    %6164 = vmatpush1.msra.mxu0 %v6163
    %6165 = vmatprep.subr.mxu0 0.0
    %v6166 = vand.u32 %v3807, 4294901760
    %v6167 = vsub.f32 %v3807, %v6166
    %6168 = vmatpush1.msra.mxu0 %v6167
    %6169 = vmatprep.subr.mxu0 0.0
    %v6170 = vand.u32 %v3808, 4294901760
    %v6171 = vsub.f32 %v3808, %v6170
    %6172 = vmatpush1.msra.mxu0 %v6171
    %6173 = vmatprep.subr.mxu0 0.0
    %v6174 = vand.u32 %v3809, 4294901760
    %v6175 = vsub.f32 %v3809, %v6174
    %6176 = vmatpush1.msra.mxu0 %v6175
    %6177 = vmatprep.subr.mxu0 0.0
    %v6178 = vand.u32 %v3810, 4294901760
    %v6179 = vsub.f32 %v3810, %v6178
    %6180 = vmatpush1.msra.mxu0 %v6179
    %6181 = vmatprep.subr.mxu0 0.0
    %v6182 = vand.u32 %v3811, 4294901760
    %v6183 = vsub.f32 %v3811, %v6182
    %6184 = vmatpush1.msra.mxu0 %v6183
    %6185 = vmatprep.subr.mxu0 0.0
    %v6186 = vand.u32 %v3812, 4294901760
    %v6187 = vsub.f32 %v3812, %v6186
    %6188 = vmatpush1.msra.mxu0 %v6187
    %6189 = vmatprep.subr.mxu0 0.0
    %v6190 = vand.u32 %v3813, 4294901760
    %v6191 = vsub.f32 %v3813, %v6190
    %6192 = vmatpush1.msra.mxu0 %v6191
    %6193 = vmatprep.subr.mxu0 0.0
    %v6194 = vand.u32 %v3814, 4294901760
    %v6195 = vsub.f32 %v3814, %v6194
    %6196 = vmatpush1.msra.mxu0 %v6195
    %6197 = vmatprep.subr.mxu0 0.0
    %v6198 = vand.u32 %v3815, 4294901760
    %v6199 = vsub.f32 %v3815, %v6198
    %6200 = vmatpush1.msra.mxu0 %v6199
    %6201 = vmatprep.subr.mxu0 0.0
    %v6202 = vand.u32 %v3816, 4294901760
    %v6203 = vsub.f32 %v3816, %v6202
    %6204 = vmatpush1.msra.mxu0 %v6203
    %6205 = vmatprep.subr.mxu0 0.0
    %v6206 = vand.u32 %v3817, 4294901760
    %v6207 = vsub.f32 %v3817, %v6206
    %6208 = vmatpush1.msra.mxu0 %v6207
    %6209 = vmatprep.subr.mxu0 0.0
    %v6210 = vand.u32 %v3818, 4294901760
    %v6211 = vsub.f32 %v3818, %v6210
    %6212 = vmatpush1.msra.mxu0 %v6211
    %6213 = vmatprep.subr.mxu0 0.0
    %v6214 = vand.u32 %v3819, 4294901760
    %v6215 = vsub.f32 %v3819, %v6214
    %6216 = vmatpush1.msra.mxu0 %v6215
    %6217 = vmatprep.subr.mxu0 0.0
    %v6218 = vand.u32 %v3820, 4294901760
    %v6219 = vsub.f32 %v3820, %v6218
    %6220 = vmatpush1.msra.mxu0 %v6219
    %6221 = vmatprep.subr.mxu0 0.0
    %v6222 = vand.u32 %v3821, 4294901760
    %v6223 = vsub.f32 %v3821, %v6222
    %6224 = vmatpush1.msra.mxu0 %v6223
    %6225 = vmatprep.subr.mxu0 0.0
    %v6226 = vand.u32 %v3822, 4294901760
    %v6227 = vsub.f32 %v3822, %v6226
    %6228 = vmatpush1.msra.mxu0 %v6227
    %6229 = vmatprep.subr.mxu0 0.0
    %v6230 = vand.u32 %v3823, 4294901760
    %v6231 = vsub.f32 %v3823, %v6230
    %6232 = vmatpush1.msra.mxu0 %v6231
    %6233 = vmatprep.subr.mxu0 0.0
    %v6234 = vand.u32 %v3824, 4294901760
    %v6235 = vsub.f32 %v3824, %v6234
    %6236 = vmatpush1.msra.mxu0 %v6235
    %6237 = vmatprep.subr.mxu0 0.0
    %v6238 = vand.u32 %v3825, 4294901760
    %v6239 = vsub.f32 %v3825, %v6238
    %6240 = vmatpush1.msra.mxu0 %v6239
    %6241 = vmatprep.subr.mxu0 0.0
    %v6242 = vand.u32 %v3826, 4294901760
    %v6243 = vsub.f32 %v3826, %v6242
    %6244 = vmatpush1.msra.mxu0 %v6243
    %6245 = vmatprep.subr.mxu0 0.0
    %v6246 = vand.u32 %v3827, 4294901760
    %v6247 = vsub.f32 %v3827, %v6246
    %6248 = vmatpush1.msra.mxu0 %v6247
    %6249 = vmatprep.subr.mxu0 0.0
    %v6250 = vand.u32 %v3828, 4294901760
    %v6251 = vsub.f32 %v3828, %v6250
    %6252 = vmatpush1.msra.mxu0 %v6251
    %6253 = vmatprep.subr.mxu0 0.0
    %v6254 = vand.u32 %v3829, 4294901760
    %v6255 = vsub.f32 %v3829, %v6254
    %6256 = vmatpush1.msra.mxu0 %v6255
    %6257 = vmatprep.subr.mxu0 0.0
    %v6258 = vand.u32 %v3830, 4294901760
    %v6259 = vsub.f32 %v3830, %v6258
    %6260 = vmatpush1.msra.mxu0 %v6259
    %v6261 = vand.u32 %v4918, 4294901760
    %v6262 = vsub.f32 %v4918, %v6261
    %6263 = vmatprep.mubr.f32.mxu0 %v6262
    %v6264 = vand.u32 %v4916, 4294901760
    %v6265 = vsub.f32 %v4916, %v6264
    %6266 = vmatmul.mubr.f32.gmra.mrb[0].mxu0 %v6265
    %v6267 = vpop.f32.mrb[0].mxu0
    %v6268 = vadd.f32 %v6130, %v6267
    %v6269 = vpop.f32.mrb[0].mxu0
    %6270 = vdwg.mxu0
    %6271 = vmatprep.subr.mxu0 0.0
    %v6272 = vand.u32 %v3799, 4294901760
    %6273 = vmatpush1.msra.mxu0 %v6272
    %6274 = vmatprep.subr.mxu0 0.0
    %v6275 = vand.u32 %v3800, 4294901760
    %6276 = vmatpush1.msra.mxu0 %v6275
    %6277 = vmatprep.subr.mxu0 0.0
    %v6278 = vand.u32 %v3801, 4294901760
    %6279 = vmatpush1.msra.mxu0 %v6278
    %6280 = vmatprep.subr.mxu0 0.0
    %v6281 = vand.u32 %v3802, 4294901760
    %6282 = vmatpush1.msra.mxu0 %v6281
    %6283 = vmatprep.subr.mxu0 0.0
    %v6284 = vand.u32 %v3803, 4294901760
    %6285 = vmatpush1.msra.mxu0 %v6284
    %6286 = vmatprep.subr.mxu0 0.0
    %v6287 = vand.u32 %v3804, 4294901760
    %6288 = vmatpush1.msra.mxu0 %v6287
    %6289 = vmatprep.subr.mxu0 0.0
    %v6290 = vand.u32 %v3805, 4294901760
    %6291 = vmatpush1.msra.mxu0 %v6290
    %6292 = vmatprep.subr.mxu0 0.0
    %v6293 = vand.u32 %v3806, 4294901760
    %6294 = vmatpush1.msra.mxu0 %v6293
    %6295 = vmatprep.subr.mxu0 0.0
    %v6296 = vand.u32 %v3807, 4294901760
    %6297 = vmatpush1.msra.mxu0 %v6296
    %6298 = vmatprep.subr.mxu0 0.0
    %v6299 = vand.u32 %v3808, 4294901760
    %6300 = vmatpush1.msra.mxu0 %v6299
    %6301 = vmatprep.subr.mxu0 0.0
    %v6302 = vand.u32 %v3809, 4294901760
    %6303 = vmatpush1.msra.mxu0 %v6302
    %6304 = vmatprep.subr.mxu0 0.0
    %v6305 = vand.u32 %v3810, 4294901760
    %6306 = vmatpush1.msra.mxu0 %v6305
    %6307 = vmatprep.subr.mxu0 0.0
    %v6308 = vand.u32 %v3811, 4294901760
    %6309 = vmatpush1.msra.mxu0 %v6308
    %6310 = vmatprep.subr.mxu0 0.0
    %v6311 = vand.u32 %v3812, 4294901760
    %6312 = vmatpush1.msra.mxu0 %v6311
    %6313 = vmatprep.subr.mxu0 0.0
    %v6314 = vand.u32 %v3813, 4294901760
    %6315 = vmatpush1.msra.mxu0 %v6314
    %6316 = vmatprep.subr.mxu0 0.0
    %v6317 = vand.u32 %v3814, 4294901760
    %6318 = vmatpush1.msra.mxu0 %v6317
    %6319 = vmatprep.subr.mxu0 0.0
    %v6320 = vand.u32 %v3815, 4294901760
    %6321 = vmatpush1.msra.mxu0 %v6320
    %6322 = vmatprep.subr.mxu0 0.0
    %v6323 = vand.u32 %v3816, 4294901760
    %6324 = vmatpush1.msra.mxu0 %v6323
    %6325 = vmatprep.subr.mxu0 0.0
    %v6326 = vand.u32 %v3817, 4294901760
    %6327 = vmatpush1.msra.mxu0 %v6326
    %6328 = vmatprep.subr.mxu0 0.0
    %v6329 = vand.u32 %v3818, 4294901760
    %6330 = vmatpush1.msra.mxu0 %v6329
    %6331 = vmatprep.subr.mxu0 0.0
    %v6332 = vand.u32 %v3819, 4294901760
    %6333 = vmatpush1.msra.mxu0 %v6332
    %6334 = vmatprep.subr.mxu0 0.0
    %v6335 = vand.u32 %v3820, 4294901760
    %6336 = vmatpush1.msra.mxu0 %v6335
    %6337 = vmatprep.subr.mxu0 0.0
    %v6338 = vand.u32 %v3821, 4294901760
    %6339 = vmatpush1.msra.mxu0 %v6338
    %6340 = vmatprep.subr.mxu0 0.0
    %v6341 = vand.u32 %v3822, 4294901760
    %6342 = vmatpush1.msra.mxu0 %v6341
    %6343 = vmatprep.subr.mxu0 0.0
    %v6344 = vand.u32 %v3823, 4294901760
    %6345 = vmatpush1.msra.mxu0 %v6344
    %6346 = vmatprep.subr.mxu0 0.0
    %v6347 = vand.u32 %v3824, 4294901760
    %6348 = vmatpush1.msra.mxu0 %v6347
    %6349 = vmatprep.subr.mxu0 0.0
    %v6350 = vand.u32 %v3825, 4294901760
    %6351 = vmatpush1.msra.mxu0 %v6350
    %6352 = vmatprep.subr.mxu0 0.0
    %v6353 = vand.u32 %v3826, 4294901760
    %6354 = vmatpush1.msra.mxu0 %v6353
    %6355 = vmatprep.subr.mxu0 0.0
    %v6356 = vand.u32 %v3827, 4294901760
    %6357 = vmatpush1.msra.mxu0 %v6356
    %6358 = vmatprep.subr.mxu0 0.0
    %v6359 = vand.u32 %v3828, 4294901760
    %6360 = vmatpush1.msra.mxu0 %v6359
    %6361 = vmatprep.subr.mxu0 0.0
    %v6362 = vand.u32 %v3829, 4294901760
    %6363 = vmatpush1.msra.mxu0 %v6362
    %6364 = vmatprep.subr.mxu0 0.0
    %v6365 = vand.u32 %v3830, 4294901760
    %6366 = vmatpush1.msra.mxu0 %v6365
    %v6367 = vand.u32 %v4918, 4294901760
    %v6368 = vsub.f32 %v4918, %v6367
    %v6369 = vand.u32 %v6368, 4294901760
    %6370 = vmatprep.mubr.f32.mxu0 %v6369
    %v6371 = vand.u32 %v4916, 4294901760
    %v6372 = vsub.f32 %v4916, %v6371
    %v6373 = vand.u32 %v6372, 4294901760
    %6374 = vmatmul.mubr.f32.gmra.mrb[0].mxu0 %v6373
    %v6375 = vpop.f32.mrb[0].mxu0
    %v6376 = vadd.f32 %v6268, %v6375
    %v6377 = vpop.f32.mrb[0].mxu0
    %6378 = vdwg.mxu0
    %6379 = vmatprep.subr.mxu0 0.0
    %v6380 = vand.u32 %v3799, 4294901760
    %v6381 = vsub.f32 %v3799, %v6380
    %v6382 = vand.u32 %v6381, 4294901760
    %6383 = vmatpush1.msra.mxu0 %v6382
    %6384 = vmatprep.subr.mxu0 0.0
    %v6385 = vand.u32 %v3800, 4294901760
    %v6386 = vsub.f32 %v3800, %v6385
    %v6387 = vand.u32 %v6386, 4294901760
    %6388 = vmatpush1.msra.mxu0 %v6387
    %6389 = vmatprep.subr.mxu0 0.0
    %v6390 = vand.u32 %v3801, 4294901760
    %v6391 = vsub.f32 %v3801, %v6390
    %v6392 = vand.u32 %v6391, 4294901760
    %6393 = vmatpush1.msra.mxu0 %v6392
    %6394 = vmatprep.subr.mxu0 0.0
    %v6395 = vand.u32 %v3802, 4294901760
    %v6396 = vsub.f32 %v3802, %v6395
    %v6397 = vand.u32 %v6396, 4294901760
    %6398 = vmatpush1.msra.mxu0 %v6397
    %6399 = vmatprep.subr.mxu0 0.0
    %v6400 = vand.u32 %v3803, 4294901760
    %v6401 = vsub.f32 %v3803, %v6400
    %v6402 = vand.u32 %v6401, 4294901760
    %6403 = vmatpush1.msra.mxu0 %v6402
    %6404 = vmatprep.subr.mxu0 0.0
    %v6405 = vand.u32 %v3804, 4294901760
    %v6406 = vsub.f32 %v3804, %v6405
    %v6407 = vand.u32 %v6406, 4294901760
    %6408 = vmatpush1.msra.mxu0 %v6407
    %6409 = vmatprep.subr.mxu0 0.0
    %v6410 = vand.u32 %v3805, 4294901760
    %v6411 = vsub.f32 %v3805, %v6410
    %v6412 = vand.u32 %v6411, 4294901760
    %6413 = vmatpush1.msra.mxu0 %v6412
    %6414 = vmatprep.subr.mxu0 0.0
    %v6415 = vand.u32 %v3806, 4294901760
    %v6416 = vsub.f32 %v3806, %v6415
    %v6417 = vand.u32 %v6416, 4294901760
    %6418 = vmatpush1.msra.mxu0 %v6417
    %6419 = vmatprep.subr.mxu0 0.0
    %v6420 = vand.u32 %v3807, 4294901760
    %v6421 = vsub.f32 %v3807, %v6420
    %v6422 = vand.u32 %v6421, 4294901760
    %6423 = vmatpush1.msra.mxu0 %v6422
    %6424 = vmatprep.subr.mxu0 0.0
    %v6425 = vand.u32 %v3808, 4294901760
    %v6426 = vsub.f32 %v3808, %v6425
    %v6427 = vand.u32 %v6426, 4294901760
    %6428 = vmatpush1.msra.mxu0 %v6427
    %6429 = vmatprep.subr.mxu0 0.0
    %v6430 = vand.u32 %v3809, 4294901760
    %v6431 = vsub.f32 %v3809, %v6430
    %v6432 = vand.u32 %v6431, 4294901760
    %6433 = vmatpush1.msra.mxu0 %v6432
    %6434 = vmatprep.subr.mxu0 0.0
    %v6435 = vand.u32 %v3810, 4294901760
    %v6436 = vsub.f32 %v3810, %v6435
    %v6437 = vand.u32 %v6436, 4294901760
    %6438 = vmatpush1.msra.mxu0 %v6437
    %6439 = vmatprep.subr.mxu0 0.0
    %v6440 = vand.u32 %v3811, 4294901760
    %v6441 = vsub.f32 %v3811, %v6440
    %v6442 = vand.u32 %v6441, 4294901760
    %6443 = vmatpush1.msra.mxu0 %v6442
    %6444 = vmatprep.subr.mxu0 0.0
    %v6445 = vand.u32 %v3812, 4294901760
    %v6446 = vsub.f32 %v3812, %v6445
    %v6447 = vand.u32 %v6446, 4294901760
    %6448 = vmatpush1.msra.mxu0 %v6447
    %6449 = vmatprep.subr.mxu0 0.0
    %v6450 = vand.u32 %v3813, 4294901760
    %v6451 = vsub.f32 %v3813, %v6450
    %v6452 = vand.u32 %v6451, 4294901760
    %6453 = vmatpush1.msra.mxu0 %v6452
    %6454 = vmatprep.subr.mxu0 0.0
    %v6455 = vand.u32 %v3814, 4294901760
    %v6456 = vsub.f32 %v3814, %v6455
    %v6457 = vand.u32 %v6456, 4294901760
    %6458 = vmatpush1.msra.mxu0 %v6457
    %6459 = vmatprep.subr.mxu0 0.0
    %v6460 = vand.u32 %v3815, 4294901760
    %v6461 = vsub.f32 %v3815, %v6460
    %v6462 = vand.u32 %v6461, 4294901760
    %6463 = vmatpush1.msra.mxu0 %v6462
    %6464 = vmatprep.subr.mxu0 0.0
    %v6465 = vand.u32 %v3816, 4294901760
    %v6466 = vsub.f32 %v3816, %v6465
    %v6467 = vand.u32 %v6466, 4294901760
    %6468 = vmatpush1.msra.mxu0 %v6467
    %6469 = vmatprep.subr.mxu0 0.0
    %v6470 = vand.u32 %v3817, 4294901760
    %v6471 = vsub.f32 %v3817, %v6470
    %v6472 = vand.u32 %v6471, 4294901760
    %6473 = vmatpush1.msra.mxu0 %v6472
    %6474 = vmatprep.subr.mxu0 0.0
    %v6475 = vand.u32 %v3818, 4294901760
    %v6476 = vsub.f32 %v3818, %v6475
    %v6477 = vand.u32 %v6476, 4294901760
    %6478 = vmatpush1.msra.mxu0 %v6477
    %6479 = vmatprep.subr.mxu0 0.0
    %v6480 = vand.u32 %v3819, 4294901760
    %v6481 = vsub.f32 %v3819, %v6480
    %v6482 = vand.u32 %v6481, 4294901760
    %6483 = vmatpush1.msra.mxu0 %v6482
    %6484 = vmatprep.subr.mxu0 0.0
    %v6485 = vand.u32 %v3820, 4294901760
    %v6486 = vsub.f32 %v3820, %v6485
    %v6487 = vand.u32 %v6486, 4294901760
    %6488 = vmatpush1.msra.mxu0 %v6487
    %6489 = vmatprep.subr.mxu0 0.0
    %v6490 = vand.u32 %v3821, 4294901760
    %v6491 = vsub.f32 %v3821, %v6490
    %v6492 = vand.u32 %v6491, 4294901760
    %6493 = vmatpush1.msra.mxu0 %v6492
    %6494 = vmatprep.subr.mxu0 0.0
    %v6495 = vand.u32 %v3822, 4294901760
    %v6496 = vsub.f32 %v3822, %v6495
    %v6497 = vand.u32 %v6496, 4294901760
    %6498 = vmatpush1.msra.mxu0 %v6497
    %6499 = vmatprep.subr.mxu0 0.0
    %v6500 = vand.u32 %v3823, 4294901760
    %v6501 = vsub.f32 %v3823, %v6500
    %v6502 = vand.u32 %v6501, 4294901760
    %6503 = vmatpush1.msra.mxu0 %v6502
    %6504 = vmatprep.subr.mxu0 0.0
    %v6505 = vand.u32 %v3824, 4294901760
    %v6506 = vsub.f32 %v3824, %v6505
    %v6507 = vand.u32 %v6506, 4294901760
    %6508 = vmatpush1.msra.mxu0 %v6507
    %6509 = vmatprep.subr.mxu0 0.0
    %v6510 = vand.u32 %v3825, 4294901760
    %v6511 = vsub.f32 %v3825, %v6510
    %v6512 = vand.u32 %v6511, 4294901760
    %6513 = vmatpush1.msra.mxu0 %v6512
    %6514 = vmatprep.subr.mxu0 0.0
    %v6515 = vand.u32 %v3826, 4294901760
    %v6516 = vsub.f32 %v3826, %v6515
    %v6517 = vand.u32 %v6516, 4294901760
    %6518 = vmatpush1.msra.mxu0 %v6517
    %6519 = vmatprep.subr.mxu0 0.0
    %v6520 = vand.u32 %v3827, 4294901760
    %v6521 = vsub.f32 %v3827, %v6520
    %v6522 = vand.u32 %v6521, 4294901760
    %6523 = vmatpush1.msra.mxu0 %v6522
    %6524 = vmatprep.subr.mxu0 0.0
    %v6525 = vand.u32 %v3828, 4294901760
    %v6526 = vsub.f32 %v3828, %v6525
    %v6527 = vand.u32 %v6526, 4294901760
    %6528 = vmatpush1.msra.mxu0 %v6527
    %6529 = vmatprep.subr.mxu0 0.0
    %v6530 = vand.u32 %v3829, 4294901760
    %v6531 = vsub.f32 %v3829, %v6530
    %v6532 = vand.u32 %v6531, 4294901760
    %6533 = vmatpush1.msra.mxu0 %v6532
    %6534 = vmatprep.subr.mxu0 0.0
    %v6535 = vand.u32 %v3830, 4294901760
    %v6536 = vsub.f32 %v3830, %v6535
    %v6537 = vand.u32 %v6536, 4294901760
    %6538 = vmatpush1.msra.mxu0 %v6537
    %v6539 = vand.u32 %v4918, 4294901760
    %6540 = vmatprep.mubr.f32.mxu0 %v6539
    %v6541 = vand.u32 %v4916, 4294901760
    %6542 = vmatmul.mubr.f32.gmra.mrb[0].mxu0 %v6541
    %v6543 = vpop.f32.mrb[0].mxu0
    %v6544 = vadd.f32 %v6376, %v6543
    %v6545 = vpop.f32.mrb[0].mxu0
    %6546 = vdwg.mxu0
    %6547 = vmatprep.subr.mxu0 0.0
    %v6548 = vand.u32 %v3799, 4294901760
    %6549 = vmatpush1.msra.mxu0 %v6548
    %6550 = vmatprep.subr.mxu0 0.0
    %v6551 = vand.u32 %v3800, 4294901760
    %6552 = vmatpush1.msra.mxu0 %v6551
    %6553 = vmatprep.subr.mxu0 0.0
    %v6554 = vand.u32 %v3801, 4294901760
    %6555 = vmatpush1.msra.mxu0 %v6554
    %6556 = vmatprep.subr.mxu0 0.0
    %v6557 = vand.u32 %v3802, 4294901760
    %6558 = vmatpush1.msra.mxu0 %v6557
    %6559 = vmatprep.subr.mxu0 0.0
    %v6560 = vand.u32 %v3803, 4294901760
    %6561 = vmatpush1.msra.mxu0 %v6560
    %6562 = vmatprep.subr.mxu0 0.0
    %v6563 = vand.u32 %v3804, 4294901760
    %6564 = vmatpush1.msra.mxu0 %v6563
    %6565 = vmatprep.subr.mxu0 0.0
    %v6566 = vand.u32 %v3805, 4294901760
    %6567 = vmatpush1.msra.mxu0 %v6566
    %6568 = vmatprep.subr.mxu0 0.0
    %v6569 = vand.u32 %v3806, 4294901760
    %6570 = vmatpush1.msra.mxu0 %v6569
    %6571 = vmatprep.subr.mxu0 0.0
    %v6572 = vand.u32 %v3807, 4294901760
    %6573 = vmatpush1.msra.mxu0 %v6572
    %6574 = vmatprep.subr.mxu0 0.0
    %v6575 = vand.u32 %v3808, 4294901760
    %6576 = vmatpush1.msra.mxu0 %v6575
    %6577 = vmatprep.subr.mxu0 0.0
    %v6578 = vand.u32 %v3809, 4294901760
    %6579 = vmatpush1.msra.mxu0 %v6578
    %6580 = vmatprep.subr.mxu0 0.0
    %v6581 = vand.u32 %v3810, 4294901760
    %6582 = vmatpush1.msra.mxu0 %v6581
    %6583 = vmatprep.subr.mxu0 0.0
    %v6584 = vand.u32 %v3811, 4294901760
    %6585 = vmatpush1.msra.mxu0 %v6584
    %6586 = vmatprep.subr.mxu0 0.0
    %v6587 = vand.u32 %v3812, 4294901760
    %6588 = vmatpush1.msra.mxu0 %v6587
    %6589 = vmatprep.subr.mxu0 0.0
    %v6590 = vand.u32 %v3813, 4294901760
    %6591 = vmatpush1.msra.mxu0 %v6590
    %6592 = vmatprep.subr.mxu0 0.0
    %v6593 = vand.u32 %v3814, 4294901760
    %6594 = vmatpush1.msra.mxu0 %v6593
    %6595 = vmatprep.subr.mxu0 0.0
    %v6596 = vand.u32 %v3815, 4294901760
    %6597 = vmatpush1.msra.mxu0 %v6596
    %6598 = vmatprep.subr.mxu0 0.0
    %v6599 = vand.u32 %v3816, 4294901760
    %6600 = vmatpush1.msra.mxu0 %v6599
    %6601 = vmatprep.subr.mxu0 0.0
    %v6602 = vand.u32 %v3817, 4294901760
    %6603 = vmatpush1.msra.mxu0 %v6602
    %6604 = vmatprep.subr.mxu0 0.0
    %v6605 = vand.u32 %v3818, 4294901760
    %6606 = vmatpush1.msra.mxu0 %v6605
    %6607 = vmatprep.subr.mxu0 0.0
    %v6608 = vand.u32 %v3819, 4294901760
    %6609 = vmatpush1.msra.mxu0 %v6608
    %6610 = vmatprep.subr.mxu0 0.0
    %v6611 = vand.u32 %v3820, 4294901760
    %6612 = vmatpush1.msra.mxu0 %v6611
    %6613 = vmatprep.subr.mxu0 0.0
    %v6614 = vand.u32 %v3821, 4294901760
    %6615 = vmatpush1.msra.mxu0 %v6614
    %6616 = vmatprep.subr.mxu0 0.0
    %v6617 = vand.u32 %v3822, 4294901760
    %6618 = vmatpush1.msra.mxu0 %v6617
    %6619 = vmatprep.subr.mxu0 0.0
    %v6620 = vand.u32 %v3823, 4294901760
    %6621 = vmatpush1.msra.mxu0 %v6620
    %6622 = vmatprep.subr.mxu0 0.0
    %v6623 = vand.u32 %v3824, 4294901760
    %6624 = vmatpush1.msra.mxu0 %v6623
    %6625 = vmatprep.subr.mxu0 0.0
    %v6626 = vand.u32 %v3825, 4294901760
    %6627 = vmatpush1.msra.mxu0 %v6626
    %6628 = vmatprep.subr.mxu0 0.0
    %v6629 = vand.u32 %v3826, 4294901760
    %6630 = vmatpush1.msra.mxu0 %v6629
    %6631 = vmatprep.subr.mxu0 0.0
    %v6632 = vand.u32 %v3827, 4294901760
    %6633 = vmatpush1.msra.mxu0 %v6632
    %6634 = vmatprep.subr.mxu0 0.0
    %v6635 = vand.u32 %v3828, 4294901760
    %6636 = vmatpush1.msra.mxu0 %v6635
    %6637 = vmatprep.subr.mxu0 0.0
    %v6638 = vand.u32 %v3829, 4294901760
    %6639 = vmatpush1.msra.mxu0 %v6638
    %6640 = vmatprep.subr.mxu0 0.0
    %v6641 = vand.u32 %v3830, 4294901760
    %6642 = vmatpush1.msra.mxu0 %v6641
    %v6643 = vand.u32 %v4918, 4294901760
    %6644 = vmatprep.mubr.f32.mxu0 %v6643
    %v6645 = vand.u32 %v4916, 4294901760
    %6646 = vmatmul.mubr.f32.gmra.mrb[0].mxu0 %v6645
    %v6647 = vpop.f32.mrb[0].mxu0
    %v6648 = vadd.f32 %v6544, %v6647
    %v6649 = vpop.f32.mrb[0].mxu0
    %6650 = vdwg.mxu0
    %v6651 = vmax.f32 %v6648, 0.0
    %vm6652 = vcmask 254976
    %6653 = vst.msk [vmem:[#allocation9] sm:$0x3] %vm6652, %v6651
    // Predicated region
    $region34: #{net_forward.1} parent=1 // pred_check
      _
    $region35: #{net_forward.1} parent=1 // pred_check_branch
      %6655 = sbr.rel (0) target = $region37
    $region36: #{net_forward.1} parent=1 // pred_region
      %s6657 = ssub.s32 32, 32
      %6658 = vsyncadd [#allocation5], %s6657
      %s6660 = sshll.u32 [#allocation9], 4
      %s6661 = int_to_ptr.vmem [resolvable:$true] %s6660
      %6663 = dma.vmem_to_hbm [thread:$0]  %s6661, 32, %s5, [#allocation5]
    $region37: #{net_forward.1} parent=1 // pred_fallthru
      _
    // Predicated region
    $region38: #{net_forward.1} parent=1 // pred_check
      _
    $region39: #{net_forward.1} parent=1 // pred_check_branch
      %6665 = sbr.rel (0) target = $region41
    $region40: #{net_forward.1} parent=1 // pred_region
      %6666 = dma.done [#allocation5], 32
    $region41: #{net_forward.1} parent=1 // pred_fallthru
      _
    %6667 = vsyncpa [#allocation4], 1
    %6668 = vsyncpa [#allocation7], 1
    %6669 = vsyncpa [#allocation5], 1

</llo_original>
